<compile_context>
chip_gen: v7x
topology: tpu7x:2x2x1
jax: 0.10.0
libtpu: 0.0.40
codegen_flags: <defaults>
</compile_context>

<pallas_src>
import math
from functools import partial

import jax
import jax.numpy as jnp
from jax.experimental import pallas as pl
from jax.experimental.pallas import tpu as pltpu

_L = 16  # sublane-tile-aligned left pad of the W axis inside scratch (bf16 tile = 16)


def _resgroup_kernel(x_ref, xt_ref, xb_ref, w1_ref, b1_ref, w2_ref, b2_ref,
                     o_ref, xpad_sc, y1_sc, *, TH, W, N, res_scale, n_h_tiles):
    """One (batch, H-tile) pair per grid step.

    x_ref   : (1, TH, W, N)     f32   core input rows of this tile (NHWC)
    xt_ref  : (1, 2,  W, N)     f32   the 2 image rows just above the tile (clamped)
    xb_ref  : (1, 2,  W, N)     f32   the 2 image rows just below the tile (clamped)
    w1/w2   : (9*N, N)          bf16  tap-major, block-diagonal-over-groups weights
    b1/b2   : (1, N)            f32   biases
    o_ref   : (1, TH, W, N)     f32   output tile
    xpad_sc : (TH+4, W+24, N)   bf16  zero-halo'd input tile (interior at [2:, _L:])
    y1_sc   : (TH+4, W+24, N)   bf16  zero-halo'd conv1 activation
    """
    f32, bf16 = jnp.float32, jnp.bfloat16
    t = pl.program_id(1)
    HP = TH + 4

    # --- zero the 1-column W halo on both scratch slabs (cheap thin stores) ---
    zcol = jnp.zeros((HP, 1, N), bf16)
    for sc in (xpad_sc, y1_sc):
        sc[:, _L - 1:_L, :] = zcol
        sc[:, _L + W:_L + W + 1, :] = zcol

    # --- stage the core input rows (single f32->bf16 cast, aligned store) ---
    xpad_sc[2:2 + TH, _L:_L + W, :] = x_ref[0].astype(bf16)

    # --- 2-row top/bottom halos: real neighbour rows inside the image, zeros at
    #     the image boundary (re-done every step: safe under "parallel" split) ---
    zrow2 = jnp.zeros((2, W, N), bf16)

    @pl.when(t > 0)
    def _():
        xpad_sc[0:2, _L:_L + W, :] = xt_ref[0].astype(bf16)

    @pl.when(t == 0)
    def _():
        xpad_sc[0:2, _L:_L + W, :] = zrow2

    @pl.when(t < n_h_tiles - 1)
    def _():
        xpad_sc[TH + 2:TH + 4, _L:_L + W, :] = xb_ref[0].astype(bf16)

    @pl.when(t == n_h_tiles - 1)
    def _():
        xpad_sc[TH + 2:TH + 4, _L:_L + W, :] = zrow2

    def conv3x3_relu(src_ref, r0, n_rows, w_ref, b_ref):
        """3x3 grouped conv (groups fused block-diagonally) + bias + ReLU on
        padded rows [r0, r0 + n_rows) of src_ref. Returns (n_rows, W, N) f32."""
        M = n_rows * W
        if N < 128:
            # Stacked-K im2col: one (M, 9N) @ (9N, N) MXU matmul (lane-dense K).
            patches = jnp.concatenate(
                [src_ref[r0 - 1 + ky:r0 - 1 + ky + n_rows,
                         _L - 1 + kx:_L - 1 + kx + W, :]
                 for ky in range(3) for kx in range(3)], axis=-1)
            acc = jnp.dot(patches.reshape(M, 9 * N), w_ref[...],
                          preferred_element_type=f32)
        else:
            # Per-tap accumulation: nine (M, N) @ (N, N) dots, f32 accumulate.
            acc = jnp.zeros((M, N), f32)
            for k, (ky, kx) in enumerate(
                    [(ky, kx) for ky in range(3) for kx in range(3)]):
                tap = src_ref[r0 - 1 + ky:r0 - 1 + ky + n_rows,
                              _L - 1 + kx:_L - 1 + kx + W, :]
                acc = acc + jnp.dot(tap.reshape(M, N),
                                    w_ref[k * N:(k + 1) * N, :],
                                    preferred_element_type=f32)
        acc = acc.reshape(n_rows, W, N) + b_ref[0]
        return jnp.maximum(acc, 0.0)

    # conv1 + ReLU on TH+2 rows (1-row look-around needed by conv2); bf16 store.
    y1_sc[1:TH + 3, _L:_L + W, :] = conv3x3_relu(
        xpad_sc, 1, TH + 2, w1_ref, b1_ref).astype(bf16)

    # Rows of y1 that fall outside the image must be ZERO padding for conv2.
    zrow1 = jnp.zeros((1, W, N), bf16)

    @pl.when(t == 0)
    def _():
        y1_sc[1:2, _L:_L + W, :] = zrow1

    @pl.when(t == n_h_tiles - 1)
    def _():
        y1_sc[TH + 2:TH + 3, _L:_L + W, :] = zrow1

    # conv2 + ReLU, res_scale, residual add (residual re-read late, f32 on VPU).
    y2 = conv3x3_relu(y1_sc, 2, TH, w2_ref, b2_ref)
    o_ref[0] = (y2 * res_scale + x_ref[0]).astype(o_ref.dtype)


def _vmem_limit_bytes():
    cap = 128 * 1024 * 1024
    try:
        cap = int(getattr(pltpu.get_tpu_info(), "vmem_capacity_bytes", cap))
    except Exception:
        pass
    # Leave headroom for compiler-internal scratch / semaphores / spill slots:
    # ~54 MiB on v7x (64 MiB physical), ~109 MiB on v5e/v6e (128 MiB physical).
    return max(min(int(cap * 0.85), cap - (8 << 20)), 32 << 20)


def _pick_tile_h(H, W, N, vmem_limit):
    """Largest even divisor of H whose per-step footprint fits ~half the budget."""
    def footprint(th):
        io = 2 * 2 * th * W * N * 4                     # in + out core blocks, x2 buffers
        halos = 2 * 2 * (2 * W * N * 4)                 # two 2-row halo views, x2 buffers
        scratch = 2 * (th + 4) * (W + 24) * N * 2       # two bf16 padded slabs
        vals = th * W * 9 * N * 2 + 2 * th * W * N * 4  # in-kernel patches + acc values
        return io + halos + scratch + vals
    cands = [d for d in range(2, H + 1, 2) if H % d == 0]
    if not cands:
        return H
    th = cands[0]
    for d in cands:
        if footprint(d) <= vmem_limit // 2:
            th = d
    return th


def res_group_block(x_nchw, w1, b1, w2, b2, *, n_groups, res_scale=1.0, tile_h=None):
    """x_nchw: (B, N, H, W) f32; w: (N, N//G, 3, 3) PyTorch grouped-conv layout."""
    B, N, H, W = x_nchw.shape
    G = n_groups
    Cg = N // G
    assert N % G == 0
    assert H % 2 == 0, "2-row-halo H tiling assumes even H"  # TODO(synk): odd H

    vmem_limit = _vmem_limit_bytes()
    TH = tile_h if tile_h is not None else _pick_tile_h(H, W, N, vmem_limit)
    assert H % TH == 0 and TH % 2 == 0
    nH = H // TH
    hb = TH // 2  # index of a 2-row block in units of the halo BlockSpec

    # NCHW -> NHWC.
    # TODO(synk): keep the surrounding model NHWC end-to-end (or transpose
    # on-chip) to avoid these two extra full-tensor HBM passes.
    x = jnp.transpose(x_nchw, (0, 2, 3, 1)).astype(jnp.float32)

    def to_im2col_blockdiag(w):
        # (N, Cg, 3, 3) torch grouped OIHW -> (9*N, N) tap-major block-diagonal.
        # Row = (ky*3+kx)*N + ci_global ; column = co_global.
        wt = jnp.transpose(w.reshape(G, Cg, Cg, 3, 3), (3, 4, 0, 2, 1))  # ky,kx,g,ci,co
        eye = jnp.eye(G, dtype=w.dtype)
        wbd = jnp.einsum('yxgio,gh->yxgiho', wt, eye)                    # 3,3,G,Cg,G,Cg
        return wbd.reshape(9 * N, N).astype(jnp.bfloat16)
    # TODO(synk): when Cg >= the MXU tile width (128 v5e / 256 v6e+), split the
    # block-diagonal fusion into G per-group matmuls to avoid G x redundant FLOPs.
    # TODO(synk): for production nets with small N, pad N to 128 (or reorient so
    # H*W is the lane axis) for lane-dense stores.

    w1k, w2k = to_im2col_blockdiag(w1), to_im2col_blockdiag(w2)
    b1g = b1.reshape(1, N).astype(jnp.float32)
    b2g = b2.reshape(1, N).astype(jnp.float32)

    kernel = partial(_resgroup_kernel, TH=TH, W=W, N=N,
                     res_scale=float(res_scale), n_h_tiles=nH)

    def build(single_buffer_weights):
        wkw = ({"pipeline_mode": pl.Buffered(1)} if single_buffer_weights else {})
        in_specs = [
            pl.BlockSpec((1, TH, W, N), lambda b, t: (b, t, 0, 0)),
            # 2 rows above / below the tile; clamped at image edges (unused there).
            pl.BlockSpec((1, 2, W, N),
                         lambda b, t: (b, jnp.maximum(t * hb - 1, 0), 0, 0)),
            pl.BlockSpec((1, 2, W, N),
                         lambda b, t: (b, jnp.minimum(t * hb + hb, H // 2 - 1), 0, 0)),
            pl.BlockSpec((9 * N, N), lambda b, t: (0, 0), **wkw),
            pl.BlockSpec((1, N), lambda b, t: (0, 0), **wkw),
            pl.BlockSpec((9 * N, N), lambda b, t: (0, 0), **wkw),
            pl.BlockSpec((1, N), lambda b, t: (0, 0), **wkw),
        ]
        return pl.pallas_call(
            kernel,
            out_shape=jax.ShapeDtypeStruct((B, H, W, N), jnp.float32),
            grid=(B, nH),
            in_specs=in_specs,
            out_specs=pl.BlockSpec((1, TH, W, N), lambda b, t: (b, t, 0, 0)),
            scratch_shapes=[
                pltpu.VMEM((TH + 4, W + 24, N), jnp.bfloat16),
                pltpu.VMEM((TH + 4, W + 24, N), jnp.bfloat16),
            ],
            compiler_params=pltpu.CompilerParams(
                dimension_semantics=("parallel", "parallel"),
                vmem_limit_bytes=vmem_limit),
        )

    try:
        out_nhwc = build(True)(x, x, x, w1k, b1g, w2k, b2g)
    except Exception:
        # pipeline_mode=pl.Buffered(1) unsupported on this jax version: fall back
        # to default double-buffered weight/bias specs.
        out_nhwc = build(False)(x, x, x, w1k, b1g, w2k, b2g)

    return jnp.transpose(out_nhwc, (0, 3, 1, 2))      # back to NCHW


def _reference(x, w1, b1, w2, b2, G, res_scale):
    """Mirrors the kernel's numerics: bf16 conv operands, f32 accumulation."""
    dn = ('NCHW', 'OIHW', 'NCHW')
    bf = lambda a: a.astype(jnp.bfloat16)

    def conv(inp, w, b):
        out = jax.lax.conv_general_dilated(
            bf(inp), bf(w), window_strides=(1, 1), padding=((1, 1), (1, 1)),
            dimension_numbers=dn, feature_group_count=G,
            preferred_element_type=jnp.float32)
        return out + b.reshape(1, -1, 1, 1)

    y = jax.nn.relu(conv(x, w1, b1))
    y = jax.nn.relu(conv(y, w2, b2)) * res_scale
    return y + x


if __name__ == "__main__":
    B, N, H, W = 2, 8, 16, 16
    G = 2
    Cg = N // G
    res_scale = 0.5

    key = jax.random.PRNGKey(0)
    kx, kw1, kb1, kw2, kb2 = jax.random.split(key, 5)

    # Deterministic parameter init (Kaiming-uniform-like bound as in nn.Conv2d).
    fan_in = Cg * 3 * 3
    bound = 1.0 / math.sqrt(fan_in)
    x = jax.random.normal(kx, (B, N, H, W), jnp.float32)
    w1 = jax.random.uniform(kw1, (N, Cg, 3, 3), jnp.float32, -bound, bound)
    b1 = jax.random.uniform(kb1, (N,), jnp.float32, -bound, bound)
    w2 = jax.random.uniform(kw2, (N, Cg, 3, 3), jnp.float32, -bound, bound)
    b2 = jax.random.uniform(kb2, (N,), jnp.float32, -bound, bound)

    # tile_h=8 exercises the 2-row-halo H-tiling path (grid = (B, 2)).
    out = res_group_block(x, w1, b1, w2, b2, n_groups=G,
                          res_scale=res_scale, tile_h=8)
    out = jax.block_until_ready(out)

    ref = _reference(x, w1, b1, w2, b2, G, res_scale)
    assert out.shape == (B, N, H, W)
    assert jnp.allclose(out, ref, atol=2e-3, rtol=2e-3), "mismatch vs reference"

    print("KERNEL_OK")
</pallas_src>

<mosaic_0001>
module attributes {stable_mosaic.version = 11 : i64} {
  func.func @_resgroup_kernel(%arg0: i32, %arg1: i32, %arg2: memref<1x8x16x8xf32, #tpu.memory_space<vmem>>, %arg3: memref<1x2x16x8xf32, #tpu.memory_space<vmem>>, %arg4: memref<1x2x16x8xf32, #tpu.memory_space<vmem>>, %arg5: memref<72x8xbf16, #tpu.memory_space<vmem>>, %arg6: memref<1x8xf32, #tpu.memory_space<vmem>>, %arg7: memref<72x8xbf16, #tpu.memory_space<vmem>>, %arg8: memref<1x8xf32, #tpu.memory_space<vmem>>, %arg9: memref<1x8x16x8xf32, #tpu.memory_space<vmem>>, %arg10: memref<12x40x8xbf16, #tpu.memory_space<vmem>>, %arg11: memref<12x40x8xbf16, #tpu.memory_space<vmem>>) attributes {dimension_semantics = [#tpu.dimension_semantics<parallel>, #tpu.dimension_semantics<parallel>], iteration_bounds = array<i64: 2, 2>, scalar_prefetch = 0 : i64, scratch_operands = 2 : i64, tpu.core_type = #tpu.core_type<tc>, window_params = [{transform_indices = @transform_0, window_bounds = array<i64: 1, 8, 16, 8>}, {transform_indices = @transform_1, window_bounds = array<i64: 1, 2, 16, 8>}, {transform_indices = @transform_2, window_bounds = array<i64: 1, 2, 16, 8>}, {pipeline_mode = #tpu.pipeline_mode<synchronous>, transform_indices = @transform_3, window_bounds = array<i64: 72, 8>}, {pipeline_mode = #tpu.pipeline_mode<synchronous>, transform_indices = @transform_4, window_bounds = array<i64: 1, 8>}, {pipeline_mode = #tpu.pipeline_mode<synchronous>, transform_indices = @transform_5, window_bounds = array<i64: 72, 8>}, {pipeline_mode = #tpu.pipeline_mode<synchronous>, transform_indices = @transform_6, window_bounds = array<i64: 1, 8>}, {transform_indices = @transform_7, window_bounds = array<i64: 1, 8, 16, 8>}]} {
    %cst = arith.constant 0.000000e+00 : bf16
    %0 = vector.broadcast %cst : bf16 to vector<12x1x8xbf16>
    %c0 = arith.constant 0 : index
    %c15 = arith.constant 15 : index
    %c0_0 = arith.constant 0 : index
    %1 = vector.load %arg10[%c0, %c15, %c0_0] : memref<12x40x8xbf16, #tpu.memory_space<vmem>>, vector<12x1x8xbf16>
    tpu.vector_store %arg10[%c0, %c15, %c0_0], %0 {strides = array<i32>} : memref<12x40x8xbf16, #tpu.memory_space<vmem>>, vector<12x1x8xbf16>,
    %c0_1 = arith.constant 0 : index
    %c32 = arith.constant 32 : index
    %c0_2 = arith.constant 0 : index
    %2 = vector.load %arg10[%c0_1, %c32, %c0_2] : memref<12x40x8xbf16, #tpu.memory_space<vmem>>, vector<12x1x8xbf16>
    tpu.vector_store %arg10[%c0_1, %c32, %c0_2], %0 {strides = array<i32>} : memref<12x40x8xbf16, #tpu.memory_space<vmem>>, vector<12x1x8xbf16>,
    %c0_3 = arith.constant 0 : index
    %c15_4 = arith.constant 15 : index
    %c0_5 = arith.constant 0 : index
    %3 = vector.load %arg11[%c0_3, %c15_4, %c0_5] : memref<12x40x8xbf16, #tpu.memory_space<vmem>>, vector<12x1x8xbf16>
    tpu.vector_store %arg11[%c0_3, %c15_4, %c0_5], %0 {strides = array<i32>} : memref<12x40x8xbf16, #tpu.memory_space<vmem>>, vector<12x1x8xbf16>,
    %c0_6 = arith.constant 0 : index
    %c32_7 = arith.constant 32 : index
    %c0_8 = arith.constant 0 : index
    %4 = vector.load %arg11[%c0_6, %c32_7, %c0_8] : memref<12x40x8xbf16, #tpu.memory_space<vmem>>, vector<12x1x8xbf16>
    tpu.vector_store %arg11[%c0_6, %c32_7, %c0_8], %0 {strides = array<i32>} : memref<12x40x8xbf16, #tpu.memory_space<vmem>>, vector<12x1x8xbf16>,
    %c0_9 = arith.constant 0 : index
    %c0_10 = arith.constant 0 : index
    %c0_11 = arith.constant 0 : index
    %c0_12 = arith.constant 0 : index
    %5 = vector.load %arg2[%c0_9, %c0_10, %c0_11, %c0_12] : memref<1x8x16x8xf32, #tpu.memory_space<vmem>>, vector<1x8x16x8xf32>
    %6 = vector.shape_cast %5 : vector<1x8x16x8xf32> to vector<8x16x8xf32>
    %7 = arith.truncf %6 : vector<8x16x8xf32> to vector<8x16x8xbf16>
    %c2 = arith.constant 2 : index
    %c16 = arith.constant 16 : index
    %c0_13 = arith.constant 0 : index
    %8 = vector.load %arg10[%c2, %c16, %c0_13] : memref<12x40x8xbf16, #tpu.memory_space<vmem>>, vector<8x16x8xbf16>
    tpu.vector_store %arg10[%c2, %c16, %c0_13], %7 {strides = array<i32>} : memref<12x40x8xbf16, #tpu.memory_space<vmem>>, vector<8x16x8xbf16>,
    %cst_14 = arith.constant 0.000000e+00 : bf16
    %9 = vector.broadcast %cst_14 : bf16 to vector<2x16x8xbf16>
    %c0_i32 = arith.constant 0 : i32
    %10 = arith.cmpi sgt, %arg1, %c0_i32 : i32
    %11 = arith.extui %10 : i1 to i32
    %c0_i32_15 = arith.constant 0 : i32
    %12 = arith.cmpi ne, %11, %c0_i32_15 : i32
    scf.if %12 {
      %c0_101 = arith.constant 0 : index
      %c0_102 = arith.constant 0 : index
      %c0_103 = arith.constant 0 : index
      %c0_104 = arith.constant 0 : index
      %81 = vector.load %arg3[%c0_101, %c0_102, %c0_103, %c0_104] : memref<1x2x16x8xf32, #tpu.memory_space<vmem>>, vector<1x2x16x8xf32>
      %82 = vector.shape_cast %81 : vector<1x2x16x8xf32> to vector<2x16x8xf32>
      %83 = arith.truncf %82 : vector<2x16x8xf32> to vector<2x16x8xbf16>
      %c0_105 = arith.constant 0 : index
      %c16_106 = arith.constant 16 : index
      %c0_107 = arith.constant 0 : index
      %84 = vector.load %arg10[%c0_105, %c16_106, %c0_107] : memref<12x40x8xbf16, #tpu.memory_space<vmem>>, vector<2x16x8xbf16>
      tpu.vector_store %arg10[%c0_105, %c16_106, %c0_107], %83 {strides = array<i32>} : memref<12x40x8xbf16, #tpu.memory_space<vmem>>, vector<2x16x8xbf16>,
    } else {
    }
    %c0_i32_16 = arith.constant 0 : i32
    %13 = arith.cmpi eq, %arg1, %c0_i32_16 : i32
    %14 = arith.extui %13 : i1 to i32
    %c0_i32_17 = arith.constant 0 : i32
    %15 = arith.cmpi ne, %14, %c0_i32_17 : i32
    scf.if %15 {
      %c0_101 = arith.constant 0 : index
      %c16_102 = arith.constant 16 : index
      %c0_103 = arith.constant 0 : index
      %81 = vector.load %arg10[%c0_101, %c16_102, %c0_103] : memref<12x40x8xbf16, #tpu.memory_space<vmem>>, vector<2x16x8xbf16>
      tpu.vector_store %arg10[%c0_101, %c16_102, %c0_103], %9 {strides = array<i32>} : memref<12x40x8xbf16, #tpu.memory_space<vmem>>, vector<2x16x8xbf16>,
    } else {
    }
    %c1_i32 = arith.constant 1 : i32
    %16 = arith.cmpi slt, %arg1, %c1_i32 : i32
    %17 = arith.extui %16 : i1 to i32
    %c0_i32_18 = arith.constant 0 : i32
    %18 = arith.cmpi ne, %17, %c0_i32_18 : i32
    scf.if %18 {
      %c0_101 = arith.constant 0 : index
      %c0_102 = arith.constant 0 : index
      %c0_103 = arith.constant 0 : index
      %c0_104 = arith.constant 0 : index
      %81 = vector.load %arg4[%c0_101, %c0_102, %c0_103, %c0_104] : memref<1x2x16x8xf32, #tpu.memory_space<vmem>>, vector<1x2x16x8xf32>
      %82 = vector.shape_cast %81 : vector<1x2x16x8xf32> to vector<2x16x8xf32>
      %83 = arith.truncf %82 : vector<2x16x8xf32> to vector<2x16x8xbf16>
      %c10 = arith.constant 10 : index
      %c16_105 = arith.constant 16 : index
      %c0_106 = arith.constant 0 : index
      %84 = vector.load %arg10[%c10, %c16_105, %c0_106] : memref<12x40x8xbf16, #tpu.memory_space<vmem>>, vector<2x16x8xbf16>
      tpu.vector_store %arg10[%c10, %c16_105, %c0_106], %83 {strides = array<i32>} : memref<12x40x8xbf16, #tpu.memory_space<vmem>>, vector<2x16x8xbf16>,
    } else {
    }
    %c1_i32_19 = arith.constant 1 : i32
    %19 = arith.cmpi eq, %arg1, %c1_i32_19 : i32
    %20 = arith.extui %19 : i1 to i32
    %c0_i32_20 = arith.constant 0 : i32
    %21 = arith.cmpi ne, %20, %c0_i32_20 : i32
    scf.if %21 {
      %c10 = arith.constant 10 : index
      %c16_101 = arith.constant 16 : index
      %c0_102 = arith.constant 0 : index
      %81 = vector.load %arg10[%c10, %c16_101, %c0_102] : memref<12x40x8xbf16, #tpu.memory_space<vmem>>, vector<2x16x8xbf16>
      tpu.vector_store %arg10[%c10, %c16_101, %c0_102], %9 {strides = array<i32>} : memref<12x40x8xbf16, #tpu.memory_space<vmem>>, vector<2x16x8xbf16>,
    } else {
    }
    %c0_21 = arith.constant 0 : index
    %c15_22 = arith.constant 15 : index
    %c0_23 = arith.constant 0 : index
    %22 = vector.load %arg10[%c0_21, %c15_22, %c0_23] : memref<12x40x8xbf16, #tpu.memory_space<vmem>>, vector<10x16x8xbf16>
    %c0_24 = arith.constant 0 : index
    %c16_25 = arith.constant 16 : index
    %c0_26 = arith.constant 0 : index
    %23 = vector.load %arg10[%c0_24, %c16_25, %c0_26] : memref<12x40x8xbf16, #tpu.memory_space<vmem>>, vector<10x16x8xbf16>
    %c0_27 = arith.constant 0 : index
    %c17 = arith.constant 17 : index
    %c0_28 = arith.constant 0 : index
    %24 = vector.load %arg10[%c0_27, %c17, %c0_28] : memref<12x40x8xbf16, #tpu.memory_space<vmem>>, vector<10x16x8xbf16>
    %c1 = arith.constant 1 : index
    %c15_29 = arith.constant 15 : index
    %c0_30 = arith.constant 0 : index
    %25 = vector.load %arg10[%c1, %c15_29, %c0_30] : memref<12x40x8xbf16, #tpu.memory_space<vmem>>, vector<10x16x8xbf16>
    %c1_31 = arith.constant 1 : index
    %c16_32 = arith.constant 16 : index
    %c0_33 = arith.constant 0 : index
    %26 = vector.load %arg10[%c1_31, %c16_32, %c0_33] : memref<12x40x8xbf16, #tpu.memory_space<vmem>>, vector<10x16x8xbf16>
    %c1_34 = arith.constant 1 : index
    %c17_35 = arith.constant 17 : index
    %c0_36 = arith.constant 0 : index
    %27 = vector.load %arg10[%c1_34, %c17_35, %c0_36] : memref<12x40x8xbf16, #tpu.memory_space<vmem>>, vector<10x16x8xbf16>
    %c2_37 = arith.constant 2 : index
    %c15_38 = arith.constant 15 : index
    %c0_39 = arith.constant 0 : index
    %28 = vector.load %arg10[%c2_37, %c15_38, %c0_39] : memref<12x40x8xbf16, #tpu.memory_space<vmem>>, vector<10x16x8xbf16>
    %c2_40 = arith.constant 2 : index
    %c16_41 = arith.constant 16 : index
    %c0_42 = arith.constant 0 : index
    %29 = vector.load %arg10[%c2_40, %c16_41, %c0_42] : memref<12x40x8xbf16, #tpu.memory_space<vmem>>, vector<10x16x8xbf16>
    %c2_43 = arith.constant 2 : index
    %c17_44 = arith.constant 17 : index
    %c0_45 = arith.constant 0 : index
    %30 = vector.load %arg10[%c2_43, %c17_44, %c0_45] : memref<12x40x8xbf16, #tpu.memory_space<vmem>>, vector<10x16x8xbf16>
    %31 = tpu.concatenate %22, %23, %24, %25, %26, %27, %28, %29, %30 in 2 : vector<10x16x8xbf16>, vector<10x16x8xbf16>, vector<10x16x8xbf16>, vector<10x16x8xbf16>, vector<10x16x8xbf16>, vector<10x16x8xbf16>, vector<10x16x8xbf16>, vector<10x16x8xbf16>, vector<10x16x8xbf16> -> vector<10x16x72xbf16>
    %32 = vector.shape_cast %31 : vector<10x16x72xbf16> to vector<160x72xbf16>
    %c0_46 = arith.constant 0 : index
    %c0_47 = arith.constant 0 : index
    %33 = vector.load %arg5[%c0_46, %c0_47] : memref<72x8xbf16, #tpu.memory_space<vmem>>, vector<72x8xbf16>
    %cst_48 = arith.constant dense<0.000000e+00> : vector<160x8xf32>
    %34 = tpu.matmul %32, %33, %cst_48 {dimension_numbers = #tpu.dot_dimension_numbers<[1], [0], [0], [1], [0, 0, 1, 1], [], []>} : vector<160x72xbf16>, vector<72x8xbf16>, vector<160x8xf32> -> vector<160x8xf32>
    %35 = vector.shape_cast %34 : vector<160x8xf32> to vector<10x16x8xf32>
    %c0_49 = arith.constant 0 : index
    %c0_50 = arith.constant 0 : index
    %36 = vector.load %arg6[%c0_49, %c0_50] : memref<1x8xf32, #tpu.memory_space<vmem>>, vector<1x8xf32>
    %37 = vector.shape_cast %36 : vector<1x8xf32> to vector<8xf32>
    %38 = vector.shape_cast %37 : vector<8xf32> to vector<1x1x8xf32>
    %39 = vector.broadcast %38 : vector<1x1x8xf32> to vector<10x16x8xf32>
    %40 = arith.addf %35, %39 : vector<10x16x8xf32>
    %cst_51 = arith.constant 0.000000e+00 : f32
    %41 = vector.broadcast %cst_51 : f32 to vector<10x16x8xf32>
    %42 = arith.maximumf %40, %41 : vector<10x16x8xf32>
    %43 = arith.truncf %42 : vector<10x16x8xf32> to vector<10x16x8xbf16>
    %c1_52 = arith.constant 1 : index
    %c16_53 = arith.constant 16 : index
    %c0_54 = arith.constant 0 : index
    %44 = vector.load %arg11[%c1_52, %c16_53, %c0_54] : memref<12x40x8xbf16, #tpu.memory_space<vmem>>, vector<10x16x8xbf16>
    tpu.vector_store %arg11[%c1_52, %c16_53, %c0_54], %43 {strides = array<i32>} : memref<12x40x8xbf16, #tpu.memory_space<vmem>>, vector<10x16x8xbf16>,
    %cst_55 = arith.constant 0.000000e+00 : bf16
    %45 = vector.broadcast %cst_55 : bf16 to vector<1x16x8xbf16>
    %c0_i32_56 = arith.constant 0 : i32
    %46 = arith.cmpi eq, %arg1, %c0_i32_56 : i32
    %47 = arith.extui %46 : i1 to i32
    %c0_i32_57 = arith.constant 0 : i32
    %48 = arith.cmpi ne, %47, %c0_i32_57 : i32
    scf.if %48 {
      %c1_101 = arith.constant 1 : index
      %c16_102 = arith.constant 16 : index
      %c0_103 = arith.constant 0 : index
      %81 = vector.load %arg11[%c1_101, %c16_102, %c0_103] : memref<12x40x8xbf16, #tpu.memory_space<vmem>>, vector<1x16x8xbf16>
      tpu.vector_store %arg11[%c1_101, %c16_102, %c0_103], %45 {strides = array<i32>} : memref<12x40x8xbf16, #tpu.memory_space<vmem>>, vector<1x16x8xbf16>,
    } else {
    }
    %c1_i32_58 = arith.constant 1 : i32
    %49 = arith.cmpi eq, %arg1, %c1_i32_58 : i32
    %50 = arith.extui %49 : i1 to i32
    %c0_i32_59 = arith.constant 0 : i32
    %51 = arith.cmpi ne, %50, %c0_i32_59 : i32
    scf.if %51 {
      %c10 = arith.constant 10 : index
      %c16_101 = arith.constant 16 : index
      %c0_102 = arith.constant 0 : index
      %81 = vector.load %arg11[%c10, %c16_101, %c0_102] : memref<12x40x8xbf16, #tpu.memory_space<vmem>>, vector<1x16x8xbf16>
      tpu.vector_store %arg11[%c10, %c16_101, %c0_102], %45 {strides = array<i32>} : memref<12x40x8xbf16, #tpu.memory_space<vmem>>, vector<1x16x8xbf16>,
    } else {
    }
    %c1_60 = arith.constant 1 : index
    %c15_61 = arith.constant 15 : index
    %c0_62 = arith.constant 0 : index
    %52 = vector.load %arg11[%c1_60, %c15_61, %c0_62] : memref<12x40x8xbf16, #tpu.memory_space<vmem>>, vector<8x16x8xbf16>
    %c1_63 = arith.constant 1 : index
    %c16_64 = arith.constant 16 : index
    %c0_65 = arith.constant 0 : index
    %53 = vector.load %arg11[%c1_63, %c16_64, %c0_65] : memref<12x40x8xbf16, #tpu.memory_space<vmem>>, vector<8x16x8xbf16>
    %c1_66 = arith.constant 1 : index
    %c17_67 = arith.constant 17 : index
    %c0_68 = arith.constant 0 : index
    %54 = vector.load %arg11[%c1_66, %c17_67, %c0_68] : memref<12x40x8xbf16, #tpu.memory_space<vmem>>, vector<8x16x8xbf16>
    %c2_69 = arith.constant 2 : index
    %c15_70 = arith.constant 15 : index
    %c0_71 = arith.constant 0 : index
    %55 = vector.load %arg11[%c2_69, %c15_70, %c0_71] : memref<12x40x8xbf16, #tpu.memory_space<vmem>>, vector<8x16x8xbf16>
    %c2_72 = arith.constant 2 : index
    %c16_73 = arith.constant 16 : index
    %c0_74 = arith.constant 0 : index
    %56 = vector.load %arg11[%c2_72, %c16_73, %c0_74] : memref<12x40x8xbf16, #tpu.memory_space<vmem>>, vector<8x16x8xbf16>
    %c2_75 = arith.constant 2 : index
    %c17_76 = arith.constant 17 : index
    %c0_77 = arith.constant 0 : index
    %57 = vector.load %arg11[%c2_75, %c17_76, %c0_77] : memref<12x40x8xbf16, #tpu.memory_space<vmem>>, vector<8x16x8xbf16>
    %c3 = arith.constant 3 : index
    %c15_78 = arith.constant 15 : index
    %c0_79 = arith.constant 0 : index
    %58 = vector.load %arg11[%c3, %c15_78, %c0_79] : memref<12x40x8xbf16, #tpu.memory_space<vmem>>, vector<8x16x8xbf16>
    %c3_80 = arith.constant 3 : index
    %c16_81 = arith.constant 16 : index
    %c0_82 = arith.constant 0 : index
    %59 = vector.load %arg11[%c3_80, %c16_81, %c0_82] : memref<12x40x8xbf16, #tpu.memory_space<vmem>>, vector<8x16x8xbf16>
    %c3_83 = arith.constant 3 : index
    %c17_84 = arith.constant 17 : index
    %c0_85 = arith.constant 0 : index
    %60 = vector.load %arg11[%c3_83, %c17_84, %c0_85] : memref<12x40x8xbf16, #tpu.memory_space<vmem>>, vector<8x16x8xbf16>
    %61 = tpu.concatenate %52, %53, %54, %55, %56, %57, %58, %59, %60 in 2 : vector<8x16x8xbf16>, vector<8x16x8xbf16>, vector<8x16x8xbf16>, vector<8x16x8xbf16>, vector<8x16x8xbf16>, vector<8x16x8xbf16>, vector<8x16x8xbf16>, vector<8x16x8xbf16>, vector<8x16x8xbf16> -> vector<8x16x72xbf16>
    %62 = vector.shape_cast %61 : vector<8x16x72xbf16> to vector<128x72xbf16>
    %c0_86 = arith.constant 0 : index
    %c0_87 = arith.constant 0 : index
    %63 = vector.load %arg7[%c0_86, %c0_87] : memref<72x8xbf16, #tpu.memory_space<vmem>>, vector<72x8xbf16>
    %cst_88 = arith.constant dense<0.000000e+00> : vector<128x8xf32>
    %64 = tpu.matmul %62, %63, %cst_88 {dimension_numbers = #tpu.dot_dimension_numbers<[1], [0], [0], [1], [0, 0, 1, 1], [], []>} : vector<128x72xbf16>, vector<72x8xbf16>, vector<128x8xf32> -> vector<128x8xf32>
    %65 = vector.shape_cast %64 : vector<128x8xf32> to vector<8x16x8xf32>
    %c0_89 = arith.constant 0 : index
    %c0_90 = arith.constant 0 : index
    %66 = vector.load %arg8[%c0_89, %c0_90] : memref<1x8xf32, #tpu.memory_space<vmem>>, vector<1x8xf32>
    %67 = vector.shape_cast %66 : vector<1x8xf32> to vector<8xf32>
    %68 = vector.shape_cast %67 : vector<8xf32> to vector<1x1x8xf32>
    %69 = vector.broadcast %68 : vector<1x1x8xf32> to vector<8x16x8xf32>
    %70 = arith.addf %65, %69 : vector<8x16x8xf32>
    %cst_91 = arith.constant 0.000000e+00 : f32
    %71 = vector.broadcast %cst_91 : f32 to vector<8x16x8xf32>
    %72 = arith.maximumf %70, %71 : vector<8x16x8xf32>
    %cst_92 = arith.constant 5.000000e-01 : f32
    %73 = vector.broadcast %cst_92 : f32 to vector<8x16x8xf32>
    %74 = arith.mulf %72, %73 : vector<8x16x8xf32>
    %c0_93 = arith.constant 0 : index
    %c0_94 = arith.constant 0 : index
    %c0_95 = arith.constant 0 : index
    %c0_96 = arith.constant 0 : index
    %75 = vector.load %arg2[%c0_93, %c0_94, %c0_95, %c0_96] : memref<1x8x16x8xf32, #tpu.memory_space<vmem>>, vector<1x8x16x8xf32>
    %76 = vector.shape_cast %75 : vector<1x8x16x8xf32> to vector<8x16x8xf32>
    %77 = arith.addf %74, %76 : vector<8x16x8xf32>
    %c0_97 = arith.constant 0 : index
    %c0_98 = arith.constant 0 : index
    %c0_99 = arith.constant 0 : index
    %c0_100 = arith.constant 0 : index
    %78 = vector.load %arg9[%c0_97, %c0_98, %c0_99, %c0_100] : memref<1x8x16x8xf32, #tpu.memory_space<vmem>>, vector<1x8x16x8xf32>
    %79 = vector.shape_cast %78 : vector<1x8x16x8xf32> to vector<8x16x8xf32>
    %80 = vector.shape_cast %77 : vector<8x16x8xf32> to vector<1x8x16x8xf32>
    tpu.vector_store %arg9[%c0_97, %c0_98, %c0_99, %c0_100], %80 {strides = array<i32>} : memref<1x8x16x8xf32, #tpu.memory_space<vmem>>, vector<1x8x16x8xf32>,
    return
  }
  func.func @transform_0(%arg0: i32, %arg1: i32) -> (i32, i32, i32, i32) {
    %c0_i32 = arith.constant 0 : i32
    %c0_i32_0 = arith.constant 0 : i32
    %c0_i32_1 = arith.constant 0 : i32
    return %arg0, %arg1, %c0_i32, %c0_i32_0 : i32, i32, i32, i32
  }
  func.func @transform_1(%arg0: i32, %arg1: i32) -> (i32, i32, i32, i32) {
    %c4_i32 = arith.constant 4 : i32
    %0 = arith.muli %arg1, %c4_i32 : i32
    %c1_i32 = arith.constant 1 : i32
    %1 = arith.subi %0, %c1_i32 : i32
    %c0_i32 = arith.constant 0 : i32
    %2 = arith.maxsi %1, %c0_i32 : i32
    %c0_i32_0 = arith.constant 0 : i32
    %c0_i32_1 = arith.constant 0 : i32
    %c0_i32_2 = arith.constant 0 : i32
    return %arg0, %2, %c0_i32_0, %c0_i32_1 : i32, i32, i32, i32
  }
  func.func @transform_2(%arg0: i32, %arg1: i32) -> (i32, i32, i32, i32) {
    %c4_i32 = arith.constant 4 : i32
    %0 = arith.muli %arg1, %c4_i32 : i32
    %c4_i32_0 = arith.constant 4 : i32
    %1 = arith.addi %0, %c4_i32_0 : i32
    %c7_i32 = arith.constant 7 : i32
    %2 = arith.minsi %1, %c7_i32 : i32
    %c0_i32 = arith.constant 0 : i32
    %c0_i32_1 = arith.constant 0 : i32
    %c0_i32_2 = arith.constant 0 : i32
    return %arg0, %2, %c0_i32, %c0_i32_1 : i32, i32, i32, i32
  }
  func.func @transform_3(%arg0: i32, %arg1: i32) -> (i32, i32) {
    %c0_i32 = arith.constant 0 : i32
    %c0_i32_0 = arith.constant 0 : i32
    %c0_i32_1 = arith.constant 0 : i32
    return %c0_i32, %c0_i32_0 : i32, i32
  }
  func.func @transform_4(%arg0: i32, %arg1: i32) -> (i32, i32) {
    %c0_i32 = arith.constant 0 : i32
    %c0_i32_0 = arith.constant 0 : i32
    %c0_i32_1 = arith.constant 0 : i32
    return %c0_i32, %c0_i32_0 : i32, i32
  }
  func.func @transform_5(%arg0: i32, %arg1: i32) -> (i32, i32) {
    %c0_i32 = arith.constant 0 : i32
    %c0_i32_0 = arith.constant 0 : i32
    %c0_i32_1 = arith.constant 0 : i32
    return %c0_i32, %c0_i32_0 : i32, i32
  }
  func.func @transform_6(%arg0: i32, %arg1: i32) -> (i32, i32) {
    %c0_i32 = arith.constant 0 : i32
    %c0_i32_0 = arith.constant 0 : i32
    %c0_i32_1 = arith.constant 0 : i32
    return %c0_i32, %c0_i32_0 : i32, i32
  }
  func.func @transform_7(%arg0: i32, %arg1: i32) -> (i32, i32, i32, i32) {
    %c0_i32 = arith.constant 0 : i32
    %c0_i32_0 = arith.constant 0 : i32
    %c0_i32_1 = arith.constant 0 : i32
    return %arg0, %arg1, %c0_i32, %c0_i32_0 : i32, i32, i32, i32
  }
}

module attributes {stable_mosaic.version = 11 : i64} {
  func.func @_resgroup_kernel(%arg0: i32, %arg1: i32, %arg2: memref<1x8x16x8xf32, #tpu.memory_space<vmem>>, %arg3: memref<1x2x16x8xf32, #tpu.memory_space<vmem>>, %arg4: memref<1x2x16x8xf32, #tpu.memory_space<vmem>>, %arg5: memref<72x8xbf16, #tpu.memory_space<vmem>>, %arg6: memref<1x8xf32, #tpu.memory_space<vmem>>, %arg7: memref<72x8xbf16, #tpu.memory_space<vmem>>, %arg8: memref<1x8xf32, #tpu.memory_space<vmem>>, %arg9: memref<1x8x16x8xf32, #tpu.memory_space<vmem>>, %arg10: memref<12x40x8xbf16, #tpu.memory_space<vmem>>, %arg11: memref<12x40x8xbf16, #tpu.memory_space<vmem>>) attributes {dimension_semantics = [#tpu.dimension_semantics<parallel>, #tpu.dimension_semantics<parallel>], iteration_bounds = array<i64: 2, 2>, scalar_prefetch = 0 : i64, scratch_operands = 2 : i64, tpu.core_type = #tpu.core_type<tc>, window_params = [{transform_indices = @transform_0, window_bounds = array<i64: 1, 8, 16, 8>}, {transform_indices = @transform_1, window_bounds = array<i64: 1, 2, 16, 8>}, {transform_indices = @transform_2, window_bounds = array<i64: 1, 2, 16, 8>}, {pipeline_mode = #tpu.pipeline_mode<synchronous>, transform_indices = @transform_3, window_bounds = array<i64: 72, 8>}, {pipeline_mode = #tpu.pipeline_mode<synchronous>, transform_indices = @transform_4, window_bounds = array<i64: 1, 8>}, {pipeline_mode = #tpu.pipeline_mode<synchronous>, transform_indices = @transform_5, window_bounds = array<i64: 72, 8>}, {pipeline_mode = #tpu.pipeline_mode<synchronous>, transform_indices = @transform_6, window_bounds = array<i64: 1, 8>}, {transform_indices = @transform_7, window_bounds = array<i64: 1, 8, 16, 8>}]} {
    %cst = arith.constant 0.000000e+00 : bf16
    %0 = vector.broadcast %cst : bf16 to vector<12x1x8xbf16>
    %c0 = arith.constant 0 : index
    %c15 = arith.constant 15 : index
    %c0_0 = arith.constant 0 : index
    %1 = vector.load %arg10[%c0, %c15, %c0_0] : memref<12x40x8xbf16, #tpu.memory_space<vmem>>, vector<12x1x8xbf16>
    tpu.vector_store %arg10[%c0, %c15, %c0_0], %0 {strides = array<i32>} : memref<12x40x8xbf16, #tpu.memory_space<vmem>>, vector<12x1x8xbf16>,
    %c0_1 = arith.constant 0 : index
    %c32 = arith.constant 32 : index
    %c0_2 = arith.constant 0 : index
    %2 = vector.load %arg10[%c0_1, %c32, %c0_2] : memref<12x40x8xbf16, #tpu.memory_space<vmem>>, vector<12x1x8xbf16>
    tpu.vector_store %arg10[%c0_1, %c32, %c0_2], %0 {strides = array<i32>} : memref<12x40x8xbf16, #tpu.memory_space<vmem>>, vector<12x1x8xbf16>,
    %c0_3 = arith.constant 0 : index
    %c15_4 = arith.constant 15 : index
    %c0_5 = arith.constant 0 : index
    %3 = vector.load %arg11[%c0_3, %c15_4, %c0_5] : memref<12x40x8xbf16, #tpu.memory_space<vmem>>, vector<12x1x8xbf16>
    tpu.vector_store %arg11[%c0_3, %c15_4, %c0_5], %0 {strides = array<i32>} : memref<12x40x8xbf16, #tpu.memory_space<vmem>>, vector<12x1x8xbf16>,
    %c0_6 = arith.constant 0 : index
    %c32_7 = arith.constant 32 : index
    %c0_8 = arith.constant 0 : index
    %4 = vector.load %arg11[%c0_6, %c32_7, %c0_8] : memref<12x40x8xbf16, #tpu.memory_space<vmem>>, vector<12x1x8xbf16>
    tpu.vector_store %arg11[%c0_6, %c32_7, %c0_8], %0 {strides = array<i32>} : memref<12x40x8xbf16, #tpu.memory_space<vmem>>, vector<12x1x8xbf16>,
    %c0_9 = arith.constant 0 : index
    %c0_10 = arith.constant 0 : index
    %c0_11 = arith.constant 0 : index
    %c0_12 = arith.constant 0 : index
    %5 = vector.load %arg2[%c0_9, %c0_10, %c0_11, %c0_12] : memref<1x8x16x8xf32, #tpu.memory_space<vmem>>, vector<1x8x16x8xf32>
    %6 = vector.shape_cast %5 : vector<1x8x16x8xf32> to vector<8x16x8xf32>
    %7 = arith.truncf %6 : vector<8x16x8xf32> to vector<8x16x8xbf16>
    %c2 = arith.constant 2 : index
    %c16 = arith.constant 16 : index
    %c0_13 = arith.constant 0 : index
    %8 = vector.load %arg10[%c2, %c16, %c0_13] : memref<12x40x8xbf16, #tpu.memory_space<vmem>>, vector<8x16x8xbf16>
    tpu.vector_store %arg10[%c2, %c16, %c0_13], %7 {strides = array<i32>} : memref<12x40x8xbf16, #tpu.memory_space<vmem>>, vector<8x16x8xbf16>,
    %cst_14 = arith.constant 0.000000e+00 : bf16
    %9 = vector.broadcast %cst_14 : bf16 to vector<2x16x8xbf16>
    %c0_i32 = arith.constant 0 : i32
    %10 = arith.cmpi sgt, %arg1, %c0_i32 : i32
    %11 = arith.extui %10 : i1 to i32
    %c0_i32_15 = arith.constant 0 : i32
    %12 = arith.cmpi ne, %11, %c0_i32_15 : i32
    scf.if %12 {
      %c0_101 = arith.constant 0 : index
      %c0_102 = arith.constant 0 : index
      %c0_103 = arith.constant 0 : index
      %c0_104 = arith.constant 0 : index
      %81 = vector.load %arg3[%c0_101, %c0_102, %c0_103, %c0_104] : memref<1x2x16x8xf32, #tpu.memory_space<vmem>>, vector<1x2x16x8xf32>
      %82 = vector.shape_cast %81 : vector<1x2x16x8xf32> to vector<2x16x8xf32>
      %83 = arith.truncf %82 : vector<2x16x8xf32> to vector<2x16x8xbf16>
      %c0_105 = arith.constant 0 : index
      %c16_106 = arith.constant 16 : index
      %c0_107 = arith.constant 0 : index
      %84 = vector.load %arg10[%c0_105, %c16_106, %c0_107] : memref<12x40x8xbf16, #tpu.memory_space<vmem>>, vector<2x16x8xbf16>
      tpu.vector_store %arg10[%c0_105, %c16_106, %c0_107], %83 {strides = array<i32>} : memref<12x40x8xbf16, #tpu.memory_space<vmem>>, vector<2x16x8xbf16>,
    } else {
    }
    %c0_i32_16 = arith.constant 0 : i32
    %13 = arith.cmpi eq, %arg1, %c0_i32_16 : i32
    %14 = arith.extui %13 : i1 to i32
    %c0_i32_17 = arith.constant 0 : i32
    %15 = arith.cmpi ne, %14, %c0_i32_17 : i32
    scf.if %15 {
      %c0_101 = arith.constant 0 : index
      %c16_102 = arith.constant 16 : index
      %c0_103 = arith.constant 0 : index
      %81 = vector.load %arg10[%c0_101, %c16_102, %c0_103] : memref<12x40x8xbf16, #tpu.memory_space<vmem>>, vector<2x16x8xbf16>
      tpu.vector_store %arg10[%c0_101, %c16_102, %c0_103], %9 {strides = array<i32>} : memref<12x40x8xbf16, #tpu.memory_space<vmem>>, vector<2x16x8xbf16>,
    } else {
    }
    %c1_i32 = arith.constant 1 : i32
    %16 = arith.cmpi slt, %arg1, %c1_i32 : i32
    %17 = arith.extui %16 : i1 to i32
    %c0_i32_18 = arith.constant 0 : i32
    %18 = arith.cmpi ne, %17, %c0_i32_18 : i32
    scf.if %18 {
      %c0_101 = arith.constant 0 : index
      %c0_102 = arith.constant 0 : index
      %c0_103 = arith.constant 0 : index
      %c0_104 = arith.constant 0 : index
      %81 = vector.load %arg4[%c0_101, %c0_102, %c0_103, %c0_104] : memref<1x2x16x8xf32, #tpu.memory_space<vmem>>, vector<1x2x16x8xf32>
      %82 = vector.shape_cast %81 : vector<1x2x16x8xf32> to vector<2x16x8xf32>
      %83 = arith.truncf %82 : vector<2x16x8xf32> to vector<2x16x8xbf16>
      %c10 = arith.constant 10 : index
      %c16_105 = arith.constant 16 : index
      %c0_106 = arith.constant 0 : index
      %84 = vector.load %arg10[%c10, %c16_105, %c0_106] : memref<12x40x8xbf16, #tpu.memory_space<vmem>>, vector<2x16x8xbf16>
      tpu.vector_store %arg10[%c10, %c16_105, %c0_106], %83 {strides = array<i32>} : memref<12x40x8xbf16, #tpu.memory_space<vmem>>, vector<2x16x8xbf16>,
    } else {
    }
    %c1_i32_19 = arith.constant 1 : i32
    %19 = arith.cmpi eq, %arg1, %c1_i32_19 : i32
    %20 = arith.extui %19 : i1 to i32
    %c0_i32_20 = arith.constant 0 : i32
    %21 = arith.cmpi ne, %20, %c0_i32_20 : i32
    scf.if %21 {
      %c10 = arith.constant 10 : index
      %c16_101 = arith.constant 16 : index
      %c0_102 = arith.constant 0 : index
      %81 = vector.load %arg10[%c10, %c16_101, %c0_102] : memref<12x40x8xbf16, #tpu.memory_space<vmem>>, vector<2x16x8xbf16>
      tpu.vector_store %arg10[%c10, %c16_101, %c0_102], %9 {strides = array<i32>} : memref<12x40x8xbf16, #tpu.memory_space<vmem>>, vector<2x16x8xbf16>,
    } else {
    }
    %c0_21 = arith.constant 0 : index
    %c15_22 = arith.constant 15 : index
    %c0_23 = arith.constant 0 : index
    %22 = vector.load %arg10[%c0_21, %c15_22, %c0_23] : memref<12x40x8xbf16, #tpu.memory_space<vmem>>, vector<10x16x8xbf16>
    %c0_24 = arith.constant 0 : index
    %c16_25 = arith.constant 16 : index
    %c0_26 = arith.constant 0 : index
    %23 = vector.load %arg10[%c0_24, %c16_25, %c0_26] : memref<12x40x8xbf16, #tpu.memory_space<vmem>>, vector<10x16x8xbf16>
    %c0_27 = arith.constant 0 : index
    %c17 = arith.constant 17 : index
    %c0_28 = arith.constant 0 : index
    %24 = vector.load %arg10[%c0_27, %c17, %c0_28] : memref<12x40x8xbf16, #tpu.memory_space<vmem>>, vector<10x16x8xbf16>
    %c1 = arith.constant 1 : index
    %c15_29 = arith.constant 15 : index
    %c0_30 = arith.constant 0 : index
    %25 = vector.load %arg10[%c1, %c15_29, %c0_30] : memref<12x40x8xbf16, #tpu.memory_space<vmem>>, vector<10x16x8xbf16>
    %c1_31 = arith.constant 1 : index
    %c16_32 = arith.constant 16 : index
    %c0_33 = arith.constant 0 : index
    %26 = vector.load %arg10[%c1_31, %c16_32, %c0_33] : memref<12x40x8xbf16, #tpu.memory_space<vmem>>, vector<10x16x8xbf16>
    %c1_34 = arith.constant 1 : index
    %c17_35 = arith.constant 17 : index
    %c0_36 = arith.constant 0 : index
    %27 = vector.load %arg10[%c1_34, %c17_35, %c0_36] : memref<12x40x8xbf16, #tpu.memory_space<vmem>>, vector<10x16x8xbf16>
    %c2_37 = arith.constant 2 : index
    %c15_38 = arith.constant 15 : index
    %c0_39 = arith.constant 0 : index
    %28 = vector.load %arg10[%c2_37, %c15_38, %c0_39] : memref<12x40x8xbf16, #tpu.memory_space<vmem>>, vector<10x16x8xbf16>
    %c2_40 = arith.constant 2 : index
    %c16_41 = arith.constant 16 : index
    %c0_42 = arith.constant 0 : index
    %29 = vector.load %arg10[%c2_40, %c16_41, %c0_42] : memref<12x40x8xbf16, #tpu.memory_space<vmem>>, vector<10x16x8xbf16>
    %c2_43 = arith.constant 2 : index
    %c17_44 = arith.constant 17 : index
    %c0_45 = arith.constant 0 : index
    %30 = vector.load %arg10[%c2_43, %c17_44, %c0_45] : memref<12x40x8xbf16, #tpu.memory_space<vmem>>, vector<10x16x8xbf16>
    %31 = tpu.concatenate %22, %23, %24, %25, %26, %27, %28, %29, %30 in 2 : vector<10x16x8xbf16>, vector<10x16x8xbf16>, vector<10x16x8xbf16>, vector<10x16x8xbf16>, vector<10x16x8xbf16>, vector<10x16x8xbf16>, vector<10x16x8xbf16>, vector<10x16x8xbf16>, vector<10x16x8xbf16> -> vector<10x16x72xbf16>
    %32 = vector.shape_cast %31 : vector<10x16x72xbf16> to vector<160x72xbf16>
    %c0_46 = arith.constant 0 : index
    %c0_47 = arith.constant 0 : index
    %33 = vector.load %arg5[%c0_46, %c0_47] : memref<72x8xbf16, #tpu.memory_space<vmem>>, vector<72x8xbf16>
    %cst_48 = arith.constant dense<0.000000e+00> : vector<160x8xf32>
    %34 = tpu.matmul %32, %33, %cst_48 {dimension_numbers = #tpu.dot_dimension_numbers<[1], [0], [0], [1], [0, 0, 1, 1], [], []>} : vector<160x72xbf16>, vector<72x8xbf16>, vector<160x8xf32> -> vector<160x8xf32>
    %35 = vector.shape_cast %34 : vector<160x8xf32> to vector<10x16x8xf32>
    %c0_49 = arith.constant 0 : index
    %c0_50 = arith.constant 0 : index
    %36 = vector.load %arg6[%c0_49, %c0_50] : memref<1x8xf32, #tpu.memory_space<vmem>>, vector<1x8xf32>
    %37 = vector.shape_cast %36 : vector<1x8xf32> to vector<8xf32>
    %38 = vector.shape_cast %37 : vector<8xf32> to vector<1x1x8xf32>
    %39 = vector.broadcast %38 : vector<1x1x8xf32> to vector<10x16x8xf32>
    %40 = arith.addf %35, %39 : vector<10x16x8xf32>
    %cst_51 = arith.constant 0.000000e+00 : f32
    %41 = vector.broadcast %cst_51 : f32 to vector<10x16x8xf32>
    %42 = arith.maximumf %40, %41 : vector<10x16x8xf32>
    %43 = arith.truncf %42 : vector<10x16x8xf32> to vector<10x16x8xbf16>
    %c1_52 = arith.constant 1 : index
    %c16_53 = arith.constant 16 : index
    %c0_54 = arith.constant 0 : index
    %44 = vector.load %arg11[%c1_52, %c16_53, %c0_54] : memref<12x40x8xbf16, #tpu.memory_space<vmem>>, vector<10x16x8xbf16>
    tpu.vector_store %arg11[%c1_52, %c16_53, %c0_54], %43 {strides = array<i32>} : memref<12x40x8xbf16, #tpu.memory_space<vmem>>, vector<10x16x8xbf16>,
    %cst_55 = arith.constant 0.000000e+00 : bf16
    %45 = vector.broadcast %cst_55 : bf16 to vector<1x16x8xbf16>
    %c0_i32_56 = arith.constant 0 : i32
    %46 = arith.cmpi eq, %arg1, %c0_i32_56 : i32
    %47 = arith.extui %46 : i1 to i32
    %c0_i32_57 = arith.constant 0 : i32
    %48 = arith.cmpi ne, %47, %c0_i32_57 : i32
    scf.if %48 {
      %c1_101 = arith.constant 1 : index
      %c16_102 = arith.constant 16 : index
      %c0_103 = arith.constant 0 : index
      %81 = vector.load %arg11[%c1_101, %c16_102, %c0_103] : memref<12x40x8xbf16, #tpu.memory_space<vmem>>, vector<1x16x8xbf16>
      tpu.vector_store %arg11[%c1_101, %c16_102, %c0_103], %45 {strides = array<i32>} : memref<12x40x8xbf16, #tpu.memory_space<vmem>>, vector<1x16x8xbf16>,
    } else {
    }
    %c1_i32_58 = arith.constant 1 : i32
    %49 = arith.cmpi eq, %arg1, %c1_i32_58 : i32
    %50 = arith.extui %49 : i1 to i32
    %c0_i32_59 = arith.constant 0 : i32
    %51 = arith.cmpi ne, %50, %c0_i32_59 : i32
    scf.if %51 {
      %c10 = arith.constant 10 : index
      %c16_101 = arith.constant 16 : index
      %c0_102 = arith.constant 0 : index
      %81 = vector.load %arg11[%c10, %c16_101, %c0_102] : memref<12x40x8xbf16, #tpu.memory_space<vmem>>, vector<1x16x8xbf16>
      tpu.vector_store %arg11[%c10, %c16_101, %c0_102], %45 {strides = array<i32>} : memref<12x40x8xbf16, #tpu.memory_space<vmem>>, vector<1x16x8xbf16>,
    } else {
    }
    %c1_60 = arith.constant 1 : index
    %c15_61 = arith.constant 15 : index
    %c0_62 = arith.constant 0 : index
    %52 = vector.load %arg11[%c1_60, %c15_61, %c0_62] : memref<12x40x8xbf16, #tpu.memory_space<vmem>>, vector<8x16x8xbf16>
    %c1_63 = arith.constant 1 : index
    %c16_64 = arith.constant 16 : index
    %c0_65 = arith.constant 0 : index
    %53 = vector.load %arg11[%c1_63, %c16_64, %c0_65] : memref<12x40x8xbf16, #tpu.memory_space<vmem>>, vector<8x16x8xbf16>
    %c1_66 = arith.constant 1 : index
    %c17_67 = arith.constant 17 : index
    %c0_68 = arith.constant 0 : index
    %54 = vector.load %arg11[%c1_66, %c17_67, %c0_68] : memref<12x40x8xbf16, #tpu.memory_space<vmem>>, vector<8x16x8xbf16>
    %c2_69 = arith.constant 2 : index
    %c15_70 = arith.constant 15 : index
    %c0_71 = arith.constant 0 : index
    %55 = vector.load %arg11[%c2_69, %c15_70, %c0_71] : memref<12x40x8xbf16, #tpu.memory_space<vmem>>, vector<8x16x8xbf16>
    %c2_72 = arith.constant 2 : index
    %c16_73 = arith.constant 16 : index
    %c0_74 = arith.constant 0 : index
    %56 = vector.load %arg11[%c2_72, %c16_73, %c0_74] : memref<12x40x8xbf16, #tpu.memory_space<vmem>>, vector<8x16x8xbf16>
    %c2_75 = arith.constant 2 : index
    %c17_76 = arith.constant 17 : index
    %c0_77 = arith.constant 0 : index
    %57 = vector.load %arg11[%c2_75, %c17_76, %c0_77] : memref<12x40x8xbf16, #tpu.memory_space<vmem>>, vector<8x16x8xbf16>
    %c3 = arith.constant 3 : index
    %c15_78 = arith.constant 15 : index
    %c0_79 = arith.constant 0 : index
    %58 = vector.load %arg11[%c3, %c15_78, %c0_79] : memref<12x40x8xbf16, #tpu.memory_space<vmem>>, vector<8x16x8xbf16>
    %c3_80 = arith.constant 3 : index
    %c16_81 = arith.constant 16 : index
    %c0_82 = arith.constant 0 : index
    %59 = vector.load %arg11[%c3_80, %c16_81, %c0_82] : memref<12x40x8xbf16, #tpu.memory_space<vmem>>, vector<8x16x8xbf16>
    %c3_83 = arith.constant 3 : index
    %c17_84 = arith.constant 17 : index
    %c0_85 = arith.constant 0 : index
    %60 = vector.load %arg11[%c3_83, %c17_84, %c0_85] : memref<12x40x8xbf16, #tpu.memory_space<vmem>>, vector<8x16x8xbf16>
    %61 = tpu.concatenate %52, %53, %54, %55, %56, %57, %58, %59, %60 in 2 : vector<8x16x8xbf16>, vector<8x16x8xbf16>, vector<8x16x8xbf16>, vector<8x16x8xbf16>, vector<8x16x8xbf16>, vector<8x16x8xbf16>, vector<8x16x8xbf16>, vector<8x16x8xbf16>, vector<8x16x8xbf16> -> vector<8x16x72xbf16>
    %62 = vector.shape_cast %61 : vector<8x16x72xbf16> to vector<128x72xbf16>
    %c0_86 = arith.constant 0 : index
    %c0_87 = arith.constant 0 : index
    %63 = vector.load %arg7[%c0_86, %c0_87] : memref<72x8xbf16, #tpu.memory_space<vmem>>, vector<72x8xbf16>
    %cst_88 = arith.constant dense<0.000000e+00> : vector<128x8xf32>
    %64 = tpu.matmul %62, %63, %cst_88 {dimension_numbers = #tpu.dot_dimension_numbers<[1], [0], [0], [1], [0, 0, 1, 1], [], []>} : vector<128x72xbf16>, vector<72x8xbf16>, vector<128x8xf32> -> vector<128x8xf32>
    %65 = vector.shape_cast %64 : vector<128x8xf32> to vector<8x16x8xf32>
    %c0_89 = arith.constant 0 : index
    %c0_90 = arith.constant 0 : index
    %66 = vector.load %arg8[%c0_89, %c0_90] : memref<1x8xf32, #tpu.memory_space<vmem>>, vector<1x8xf32>
    %67 = vector.shape_cast %66 : vector<1x8xf32> to vector<8xf32>
    %68 = vector.shape_cast %67 : vector<8xf32> to vector<1x1x8xf32>
    %69 = vector.broadcast %68 : vector<1x1x8xf32> to vector<8x16x8xf32>
    %70 = arith.addf %65, %69 : vector<8x16x8xf32>
    %cst_91 = arith.constant 0.000000e+00 : f32
    %71 = vector.broadcast %cst_91 : f32 to vector<8x16x8xf32>
    %72 = arith.maximumf %70, %71 : vector<8x16x8xf32>
    %cst_92 = arith.constant 5.000000e-01 : f32
    %73 = vector.broadcast %cst_92 : f32 to vector<8x16x8xf32>
    %74 = arith.mulf %72, %73 : vector<8x16x8xf32>
    %c0_93 = arith.constant 0 : index
    %c0_94 = arith.constant 0 : index
    %c0_95 = arith.constant 0 : index
    %c0_96 = arith.constant 0 : index
    %75 = vector.load %arg2[%c0_93, %c0_94, %c0_95, %c0_96] : memref<1x8x16x8xf32, #tpu.memory_space<vmem>>, vector<1x8x16x8xf32>
    %76 = vector.shape_cast %75 : vector<1x8x16x8xf32> to vector<8x16x8xf32>
    %77 = arith.addf %74, %76 : vector<8x16x8xf32>
    %c0_97 = arith.constant 0 : index
    %c0_98 = arith.constant 0 : index
    %c0_99 = arith.constant 0 : index
    %c0_100 = arith.constant 0 : index
    %78 = vector.load %arg9[%c0_97, %c0_98, %c0_99, %c0_100] : memref<1x8x16x8xf32, #tpu.memory_space<vmem>>, vector<1x8x16x8xf32>
    %79 = vector.shape_cast %78 : vector<1x8x16x8xf32> to vector<8x16x8xf32>
    %80 = vector.shape_cast %77 : vector<8x16x8xf32> to vector<1x8x16x8xf32>
    tpu.vector_store %arg9[%c0_97, %c0_98, %c0_99, %c0_100], %80 {strides = array<i32>} : memref<1x8x16x8xf32, #tpu.memory_space<vmem>>, vector<1x8x16x8xf32>,
    return
  }
  func.func @transform_0(%arg0: i32, %arg1: i32) -> (i32, i32, i32, i32) {
    %c0_i32 = arith.constant 0 : i32
    %c0_i32_0 = arith.constant 0 : i32
    %c0_i32_1 = arith.constant 0 : i32
    return %arg0, %arg1, %c0_i32, %c0_i32_0 : i32, i32, i32, i32
  }
  func.func @transform_1(%arg0: i32, %arg1: i32) -> (i32, i32, i32, i32) {
    %c4_i32 = arith.constant 4 : i32
    %0 = arith.muli %arg1, %c4_i32 : i32
    %c1_i32 = arith.constant 1 : i32
    %1 = arith.subi %0, %c1_i32 : i32
    %c0_i32 = arith.constant 0 : i32
    %2 = arith.maxsi %1, %c0_i32 : i32
    %c0_i32_0 = arith.constant 0 : i32
    %c0_i32_1 = arith.constant 0 : i32
    %c0_i32_2 = arith.constant 0 : i32
    return %arg0, %2, %c0_i32_0, %c0_i32_1 : i32, i32, i32, i32
  }
  func.func @transform_2(%arg0: i32, %arg1: i32) -> (i32, i32, i32, i32) {
    %c4_i32 = arith.constant 4 : i32
    %0 = arith.muli %arg1, %c4_i32 : i32
    %c4_i32_0 = arith.constant 4 : i32
    %1 = arith.addi %0, %c4_i32_0 : i32
    %c7_i32 = arith.constant 7 : i32
    %2 = arith.minsi %1, %c7_i32 : i32
    %c0_i32 = arith.constant 0 : i32
    %c0_i32_1 = arith.constant 0 : i32
    %c0_i32_2 = arith.constant 0 : i32
    return %arg0, %2, %c0_i32, %c0_i32_1 : i32, i32, i32, i32
  }
  func.func @transform_3(%arg0: i32, %arg1: i32) -> (i32, i32) {
    %c0_i32 = arith.constant 0 : i32
    %c0_i32_0 = arith.constant 0 : i32
    %c0_i32_1 = arith.constant 0 : i32
    return %c0_i32, %c0_i32_0 : i32, i32
  }
  func.func @transform_4(%arg0: i32, %arg1: i32) -> (i32, i32) {
    %c0_i32 = arith.constant 0 : i32
    %c0_i32_0 = arith.constant 0 : i32
    %c0_i32_1 = arith.constant 0 : i32
    return %c0_i32, %c0_i32_0 : i32, i32
  }
  func.func @transform_5(%arg0: i32, %arg1: i32) -> (i32, i32) {
    %c0_i32 = arith.constant 0 : i32
    %c0_i32_0 = arith.constant 0 : i32
    %c0_i32_1 = arith.constant 0 : i32
    return %c0_i32, %c0_i32_0 : i32, i32
  }
  func.func @transform_6(%arg0: i32, %arg1: i32) -> (i32, i32) {
    %c0_i32 = arith.constant 0 : i32
    %c0_i32_0 = arith.constant 0 : i32
    %c0_i32_1 = arith.constant 0 : i32
    return %c0_i32, %c0_i32_0 : i32, i32
  }
  func.func @transform_7(%arg0: i32, %arg1: i32) -> (i32, i32, i32, i32) {
    %c0_i32 = arith.constant 0 : i32
    %c0_i32_0 = arith.constant 0 : i32
    %c0_i32_1 = arith.constant 0 : i32
    return %arg0, %arg1, %c0_i32, %c0_i32_0 : i32, i32, i32, i32
  }
}

</mosaic_0001>

<llo_original>
// kernel: tpu_custom_call.1
$region0: #{tpu_custom_call.1}
  #allocation0 [shape = 'u32[]', space=smem, size = 0x4, offset = 0x4, fixed_abs, tag = 'smem constant byte address 0x4 - core index']
  #allocation1 [shape = 'u32[144,128]{1,0:T(1,128)}', space=vmem, size = 0x12000, scoped, tag = 'internal scratch']
  #allocation2 [shape = 'bf16[12,40,8]{2,1,0:T(8,128)(2,1)}', space=vmem, size = 0x1e000, scoped, tag = 'scratch operand']
  #allocation3 [shape = 'bf16[12,40,8]{2,1,0:T(8,128)(2,1)}', space=vmem, size = 0x1e000, scoped, tag = 'scratch operand']
  %s0 = inlined_call_operand.hbm [shape: f32[2,16,16,8], index: 0, kind: input, shape index: {}]
  %s1 = inlined_call_operand.hbm [shape: f32[2,16,16,8], index: 1, kind: input, shape index: {}]
  %s2 = inlined_call_operand.hbm [shape: f32[2,16,16,8], index: 2, kind: input, shape index: {}]
  %s3 = inlined_call_operand.hbm [shape: bf16[72,8], index: 3, kind: input, shape index: {}]
  %s4 = inlined_call_operand.hbm [shape: f32[1,8], index: 4, kind: input, shape index: {}]
  %s5 = inlined_call_operand.hbm [shape: bf16[72,8], index: 5, kind: input, shape index: {}]
  %s6 = inlined_call_operand.hbm [shape: f32[1,8], index: 6, kind: input, shape index: {}]
  %s7 = inlined_call_operand.hbm [shape: f32[2,16,16,8], index: 7, kind: output, shape index: {}]
  %s8 = sld [smem:[#allocation0]]
  $region113: #{tpu_custom_call.1} parent=0
    _
  %s10 = ssub.s32 1, %s8
  %s11 = scalar_select 0, %s10, %s8
  $region1: #{tpu_custom_call.1} parent=0
    #allocation4 [shape = 'u8[131072]{0}', space=vmem, size = 0x20000, scoped, tag = 'input window, operand 0']
    #allocation5 [shape = 's32[2]{0}', space=sflag, size = 0x8, scoped, tag = 'scoped memory for tpu_custom_call.1']
    #allocation6 [shape = 's32[2]{0}', space=sflag, size = 0x8, scoped, tag = 'scoped memory for tpu_custom_call.1']
    #allocation7 [shape = 'u8[32768]{0}', space=vmem, size = 0x8000, scoped, tag = 'input window, operand 1']
    #allocation8 [shape = 's32[2]{0}', space=sflag, size = 0x8, scoped, tag = 'scoped memory for tpu_custom_call.1']
    #allocation9 [shape = 'u8[32768]{0}', space=vmem, size = 0x8000, scoped, tag = 'input window, operand 2']
    #allocation10 [shape = 'u8[18432]{0}', space=vmem, size = 0x4800, scoped, tag = 'input window, operand 3, single buffered']
    #allocation11 [shape = 's32[1]{0}', space=sflag, size = 0x4, scoped, tag = 'scoped memory for tpu_custom_call.1']
    #allocation12 [shape = 'u8[512]{0}', space=vmem, size = 0x400, scoped, tag = 'input window, operand 4, single buffered']
    #allocation13 [shape = 'u8[18432]{0}', space=vmem, size = 0x4800, scoped, tag = 'input window, operand 5, single buffered']
    #allocation14 [shape = 's32[1]{0}', space=sflag, size = 0x4, scoped, tag = 'scoped memory for tpu_custom_call.1']
    #allocation15 [shape = 'u8[512]{0}', space=vmem, size = 0x400, scoped, tag = 'input window, operand 6, single buffered']
    #allocation16 [shape = 'u8[131072]{0}', space=vmem, size = 0x20000, scoped, tag = 'output window, operand 0']
    %12 = vsyncpa [#allocation5], 0
    %s13 = scalar_lea.sflag [#allocation5], 1
    %14 = vsyncpa %s13, 0
    %15 = vsyncpa [#allocation8], 0
    %s16 = scalar_lea.sflag [#allocation8], 1
    %17 = vsyncpa %s16, 0
    %18 = vsyncpa [#allocation11], 0
    %19 = vsyncpa [#allocation14], 0
    %20 = vsyncpa [#allocation6], 0
    %s21 = scalar_lea.sflag [#allocation6], 1
    %22 = vsyncpa %s21, 0
    loop: start=0, step=1, limit=6
    $region2: #{tpu_custom_call.1} parent=1 // loop_pre_header
      _
    $region3: #{tpu_custom_call.1} parent=1 // loop_header
      %s24 = sphi 0, %s28
      %p25 = scmp.ge.s32.totalorder %s24, 6
      %s31 = sphi 0, %s43
      %s32 = sphi 0, %s39
      %s33 = sphi 0, %s31
      %s34 = sphi 0, %s32
      %s35 = sphi 0, %s33
      %s36 = sphi 0, %s34
      %s48 = sphi 0, %s50
      %s51 = sphi 0, %s48
      %s52 = sphi 0, %s51
      %s68 = sphi 0, %s52
      %s84 = sphi 0, %s86
      %s87 = sphi 0, %s84
      %s88 = sphi 0, %s87
      %s104 = sphi 0, %s88
      %s120 = sphi 0, %s122
      %s123 = sphi 0, %s120
      %s124 = sphi 0, %s123
      %s140 = sphi 0, %s124
      %s144 = sphi 0, %s144
      %s146 = sphi 0, %s144
      %s147 = sphi 0, %s146
      %s161 = sphi 0, %s147
      %s165 = sphi 0, %s165
      %s167 = sphi 0, %s165
      %s168 = sphi 0, %s167
      %s182 = sphi 0, %s168
      %s186 = sphi 0, %s186
      %s188 = sphi 0, %s186
      %s189 = sphi 0, %s188
      %s203 = sphi 0, %s189
      %s207 = sphi 0, %s207
      %s209 = sphi 0, %s207
      %s210 = sphi 0, %s209
      %s224 = sphi 0, %s210
      %s232 = sphi 0, %s234
      %s235 = sphi 0, %s232
      %s236 = sphi 0, %s235
      %s252 = sphi 0, %s236
    $region4: #{tpu_custom_call.1} parent=1 // loop_header_branch
      %27 = sbr.rel (%p25) target = $region8
    $region5: #{tpu_custom_call.1} parent=1 // loop_body
      %s29 = ssub.s32 %s24, 1
      %s30 = ssub.s32 %s24, 2
      %s37 = sadd.s32 1, %s32
      %p38 = scmp.ge.s32.totalorder %s37, 2
      %s39 = scalar_select %p38, 0, %s37
      %s40 = sadd.s32 1, %s31
      %s41 = scalar_select %p38, %s40, %s31
      %p42 = scmp.ge.s32.totalorder %s41, 2
      %s43 = scalar_select %p42, 0, %s41
      %s44 = ssub.s32 %s31, %s43
      %s45 = ssub.s32 %s32, %s39
      %s46 = sor.u32 %s44, %s45
      %p47 = scmp.eq.s32.totalorder %s46, 0
      %s49 = sadd.s32 %s48, 1
      %s50 = scalar_select %p47, %s48, %s49
      %p53 = pneg %p47
      %p54 = scmp.eq.s32.totalorder %s24, 3
      %p55 = por %p53, %p54
      %p56 = scmp.ne.s32.totalorder %s48, %s51
      %p57 = scmp.eq.s32.totalorder %s24, 0
      %p58 = por %p56, %p57
      %p59 = scmp.ne.s32.totalorder %s48, %s51
      %p60 = scmp.eq.s32.totalorder %s29, 3
      %p61 = por %p59, %p60
      %p62 = scmp.ne.s32.totalorder %s51, %s52
      %p63 = scmp.eq.s32.totalorder %s29, 0
      %p64 = por %p62, %p63
      %p65 = scmp.ne.s32.totalorder %s51, %s52
      %p66 = scmp.eq.s32.totalorder %s30, 3
      %p67 = por %p65, %p66
      %p69 = scmp.ne.s32.totalorder %s52, %s68
      %p70 = scmp.eq.s32.totalorder %s30, 0
      %p71 = por %p69, %p70
      %s72 = smul.u32 %s32, 4
      %s73 = ssub.s32 %s72, 1
      %p74 = scmp.gt.s32.totalorder %s73, 0
      %s75 = scalar_select %p74, %s73, 0
      %s76 = smul.u32 %s39, 4
      %s77 = ssub.s32 %s76, 1
      %p78 = scmp.gt.s32.totalorder %s77, 0
      %s79 = scalar_select %p78, %s77, 0
      %s80 = ssub.s32 %s31, %s43
      %s81 = ssub.s32 %s75, %s79
      %s82 = sor.u32 %s80, %s81
      %p83 = scmp.eq.s32.totalorder %s82, 0
      %s85 = sadd.s32 %s84, 1
      %s86 = scalar_select %p83, %s84, %s85
      %p89 = pneg %p83
      %p90 = scmp.eq.s32.totalorder %s24, 3
      %p91 = por %p89, %p90
      %p92 = scmp.ne.s32.totalorder %s84, %s87
      %p93 = scmp.eq.s32.totalorder %s24, 0
      %p94 = por %p92, %p93
      %p95 = scmp.ne.s32.totalorder %s84, %s87
      %p96 = scmp.eq.s32.totalorder %s29, 3
      %p97 = por %p95, %p96
      %p98 = scmp.ne.s32.totalorder %s87, %s88
      %p99 = scmp.eq.s32.totalorder %s29, 0
      %p100 = por %p98, %p99
      %p101 = scmp.ne.s32.totalorder %s87, %s88
      %p102 = scmp.eq.s32.totalorder %s30, 3
      %p103 = por %p101, %p102
      %p105 = scmp.ne.s32.totalorder %s88, %s104
      %p106 = scmp.eq.s32.totalorder %s30, 0
      %p107 = por %p105, %p106
      %s108 = smul.u32 %s32, 4
      %s109 = sadd.s32 %s108, 4
      %p110 = scmp.lt.s32.totalorder %s109, 7
      %s111 = scalar_select %p110, %s109, 7
      %s112 = smul.u32 %s39, 4
      %s113 = sadd.s32 %s112, 4
      %p114 = scmp.lt.s32.totalorder %s113, 7
      %s115 = scalar_select %p114, %s113, 7
      %s116 = ssub.s32 %s31, %s43
      %s117 = ssub.s32 %s111, %s115
      %s118 = sor.u32 %s116, %s117
      %p119 = scmp.eq.s32.totalorder %s118, 0
      %s121 = sadd.s32 %s120, 1
      %s122 = scalar_select %p119, %s120, %s121
      %p125 = pneg %p119
      %p126 = scmp.eq.s32.totalorder %s24, 3
      %p127 = por %p125, %p126
      %p128 = scmp.ne.s32.totalorder %s120, %s123
      %p129 = scmp.eq.s32.totalorder %s24, 0
      %p130 = por %p128, %p129
      %p131 = scmp.ne.s32.totalorder %s120, %s123
      %p132 = scmp.eq.s32.totalorder %s29, 3
      %p133 = por %p131, %p132
      %p134 = scmp.ne.s32.totalorder %s123, %s124
      %p135 = scmp.eq.s32.totalorder %s29, 0
      %p136 = por %p134, %p135
      %p137 = scmp.ne.s32.totalorder %s123, %s124
      %p138 = scmp.eq.s32.totalorder %s30, 3
      %p139 = por %p137, %p138
      %p141 = scmp.ne.s32.totalorder %s124, %s140
      %p142 = scmp.eq.s32.totalorder %s30, 0
      %p143 = por %p141, %p142
      %s145 = sadd.s32 %s144, 1
      %p148 = scmp.eq.s32.totalorder %s24, 3
      %p149 = scmp.ne.s32.totalorder %s144, %s146
      %p150 = scmp.eq.s32.totalorder %s24, 0
      %p151 = por %p149, %p150
      %p152 = scmp.ne.s32.totalorder %s144, %s146
      %p153 = scmp.eq.s32.totalorder %s29, 3
      %p154 = por %p152, %p153
      %p155 = scmp.ne.s32.totalorder %s146, %s147
      %p156 = scmp.eq.s32.totalorder %s29, 0
      %p157 = por %p155, %p156
      %p158 = scmp.ne.s32.totalorder %s146, %s147
      %p159 = scmp.eq.s32.totalorder %s30, 3
      %p160 = por %p158, %p159
      %p162 = scmp.ne.s32.totalorder %s147, %s161
      %p163 = scmp.eq.s32.totalorder %s30, 0
      %p164 = por %p162, %p163
      %s166 = sadd.s32 %s165, 1
      %p169 = scmp.eq.s32.totalorder %s24, 3
      %p170 = scmp.ne.s32.totalorder %s165, %s167
      %p171 = scmp.eq.s32.totalorder %s24, 0
      %p172 = por %p170, %p171
      %p173 = scmp.ne.s32.totalorder %s165, %s167
      %p174 = scmp.eq.s32.totalorder %s29, 3
      %p175 = por %p173, %p174
      %p176 = scmp.ne.s32.totalorder %s167, %s168
      %p177 = scmp.eq.s32.totalorder %s29, 0
      %p178 = por %p176, %p177
      %p179 = scmp.ne.s32.totalorder %s167, %s168
      %p180 = scmp.eq.s32.totalorder %s30, 3
      %p181 = por %p179, %p180
      %p183 = scmp.ne.s32.totalorder %s168, %s182
      %p184 = scmp.eq.s32.totalorder %s30, 0
      %p185 = por %p183, %p184
      %s187 = sadd.s32 %s186, 1
      %p190 = scmp.eq.s32.totalorder %s24, 3
      %p191 = scmp.ne.s32.totalorder %s186, %s188
      %p192 = scmp.eq.s32.totalorder %s24, 0
      %p193 = por %p191, %p192
      %p194 = scmp.ne.s32.totalorder %s186, %s188
      %p195 = scmp.eq.s32.totalorder %s29, 3
      %p196 = por %p194, %p195
      %p197 = scmp.ne.s32.totalorder %s188, %s189
      %p198 = scmp.eq.s32.totalorder %s29, 0
      %p199 = por %p197, %p198
      %p200 = scmp.ne.s32.totalorder %s188, %s189
      %p201 = scmp.eq.s32.totalorder %s30, 3
      %p202 = por %p200, %p201
      %p204 = scmp.ne.s32.totalorder %s189, %s203
      %p205 = scmp.eq.s32.totalorder %s30, 0
      %p206 = por %p204, %p205
      %s208 = sadd.s32 %s207, 1
      %p211 = scmp.eq.s32.totalorder %s24, 3
      %p212 = scmp.ne.s32.totalorder %s207, %s209
      %p213 = scmp.eq.s32.totalorder %s24, 0
      %p214 = por %p212, %p213
      %p215 = scmp.ne.s32.totalorder %s207, %s209
      %p216 = scmp.eq.s32.totalorder %s29, 3
      %p217 = por %p215, %p216
      %p218 = scmp.ne.s32.totalorder %s209, %s210
      %p219 = scmp.eq.s32.totalorder %s29, 0
      %p220 = por %p218, %p219
      %p221 = scmp.ne.s32.totalorder %s209, %s210
      %p222 = scmp.eq.s32.totalorder %s30, 3
      %p223 = por %p221, %p222
      %p225 = scmp.ne.s32.totalorder %s210, %s224
      %p226 = scmp.eq.s32.totalorder %s30, 0
      %p227 = por %p225, %p226
      %s228 = ssub.s32 %s31, %s43
      %s229 = ssub.s32 %s32, %s39
      %s230 = sor.u32 %s228, %s229
      %p231 = scmp.eq.s32.totalorder %s230, 0
      %s233 = sadd.s32 %s232, 1
      %s234 = scalar_select %p231, %s232, %s233
      %p237 = pneg %p231
      %p238 = scmp.eq.s32.totalorder %s24, 3
      %p239 = por %p237, %p238
      %p240 = scmp.ne.s32.totalorder %s232, %s235
      %p241 = scmp.eq.s32.totalorder %s24, 0
      %p242 = por %p240, %p241
      %p243 = scmp.ne.s32.totalorder %s232, %s235
      %p244 = scmp.eq.s32.totalorder %s29, 3
      %p245 = por %p243, %p244
      %p246 = scmp.ne.s32.totalorder %s235, %s236
      %p247 = scmp.eq.s32.totalorder %s29, 0
      %p248 = por %p246, %p247
      %p249 = scmp.ne.s32.totalorder %s235, %s236
      %p250 = scmp.eq.s32.totalorder %s30, 3
      %p251 = por %p249, %p250
      %p253 = scmp.ne.s32.totalorder %s236, %s252
      %p254 = scmp.eq.s32.totalorder %s30, 0
      %p255 = por %p253, %p254
      %p256 = scmp.le.s32.totalorder 1, %s24
      %p257 = scmp.lt.s32.totalorder %s24, 5
      %p258 = pnand %p256, %p257
      %p259 = pneg %p258
      // Predicated region
      $region9: #{tpu_custom_call.1} parent=5 // pred_check
        _
      $region10: #{tpu_custom_call.1} parent=5 // pred_check_branch
        %261 = sbr.rel (%p258) target = $region12
      $region11: #{tpu_custom_call.1} parent=5 // pred_region
        %s262 = ssub.s32 %s24, 1
        // Predicated region
        $region13: #{tpu_custom_call.1} parent=11 // pred_check
          %p263 = pneg %p157
        $region14: #{tpu_custom_call.1} parent=11 // pred_check_branch
          %265 = sbr.rel (%p263) target = $region16
        $region15: #{tpu_custom_call.1} parent=11 // pred_region
          %s267 = ssub.s32 576, 576
          %268 = vsyncadd [#allocation11], %s267
          %s269 = sshll.u32 [#allocation10], 4
          %s270 = int_to_ptr.vmem [resolvable:$true] %s269
          %275 = dma.hbm_to_vmem [thread:$0]  %s3, 576, %s270, [#allocation11], 64, 64, 4
        $region16: #{tpu_custom_call.1} parent=11 // pred_fallthru
          _
        // Predicated region
        $region17: #{tpu_custom_call.1} parent=11 // pred_check
          %p276 = pneg %p178
        $region18: #{tpu_custom_call.1} parent=11 // pred_check_branch
          %278 = sbr.rel (%p276) target = $region20
        $region19: #{tpu_custom_call.1} parent=11 // pred_region
          %s280 = ssub.s32 16, 16
          %281 = vsyncadd [#allocation11], %s280
          %s283 = sshll.u32 [#allocation12], 4
          %s284 = int_to_ptr.vmem [resolvable:$true] %s283
          %286 = dma.hbm_to_vmem [thread:$0]  %s4, 16, %s284, [#allocation11]
        $region20: #{tpu_custom_call.1} parent=11 // pred_fallthru
          _
        // Predicated region
        $region21: #{tpu_custom_call.1} parent=11 // pred_check
          %p287 = pneg %p199
        $region22: #{tpu_custom_call.1} parent=11 // pred_check_branch
          %289 = sbr.rel (%p287) target = $region24
        $region23: #{tpu_custom_call.1} parent=11 // pred_region
          %s291 = ssub.s32 576, 576
          %292 = vsyncadd [#allocation14], %s291
          %s293 = sshll.u32 [#allocation13], 4
          %s294 = int_to_ptr.vmem [resolvable:$true] %s293
          %299 = dma.hbm_to_vmem [thread:$0]  %s5, 576, %s294, [#allocation14], 64, 64, 4
        $region24: #{tpu_custom_call.1} parent=11 // pred_fallthru
          _
        // Predicated region
        $region25: #{tpu_custom_call.1} parent=11 // pred_check
          %p300 = pneg %p220
        $region26: #{tpu_custom_call.1} parent=11 // pred_check_branch
          %302 = sbr.rel (%p300) target = $region28
        $region27: #{tpu_custom_call.1} parent=11 // pred_region
          %s304 = ssub.s32 16, 16
          %305 = vsyncadd [#allocation14], %s304
          %s307 = sshll.u32 [#allocation15], 4
          %s308 = int_to_ptr.vmem [resolvable:$true] %s307
          %310 = dma.hbm_to_vmem [thread:$0]  %s6, 16, %s308, [#allocation14]
        $region28: #{tpu_custom_call.1} parent=11 // pred_fallthru
          _
      $region12: #{tpu_custom_call.1} parent=5 // pred_fallthru
        _
      %p311 = scmp.lt.s32.totalorder %s24, 4
      // Predicated region
      $region29: #{tpu_custom_call.1} parent=5 // pred_check
        %p312 = pneg %p311
      $region30: #{tpu_custom_call.1} parent=5 // pred_check_branch
        %314 = sbr.rel (%p312) target = $region32
      $region31: #{tpu_custom_call.1} parent=5 // pred_region
        // Predicated region
        $region33: #{tpu_custom_call.1} parent=31 // pred_check
          %p315 = pneg %p58
        $region34: #{tpu_custom_call.1} parent=31 // pred_check_branch
          %317 = sbr.rel (%p315) target = $region36
        $region35: #{tpu_custom_call.1} parent=31 // pred_region
          %s318 = sand.u32 %s48, 1
          %s319 = scalar_lea.sflag [#allocation5], %s318
          %s320 = sand.u32 %s48, 1
          %s321 = smul.addr %s320, 128
          %s322 = scalar_lea.vmem [#allocation4], %s321
          %s323 = smul.u32 8, %s32
          %s325 = ssub.s32 2048, 2048
          %326 = vsyncadd %s319, %s325
          %s327 = smul.addr %s323, 2
          %s328 = smul.addr %s31, 32
          %s329 = sadd.s32 %s327, %s328
          %s330 = smul.addr %s329, 128
          %s331 = scalar_lea.hbm %s0, %s330
          %s332 = sshll.u32 %s322, 4
          %s333 = int_to_ptr.vmem [resolvable:$true] %s332
          %338 = dma.hbm_to_vmem [thread:$0]  %s331, 2048, %s333, %s319, 128, 128, 8
        $region36: #{tpu_custom_call.1} parent=31 // pred_fallthru
          _
        // Predicated region
        $region37: #{tpu_custom_call.1} parent=31 // pred_check
          %p339 = pneg %p94
        $region38: #{tpu_custom_call.1} parent=31 // pred_check_branch
          %341 = sbr.rel (%p339) target = $region40
        $region39: #{tpu_custom_call.1} parent=31 // pred_region
          %s342 = sand.u32 %s24, 1
          %s343 = scalar_lea.sflag [#allocation8], %s342
          %s344 = sand.u32 %s84, 1
          %s345 = smul.addr %s344, 32
          %s346 = scalar_lea.vmem [#allocation7], %s345
          %s347 = smul.u32 %s32, 4
          %s348 = ssub.s32 %s347, 1
          %p349 = scmp.gt.s32.totalorder %s348, 0
          %s350 = scalar_select %p349, %s348, 0
          %s351 = smul.u32 2, %s350
          %s353 = ssub.s32 512, 512
          %354 = vsyncadd %s343, %s353
          %s355 = smul.addr %s351, 2
          %s356 = smul.addr %s31, 32
          %s357 = sadd.s32 %s355, %s356
          %s358 = smul.addr %s357, 128
          %s359 = scalar_lea.hbm %s1, %s358
          %s360 = sshll.u32 %s346, 4
          %s361 = int_to_ptr.vmem [resolvable:$true] %s360
          %366 = dma.hbm_to_vmem [thread:$0]  %s359, 512, %s361, %s343, 128, 128, 8
        $region40: #{tpu_custom_call.1} parent=31 // pred_fallthru
          _
        // Predicated region
        $region41: #{tpu_custom_call.1} parent=31 // pred_check
          %p367 = pneg %p130
        $region42: #{tpu_custom_call.1} parent=31 // pred_check_branch
          %369 = sbr.rel (%p367) target = $region44
        $region43: #{tpu_custom_call.1} parent=31 // pred_region
          %s370 = sand.u32 %s24, 1
          %s371 = scalar_lea.sflag [#allocation8], %s370
          %s372 = sand.u32 %s120, 1
          %s373 = smul.addr %s372, 32
          %s374 = scalar_lea.vmem [#allocation9], %s373
          %s375 = smul.u32 %s32, 4
          %s376 = sadd.s32 %s375, 4
          %p377 = scmp.lt.s32.totalorder %s376, 7
          %s378 = scalar_select %p377, %s376, 7
          %s379 = smul.u32 2, %s378
          %s381 = ssub.s32 512, 512
          %382 = vsyncadd %s371, %s381
          %s383 = smul.addr %s379, 2
          %s384 = smul.addr %s31, 32
          %s385 = sadd.s32 %s383, %s384
          %s386 = smul.addr %s385, 128
          %s387 = scalar_lea.hbm %s2, %s386
          %s388 = sshll.u32 %s374, 4
          %s389 = int_to_ptr.vmem [resolvable:$true] %s388
          %394 = dma.hbm_to_vmem [thread:$0]  %s387, 512, %s389, %s371, 128, 128, 8
        $region44: #{tpu_custom_call.1} parent=31 // pred_fallthru
          _
      $region32: #{tpu_custom_call.1} parent=5 // pred_fallthru
        _
      %p395 = scmp.le.s32.totalorder 1, %s24
      %p396 = scmp.lt.s32.totalorder %s24, 5
      %p397 = pnand %p395, %p396
      %p398 = pneg %p397
      // Predicated region
      $region45: #{tpu_custom_call.1} parent=5 // pred_check
        _
      $region46: #{tpu_custom_call.1} parent=5 // pred_check_branch
        %400 = sbr.rel (%p397) target = $region48
      $region47: #{tpu_custom_call.1} parent=5 // pred_region
        %s401 = ssub.s32 %s24, 1
        %s402 = sand.u32 %s51, 1
        %s403 = scalar_lea.sflag [#allocation5], %s402
        %s404 = sand.u32 %s51, 1
        %s405 = smul.addr %s404, 128
        %s406 = scalar_lea.vmem [#allocation4], %s405
        // Predicated region
        $region49: #{tpu_custom_call.1} parent=47 // pred_check
          %p407 = pneg %p64
        $region50: #{tpu_custom_call.1} parent=47 // pred_check_branch
          %409 = sbr.rel (%p407) target = $region52
        $region51: #{tpu_custom_call.1} parent=47 // pred_region
          %410 = dma.done %s403, 2048
        $region52: #{tpu_custom_call.1} parent=47 // pred_fallthru
          _
        %s411 = sand.u32 %s29, 1
        %s412 = scalar_lea.sflag [#allocation8], %s411
        %s413 = sand.u32 %s87, 1
        %s414 = smul.addr %s413, 32
        %s415 = scalar_lea.vmem [#allocation7], %s414
        // Predicated region
        $region53: #{tpu_custom_call.1} parent=47 // pred_check
          %p416 = pneg %p100
        $region54: #{tpu_custom_call.1} parent=47 // pred_check_branch
          %418 = sbr.rel (%p416) target = $region56
        $region55: #{tpu_custom_call.1} parent=47 // pred_region
          %419 = dma.done %s412, 512
        $region56: #{tpu_custom_call.1} parent=47 // pred_fallthru
          _
        %s420 = sand.u32 %s29, 1
        %s421 = scalar_lea.sflag [#allocation8], %s420
        %s422 = sand.u32 %s123, 1
        %s423 = smul.addr %s422, 32
        %s424 = scalar_lea.vmem [#allocation9], %s423
        // Predicated region
        $region57: #{tpu_custom_call.1} parent=47 // pred_check
          %p425 = pneg %p136
        $region58: #{tpu_custom_call.1} parent=47 // pred_check_branch
          %427 = sbr.rel (%p425) target = $region60
        $region59: #{tpu_custom_call.1} parent=47 // pred_region
          %428 = dma.done %s421, 512
        $region60: #{tpu_custom_call.1} parent=47 // pred_fallthru
          _
        // Predicated region
        $region61: #{tpu_custom_call.1} parent=47 // pred_check
          %p429 = pneg %p157
        $region62: #{tpu_custom_call.1} parent=47 // pred_check_branch
          %431 = sbr.rel (%p429) target = $region64
        $region63: #{tpu_custom_call.1} parent=47 // pred_region
          %432 = dma.done [#allocation11], 576
        $region64: #{tpu_custom_call.1} parent=47 // pred_fallthru
          _
        // Predicated region
        $region65: #{tpu_custom_call.1} parent=47 // pred_check
          %p433 = pneg %p178
        $region66: #{tpu_custom_call.1} parent=47 // pred_check_branch
          %435 = sbr.rel (%p433) target = $region68
        $region67: #{tpu_custom_call.1} parent=47 // pred_region
          %436 = dma.done [#allocation11], 16
        $region68: #{tpu_custom_call.1} parent=47 // pred_fallthru
          _
        // Predicated region
        $region69: #{tpu_custom_call.1} parent=47 // pred_check
          %p437 = pneg %p199
        $region70: #{tpu_custom_call.1} parent=47 // pred_check_branch
          %439 = sbr.rel (%p437) target = $region72
        $region71: #{tpu_custom_call.1} parent=47 // pred_region
          %440 = dma.done [#allocation14], 576
        $region72: #{tpu_custom_call.1} parent=47 // pred_fallthru
          _
        // Predicated region
        $region73: #{tpu_custom_call.1} parent=47 // pred_check
          %p441 = pneg %p220
        $region74: #{tpu_custom_call.1} parent=47 // pred_check_branch
          %443 = sbr.rel (%p441) target = $region76
        $region75: #{tpu_custom_call.1} parent=47 // pred_region
          %444 = dma.done [#allocation14], 16
        $region76: #{tpu_custom_call.1} parent=47 // pred_fallthru
          _
        %s445 = sand.u32 %s51, 1
        %s446 = scalar_lea.sflag [#allocation5], %s445
        %s447 = sand.u32 %s51, 1
        %s448 = smul.addr %s447, 128
        %s449 = scalar_lea.vmem [#allocation4], %s448
        %p450 = pneg %p64
        %p451 = pneg %p61
        %s452 = sand.u32 %s29, 1
        %s453 = scalar_lea.sflag [#allocation8], %s452
        %s454 = sand.u32 %s87, 1
        %s455 = smul.addr %s454, 32
        %s456 = scalar_lea.vmem [#allocation7], %s455
        %p457 = pneg %p100
        %p458 = pneg %p97
        %s459 = sand.u32 %s29, 1
        %s460 = scalar_lea.sflag [#allocation8], %s459
        %s461 = sand.u32 %s123, 1
        %s462 = smul.addr %s461, 32
        %s463 = scalar_lea.vmem [#allocation9], %s462
        %p464 = pneg %p136
        %p465 = pneg %p133
        %p466 = pneg %p157
        %p467 = pneg %p154
        %p468 = pneg %p178
        %p469 = pneg %p175
        %p470 = pneg %p199
        %p471 = pneg %p196
        %p472 = pneg %p220
        %p473 = pneg %p217
        %p474 = pneg %p248
        %p475 = pneg %p245
        %s476 = sand.u32 %s235, 1
        %s477 = scalar_lea.sflag [#allocation6], %s476
        %s478 = sand.u32 %s235, 1
        %s479 = smul.addr %s478, 128
        %s480 = scalar_lea.vmem [#allocation16], %s479
        %s481 = smul.u32 8, %s34
        %s482 = smul.u32 %s34, 4
        %s483 = ssub.s32 %s482, 1
        %p484 = scmp.gt.s32.totalorder %s483, 0
        %s485 = scalar_select %p484, %s483, 0
        %s486 = smul.u32 2, %s485
        %s487 = smul.u32 %s34, 4
        %s488 = sadd.s32 %s487, 4
        %p489 = scmp.lt.s32.totalorder %s488, 7
        %s490 = scalar_select %p489, %s488, 7
        %s491 = smul.u32 2, %s490
        %s492 = smul.u32 8, %s34
        %vm494 = vcmask 60419
        %vm495 = vsmask.f32 7950
        %vm496 = vmand %vm494, %vm495
        %v497 = vld [vmem:[#allocation2 + $0x4] sm:$0x8]
        %v498 = vsel %vm496, 0, %v497
        %499 = vst [vmem:[#allocation2 + $0x4] sm:$0x8] %v498
        %v500 = vld [vmem:[#allocation2 + $0x18] sm:$0x8]
        %v501 = vsel %vm496, 0, %v500
        %502 = vst [vmem:[#allocation2 + $0x18] sm:$0x8] %v501
        %v503 = vld [vmem:[#allocation2 + $0x2c] sm:$0x8]
        %v504 = vsel %vm496, 0, %v503
        %505 = vst [vmem:[#allocation2 + $0x2c] sm:$0x8] %v504
        %v506 = vld [vmem:[#allocation2 + $0x40] sm:$0x8]
        %v507 = vsel %vm496, 0, %v506
        %508 = vst [vmem:[#allocation2 + $0x40] sm:$0x8] %v507
        %v509 = vld [vmem:[#allocation2 + $0x54] sm:$0x8]
        %v510 = vsel %vm496, 0, %v509
        %511 = vst [vmem:[#allocation2 + $0x54] sm:$0x8] %v510
        %v512 = vld [vmem:[#allocation2 + $0x68] sm:$0x8]
        %v513 = vsel %vm496, 0, %v512
        %514 = vst [vmem:[#allocation2 + $0x68] sm:$0x8] %v513
        %v515 = vld [vmem:[#allocation2 + $0x7c] sm:$0x8]
        %v516 = vsel %vm496, 0, %v515
        %517 = vst [vmem:[#allocation2 + $0x7c] sm:$0x8] %v516
        %v518 = vld [vmem:[#allocation2 + $0x90] sm:$0x8]
        %v519 = vsel %vm496, 0, %v518
        %520 = vst [vmem:[#allocation2 + $0x90] sm:$0x8] %v519
        %v521 = vld [vmem:[#allocation2 + $0xa4] sm:$0x8]
        %v522 = vsel %vm496, 0, %v521
        %523 = vst [vmem:[#allocation2 + $0xa4] sm:$0x8] %v522
        %v524 = vld [vmem:[#allocation2 + $0xb8] sm:$0x8]
        %v525 = vsel %vm496, 0, %v524
        %526 = vst [vmem:[#allocation2 + $0xb8] sm:$0x8] %v525
        %v527 = vld [vmem:[#allocation2 + $0xcc] sm:$0x8]
        %v528 = vsel %vm496, 0, %v527
        %529 = vst [vmem:[#allocation2 + $0xcc] sm:$0x8] %v528
        %v530 = vld [vmem:[#allocation2 + $0xe0] sm:$0x8]
        %v531 = vsel %vm496, 0, %v530
        %532 = vst [vmem:[#allocation2 + $0xe0] sm:$0x8] %v531
        %vm533 = vcmask 57344
        %vm534 = vsmask.f32 256
        %vm535 = vmand %vm533, %vm534
        %v536 = vld [vmem:[#allocation2 + $0x10] sm:$0x1]
        %v537 = vsel %vm535, 0, %v536
        %538 = vst [vmem:[#allocation2 + $0x10] sm:$0x1] %v537
        %v539 = vld [vmem:[#allocation2 + $0x24] sm:$0x1]
        %v540 = vsel %vm535, 0, %v539
        %541 = vst [vmem:[#allocation2 + $0x24] sm:$0x1] %v540
        %v542 = vld [vmem:[#allocation2 + $0x38] sm:$0x1]
        %v543 = vsel %vm535, 0, %v542
        %544 = vst [vmem:[#allocation2 + $0x38] sm:$0x1] %v543
        %v545 = vld [vmem:[#allocation2 + $0x4c] sm:$0x1]
        %v546 = vsel %vm535, 0, %v545
        %547 = vst [vmem:[#allocation2 + $0x4c] sm:$0x1] %v546
        %v548 = vld [vmem:[#allocation2 + $0x60] sm:$0x1]
        %v549 = vsel %vm535, 0, %v548
        %550 = vst [vmem:[#allocation2 + $0x60] sm:$0x1] %v549
        %v551 = vld [vmem:[#allocation2 + $0x74] sm:$0x1]
        %v552 = vsel %vm535, 0, %v551
        %553 = vst [vmem:[#allocation2 + $0x74] sm:$0x1] %v552
        %v554 = vld [vmem:[#allocation2 + $0x88] sm:$0x1]
        %v555 = vsel %vm535, 0, %v554
        %556 = vst [vmem:[#allocation2 + $0x88] sm:$0x1] %v555
        %v557 = vld [vmem:[#allocation2 + $0x9c] sm:$0x1]
        %v558 = vsel %vm535, 0, %v557
        %559 = vst [vmem:[#allocation2 + $0x9c] sm:$0x1] %v558
        %v560 = vld [vmem:[#allocation2 + $0xb0] sm:$0x1]
        %v561 = vsel %vm535, 0, %v560
        %562 = vst [vmem:[#allocation2 + $0xb0] sm:$0x1] %v561
        %v563 = vld [vmem:[#allocation2 + $0xc4] sm:$0x1]
        %v564 = vsel %vm535, 0, %v563
        %565 = vst [vmem:[#allocation2 + $0xc4] sm:$0x1] %v564
        %v566 = vld [vmem:[#allocation2 + $0xd8] sm:$0x1]
        %v567 = vsel %vm535, 0, %v566
        %568 = vst [vmem:[#allocation2 + $0xd8] sm:$0x1] %v567
        %v569 = vld [vmem:[#allocation2 + $0xec] sm:$0x1]
        %v570 = vsel %vm535, 0, %v569
        %571 = vst [vmem:[#allocation2 + $0xec] sm:$0x1] %v570
        %v572 = vld [vmem:[#allocation3 + $0x4] sm:$0x8]
        %v573 = vsel %vm496, 0, %v572
        %574 = vst [vmem:[#allocation3 + $0x4] sm:$0x8] %v573
        %v575 = vld [vmem:[#allocation3 + $0x18] sm:$0x8]
        %v576 = vsel %vm496, 0, %v575
        %577 = vst [vmem:[#allocation3 + $0x18] sm:$0x8] %v576
        %v578 = vld [vmem:[#allocation3 + $0x2c] sm:$0x8]
        %v579 = vsel %vm496, 0, %v578
        %580 = vst [vmem:[#allocation3 + $0x2c] sm:$0x8] %v579
        %v581 = vld [vmem:[#allocation3 + $0x40] sm:$0x8]
        %v582 = vsel %vm496, 0, %v581
        %583 = vst [vmem:[#allocation3 + $0x40] sm:$0x8] %v582
        %v584 = vld [vmem:[#allocation3 + $0x54] sm:$0x8]
        %v585 = vsel %vm496, 0, %v584
        %586 = vst [vmem:[#allocation3 + $0x54] sm:$0x8] %v585
        %v587 = vld [vmem:[#allocation3 + $0x68] sm:$0x8]
        %v588 = vsel %vm496, 0, %v587
        %589 = vst [vmem:[#allocation3 + $0x68] sm:$0x8] %v588
        %v590 = vld [vmem:[#allocation3 + $0x7c] sm:$0x8]
        %v591 = vsel %vm496, 0, %v590
        %592 = vst [vmem:[#allocation3 + $0x7c] sm:$0x8] %v591
        %v593 = vld [vmem:[#allocation3 + $0x90] sm:$0x8]
        %v594 = vsel %vm496, 0, %v593
        %595 = vst [vmem:[#allocation3 + $0x90] sm:$0x8] %v594
        %v596 = vld [vmem:[#allocation3 + $0xa4] sm:$0x8]
        %v597 = vsel %vm496, 0, %v596
        %598 = vst [vmem:[#allocation3 + $0xa4] sm:$0x8] %v597
        %v599 = vld [vmem:[#allocation3 + $0xb8] sm:$0x8]
        %v600 = vsel %vm496, 0, %v599
        %601 = vst [vmem:[#allocation3 + $0xb8] sm:$0x8] %v600
        %v602 = vld [vmem:[#allocation3 + $0xcc] sm:$0x8]
        %v603 = vsel %vm496, 0, %v602
        %604 = vst [vmem:[#allocation3 + $0xcc] sm:$0x8] %v603
        %v605 = vld [vmem:[#allocation3 + $0xe0] sm:$0x8]
        %v606 = vsel %vm496, 0, %v605
        %607 = vst [vmem:[#allocation3 + $0xe0] sm:$0x8] %v606
        %v608 = vld [vmem:[#allocation3 + $0x10] sm:$0x1]
        %v609 = vsel %vm535, 0, %v608
        %610 = vst [vmem:[#allocation3 + $0x10] sm:$0x1] %v609
        %v611 = vld [vmem:[#allocation3 + $0x24] sm:$0x1]
        %v612 = vsel %vm535, 0, %v611
        %613 = vst [vmem:[#allocation3 + $0x24] sm:$0x1] %v612
        %v614 = vld [vmem:[#allocation3 + $0x38] sm:$0x1]
        %v615 = vsel %vm535, 0, %v614
        %616 = vst [vmem:[#allocation3 + $0x38] sm:$0x1] %v615
        %v617 = vld [vmem:[#allocation3 + $0x4c] sm:$0x1]
        %v618 = vsel %vm535, 0, %v617
        %619 = vst [vmem:[#allocation3 + $0x4c] sm:$0x1] %v618
        %v620 = vld [vmem:[#allocation3 + $0x60] sm:$0x1]
        %v621 = vsel %vm535, 0, %v620
        %622 = vst [vmem:[#allocation3 + $0x60] sm:$0x1] %v621
        %v623 = vld [vmem:[#allocation3 + $0x74] sm:$0x1]
        %v624 = vsel %vm535, 0, %v623
        %625 = vst [vmem:[#allocation3 + $0x74] sm:$0x1] %v624
        %v626 = vld [vmem:[#allocation3 + $0x88] sm:$0x1]
        %v627 = vsel %vm535, 0, %v626
        %628 = vst [vmem:[#allocation3 + $0x88] sm:$0x1] %v627
        %v629 = vld [vmem:[#allocation3 + $0x9c] sm:$0x1]
        %v630 = vsel %vm535, 0, %v629
        %631 = vst [vmem:[#allocation3 + $0x9c] sm:$0x1] %v630
        %v632 = vld [vmem:[#allocation3 + $0xb0] sm:$0x1]
        %v633 = vsel %vm535, 0, %v632
        %634 = vst [vmem:[#allocation3 + $0xb0] sm:$0x1] %v633
        %v635 = vld [vmem:[#allocation3 + $0xc4] sm:$0x1]
        %v636 = vsel %vm535, 0, %v635
        %637 = vst [vmem:[#allocation3 + $0xc4] sm:$0x1] %v636
        %v638 = vld [vmem:[#allocation3 + $0xd8] sm:$0x1]
        %v639 = vsel %vm535, 0, %v638
        %640 = vst [vmem:[#allocation3 + $0xd8] sm:$0x1] %v639
        %v641 = vld [vmem:[#allocation3 + $0xec] sm:$0x1]
        %v642 = vsel %vm535, 0, %v641
        %643 = vst [vmem:[#allocation3 + $0xec] sm:$0x1] %v642
        %v644 = vld [vmem:[%s406] sm:$0xff]
        %v645 = vld [vmem:[%s406 + $0x8] sm:$0xff]
        %v646 = vld [vmem:[%s406 + $0x10] sm:$0xff]
        %v647 = vld [vmem:[%s406 + $0x18] sm:$0xff]
        %v648 = vld [vmem:[%s406 + $0x20] sm:$0xff]
        %v649 = vld [vmem:[%s406 + $0x28] sm:$0xff]
        %v650 = vld [vmem:[%s406 + $0x30] sm:$0xff]
        %v651 = vld [vmem:[%s406 + $0x38] sm:$0xff]
        %v652 = vld [vmem:[%s406 + $0x40] sm:$0xff]
        %v653 = vld [vmem:[%s406 + $0x48] sm:$0xff]
        %v654 = vld [vmem:[%s406 + $0x50] sm:$0xff]
        %v655 = vld [vmem:[%s406 + $0x58] sm:$0xff]
        %v656 = vld [vmem:[%s406 + $0x60] sm:$0xff]
        %v657 = vld [vmem:[%s406 + $0x68] sm:$0xff]
        %v658 = vld [vmem:[%s406 + $0x70] sm:$0xff]
        %v659 = vld [vmem:[%s406 + $0x78] sm:$0xff]
        %v660 = vpack.c.bf16 %v645, %v644
        %v661 = vpack.c.bf16 %v647, %v646
        %v662 = vpack.c.bf16 %v649, %v648
        %v663 = vpack.c.bf16 %v651, %v650
        %v664 = vpack.c.bf16 %v653, %v652
        %v665 = vpack.c.bf16 %v655, %v654
        %v666 = vpack.c.bf16 %v657, %v656
        %v667 = vpack.c.bf16 %v659, %v658
        %v676 = vunpack.c.l.b16 %v660
        %v677 = vunpack.c.h.b16 %v660
        %v678 = vunpack.c.l.b16 %v661
        %v679 = vunpack.c.h.b16 %v661
        %v680 = vunpack.c.l.b16 %v662
        %v681 = vunpack.c.h.b16 %v662
        %v682 = vunpack.c.l.b16 %v663
        %v683 = vunpack.c.h.b16 %v663
        %v684 = vunpack.c.l.b16 %v664
        %v685 = vunpack.c.h.b16 %v664
        %v686 = vunpack.c.l.b16 %v665
        %v687 = vunpack.c.h.b16 %v665
        %v688 = vunpack.c.l.b16 %v666
        %v689 = vunpack.c.h.b16 %v666
        %v690 = vunpack.c.l.b16 %v667
        %v691 = vunpack.c.h.b16 %v667
        %v692 = vpack.c.b16 %v676, %v676
        %v693 = vpack.c.b16 %v677, %v677
        %v694 = vpack.c.b16 %v678, %v678
        %v695 = vpack.c.b16 %v679, %v679
        %v696 = vpack.c.b16 %v680, %v680
        %v697 = vpack.c.b16 %v681, %v681
        %v698 = vpack.c.b16 %v682, %v682
        %v699 = vpack.c.b16 %v683, %v683
        %v700 = vpack.c.b16 %v684, %v684
        %v701 = vpack.c.b16 %v685, %v685
        %v702 = vpack.c.b16 %v686, %v686
        %v703 = vpack.c.b16 %v687, %v687
        %v704 = vpack.c.b16 %v688, %v688
        %v705 = vpack.c.b16 %v689, %v689
        %v706 = vpack.c.b16 %v690, %v690
        %v707 = vpack.c.b16 %v691, %v691
        %s724 = scalar_lea.vmem [#allocation2], 40
        %vm725 = vcmask 60416
        %726 = vst.msk [vmem:[%s724 + $0x8] sm:$0xf] %vm725, %v692
        %727 = vst.msk [vmem:[%s724 + $0xc] sm:$0xf] %vm725, %v693
        %728 = vst.msk [vmem:[%s724 + $0x1c] sm:$0xf] %vm725, %v694
        %729 = vst.msk [vmem:[%s724 + $0x20] sm:$0xf] %vm725, %v695
        %730 = vst.msk [vmem:[%s724 + $0x30] sm:$0xf] %vm725, %v696
        %731 = vst.msk [vmem:[%s724 + $0x34] sm:$0xf] %vm725, %v697
        %732 = vst.msk [vmem:[%s724 + $0x44] sm:$0xf] %vm725, %v698
        %733 = vst.msk [vmem:[%s724 + $0x48] sm:$0xf] %vm725, %v699
        %734 = vst.msk [vmem:[%s724 + $0x58] sm:$0xf] %vm725, %v700
        %735 = vst.msk [vmem:[%s724 + $0x5c] sm:$0xf] %vm725, %v701
        %736 = vst.msk [vmem:[%s724 + $0x6c] sm:$0xf] %vm725, %v702
        %737 = vst.msk [vmem:[%s724 + $0x70] sm:$0xf] %vm725, %v703
        %738 = vst.msk [vmem:[%s724 + $0x80] sm:$0xf] %vm725, %v704
        %739 = vst.msk [vmem:[%s724 + $0x84] sm:$0xf] %vm725, %v705
        %740 = vst.msk [vmem:[%s724 + $0x94] sm:$0xf] %vm725, %v706
        %741 = vst.msk [vmem:[%s724 + $0x98] sm:$0xf] %vm725, %v707
        %p742 = scmp.gt.s32.totalorder %s34, 0
        // Predicated region
        $region77: #{tpu_custom_call.1} parent=47 // pred_check
          %p743 = pneg %p742
        $region78: #{tpu_custom_call.1} parent=47 // pred_check_branch
          %745 = sbr.rel (%p743) target = $region80
        $region79: #{tpu_custom_call.1} parent=47 // pred_region
          %v746 = vld [vmem:[%s415] sm:$0xff]
          %v747 = vld [vmem:[%s415 + $0x8] sm:$0xff]
          %v748 = vld [vmem:[%s415 + $0x10] sm:$0xff]
          %v749 = vld [vmem:[%s415 + $0x18] sm:$0xff]
          %v750 = vpack.c.bf16 %v747, %v746
          %v751 = vpack.c.bf16 %v749, %v748
          %v754 = vunpack.c.l.b16 %v750
          %v755 = vunpack.c.h.b16 %v750
          %v756 = vunpack.c.l.b16 %v751
          %v757 = vunpack.c.h.b16 %v751
          %v758 = vpack.c.b16 %v754, %v754
          %v759 = vpack.c.b16 %v755, %v755
          %v760 = vpack.c.b16 %v756, %v756
          %v761 = vpack.c.b16 %v757, %v757
          %766 = vst.msk [vmem:[#allocation2 + $0x8] sm:$0xf] %vm725, %v758
          %767 = vst.msk [vmem:[#allocation2 + $0xc] sm:$0xf] %vm725, %v759
          %768 = vst.msk [vmem:[#allocation2 + $0x1c] sm:$0xf] %vm725, %v760
          %769 = vst.msk [vmem:[#allocation2 + $0x20] sm:$0xf] %vm725, %v761
        $region80: #{tpu_custom_call.1} parent=47 // pred_fallthru
          _
        %p770 = scmp.eq.s32.totalorder %s34, 0
        // Predicated region
        $region81: #{tpu_custom_call.1} parent=47 // pred_check
          %p771 = pneg %p770
        $region82: #{tpu_custom_call.1} parent=47 // pred_check_branch
          %773 = sbr.rel (%p771) target = $region84
        $region83: #{tpu_custom_call.1} parent=47 // pred_region
          %774 = vst.msk [vmem:[#allocation2 + $0x8] sm:$0xf] %vm725, 0
          %775 = vst.msk [vmem:[#allocation2 + $0xc] sm:$0xf] %vm725, 0
          %776 = vst.msk [vmem:[#allocation2 + $0x1c] sm:$0xf] %vm725, 0
          %777 = vst.msk [vmem:[#allocation2 + $0x20] sm:$0xf] %vm725, 0
        $region84: #{tpu_custom_call.1} parent=47 // pred_fallthru
          _
        %p778 = scmp.lt.s32.totalorder %s34, 1
        // Predicated region
        $region85: #{tpu_custom_call.1} parent=47 // pred_check
          %p779 = pneg %p778
        $region86: #{tpu_custom_call.1} parent=47 // pred_check_branch
          %781 = sbr.rel (%p779) target = $region88
        $region87: #{tpu_custom_call.1} parent=47 // pred_region
          %v782 = vld [vmem:[%s424] sm:$0xff]
          %v783 = vld [vmem:[%s424 + $0x8] sm:$0xff]
          %v784 = vld [vmem:[%s424 + $0x10] sm:$0xff]
          %v785 = vld [vmem:[%s424 + $0x18] sm:$0xff]
          %v786 = vpack.c.bf16 %v783, %v782
          %v787 = vpack.c.bf16 %v785, %v784
          %v790 = vunpack.c.l.b16 %v786
          %v791 = vunpack.c.h.b16 %v786
          %v792 = vunpack.c.l.b16 %v787
          %v793 = vunpack.c.h.b16 %v787
          %v794 = vpack.c.b16 %v790, %v790
          %v795 = vpack.c.b16 %v791, %v791
          %v796 = vpack.c.b16 %v792, %v792
          %v797 = vpack.c.b16 %v793, %v793
          %s802 = scalar_lea.vmem [#allocation2], 200
          %803 = vst.msk [vmem:[%s802 + $0x8] sm:$0xf] %vm725, %v794
          %804 = vst.msk [vmem:[%s802 + $0xc] sm:$0xf] %vm725, %v795
          %805 = vst.msk [vmem:[%s802 + $0x1c] sm:$0xf] %vm725, %v796
          %806 = vst.msk [vmem:[%s802 + $0x20] sm:$0xf] %vm725, %v797
        $region88: #{tpu_custom_call.1} parent=47 // pred_fallthru
          _
        %p807 = scmp.eq.s32.totalorder %s34, 1
        // Predicated region
        $region89: #{tpu_custom_call.1} parent=47 // pred_check
          %p808 = pneg %p807
        $region90: #{tpu_custom_call.1} parent=47 // pred_check_branch
          %810 = sbr.rel (%p808) target = $region92
        $region91: #{tpu_custom_call.1} parent=47 // pred_region
          %s811 = scalar_lea.vmem [#allocation2], 200
          %812 = vst.msk [vmem:[%s811 + $0x8] sm:$0xf] %vm725, 0
          %813 = vst.msk [vmem:[%s811 + $0xc] sm:$0xf] %vm725, 0
          %814 = vst.msk [vmem:[%s811 + $0x1c] sm:$0xf] %vm725, 0
          %815 = vst.msk [vmem:[%s811 + $0x20] sm:$0xf] %vm725, 0
        $region92: #{tpu_custom_call.1} parent=47 // pred_fallthru
          _
        %v816 = vld [vmem:[#allocation2 + $0x4] sm:$0x8]
        %v817 = vld [vmem:[#allocation2 + $0x8] sm:$0xf]
        %v818 = vld [vmem:[#allocation2 + $0xc] sm:$0xf]
        %v819 = vld [vmem:[#allocation2 + $0x18] sm:$0x8]
        %v820 = vld [vmem:[#allocation2 + $0x1c] sm:$0xf]
        %v821 = vld [vmem:[#allocation2 + $0x20] sm:$0xf]
        %v822 = vld [vmem:[#allocation2 + $0x2c] sm:$0x8]
        %v823 = vld [vmem:[#allocation2 + $0x30] sm:$0xf]
        %v824 = vld [vmem:[#allocation2 + $0x34] sm:$0xf]
        %v825 = vld [vmem:[#allocation2 + $0x40] sm:$0x8]
        %v826 = vld [vmem:[#allocation2 + $0x44] sm:$0xf]
        %v827 = vld [vmem:[#allocation2 + $0x48] sm:$0xf]
        %v828 = vld [vmem:[#allocation2 + $0x54] sm:$0x8]
        %v829 = vld [vmem:[#allocation2 + $0x58] sm:$0xf]
        %v830 = vld [vmem:[#allocation2 + $0x5c] sm:$0xf]
        %v831 = vld [vmem:[#allocation2 + $0x68] sm:$0x8]
        %v832 = vld [vmem:[#allocation2 + $0x6c] sm:$0xf]
        %v833 = vld [vmem:[#allocation2 + $0x70] sm:$0xf]
        %v834 = vld [vmem:[#allocation2 + $0x7c] sm:$0x8]
        %v835 = vld [vmem:[#allocation2 + $0x80] sm:$0xf]
        %v836 = vld [vmem:[#allocation2 + $0x84] sm:$0xf]
        %v837 = vld [vmem:[#allocation2 + $0x90] sm:$0x8]
        %v838 = vld [vmem:[#allocation2 + $0x94] sm:$0xf]
        %v839 = vld [vmem:[#allocation2 + $0x98] sm:$0xf]
        %v840 = vld [vmem:[#allocation2 + $0xa4] sm:$0x8]
        %v841 = vld [vmem:[#allocation2 + $0xa8] sm:$0xf]
        %v842 = vld [vmem:[#allocation2 + $0xac] sm:$0xf]
        %v843 = vld [vmem:[#allocation2 + $0xb8] sm:$0x8]
        %v844 = vld [vmem:[#allocation2 + $0xbc] sm:$0xf]
        %v845 = vld [vmem:[#allocation2 + $0xc0] sm:$0xf]
        %v846 = vld [vmem:[#allocation2 + $0x10] sm:$0x1]
        %v847 = vld [vmem:[#allocation2 + $0x24] sm:$0x1]
        %v848 = vld [vmem:[#allocation2 + $0x38] sm:$0x1]
        %v849 = vld [vmem:[#allocation2 + $0x4c] sm:$0x1]
        %v850 = vld [vmem:[#allocation2 + $0x60] sm:$0x1]
        %v851 = vld [vmem:[#allocation2 + $0x74] sm:$0x1]
        %v852 = vld [vmem:[#allocation2 + $0x88] sm:$0x1]
        %v853 = vld [vmem:[#allocation2 + $0x9c] sm:$0x1]
        %v854 = vld [vmem:[#allocation2 + $0xb0] sm:$0x1]
        %v855 = vld [vmem:[#allocation2 + $0xc4] sm:$0x1]
        %s856 = scalar_lea.vmem [#allocation2], 20
        %v857 = vld [vmem:[%s856 + $0x4] sm:$0x8]
        %v858 = vld [vmem:[%s856 + $0x8] sm:$0xf]
        %v859 = vld [vmem:[%s856 + $0xc] sm:$0xf]
        %v860 = vld [vmem:[%s856 + $0x18] sm:$0x8]
        %v861 = vld [vmem:[%s856 + $0x1c] sm:$0xf]
        %v862 = vld [vmem:[%s856 + $0x20] sm:$0xf]
        %v863 = vld [vmem:[%s856 + $0x2c] sm:$0x8]
        %v864 = vld [vmem:[%s856 + $0x30] sm:$0xf]
        %v865 = vld [vmem:[%s856 + $0x34] sm:$0xf]
        %v866 = vld [vmem:[%s856 + $0x40] sm:$0x8]
        %v867 = vld [vmem:[%s856 + $0x44] sm:$0xf]
        %v868 = vld [vmem:[%s856 + $0x48] sm:$0xf]
        %v869 = vld [vmem:[%s856 + $0x54] sm:$0x8]
        %v870 = vld [vmem:[%s856 + $0x58] sm:$0xf]
        %v871 = vld [vmem:[%s856 + $0x5c] sm:$0xf]
        %v872 = vld [vmem:[%s856 + $0x68] sm:$0x8]
        %v873 = vld [vmem:[%s856 + $0x6c] sm:$0xf]
        %v874 = vld [vmem:[%s856 + $0x70] sm:$0xf]
        %v875 = vld [vmem:[%s856 + $0x7c] sm:$0x8]
        %v876 = vld [vmem:[%s856 + $0x80] sm:$0xf]
        %v877 = vld [vmem:[%s856 + $0x84] sm:$0xf]
        %v878 = vld [vmem:[%s856 + $0x90] sm:$0x8]
        %v879 = vld [vmem:[%s856 + $0x94] sm:$0xf]
        %v880 = vld [vmem:[%s856 + $0x98] sm:$0xf]
        %v881 = vld [vmem:[%s856 + $0xa4] sm:$0x8]
        %v882 = vld [vmem:[%s856 + $0xa8] sm:$0xf]
        %v883 = vld [vmem:[%s856 + $0xac] sm:$0xf]
        %v884 = vld [vmem:[%s856 + $0xb8] sm:$0x8]
        %v885 = vld [vmem:[%s856 + $0xbc] sm:$0xf]
        %v886 = vld [vmem:[%s856 + $0xc0] sm:$0xf]
        %v887 = vld [vmem:[%s856 + $0x10] sm:$0x1]
        %v888 = vld [vmem:[%s856 + $0x24] sm:$0x1]
        %v889 = vld [vmem:[%s856 + $0x38] sm:$0x1]
        %v890 = vld [vmem:[%s856 + $0x4c] sm:$0x1]
        %v891 = vld [vmem:[%s856 + $0x60] sm:$0x1]
        %v892 = vld [vmem:[%s856 + $0x74] sm:$0x1]
        %v893 = vld [vmem:[%s856 + $0x88] sm:$0x1]
        %v894 = vld [vmem:[%s856 + $0x9c] sm:$0x1]
        %v895 = vld [vmem:[%s856 + $0xb0] sm:$0x1]
        %v896 = vld [vmem:[%s856 + $0xc4] sm:$0x1]
        %v897 = vld [vmem:[%s724 + $0x4] sm:$0x8]
        %v898 = vld [vmem:[%s724 + $0x8] sm:$0xf]
        %v899 = vld [vmem:[%s724 + $0xc] sm:$0xf]
        %v900 = vld [vmem:[%s724 + $0x18] sm:$0x8]
        %v901 = vld [vmem:[%s724 + $0x1c] sm:$0xf]
        %v902 = vld [vmem:[%s724 + $0x20] sm:$0xf]
        %v903 = vld [vmem:[%s724 + $0x2c] sm:$0x8]
        %v904 = vld [vmem:[%s724 + $0x30] sm:$0xf]
        %v905 = vld [vmem:[%s724 + $0x34] sm:$0xf]
        %v906 = vld [vmem:[%s724 + $0x40] sm:$0x8]
        %v907 = vld [vmem:[%s724 + $0x44] sm:$0xf]
        %v908 = vld [vmem:[%s724 + $0x48] sm:$0xf]
        %v909 = vld [vmem:[%s724 + $0x54] sm:$0x8]
        %v910 = vld [vmem:[%s724 + $0x58] sm:$0xf]
        %v911 = vld [vmem:[%s724 + $0x5c] sm:$0xf]
        %v912 = vld [vmem:[%s724 + $0x68] sm:$0x8]
        %v913 = vld [vmem:[%s724 + $0x6c] sm:$0xf]
        %v914 = vld [vmem:[%s724 + $0x70] sm:$0xf]
        %v915 = vld [vmem:[%s724 + $0x7c] sm:$0x8]
        %v916 = vld [vmem:[%s724 + $0x80] sm:$0xf]
        %v917 = vld [vmem:[%s724 + $0x84] sm:$0xf]
        %v918 = vld [vmem:[%s724 + $0x90] sm:$0x8]
        %v919 = vld [vmem:[%s724 + $0x94] sm:$0xf]
        %v920 = vld [vmem:[%s724 + $0x98] sm:$0xf]
        %v921 = vld [vmem:[%s724 + $0xa4] sm:$0x8]
        %v922 = vld [vmem:[%s724 + $0xa8] sm:$0xf]
        %v923 = vld [vmem:[%s724 + $0xac] sm:$0xf]
        %v924 = vld [vmem:[%s724 + $0xb8] sm:$0x8]
        %v925 = vld [vmem:[%s724 + $0xbc] sm:$0xf]
        %v926 = vld [vmem:[%s724 + $0xc0] sm:$0xf]
        %v927 = vld [vmem:[%s724 + $0x10] sm:$0x1]
        %v928 = vld [vmem:[%s724 + $0x24] sm:$0x1]
        %v929 = vld [vmem:[%s724 + $0x38] sm:$0x1]
        %v930 = vld [vmem:[%s724 + $0x4c] sm:$0x1]
        %v931 = vld [vmem:[%s724 + $0x60] sm:$0x1]
        %v932 = vld [vmem:[%s724 + $0x74] sm:$0x1]
        %v933 = vld [vmem:[%s724 + $0x88] sm:$0x1]
        %v934 = vld [vmem:[%s724 + $0x9c] sm:$0x1]
        %v935 = vld [vmem:[%s724 + $0xb0] sm:$0x1]
        %v936 = vld [vmem:[%s724 + $0xc4] sm:$0x1]
        %v967 = vunpack.c.l.b16 %v816
        %v968 = vunpack.c.l.b16 %v817
        %v969 = vunpack.c.l.b16 %v818
        %v970 = vunpack.c.l.b16 %v819
        %v971 = vunpack.c.l.b16 %v820
        %v972 = vunpack.c.l.b16 %v821
        %v973 = vunpack.c.l.b16 %v822
        %v974 = vunpack.c.l.b16 %v823
        %v975 = vunpack.c.l.b16 %v824
        %v976 = vunpack.c.l.b16 %v825
        %v977 = vunpack.c.l.b16 %v826
        %v978 = vunpack.c.l.b16 %v827
        %v979 = vunpack.c.l.b16 %v828
        %v980 = vunpack.c.l.b16 %v829
        %v981 = vunpack.c.l.b16 %v830
        %v982 = vunpack.c.l.b16 %v831
        %v983 = vunpack.c.l.b16 %v832
        %v984 = vunpack.c.l.b16 %v833
        %v985 = vunpack.c.l.b16 %v834
        %v986 = vunpack.c.l.b16 %v835
        %v987 = vunpack.c.l.b16 %v836
        %v988 = vunpack.c.l.b16 %v837
        %v989 = vunpack.c.l.b16 %v838
        %v990 = vunpack.c.l.b16 %v839
        %v991 = vunpack.c.l.b16 %v840
        %v992 = vunpack.c.l.b16 %v841
        %v993 = vunpack.c.l.b16 %v842
        %v994 = vunpack.c.l.b16 %v843
        %v995 = vunpack.c.l.b16 %v844
        %v996 = vunpack.c.l.b16 %v845
        %v997 = vpack.c.b16 %v968, %v967
        %v998 = vpack.c.b16 %v969, %v969
        %v999 = vpack.c.b16 %v971, %v970
        %v1000 = vpack.c.b16 %v972, %v972
        %v1001 = vpack.c.b16 %v974, %v973
        %v1002 = vpack.c.b16 %v975, %v975
        %v1003 = vpack.c.b16 %v977, %v976
        %v1004 = vpack.c.b16 %v978, %v978
        %v1005 = vpack.c.b16 %v980, %v979
        %v1006 = vpack.c.b16 %v981, %v981
        %v1007 = vpack.c.b16 %v983, %v982
        %v1008 = vpack.c.b16 %v984, %v984
        %v1009 = vpack.c.b16 %v986, %v985
        %v1010 = vpack.c.b16 %v987, %v987
        %v1011 = vpack.c.b16 %v989, %v988
        %v1012 = vpack.c.b16 %v990, %v990
        %v1013 = vpack.c.b16 %v992, %v991
        %v1014 = vpack.c.b16 %v993, %v993
        %v1015 = vpack.c.b16 %v995, %v994
        %v1016 = vpack.c.b16 %v996, %v996
        %v1017 = vpack.c.b16 %v969, %v968
        %v1018 = vpack.c.b16 %v972, %v971
        %v1019 = vpack.c.b16 %v975, %v974
        %v1020 = vpack.c.b16 %v978, %v977
        %v1021 = vpack.c.b16 %v981, %v980
        %v1022 = vpack.c.b16 %v984, %v983
        %v1023 = vpack.c.b16 %v987, %v986
        %v1024 = vpack.c.b16 %v990, %v989
        %v1025 = vpack.c.b16 %v993, %v992
        %v1026 = vpack.c.b16 %v996, %v995
        %v1028 = vshrl.u32 %v1017, 16
        %v1030 = vrot.slane %v1028, 4
        %v1031 = vshll.u32 %v1017, 16
        %v1033 = vrot.slane %v1031, 5
        %v1034 = vor.u32 %v1030, %v1033
        %v1036 = vshrl.u32 %v1018, 16
        %v1038 = vrot.slane %v1036, 4
        %v1039 = vshll.u32 %v1018, 16
        %v1041 = vrot.slane %v1039, 5
        %v1042 = vor.u32 %v1038, %v1041
        %v1044 = vshrl.u32 %v1019, 16
        %v1046 = vrot.slane %v1044, 4
        %v1047 = vshll.u32 %v1019, 16
        %v1049 = vrot.slane %v1047, 5
        %v1050 = vor.u32 %v1046, %v1049
        %v1052 = vshrl.u32 %v1020, 16
        %v1054 = vrot.slane %v1052, 4
        %v1055 = vshll.u32 %v1020, 16
        %v1057 = vrot.slane %v1055, 5
        %v1058 = vor.u32 %v1054, %v1057
        %v1060 = vshrl.u32 %v1021, 16
        %v1062 = vrot.slane %v1060, 4
        %v1063 = vshll.u32 %v1021, 16
        %v1065 = vrot.slane %v1063, 5
        %v1066 = vor.u32 %v1062, %v1065
        %v1068 = vshrl.u32 %v1022, 16
        %v1070 = vrot.slane %v1068, 4
        %v1071 = vshll.u32 %v1022, 16
        %v1073 = vrot.slane %v1071, 5
        %v1074 = vor.u32 %v1070, %v1073
        %v1076 = vshrl.u32 %v1023, 16
        %v1078 = vrot.slane %v1076, 4
        %v1079 = vshll.u32 %v1023, 16
        %v1081 = vrot.slane %v1079, 5
        %v1082 = vor.u32 %v1078, %v1081
        %v1084 = vshrl.u32 %v1024, 16
        %v1086 = vrot.slane %v1084, 4
        %v1087 = vshll.u32 %v1024, 16
        %v1089 = vrot.slane %v1087, 5
        %v1090 = vor.u32 %v1086, %v1089
        %v1092 = vshrl.u32 %v1025, 16
        %v1094 = vrot.slane %v1092, 4
        %v1095 = vshll.u32 %v1025, 16
        %v1097 = vrot.slane %v1095, 5
        %v1098 = vor.u32 %v1094, %v1097
        %v1100 = vshrl.u32 %v1026, 16
        %v1102 = vrot.slane %v1100, 4
        %v1103 = vshll.u32 %v1026, 16
        %v1105 = vrot.slane %v1103, 5
        %v1106 = vor.u32 %v1102, %v1105
        %1107 = vrot.lane.b32.xlu0 %v1034, 8
        %v1108 = vpop.permute.xlu0 %1107
        %1109 = vrot.lane.b32.xlu0 %v1042, 8
        %v1110 = vpop.permute.xlu0 %1109
        %1111 = vrot.lane.b32.xlu0 %v1050, 8
        %v1112 = vpop.permute.xlu0 %1111
        %1113 = vrot.lane.b32.xlu0 %v1058, 8
        %v1114 = vpop.permute.xlu0 %1113
        %1115 = vrot.lane.b32.xlu0 %v1066, 8
        %v1116 = vpop.permute.xlu0 %1115
        %1117 = vrot.lane.b32.xlu0 %v1074, 8
        %v1118 = vpop.permute.xlu0 %1117
        %1119 = vrot.lane.b32.xlu0 %v1082, 8
        %v1120 = vpop.permute.xlu0 %1119
        %1121 = vrot.lane.b32.xlu0 %v1090, 8
        %v1122 = vpop.permute.xlu0 %1121
        %1123 = vrot.lane.b32.xlu0 %v1098, 8
        %v1124 = vpop.permute.xlu0 %1123
        %1125 = vrot.lane.b32.xlu0 %v1106, 8
        %v1126 = vpop.permute.xlu0 %1125
        %v1137 = vunpack.c.l.b16 %v846
        %v1138 = vunpack.c.l.b16 %v847
        %v1139 = vunpack.c.l.b16 %v848
        %v1140 = vunpack.c.l.b16 %v849
        %v1141 = vunpack.c.l.b16 %v850
        %v1142 = vunpack.c.l.b16 %v851
        %v1143 = vunpack.c.l.b16 %v852
        %v1144 = vunpack.c.l.b16 %v853
        %v1145 = vunpack.c.l.b16 %v854
        %v1146 = vunpack.c.l.b16 %v855
        %v1147 = vpack.c.b16 %v1137, %v1137
        %v1148 = vpack.c.b16 %v1138, %v1138
        %v1149 = vpack.c.b16 %v1139, %v1139
        %v1150 = vpack.c.b16 %v1140, %v1140
        %v1151 = vpack.c.b16 %v1141, %v1141
        %v1152 = vpack.c.b16 %v1142, %v1142
        %v1153 = vpack.c.b16 %v1143, %v1143
        %v1154 = vpack.c.b16 %v1144, %v1144
        %v1155 = vpack.c.b16 %v1145, %v1145
        %v1156 = vpack.c.b16 %v1146, %v1146
        %vm1157 = vcmask 1042432
        %v1158 = vrot.slane %v1017, 5
        %v1159 = vrot.slane %v1147, 5
        %v1160 = vsel %vm1157, %v1158, %v1159
        %v1161 = vrot.slane %v1018, 5
        %v1162 = vrot.slane %v1148, 5
        %v1163 = vsel %vm1157, %v1161, %v1162
        %v1164 = vrot.slane %v1019, 5
        %v1165 = vrot.slane %v1149, 5
        %v1166 = vsel %vm1157, %v1164, %v1165
        %v1167 = vrot.slane %v1020, 5
        %v1168 = vrot.slane %v1150, 5
        %v1169 = vsel %vm1157, %v1167, %v1168
        %v1170 = vrot.slane %v1021, 5
        %v1171 = vrot.slane %v1151, 5
        %v1172 = vsel %vm1157, %v1170, %v1171
        %v1173 = vrot.slane %v1022, 5
        %v1174 = vrot.slane %v1152, 5
        %v1175 = vsel %vm1157, %v1173, %v1174
        %v1176 = vrot.slane %v1023, 5
        %v1177 = vrot.slane %v1153, 5
        %v1178 = vsel %vm1157, %v1176, %v1177
        %v1179 = vrot.slane %v1024, 5
        %v1180 = vrot.slane %v1154, 5
        %v1181 = vsel %vm1157, %v1179, %v1180
        %v1182 = vrot.slane %v1025, 5
        %v1183 = vrot.slane %v1155, 5
        %v1184 = vsel %vm1157, %v1182, %v1183
        %v1185 = vrot.slane %v1026, 5
        %v1186 = vrot.slane %v1156, 5
        %v1187 = vsel %vm1157, %v1185, %v1186
        %1188 = vrot.lane.b32.xlu0 %v1158, 16
        %v1189 = vpop.permute.xlu0 %1188
        %1190 = vrot.lane.b32.xlu0 %v1160, 16
        %v1191 = vpop.permute.xlu0 %1190
        %1192 = vrot.lane.b32.xlu0 %v1161, 16
        %v1193 = vpop.permute.xlu0 %1192
        %1194 = vrot.lane.b32.xlu0 %v1163, 16
        %v1195 = vpop.permute.xlu0 %1194
        %1196 = vrot.lane.b32.xlu0 %v1164, 16
        %v1197 = vpop.permute.xlu0 %1196
        %1198 = vrot.lane.b32.xlu0 %v1166, 16
        %v1199 = vpop.permute.xlu0 %1198
        %1200 = vrot.lane.b32.xlu0 %v1167, 16
        %v1201 = vpop.permute.xlu0 %1200
        %1202 = vrot.lane.b32.xlu0 %v1169, 16
        %v1203 = vpop.permute.xlu0 %1202
        %1204 = vrot.lane.b32.xlu0 %v1170, 16
        %v1205 = vpop.permute.xlu0 %1204
        %1206 = vrot.lane.b32.xlu0 %v1172, 16
        %v1207 = vpop.permute.xlu0 %1206
        %1208 = vrot.lane.b32.xlu0 %v1173, 16
        %v1209 = vpop.permute.xlu0 %1208
        %1210 = vrot.lane.b32.xlu0 %v1175, 16
        %v1211 = vpop.permute.xlu0 %1210
        %1212 = vrot.lane.b32.xlu0 %v1176, 16
        %v1213 = vpop.permute.xlu0 %1212
        %1214 = vrot.lane.b32.xlu0 %v1178, 16
        %v1215 = vpop.permute.xlu0 %1214
        %1216 = vrot.lane.b32.xlu0 %v1179, 16
        %v1217 = vpop.permute.xlu0 %1216
        %1218 = vrot.lane.b32.xlu0 %v1181, 16
        %v1219 = vpop.permute.xlu0 %1218
        %1220 = vrot.lane.b32.xlu0 %v1182, 16
        %v1221 = vpop.permute.xlu0 %1220
        %1222 = vrot.lane.b32.xlu0 %v1184, 16
        %v1223 = vpop.permute.xlu0 %1222
        %1224 = vrot.lane.b32.xlu0 %v1185, 16
        %v1225 = vpop.permute.xlu0 %1224
        %1226 = vrot.lane.b32.xlu0 %v1187, 16
        %v1227 = vpop.permute.xlu0 %1226
        %v1258 = vunpack.c.l.b16 %v857
        %v1259 = vunpack.c.l.b16 %v858
        %v1260 = vunpack.c.l.b16 %v859
        %v1261 = vunpack.c.l.b16 %v860
        %v1262 = vunpack.c.l.b16 %v861
        %v1263 = vunpack.c.l.b16 %v862
        %v1264 = vunpack.c.l.b16 %v863
        %v1265 = vunpack.c.l.b16 %v864
        %v1266 = vunpack.c.l.b16 %v865
        %v1267 = vunpack.c.l.b16 %v866
        %v1268 = vunpack.c.l.b16 %v867
        %v1269 = vunpack.c.l.b16 %v868
        %v1270 = vunpack.c.l.b16 %v869
        %v1271 = vunpack.c.l.b16 %v870
        %v1272 = vunpack.c.l.b16 %v871
        %v1273 = vunpack.c.l.b16 %v872
        %v1274 = vunpack.c.l.b16 %v873
        %v1275 = vunpack.c.l.b16 %v874
        %v1276 = vunpack.c.l.b16 %v875
        %v1277 = vunpack.c.l.b16 %v876
        %v1278 = vunpack.c.l.b16 %v877
        %v1279 = vunpack.c.l.b16 %v878
        %v1280 = vunpack.c.l.b16 %v879
        %v1281 = vunpack.c.l.b16 %v880
        %v1282 = vunpack.c.l.b16 %v881
        %v1283 = vunpack.c.l.b16 %v882
        %v1284 = vunpack.c.l.b16 %v883
        %v1285 = vunpack.c.l.b16 %v884
        %v1286 = vunpack.c.l.b16 %v885
        %v1287 = vunpack.c.l.b16 %v886
        %v1288 = vpack.c.b16 %v1259, %v1258
        %v1289 = vpack.c.b16 %v1260, %v1260
        %v1290 = vpack.c.b16 %v1262, %v1261
        %v1291 = vpack.c.b16 %v1263, %v1263
        %v1292 = vpack.c.b16 %v1265, %v1264
        %v1293 = vpack.c.b16 %v1266, %v1266
        %v1294 = vpack.c.b16 %v1268, %v1267
        %v1295 = vpack.c.b16 %v1269, %v1269
        %v1296 = vpack.c.b16 %v1271, %v1270
        %v1297 = vpack.c.b16 %v1272, %v1272
        %v1298 = vpack.c.b16 %v1274, %v1273
        %v1299 = vpack.c.b16 %v1275, %v1275
        %v1300 = vpack.c.b16 %v1277, %v1276
        %v1301 = vpack.c.b16 %v1278, %v1278
        %v1302 = vpack.c.b16 %v1280, %v1279
        %v1303 = vpack.c.b16 %v1281, %v1281
        %v1304 = vpack.c.b16 %v1283, %v1282
        %v1305 = vpack.c.b16 %v1284, %v1284
        %v1306 = vpack.c.b16 %v1286, %v1285
        %v1307 = vpack.c.b16 %v1287, %v1287
        %1308 = vrot.lane.b32.xlu0 %v1288, 24
        %v1309 = vpop.permute.xlu0 %1308
        %1310 = vrot.lane.b32.xlu0 %v1289, 24
        %v1311 = vpop.permute.xlu0 %1310
        %1312 = vrot.lane.b32.xlu0 %v1290, 24
        %v1313 = vpop.permute.xlu0 %1312
        %1314 = vrot.lane.b32.xlu0 %v1291, 24
        %v1315 = vpop.permute.xlu0 %1314
        %1316 = vrot.lane.b32.xlu0 %v1292, 24
        %v1317 = vpop.permute.xlu0 %1316
        %1318 = vrot.lane.b32.xlu0 %v1293, 24
        %v1319 = vpop.permute.xlu0 %1318
        %1320 = vrot.lane.b32.xlu0 %v1294, 24
        %v1321 = vpop.permute.xlu0 %1320
        %1322 = vrot.lane.b32.xlu0 %v1295, 24
        %v1323 = vpop.permute.xlu0 %1322
        %1324 = vrot.lane.b32.xlu0 %v1296, 24
        %v1325 = vpop.permute.xlu0 %1324
        %1326 = vrot.lane.b32.xlu0 %v1297, 24
        %v1327 = vpop.permute.xlu0 %1326
        %1328 = vrot.lane.b32.xlu0 %v1298, 24
        %v1329 = vpop.permute.xlu0 %1328
        %1330 = vrot.lane.b32.xlu0 %v1299, 24
        %v1331 = vpop.permute.xlu0 %1330
        %1332 = vrot.lane.b32.xlu0 %v1300, 24
        %v1333 = vpop.permute.xlu0 %1332
        %1334 = vrot.lane.b32.xlu0 %v1301, 24
        %v1335 = vpop.permute.xlu0 %1334
        %1336 = vrot.lane.b32.xlu0 %v1302, 24
        %v1337 = vpop.permute.xlu0 %1336
        %1338 = vrot.lane.b32.xlu0 %v1303, 24
        %v1339 = vpop.permute.xlu0 %1338
        %1340 = vrot.lane.b32.xlu0 %v1304, 24
        %v1341 = vpop.permute.xlu0 %1340
        %1342 = vrot.lane.b32.xlu0 %v1305, 24
        %v1343 = vpop.permute.xlu0 %1342
        %1344 = vrot.lane.b32.xlu0 %v1306, 24
        %v1345 = vpop.permute.xlu0 %1344
        %1346 = vrot.lane.b32.xlu0 %v1307, 24
        %v1347 = vpop.permute.xlu0 %1346
        %v1348 = vpack.c.b16 %v1260, %v1259
        %v1349 = vpack.c.b16 %v1263, %v1262
        %v1350 = vpack.c.b16 %v1266, %v1265
        %v1351 = vpack.c.b16 %v1269, %v1268
        %v1352 = vpack.c.b16 %v1272, %v1271
        %v1353 = vpack.c.b16 %v1275, %v1274
        %v1354 = vpack.c.b16 %v1278, %v1277
        %v1355 = vpack.c.b16 %v1281, %v1280
        %v1356 = vpack.c.b16 %v1284, %v1283
        %v1357 = vpack.c.b16 %v1287, %v1286
        %v1359 = vshrl.u32 %v1348, 16
        %v1361 = vrot.slane %v1359, 4
        %v1362 = vshll.u32 %v1348, 16
        %v1364 = vrot.slane %v1362, 5
        %v1365 = vor.u32 %v1361, %v1364
        %v1367 = vshrl.u32 %v1349, 16
        %v1369 = vrot.slane %v1367, 4
        %v1370 = vshll.u32 %v1349, 16
        %v1372 = vrot.slane %v1370, 5
        %v1373 = vor.u32 %v1369, %v1372
        %v1375 = vshrl.u32 %v1350, 16
        %v1377 = vrot.slane %v1375, 4
        %v1378 = vshll.u32 %v1350, 16
        %v1380 = vrot.slane %v1378, 5
        %v1381 = vor.u32 %v1377, %v1380
        %v1383 = vshrl.u32 %v1351, 16
        %v1385 = vrot.slane %v1383, 4
        %v1386 = vshll.u32 %v1351, 16
        %v1388 = vrot.slane %v1386, 5
        %v1389 = vor.u32 %v1385, %v1388
        %v1391 = vshrl.u32 %v1352, 16
        %v1393 = vrot.slane %v1391, 4
        %v1394 = vshll.u32 %v1352, 16
        %v1396 = vrot.slane %v1394, 5
        %v1397 = vor.u32 %v1393, %v1396
        %v1399 = vshrl.u32 %v1353, 16
        %v1401 = vrot.slane %v1399, 4
        %v1402 = vshll.u32 %v1353, 16
        %v1404 = vrot.slane %v1402, 5
        %v1405 = vor.u32 %v1401, %v1404
        %v1407 = vshrl.u32 %v1354, 16
        %v1409 = vrot.slane %v1407, 4
        %v1410 = vshll.u32 %v1354, 16
        %v1412 = vrot.slane %v1410, 5
        %v1413 = vor.u32 %v1409, %v1412
        %v1415 = vshrl.u32 %v1355, 16
        %v1417 = vrot.slane %v1415, 4
        %v1418 = vshll.u32 %v1355, 16
        %v1420 = vrot.slane %v1418, 5
        %v1421 = vor.u32 %v1417, %v1420
        %v1423 = vshrl.u32 %v1356, 16
        %v1425 = vrot.slane %v1423, 4
        %v1426 = vshll.u32 %v1356, 16
        %v1428 = vrot.slane %v1426, 5
        %v1429 = vor.u32 %v1425, %v1428
        %v1431 = vshrl.u32 %v1357, 16
        %v1433 = vrot.slane %v1431, 4
        %v1434 = vshll.u32 %v1357, 16
        %v1436 = vrot.slane %v1434, 5
        %v1437 = vor.u32 %v1433, %v1436
        %1438 = vrot.lane.b32.xlu0 %v1365, 32
        %v1439 = vpop.permute.xlu0 %1438
        %1440 = vrot.lane.b32.xlu0 %v1373, 32
        %v1441 = vpop.permute.xlu0 %1440
        %1442 = vrot.lane.b32.xlu0 %v1381, 32
        %v1443 = vpop.permute.xlu0 %1442
        %1444 = vrot.lane.b32.xlu0 %v1389, 32
        %v1445 = vpop.permute.xlu0 %1444
        %1446 = vrot.lane.b32.xlu0 %v1397, 32
        %v1447 = vpop.permute.xlu0 %1446
        %1448 = vrot.lane.b32.xlu0 %v1405, 32
        %v1449 = vpop.permute.xlu0 %1448
        %1450 = vrot.lane.b32.xlu0 %v1413, 32
        %v1451 = vpop.permute.xlu0 %1450
        %1452 = vrot.lane.b32.xlu0 %v1421, 32
        %v1453 = vpop.permute.xlu0 %1452
        %1454 = vrot.lane.b32.xlu0 %v1429, 32
        %v1455 = vpop.permute.xlu0 %1454
        %1456 = vrot.lane.b32.xlu0 %v1437, 32
        %v1457 = vpop.permute.xlu0 %1456
        %v1468 = vunpack.c.l.b16 %v887
        %v1469 = vunpack.c.l.b16 %v888
        %v1470 = vunpack.c.l.b16 %v889
        %v1471 = vunpack.c.l.b16 %v890
        %v1472 = vunpack.c.l.b16 %v891
        %v1473 = vunpack.c.l.b16 %v892
        %v1474 = vunpack.c.l.b16 %v893
        %v1475 = vunpack.c.l.b16 %v894
        %v1476 = vunpack.c.l.b16 %v895
        %v1477 = vunpack.c.l.b16 %v896
        %v1478 = vpack.c.b16 %v1468, %v1468
        %v1479 = vpack.c.b16 %v1469, %v1469
        %v1480 = vpack.c.b16 %v1470, %v1470
        %v1481 = vpack.c.b16 %v1471, %v1471
        %v1482 = vpack.c.b16 %v1472, %v1472
        %v1483 = vpack.c.b16 %v1473, %v1473
        %v1484 = vpack.c.b16 %v1474, %v1474
        %v1485 = vpack.c.b16 %v1475, %v1475
        %v1486 = vpack.c.b16 %v1476, %v1476
        %v1487 = vpack.c.b16 %v1477, %v1477
        %v1488 = vrot.slane %v1348, 5
        %v1489 = vrot.slane %v1478, 5
        %v1490 = vsel %vm1157, %v1488, %v1489
        %v1491 = vrot.slane %v1349, 5
        %v1492 = vrot.slane %v1479, 5
        %v1493 = vsel %vm1157, %v1491, %v1492
        %v1494 = vrot.slane %v1350, 5
        %v1495 = vrot.slane %v1480, 5
        %v1496 = vsel %vm1157, %v1494, %v1495
        %v1497 = vrot.slane %v1351, 5
        %v1498 = vrot.slane %v1481, 5
        %v1499 = vsel %vm1157, %v1497, %v1498
        %v1500 = vrot.slane %v1352, 5
        %v1501 = vrot.slane %v1482, 5
        %v1502 = vsel %vm1157, %v1500, %v1501
        %v1503 = vrot.slane %v1353, 5
        %v1504 = vrot.slane %v1483, 5
        %v1505 = vsel %vm1157, %v1503, %v1504
        %v1506 = vrot.slane %v1354, 5
        %v1507 = vrot.slane %v1484, 5
        %v1508 = vsel %vm1157, %v1506, %v1507
        %v1509 = vrot.slane %v1355, 5
        %v1510 = vrot.slane %v1485, 5
        %v1511 = vsel %vm1157, %v1509, %v1510
        %v1512 = vrot.slane %v1356, 5
        %v1513 = vrot.slane %v1486, 5
        %v1514 = vsel %vm1157, %v1512, %v1513
        %v1515 = vrot.slane %v1357, 5
        %v1516 = vrot.slane %v1487, 5
        %v1517 = vsel %vm1157, %v1515, %v1516
        %1518 = vrot.lane.b32.xlu0 %v1488, 40
        %v1519 = vpop.permute.xlu0 %1518
        %1520 = vrot.lane.b32.xlu0 %v1490, 40
        %v1521 = vpop.permute.xlu0 %1520
        %1522 = vrot.lane.b32.xlu0 %v1491, 40
        %v1523 = vpop.permute.xlu0 %1522
        %1524 = vrot.lane.b32.xlu0 %v1493, 40
        %v1525 = vpop.permute.xlu0 %1524
        %1526 = vrot.lane.b32.xlu0 %v1494, 40
        %v1527 = vpop.permute.xlu0 %1526
        %1528 = vrot.lane.b32.xlu0 %v1496, 40
        %v1529 = vpop.permute.xlu0 %1528
        %1530 = vrot.lane.b32.xlu0 %v1497, 40
        %v1531 = vpop.permute.xlu0 %1530
        %1532 = vrot.lane.b32.xlu0 %v1499, 40
        %v1533 = vpop.permute.xlu0 %1532
        %1534 = vrot.lane.b32.xlu0 %v1500, 40
        %v1535 = vpop.permute.xlu0 %1534
        %1536 = vrot.lane.b32.xlu0 %v1502, 40
        %v1537 = vpop.permute.xlu0 %1536
        %1538 = vrot.lane.b32.xlu0 %v1503, 40
        %v1539 = vpop.permute.xlu0 %1538
        %1540 = vrot.lane.b32.xlu0 %v1505, 40
        %v1541 = vpop.permute.xlu0 %1540
        %1542 = vrot.lane.b32.xlu0 %v1506, 40
        %v1543 = vpop.permute.xlu0 %1542
        %1544 = vrot.lane.b32.xlu0 %v1508, 40
        %v1545 = vpop.permute.xlu0 %1544
        %1546 = vrot.lane.b32.xlu0 %v1509, 40
        %v1547 = vpop.permute.xlu0 %1546
        %1548 = vrot.lane.b32.xlu0 %v1511, 40
        %v1549 = vpop.permute.xlu0 %1548
        %1550 = vrot.lane.b32.xlu0 %v1512, 40
        %v1551 = vpop.permute.xlu0 %1550
        %1552 = vrot.lane.b32.xlu0 %v1514, 40
        %v1553 = vpop.permute.xlu0 %1552
        %1554 = vrot.lane.b32.xlu0 %v1515, 40
        %v1555 = vpop.permute.xlu0 %1554
        %1556 = vrot.lane.b32.xlu0 %v1517, 40
        %v1557 = vpop.permute.xlu0 %1556
        %v1588 = vunpack.c.l.b16 %v897
        %v1589 = vunpack.c.l.b16 %v898
        %v1590 = vunpack.c.l.b16 %v899
        %v1591 = vunpack.c.l.b16 %v900
        %v1592 = vunpack.c.l.b16 %v901
        %v1593 = vunpack.c.l.b16 %v902
        %v1594 = vunpack.c.l.b16 %v903
        %v1595 = vunpack.c.l.b16 %v904
        %v1596 = vunpack.c.l.b16 %v905
        %v1597 = vunpack.c.l.b16 %v906
        %v1598 = vunpack.c.l.b16 %v907
        %v1599 = vunpack.c.l.b16 %v908
        %v1600 = vunpack.c.l.b16 %v909
        %v1601 = vunpack.c.l.b16 %v910
        %v1602 = vunpack.c.l.b16 %v911
        %v1603 = vunpack.c.l.b16 %v912
        %v1604 = vunpack.c.l.b16 %v913
        %v1605 = vunpack.c.l.b16 %v914
        %v1606 = vunpack.c.l.b16 %v915
        %v1607 = vunpack.c.l.b16 %v916
        %v1608 = vunpack.c.l.b16 %v917
        %v1609 = vunpack.c.l.b16 %v918
        %v1610 = vunpack.c.l.b16 %v919
        %v1611 = vunpack.c.l.b16 %v920
        %v1612 = vunpack.c.l.b16 %v921
        %v1613 = vunpack.c.l.b16 %v922
        %v1614 = vunpack.c.l.b16 %v923
        %v1615 = vunpack.c.l.b16 %v924
        %v1616 = vunpack.c.l.b16 %v925
        %v1617 = vunpack.c.l.b16 %v926
        %v1618 = vpack.c.b16 %v1589, %v1588
        %v1619 = vpack.c.b16 %v1590, %v1590
        %v1620 = vpack.c.b16 %v1592, %v1591
        %v1621 = vpack.c.b16 %v1593, %v1593
        %v1622 = vpack.c.b16 %v1595, %v1594
        %v1623 = vpack.c.b16 %v1596, %v1596
        %v1624 = vpack.c.b16 %v1598, %v1597
        %v1625 = vpack.c.b16 %v1599, %v1599
        %v1626 = vpack.c.b16 %v1601, %v1600
        %v1627 = vpack.c.b16 %v1602, %v1602
        %v1628 = vpack.c.b16 %v1604, %v1603
        %v1629 = vpack.c.b16 %v1605, %v1605
        %v1630 = vpack.c.b16 %v1607, %v1606
        %v1631 = vpack.c.b16 %v1608, %v1608
        %v1632 = vpack.c.b16 %v1610, %v1609
        %v1633 = vpack.c.b16 %v1611, %v1611
        %v1634 = vpack.c.b16 %v1613, %v1612
        %v1635 = vpack.c.b16 %v1614, %v1614
        %v1636 = vpack.c.b16 %v1616, %v1615
        %v1637 = vpack.c.b16 %v1617, %v1617
        %1638 = vrot.lane.b32.xlu0 %v1618, 48
        %v1639 = vpop.permute.xlu0 %1638
        %1640 = vrot.lane.b32.xlu0 %v1619, 48
        %v1641 = vpop.permute.xlu0 %1640
        %1642 = vrot.lane.b32.xlu0 %v1620, 48
        %v1643 = vpop.permute.xlu0 %1642
        %1644 = vrot.lane.b32.xlu0 %v1621, 48
        %v1645 = vpop.permute.xlu0 %1644
        %1646 = vrot.lane.b32.xlu0 %v1622, 48
        %v1647 = vpop.permute.xlu0 %1646
        %1648 = vrot.lane.b32.xlu0 %v1623, 48
        %v1649 = vpop.permute.xlu0 %1648
        %1650 = vrot.lane.b32.xlu0 %v1624, 48
        %v1651 = vpop.permute.xlu0 %1650
        %1652 = vrot.lane.b32.xlu0 %v1625, 48
        %v1653 = vpop.permute.xlu0 %1652
        %1654 = vrot.lane.b32.xlu0 %v1626, 48
        %v1655 = vpop.permute.xlu0 %1654
        %1656 = vrot.lane.b32.xlu0 %v1627, 48
        %v1657 = vpop.permute.xlu0 %1656
        %1658 = vrot.lane.b32.xlu0 %v1628, 48
        %v1659 = vpop.permute.xlu0 %1658
        %1660 = vrot.lane.b32.xlu0 %v1629, 48
        %v1661 = vpop.permute.xlu0 %1660
        %1662 = vrot.lane.b32.xlu0 %v1630, 48
        %v1663 = vpop.permute.xlu0 %1662
        %1664 = vrot.lane.b32.xlu0 %v1631, 48
        %v1665 = vpop.permute.xlu0 %1664
        %1666 = vrot.lane.b32.xlu0 %v1632, 48
        %v1667 = vpop.permute.xlu0 %1666
        %1668 = vrot.lane.b32.xlu0 %v1633, 48
        %v1669 = vpop.permute.xlu0 %1668
        %1670 = vrot.lane.b32.xlu0 %v1634, 48
        %v1671 = vpop.permute.xlu0 %1670
        %1672 = vrot.lane.b32.xlu0 %v1635, 48
        %v1673 = vpop.permute.xlu0 %1672
        %1674 = vrot.lane.b32.xlu0 %v1636, 48
        %v1675 = vpop.permute.xlu0 %1674
        %1676 = vrot.lane.b32.xlu0 %v1637, 48
        %v1677 = vpop.permute.xlu0 %1676
        %v1678 = vpack.c.b16 %v1590, %v1589
        %v1679 = vpack.c.b16 %v1593, %v1592
        %v1680 = vpack.c.b16 %v1596, %v1595
        %v1681 = vpack.c.b16 %v1599, %v1598
        %v1682 = vpack.c.b16 %v1602, %v1601
        %v1683 = vpack.c.b16 %v1605, %v1604
        %v1684 = vpack.c.b16 %v1608, %v1607
        %v1685 = vpack.c.b16 %v1611, %v1610
        %v1686 = vpack.c.b16 %v1614, %v1613
        %v1687 = vpack.c.b16 %v1617, %v1616
        %v1689 = vshrl.u32 %v1678, 16
        %v1691 = vrot.slane %v1689, 4
        %v1692 = vshll.u32 %v1678, 16
        %v1694 = vrot.slane %v1692, 5
        %v1695 = vor.u32 %v1691, %v1694
        %v1697 = vshrl.u32 %v1679, 16
        %v1699 = vrot.slane %v1697, 4
        %v1700 = vshll.u32 %v1679, 16
        %v1702 = vrot.slane %v1700, 5
        %v1703 = vor.u32 %v1699, %v1702
        %v1705 = vshrl.u32 %v1680, 16
        %v1707 = vrot.slane %v1705, 4
        %v1708 = vshll.u32 %v1680, 16
        %v1710 = vrot.slane %v1708, 5
        %v1711 = vor.u32 %v1707, %v1710
        %v1713 = vshrl.u32 %v1681, 16
        %v1715 = vrot.slane %v1713, 4
        %v1716 = vshll.u32 %v1681, 16
        %v1718 = vrot.slane %v1716, 5
        %v1719 = vor.u32 %v1715, %v1718
        %v1721 = vshrl.u32 %v1682, 16
        %v1723 = vrot.slane %v1721, 4
        %v1724 = vshll.u32 %v1682, 16
        %v1726 = vrot.slane %v1724, 5
        %v1727 = vor.u32 %v1723, %v1726
        %v1729 = vshrl.u32 %v1683, 16
        %v1731 = vrot.slane %v1729, 4
        %v1732 = vshll.u32 %v1683, 16
        %v1734 = vrot.slane %v1732, 5
        %v1735 = vor.u32 %v1731, %v1734
        %v1737 = vshrl.u32 %v1684, 16
        %v1739 = vrot.slane %v1737, 4
        %v1740 = vshll.u32 %v1684, 16
        %v1742 = vrot.slane %v1740, 5
        %v1743 = vor.u32 %v1739, %v1742
        %v1745 = vshrl.u32 %v1685, 16
        %v1747 = vrot.slane %v1745, 4
        %v1748 = vshll.u32 %v1685, 16
        %v1750 = vrot.slane %v1748, 5
        %v1751 = vor.u32 %v1747, %v1750
        %v1753 = vshrl.u32 %v1686, 16
        %v1755 = vrot.slane %v1753, 4
        %v1756 = vshll.u32 %v1686, 16
        %v1758 = vrot.slane %v1756, 5
        %v1759 = vor.u32 %v1755, %v1758
        %v1761 = vshrl.u32 %v1687, 16
        %v1763 = vrot.slane %v1761, 4
        %v1764 = vshll.u32 %v1687, 16
        %v1766 = vrot.slane %v1764, 5
        %v1767 = vor.u32 %v1763, %v1766
        %1768 = vrot.lane.b32.xlu0 %v1695, 56
        %v1769 = vpop.permute.xlu0 %1768
        %1770 = vrot.lane.b32.xlu0 %v1703, 56
        %v1771 = vpop.permute.xlu0 %1770
        %1772 = vrot.lane.b32.xlu0 %v1711, 56
        %v1773 = vpop.permute.xlu0 %1772
        %1774 = vrot.lane.b32.xlu0 %v1719, 56
        %v1775 = vpop.permute.xlu0 %1774
        %1776 = vrot.lane.b32.xlu0 %v1727, 56
        %v1777 = vpop.permute.xlu0 %1776
        %1778 = vrot.lane.b32.xlu0 %v1735, 56
        %v1779 = vpop.permute.xlu0 %1778
        %1780 = vrot.lane.b32.xlu0 %v1743, 56
        %v1781 = vpop.permute.xlu0 %1780
        %1782 = vrot.lane.b32.xlu0 %v1751, 56
        %v1783 = vpop.permute.xlu0 %1782
        %1784 = vrot.lane.b32.xlu0 %v1759, 56
        %v1785 = vpop.permute.xlu0 %1784
        %1786 = vrot.lane.b32.xlu0 %v1767, 56
        %v1787 = vpop.permute.xlu0 %1786
        %v1798 = vunpack.c.l.b16 %v927
        %v1799 = vunpack.c.l.b16 %v928
        %v1800 = vunpack.c.l.b16 %v929
        %v1801 = vunpack.c.l.b16 %v930
        %v1802 = vunpack.c.l.b16 %v931
        %v1803 = vunpack.c.l.b16 %v932
        %v1804 = vunpack.c.l.b16 %v933
        %v1805 = vunpack.c.l.b16 %v934
        %v1806 = vunpack.c.l.b16 %v935
        %v1807 = vunpack.c.l.b16 %v936
        %v1808 = vpack.c.b16 %v1798, %v1798
        %v1809 = vpack.c.b16 %v1799, %v1799
        %v1810 = vpack.c.b16 %v1800, %v1800
        %v1811 = vpack.c.b16 %v1801, %v1801
        %v1812 = vpack.c.b16 %v1802, %v1802
        %v1813 = vpack.c.b16 %v1803, %v1803
        %v1814 = vpack.c.b16 %v1804, %v1804
        %v1815 = vpack.c.b16 %v1805, %v1805
        %v1816 = vpack.c.b16 %v1806, %v1806
        %v1817 = vpack.c.b16 %v1807, %v1807
        %v1818 = vrot.slane %v1678, 5
        %v1819 = vrot.slane %v1808, 5
        %v1820 = vsel %vm1157, %v1818, %v1819
        %v1821 = vrot.slane %v1679, 5
        %v1822 = vrot.slane %v1809, 5
        %v1823 = vsel %vm1157, %v1821, %v1822
        %v1824 = vrot.slane %v1680, 5
        %v1825 = vrot.slane %v1810, 5
        %v1826 = vsel %vm1157, %v1824, %v1825
        %v1827 = vrot.slane %v1681, 5
        %v1828 = vrot.slane %v1811, 5
        %v1829 = vsel %vm1157, %v1827, %v1828
        %v1830 = vrot.slane %v1682, 5
        %v1831 = vrot.slane %v1812, 5
        %v1832 = vsel %vm1157, %v1830, %v1831
        %v1833 = vrot.slane %v1683, 5
        %v1834 = vrot.slane %v1813, 5
        %v1835 = vsel %vm1157, %v1833, %v1834
        %v1836 = vrot.slane %v1684, 5
        %v1837 = vrot.slane %v1814, 5
        %v1838 = vsel %vm1157, %v1836, %v1837
        %v1839 = vrot.slane %v1685, 5
        %v1840 = vrot.slane %v1815, 5
        %v1841 = vsel %vm1157, %v1839, %v1840
        %v1842 = vrot.slane %v1686, 5
        %v1843 = vrot.slane %v1816, 5
        %v1844 = vsel %vm1157, %v1842, %v1843
        %v1845 = vrot.slane %v1687, 5
        %v1846 = vrot.slane %v1817, 5
        %v1847 = vsel %vm1157, %v1845, %v1846
        %1848 = vrot.lane.b32.xlu0 %v1818, 64
        %v1849 = vpop.permute.xlu0 %1848
        %1850 = vrot.lane.b32.xlu0 %v1820, 64
        %v1851 = vpop.permute.xlu0 %1850
        %1852 = vrot.lane.b32.xlu0 %v1821, 64
        %v1853 = vpop.permute.xlu0 %1852
        %1854 = vrot.lane.b32.xlu0 %v1823, 64
        %v1855 = vpop.permute.xlu0 %1854
        %1856 = vrot.lane.b32.xlu0 %v1824, 64
        %v1857 = vpop.permute.xlu0 %1856
        %1858 = vrot.lane.b32.xlu0 %v1826, 64
        %v1859 = vpop.permute.xlu0 %1858
        %1860 = vrot.lane.b32.xlu0 %v1827, 64
        %v1861 = vpop.permute.xlu0 %1860
        %1862 = vrot.lane.b32.xlu0 %v1829, 64
        %v1863 = vpop.permute.xlu0 %1862
        %1864 = vrot.lane.b32.xlu0 %v1830, 64
        %v1865 = vpop.permute.xlu0 %1864
        %1866 = vrot.lane.b32.xlu0 %v1832, 64
        %v1867 = vpop.permute.xlu0 %1866
        %1868 = vrot.lane.b32.xlu0 %v1833, 64
        %v1869 = vpop.permute.xlu0 %1868
        %1870 = vrot.lane.b32.xlu0 %v1835, 64
        %v1871 = vpop.permute.xlu0 %1870
        %1872 = vrot.lane.b32.xlu0 %v1836, 64
        %v1873 = vpop.permute.xlu0 %1872
        %1874 = vrot.lane.b32.xlu0 %v1838, 64
        %v1875 = vpop.permute.xlu0 %1874
        %1876 = vrot.lane.b32.xlu0 %v1839, 64
        %v1877 = vpop.permute.xlu0 %1876
        %1878 = vrot.lane.b32.xlu0 %v1841, 64
        %v1879 = vpop.permute.xlu0 %1878
        %1880 = vrot.lane.b32.xlu0 %v1842, 64
        %v1881 = vpop.permute.xlu0 %1880
        %1882 = vrot.lane.b32.xlu0 %v1844, 64
        %v1883 = vpop.permute.xlu0 %1882
        %1884 = vrot.lane.b32.xlu0 %v1845, 64
        %v1885 = vpop.permute.xlu0 %1884
        %1886 = vrot.lane.b32.xlu0 %v1847, 64
        %v1887 = vpop.permute.xlu0 %1886
        %vm1888 = vcmask 64512
        %v1891 = vsel %vm1888, %v997, %v1108
        %v1893 = vsel %vm1888, %v998, %v1108
        %v1896 = vsel %vm1888, %v999, %v1110
        %v1898 = vsel %vm1888, %v1000, %v1110
        %v1901 = vsel %vm1888, %v1001, %v1112
        %v1903 = vsel %vm1888, %v1002, %v1112
        %v1906 = vsel %vm1888, %v1003, %v1114
        %v1908 = vsel %vm1888, %v1004, %v1114
        %v1911 = vsel %vm1888, %v1005, %v1116
        %v1913 = vsel %vm1888, %v1006, %v1116
        %v1916 = vsel %vm1888, %v1007, %v1118
        %v1918 = vsel %vm1888, %v1008, %v1118
        %v1921 = vsel %vm1888, %v1009, %v1120
        %v1923 = vsel %vm1888, %v1010, %v1120
        %v1926 = vsel %vm1888, %v1011, %v1122
        %v1928 = vsel %vm1888, %v1012, %v1122
        %v1931 = vsel %vm1888, %v1013, %v1124
        %v1933 = vsel %vm1888, %v1014, %v1124
        %v1936 = vsel %vm1888, %v1015, %v1126
        %v1938 = vsel %vm1888, %v1016, %v1126
        %vm1939 = vcmask 130048
        %v1941 = vsel %vm1939, %v1891, %v1189
        %v1943 = vsel %vm1939, %v1893, %v1191
        %v1945 = vsel %vm1939, %v1896, %v1193
        %v1947 = vsel %vm1939, %v1898, %v1195
        %v1949 = vsel %vm1939, %v1901, %v1197
        %v1951 = vsel %vm1939, %v1903, %v1199
        %v1953 = vsel %vm1939, %v1906, %v1201
        %v1955 = vsel %vm1939, %v1908, %v1203
        %v1957 = vsel %vm1939, %v1911, %v1205
        %v1959 = vsel %vm1939, %v1913, %v1207
        %v1961 = vsel %vm1939, %v1916, %v1209
        %v1963 = vsel %vm1939, %v1918, %v1211
        %v1965 = vsel %vm1939, %v1921, %v1213
        %v1967 = vsel %vm1939, %v1923, %v1215
        %v1969 = vsel %vm1939, %v1926, %v1217
        %v1971 = vsel %vm1939, %v1928, %v1219
        %v1973 = vsel %vm1939, %v1931, %v1221
        %v1975 = vsel %vm1939, %v1933, %v1223
        %v1977 = vsel %vm1939, %v1936, %v1225
        %v1979 = vsel %vm1939, %v1938, %v1227
        %vm1980 = vcmask 195584
        %v1982 = vsel %vm1980, %v1941, %v1309
        %v1984 = vsel %vm1980, %v1943, %v1311
        %v1986 = vsel %vm1980, %v1945, %v1313
        %v1988 = vsel %vm1980, %v1947, %v1315
        %v1990 = vsel %vm1980, %v1949, %v1317
        %v1992 = vsel %vm1980, %v1951, %v1319
        %v1994 = vsel %vm1980, %v1953, %v1321
        %v1996 = vsel %vm1980, %v1955, %v1323
        %v1998 = vsel %vm1980, %v1957, %v1325
        %v2000 = vsel %vm1980, %v1959, %v1327
        %v2002 = vsel %vm1980, %v1961, %v1329
        %v2004 = vsel %vm1980, %v1963, %v1331
        %v2006 = vsel %vm1980, %v1965, %v1333
        %v2008 = vsel %vm1980, %v1967, %v1335
        %v2010 = vsel %vm1980, %v1969, %v1337
        %v2012 = vsel %vm1980, %v1971, %v1339
        %v2014 = vsel %vm1980, %v1973, %v1341
        %v2016 = vsel %vm1980, %v1975, %v1343
        %v2018 = vsel %vm1980, %v1977, %v1345
        %v2020 = vsel %vm1980, %v1979, %v1347
        %vm2021 = vcmask 261120
        %v2023 = vsel %vm2021, %v1982, %v1439
        %v2024 = vsel %vm2021, %v1984, %v1439
        %v2026 = vsel %vm2021, %v1986, %v1441
        %v2027 = vsel %vm2021, %v1988, %v1441
        %v2029 = vsel %vm2021, %v1990, %v1443
        %v2030 = vsel %vm2021, %v1992, %v1443
        %v2032 = vsel %vm2021, %v1994, %v1445
        %v2033 = vsel %vm2021, %v1996, %v1445
        %v2035 = vsel %vm2021, %v1998, %v1447
        %v2036 = vsel %vm2021, %v2000, %v1447
        %v2038 = vsel %vm2021, %v2002, %v1449
        %v2039 = vsel %vm2021, %v2004, %v1449
        %v2041 = vsel %vm2021, %v2006, %v1451
        %v2042 = vsel %vm2021, %v2008, %v1451
        %v2044 = vsel %vm2021, %v2010, %v1453
        %v2045 = vsel %vm2021, %v2012, %v1453
        %v2047 = vsel %vm2021, %v2014, %v1455
        %v2048 = vsel %vm2021, %v2016, %v1455
        %v2050 = vsel %vm2021, %v2018, %v1457
        %v2051 = vsel %vm2021, %v2020, %v1457
        %vm2052 = vcmask 326656
        %v2054 = vsel %vm2052, %v2023, %v1519
        %v2056 = vsel %vm2052, %v2024, %v1521
        %v2058 = vsel %vm2052, %v2026, %v1523
        %v2060 = vsel %vm2052, %v2027, %v1525
        %v2062 = vsel %vm2052, %v2029, %v1527
        %v2064 = vsel %vm2052, %v2030, %v1529
        %v2066 = vsel %vm2052, %v2032, %v1531
        %v2068 = vsel %vm2052, %v2033, %v1533
        %v2070 = vsel %vm2052, %v2035, %v1535
        %v2072 = vsel %vm2052, %v2036, %v1537
        %v2074 = vsel %vm2052, %v2038, %v1539
        %v2076 = vsel %vm2052, %v2039, %v1541
        %v2078 = vsel %vm2052, %v2041, %v1543
        %v2080 = vsel %vm2052, %v2042, %v1545
        %v2082 = vsel %vm2052, %v2044, %v1547
        %v2084 = vsel %vm2052, %v2045, %v1549
        %v2086 = vsel %vm2052, %v2047, %v1551
        %v2088 = vsel %vm2052, %v2048, %v1553
        %v2090 = vsel %vm2052, %v2050, %v1555
        %v2092 = vsel %vm2052, %v2051, %v1557
        %vm2093 = vcmask 392192
        %v2095 = vsel %vm2093, %v2054, %v1639
        %v2097 = vsel %vm2093, %v2056, %v1641
        %v2099 = vsel %vm2093, %v2058, %v1643
        %v2101 = vsel %vm2093, %v2060, %v1645
        %v2103 = vsel %vm2093, %v2062, %v1647
        %v2105 = vsel %vm2093, %v2064, %v1649
        %v2107 = vsel %vm2093, %v2066, %v1651
        %v2109 = vsel %vm2093, %v2068, %v1653
        %v2111 = vsel %vm2093, %v2070, %v1655
        %v2113 = vsel %vm2093, %v2072, %v1657
        %v2115 = vsel %vm2093, %v2074, %v1659
        %v2117 = vsel %vm2093, %v2076, %v1661
        %v2119 = vsel %vm2093, %v2078, %v1663
        %v2121 = vsel %vm2093, %v2080, %v1665
        %v2123 = vsel %vm2093, %v2082, %v1667
        %v2125 = vsel %vm2093, %v2084, %v1669
        %v2127 = vsel %vm2093, %v2086, %v1671
        %v2129 = vsel %vm2093, %v2088, %v1673
        %v2131 = vsel %vm2093, %v2090, %v1675
        %v2133 = vsel %vm2093, %v2092, %v1677
        %vm2134 = vcmask 457728
        %v2136 = vsel %vm2134, %v2095, %v1769
        %v2137 = vsel %vm2134, %v2097, %v1769
        %v2139 = vsel %vm2134, %v2099, %v1771
        %v2140 = vsel %vm2134, %v2101, %v1771
        %v2142 = vsel %vm2134, %v2103, %v1773
        %v2143 = vsel %vm2134, %v2105, %v1773
        %v2145 = vsel %vm2134, %v2107, %v1775
        %v2146 = vsel %vm2134, %v2109, %v1775
        %v2148 = vsel %vm2134, %v2111, %v1777
        %v2149 = vsel %vm2134, %v2113, %v1777
        %v2151 = vsel %vm2134, %v2115, %v1779
        %v2152 = vsel %vm2134, %v2117, %v1779
        %v2154 = vsel %vm2134, %v2119, %v1781
        %v2155 = vsel %vm2134, %v2121, %v1781
        %v2157 = vsel %vm2134, %v2123, %v1783
        %v2158 = vsel %vm2134, %v2125, %v1783
        %v2160 = vsel %vm2134, %v2127, %v1785
        %v2161 = vsel %vm2134, %v2129, %v1785
        %v2163 = vsel %vm2134, %v2131, %v1787
        %v2164 = vsel %vm2134, %v2133, %v1787
        %vm2165 = vcmask 523264
        %v2167 = vsel %vm2165, %v2136, %v1849
        %v2169 = vsel %vm2165, %v2137, %v1851
        %v2171 = vsel %vm2165, %v2139, %v1853
        %v2173 = vsel %vm2165, %v2140, %v1855
        %v2175 = vsel %vm2165, %v2142, %v1857
        %v2177 = vsel %vm2165, %v2143, %v1859
        %v2179 = vsel %vm2165, %v2145, %v1861
        %v2181 = vsel %vm2165, %v2146, %v1863
        %v2183 = vsel %vm2165, %v2148, %v1865
        %v2185 = vsel %vm2165, %v2149, %v1867
        %v2187 = vsel %vm2165, %v2151, %v1869
        %v2189 = vsel %vm2165, %v2152, %v1871
        %v2191 = vsel %vm2165, %v2154, %v1873
        %v2193 = vsel %vm2165, %v2155, %v1875
        %v2195 = vsel %vm2165, %v2157, %v1877
        %v2197 = vsel %vm2165, %v2158, %v1879
        %v2199 = vsel %vm2165, %v2160, %v1881
        %v2201 = vsel %vm2165, %v2161, %v1883
        %v2203 = vsel %vm2165, %v2163, %v1885
        %v2205 = vsel %vm2165, %v2164, %v1887
        %vm2206 = vsmask.f32 4352
        %v2207 = vshrl.u32 %v2167, 16
        %v2209 = vrot.slane %v2207, 3
        %v2210 = vshll.u32 %v2167, 16
        %v2212 = vrot.slane %v2210, 4
        %v2213 = vor.u32 %v2209, %v2212
        %v2214 = vshrl.u32 %v2169, 16
        %v2216 = vrot.slane %v2214, 3
        %v2217 = vshll.u32 %v2169, 16
        %v2219 = vrot.slane %v2217, 4
        %v2220 = vor.u32 %v2216, %v2219
        %v2221 = vsel %vm2206, %v2213, %v2220
        %v2222 = vshrl.u32 %v2171, 16
        %v2224 = vrot.slane %v2222, 3
        %v2225 = vshll.u32 %v2171, 16
        %v2227 = vrot.slane %v2225, 4
        %v2228 = vor.u32 %v2224, %v2227
        %v2229 = vshrl.u32 %v2173, 16
        %v2231 = vrot.slane %v2229, 3
        %v2232 = vshll.u32 %v2173, 16
        %v2234 = vrot.slane %v2232, 4
        %v2235 = vor.u32 %v2231, %v2234
        %v2236 = vsel %vm2206, %v2228, %v2235
        %v2237 = vshrl.u32 %v2175, 16
        %v2239 = vrot.slane %v2237, 3
        %v2240 = vshll.u32 %v2175, 16
        %v2242 = vrot.slane %v2240, 4
        %v2243 = vor.u32 %v2239, %v2242
        %v2244 = vshrl.u32 %v2177, 16
        %v2246 = vrot.slane %v2244, 3
        %v2247 = vshll.u32 %v2177, 16
        %v2249 = vrot.slane %v2247, 4
        %v2250 = vor.u32 %v2246, %v2249
        %v2251 = vsel %vm2206, %v2243, %v2250
        %v2252 = vshrl.u32 %v2179, 16
        %v2254 = vrot.slane %v2252, 3
        %v2255 = vshll.u32 %v2179, 16
        %v2257 = vrot.slane %v2255, 4
        %v2258 = vor.u32 %v2254, %v2257
        %v2259 = vshrl.u32 %v2181, 16
        %v2261 = vrot.slane %v2259, 3
        %v2262 = vshll.u32 %v2181, 16
        %v2264 = vrot.slane %v2262, 4
        %v2265 = vor.u32 %v2261, %v2264
        %v2266 = vsel %vm2206, %v2258, %v2265
        %v2267 = vshrl.u32 %v2183, 16
        %v2269 = vrot.slane %v2267, 3
        %v2270 = vshll.u32 %v2183, 16
        %v2272 = vrot.slane %v2270, 4
        %v2273 = vor.u32 %v2269, %v2272
        %v2274 = vshrl.u32 %v2185, 16
        %v2276 = vrot.slane %v2274, 3
        %v2277 = vshll.u32 %v2185, 16
        %v2279 = vrot.slane %v2277, 4
        %v2280 = vor.u32 %v2276, %v2279
        %v2281 = vsel %vm2206, %v2273, %v2280
        %v2282 = vshrl.u32 %v2187, 16
        %v2284 = vrot.slane %v2282, 3
        %v2285 = vshll.u32 %v2187, 16
        %v2287 = vrot.slane %v2285, 4
        %v2288 = vor.u32 %v2284, %v2287
        %v2289 = vshrl.u32 %v2189, 16
        %v2291 = vrot.slane %v2289, 3
        %v2292 = vshll.u32 %v2189, 16
        %v2294 = vrot.slane %v2292, 4
        %v2295 = vor.u32 %v2291, %v2294
        %v2296 = vsel %vm2206, %v2288, %v2295
        %v2297 = vshrl.u32 %v2191, 16
        %v2299 = vrot.slane %v2297, 3
        %v2300 = vshll.u32 %v2191, 16
        %v2302 = vrot.slane %v2300, 4
        %v2303 = vor.u32 %v2299, %v2302
        %v2304 = vshrl.u32 %v2193, 16
        %v2306 = vrot.slane %v2304, 3
        %v2307 = vshll.u32 %v2193, 16
        %v2309 = vrot.slane %v2307, 4
        %v2310 = vor.u32 %v2306, %v2309
        %v2311 = vsel %vm2206, %v2303, %v2310
        %v2312 = vshrl.u32 %v2195, 16
        %v2314 = vrot.slane %v2312, 3
        %v2315 = vshll.u32 %v2195, 16
        %v2317 = vrot.slane %v2315, 4
        %v2318 = vor.u32 %v2314, %v2317
        %v2319 = vshrl.u32 %v2197, 16
        %v2321 = vrot.slane %v2319, 3
        %v2322 = vshll.u32 %v2197, 16
        %v2324 = vrot.slane %v2322, 4
        %v2325 = vor.u32 %v2321, %v2324
        %v2326 = vsel %vm2206, %v2318, %v2325
        %v2327 = vshrl.u32 %v2199, 16
        %v2329 = vrot.slane %v2327, 3
        %v2330 = vshll.u32 %v2199, 16
        %v2332 = vrot.slane %v2330, 4
        %v2333 = vor.u32 %v2329, %v2332
        %v2334 = vshrl.u32 %v2201, 16
        %v2336 = vrot.slane %v2334, 3
        %v2337 = vshll.u32 %v2201, 16
        %v2339 = vrot.slane %v2337, 4
        %v2340 = vor.u32 %v2336, %v2339
        %v2341 = vsel %vm2206, %v2333, %v2340
        %v2342 = vshrl.u32 %v2203, 16
        %v2344 = vrot.slane %v2342, 3
        %v2345 = vshll.u32 %v2203, 16
        %v2347 = vrot.slane %v2345, 4
        %v2348 = vor.u32 %v2344, %v2347
        %v2349 = vshrl.u32 %v2205, 16
        %v2351 = vrot.slane %v2349, 3
        %v2352 = vshll.u32 %v2205, 16
        %v2354 = vrot.slane %v2352, 4
        %v2355 = vor.u32 %v2351, %v2354
        %v2356 = vsel %vm2206, %v2348, %v2355
        %v2357 = vld [vmem:[#allocation10] sm:$0xf]
        %v2358 = vld [vmem:[#allocation10 + $0x4] sm:$0xf]
        %v2359 = vld [vmem:[#allocation10 + $0x8] sm:$0xf]
        %v2360 = vld [vmem:[#allocation10 + $0xc] sm:$0xf]
        %v2361 = vld [vmem:[#allocation10 + $0x10] sm:$0xf]
        %v2362 = vld [vmem:[#allocation10 + $0x14] sm:$0xf]
        %v2363 = vld [vmem:[#allocation10 + $0x18] sm:$0xf]
        %v2364 = vld [vmem:[#allocation10 + $0x1c] sm:$0xf]
        %v2365 = vld [vmem:[#allocation10 + $0x20] sm:$0xf]
        %v2375 = vunpack.c.l.b16 %v2357
        %v2376 = vunpack.c.l.b16 %v2358
        %v2377 = vunpack.c.l.b16 %v2359
        %v2378 = vunpack.c.l.b16 %v2360
        %v2379 = vunpack.c.l.b16 %v2361
        %v2380 = vunpack.c.l.b16 %v2362
        %v2381 = vunpack.c.l.b16 %v2363
        %v2382 = vunpack.c.l.b16 %v2364
        %v2383 = vunpack.c.l.b16 %v2365
        %v2384 = vpack.c.b16 %v2376, %v2375
        %v2385 = vpack.c.b16 %v2378, %v2377
        %v2386 = vpack.c.b16 %v2380, %v2379
        %v2387 = vpack.c.b16 %v2382, %v2381
        %v2388 = vpack.c.b16 %v2383, %v2383
        %vm2393 = vcmask 588800
        %v2395 = vsel %vm2393, %v2221, 0
        %v2398 = vsel %vm2393, %v2236, 0
        %v2401 = vsel %vm2393, %v2251, 0
        %v2404 = vsel %vm2393, %v2266, 0
        %v2407 = vsel %vm2393, %v2281, 0
        %v2410 = vsel %vm2393, %v2296, 0
        %v2413 = vsel %vm2393, %v2311, 0
        %v2416 = vsel %vm2393, %v2326, 0
        %v2419 = vsel %vm2393, %v2341, 0
        %v2422 = vsel %vm2393, %v2356, 0
        %vm2424 = vcmask 1043456
        %v2426 = vsel %vm2424, %v2388, 0
        %2428 = vmatprep.subr.bf16.mxu0 0
        %2429 = vmatpush1.bf16.msra.mxu0 %v2384
        %2430 = vmatprep.subr.bf16.mxu0 0
        %2431 = vmatpush1.bf16.msra.mxu0 %v2385
        %2432 = vmatprep.subr.bf16.mxu0 0
        %2433 = vmatpush1.bf16.msra.mxu0 %v2386
        %2434 = vmatprep.subr.bf16.mxu0 0
        %2435 = vmatpush1.bf16.msra.mxu0 %v2387
        %2436 = vmatprep.subr.bf16.mxu0 0
        %2437 = vmatpush1.bf16.msra.mxu0 %v2426
        %2438 = vmatprep.subr.bf16.mxu0 0
        %2439 = vmatpush1.bf16.msra.mxu0 0
        %2440 = vmatprep.subr.bf16.mxu0 0
        %2441 = vmatpush1.bf16.msra.mxu0 0
        %2442 = vmatprep.subr.bf16.mxu0 0
        %2443 = vmatpush1.bf16.msra.mxu0 0
        %2444 = vmatprep.subr.bf16.mxu0 0
        %2445 = vmatpush1.bf16.msra.mxu0 0
        %2446 = vmatprep.subr.bf16.mxu0 0
        %2447 = vmatpush1.bf16.msra.mxu0 0
        %2448 = vmatprep.subr.bf16.mxu0 0
        %2449 = vmatpush1.bf16.msra.mxu0 0
        %2450 = vmatprep.subr.bf16.mxu0 0
        %2451 = vmatpush1.bf16.msra.mxu0 0
        %2452 = vmatprep.subr.bf16.mxu0 0
        %2453 = vmatpush1.bf16.msra.mxu0 0
        %2454 = vmatprep.subr.bf16.mxu0 0
        %2455 = vmatpush1.bf16.msra.mxu0 0
        %2456 = vmatprep.subr.bf16.mxu0 0
        %2457 = vmatpush1.bf16.msra.mxu0 0
        %2458 = vmatprep.subr.bf16.mxu0 0
        %2459 = vmatpush1.bf16.msra.mxu0 0
        %2460 = vmatprep.mubr.bf16.mxu0 0
        %2461 = vmatmul.mubr.bf16.gmra.mrb[0].mxu0 %v2395
        %v2462 = vpop.f32.mrb[0].mxu0
        %v2463 = vadd.f32 0.0, %v2462
        %v2464 = vpop.f32.mrb[0].mxu0
        %v2465 = vpop.f32.mrb[0].mxu0
        %v2466 = vadd.f32 0.0, %v2465
        %v2467 = vpop.f32.mrb[0].mxu0
        %2468 = vmatprep.mubr.bf16.mxu0 0
        %2469 = vmatmul.mubr.bf16.gmra.mrb[0].mxu0 %v2398
        %v2470 = vpop.f32.mrb[0].mxu0
        %v2471 = vadd.f32 0.0, %v2470
        %v2472 = vpop.f32.mrb[0].mxu0
        %v2473 = vpop.f32.mrb[0].mxu0
        %v2474 = vadd.f32 0.0, %v2473
        %v2475 = vpop.f32.mrb[0].mxu0
        %2476 = vmatprep.mubr.bf16.mxu0 0
        %2477 = vmatmul.mubr.bf16.gmra.mrb[0].mxu0 %v2401
        %v2478 = vpop.f32.mrb[0].mxu0
        %v2479 = vadd.f32 0.0, %v2478
        %v2480 = vpop.f32.mrb[0].mxu0
        %v2481 = vpop.f32.mrb[0].mxu0
        %v2482 = vadd.f32 0.0, %v2481
        %v2483 = vpop.f32.mrb[0].mxu0
        %2484 = vmatprep.mubr.bf16.mxu0 0
        %2485 = vmatmul.mubr.bf16.gmra.mrb[0].mxu0 %v2404
        %v2486 = vpop.f32.mrb[0].mxu0
        %v2487 = vadd.f32 0.0, %v2486
        %v2488 = vpop.f32.mrb[0].mxu0
        %v2489 = vpop.f32.mrb[0].mxu0
        %v2490 = vadd.f32 0.0, %v2489
        %v2491 = vpop.f32.mrb[0].mxu0
        %2492 = vmatprep.mubr.bf16.mxu0 0
        %2493 = vmatmul.mubr.bf16.gmra.mrb[0].mxu0 %v2407
        %v2494 = vpop.f32.mrb[0].mxu0
        %v2495 = vadd.f32 0.0, %v2494
        %v2496 = vpop.f32.mrb[0].mxu0
        %v2497 = vpop.f32.mrb[0].mxu0
        %v2498 = vadd.f32 0.0, %v2497
        %v2499 = vpop.f32.mrb[0].mxu0
        %2500 = vmatprep.mubr.bf16.mxu0 0
        %2501 = vmatmul.mubr.bf16.gmra.mrb[0].mxu0 %v2410
        %v2502 = vpop.f32.mrb[0].mxu0
        %v2503 = vadd.f32 0.0, %v2502
        %v2504 = vpop.f32.mrb[0].mxu0
        %v2505 = vpop.f32.mrb[0].mxu0
        %v2506 = vadd.f32 0.0, %v2505
        %v2507 = vpop.f32.mrb[0].mxu0
        %2508 = vmatprep.mubr.bf16.mxu0 0
        %2509 = vmatmul.mubr.bf16.gmra.mrb[0].mxu0 %v2413
        %v2510 = vpop.f32.mrb[0].mxu0
        %v2511 = vadd.f32 0.0, %v2510
        %v2512 = vpop.f32.mrb[0].mxu0
        %v2513 = vpop.f32.mrb[0].mxu0
        %v2514 = vadd.f32 0.0, %v2513
        %v2515 = vpop.f32.mrb[0].mxu0
        %2516 = vmatprep.mubr.bf16.mxu0 0
        %2517 = vmatmul.mubr.bf16.gmra.mrb[0].mxu0 %v2416
        %v2518 = vpop.f32.mrb[0].mxu0
        %v2519 = vadd.f32 0.0, %v2518
        %v2520 = vpop.f32.mrb[0].mxu0
        %v2521 = vpop.f32.mrb[0].mxu0
        %v2522 = vadd.f32 0.0, %v2521
        %v2523 = vpop.f32.mrb[0].mxu0
        %2524 = vmatprep.mubr.bf16.mxu0 0
        %2525 = vmatmul.mubr.bf16.gmra.mrb[0].mxu0 %v2419
        %v2526 = vpop.f32.mrb[0].mxu0
        %v2527 = vadd.f32 0.0, %v2526
        %v2528 = vpop.f32.mrb[0].mxu0
        %v2529 = vpop.f32.mrb[0].mxu0
        %v2530 = vadd.f32 0.0, %v2529
        %v2531 = vpop.f32.mrb[0].mxu0
        %2532 = vmatprep.mubr.bf16.mxu0 0
        %2533 = vmatmul.mubr.bf16.gmra.mrb[0].mxu0 %v2422
        %v2534 = vpop.f32.mrb[0].mxu0
        %v2535 = vadd.f32 0.0, %v2534
        %v2536 = vpop.f32.mrb[0].mxu0
        %v2537 = vpop.f32.mrb[0].mxu0
        %v2538 = vadd.f32 0.0, %v2537
        %v2539 = vpop.f32.mrb[0].mxu0
        %2540 = vdwg.mxu0
        %v2541 = vld [vmem:[#allocation12] sm:$0x1]
        %v2543 = vlaneseq
        %v2544 = vshrl.u32 %v2543, 7
        %v2545 = vsub.s32 0, %v2544
        %v2546 = vrot.slane %v2541, %v2545
        %v2548 = vadd.f32 %v2463, %v2546
        %v2549 = vadd.f32 %v2466, %v2546
        %v2550 = vadd.f32 %v2471, %v2546
        %v2551 = vadd.f32 %v2474, %v2546
        %v2552 = vadd.f32 %v2479, %v2546
        %v2553 = vadd.f32 %v2482, %v2546
        %v2554 = vadd.f32 %v2487, %v2546
        %v2555 = vadd.f32 %v2490, %v2546
        %v2556 = vadd.f32 %v2495, %v2546
        %v2557 = vadd.f32 %v2498, %v2546
        %v2558 = vadd.f32 %v2503, %v2546
        %v2559 = vadd.f32 %v2506, %v2546
        %v2560 = vadd.f32 %v2511, %v2546
        %v2561 = vadd.f32 %v2514, %v2546
        %v2562 = vadd.f32 %v2519, %v2546
        %v2563 = vadd.f32 %v2522, %v2546
        %v2564 = vadd.f32 %v2527, %v2546
        %v2565 = vadd.f32 %v2530, %v2546
        %v2566 = vadd.f32 %v2535, %v2546
        %v2567 = vadd.f32 %v2538, %v2546
        %v2568 = vmax.f32 %v2548, 0.0
        %v2569 = vmax.f32 %v2549, 0.0
        %v2570 = vmax.f32 %v2550, 0.0
        %v2571 = vmax.f32 %v2551, 0.0
        %v2572 = vmax.f32 %v2552, 0.0
        %v2573 = vmax.f32 %v2553, 0.0
        %v2574 = vmax.f32 %v2554, 0.0
        %v2575 = vmax.f32 %v2555, 0.0
        %v2576 = vmax.f32 %v2556, 0.0
        %v2577 = vmax.f32 %v2557, 0.0
        %v2578 = vmax.f32 %v2558, 0.0
        %v2579 = vmax.f32 %v2559, 0.0
        %v2580 = vmax.f32 %v2560, 0.0
        %v2581 = vmax.f32 %v2561, 0.0
        %v2582 = vmax.f32 %v2562, 0.0
        %v2583 = vmax.f32 %v2563, 0.0
        %v2584 = vmax.f32 %v2564, 0.0
        %v2585 = vmax.f32 %v2565, 0.0
        %v2586 = vmax.f32 %v2566, 0.0
        %v2587 = vmax.f32 %v2567, 0.0
        %v2588 = vpack.c.bf16 %v2569, %v2568
        %v2589 = vpack.c.bf16 %v2571, %v2570
        %v2590 = vpack.c.bf16 %v2573, %v2572
        %v2591 = vpack.c.bf16 %v2575, %v2574
        %v2592 = vpack.c.bf16 %v2577, %v2576
        %v2593 = vpack.c.bf16 %v2579, %v2578
        %v2594 = vpack.c.bf16 %v2581, %v2580
        %v2595 = vpack.c.bf16 %v2583, %v2582
        %v2596 = vpack.c.bf16 %v2585, %v2584
        %v2597 = vpack.c.bf16 %v2587, %v2586
        %v2608 = vunpack.c.l.b16 %v2588
        %v2609 = vunpack.c.h.b16 %v2588
        %v2610 = vunpack.c.l.b16 %v2589
        %v2611 = vunpack.c.h.b16 %v2589
        %v2612 = vunpack.c.l.b16 %v2590
        %v2613 = vunpack.c.h.b16 %v2590
        %v2614 = vunpack.c.l.b16 %v2591
        %v2615 = vunpack.c.h.b16 %v2591
        %v2616 = vunpack.c.l.b16 %v2592
        %v2617 = vunpack.c.h.b16 %v2592
        %v2618 = vunpack.c.l.b16 %v2593
        %v2619 = vunpack.c.h.b16 %v2593
        %v2620 = vunpack.c.l.b16 %v2594
        %v2621 = vunpack.c.h.b16 %v2594
        %v2622 = vunpack.c.l.b16 %v2595
        %v2623 = vunpack.c.h.b16 %v2595
        %v2624 = vunpack.c.l.b16 %v2596
        %v2625 = vunpack.c.h.b16 %v2596
        %v2626 = vunpack.c.l.b16 %v2597
        %v2627 = vunpack.c.h.b16 %v2597
        %v2628 = vpack.c.b16 %v2608, %v2608
        %v2629 = vpack.c.b16 %v2609, %v2609
        %v2630 = vpack.c.b16 %v2610, %v2610
        %v2631 = vpack.c.b16 %v2611, %v2611
        %v2632 = vpack.c.b16 %v2612, %v2612
        %v2633 = vpack.c.b16 %v2613, %v2613
        %v2634 = vpack.c.b16 %v2614, %v2614
        %v2635 = vpack.c.b16 %v2615, %v2615
        %v2636 = vpack.c.b16 %v2616, %v2616
        %v2637 = vpack.c.b16 %v2617, %v2617
        %v2638 = vpack.c.b16 %v2618, %v2618
        %v2639 = vpack.c.b16 %v2619, %v2619
        %v2640 = vpack.c.b16 %v2620, %v2620
        %v2641 = vpack.c.b16 %v2621, %v2621
        %v2642 = vpack.c.b16 %v2622, %v2622
        %v2643 = vpack.c.b16 %v2623, %v2623
        %v2644 = vpack.c.b16 %v2624, %v2624
        %v2645 = vpack.c.b16 %v2625, %v2625
        %v2646 = vpack.c.b16 %v2626, %v2626
        %v2647 = vpack.c.b16 %v2627, %v2627
        %s2668 = scalar_lea.vmem [#allocation3], 20
        %2669 = vst.msk [vmem:[%s2668 + $0x8] sm:$0xf] %vm725, %v2628
        %2670 = vst.msk [vmem:[%s2668 + $0xc] sm:$0xf] %vm725, %v2629
        %2671 = vst.msk [vmem:[%s2668 + $0x1c] sm:$0xf] %vm725, %v2630
        %2672 = vst.msk [vmem:[%s2668 + $0x20] sm:$0xf] %vm725, %v2631
        %2673 = vst.msk [vmem:[%s2668 + $0x30] sm:$0xf] %vm725, %v2632
        %2674 = vst.msk [vmem:[%s2668 + $0x34] sm:$0xf] %vm725, %v2633
        %2675 = vst.msk [vmem:[%s2668 + $0x44] sm:$0xf] %vm725, %v2634
        %2676 = vst.msk [vmem:[%s2668 + $0x48] sm:$0xf] %vm725, %v2635
        %2677 = vst.msk [vmem:[%s2668 + $0x58] sm:$0xf] %vm725, %v2636
        %2678 = vst.msk [vmem:[%s2668 + $0x5c] sm:$0xf] %vm725, %v2637
        %2679 = vst.msk [vmem:[%s2668 + $0x6c] sm:$0xf] %vm725, %v2638
        %2680 = vst.msk [vmem:[%s2668 + $0x70] sm:$0xf] %vm725, %v2639
        %2681 = vst.msk [vmem:[%s2668 + $0x80] sm:$0xf] %vm725, %v2640
        %2682 = vst.msk [vmem:[%s2668 + $0x84] sm:$0xf] %vm725, %v2641
        %2683 = vst.msk [vmem:[%s2668 + $0x94] sm:$0xf] %vm725, %v2642
        %2684 = vst.msk [vmem:[%s2668 + $0x98] sm:$0xf] %vm725, %v2643
        %2685 = vst.msk [vmem:[%s2668 + $0xa8] sm:$0xf] %vm725, %v2644
        %2686 = vst.msk [vmem:[%s2668 + $0xac] sm:$0xf] %vm725, %v2645
        %2687 = vst.msk [vmem:[%s2668 + $0xbc] sm:$0xf] %vm725, %v2646
        %2688 = vst.msk [vmem:[%s2668 + $0xc0] sm:$0xf] %vm725, %v2647
        // Predicated region
        $region93: #{tpu_custom_call.1} parent=47 // pred_check
          %p2689 = pneg %p770
        $region94: #{tpu_custom_call.1} parent=47 // pred_check_branch
          %2691 = sbr.rel (%p2689) target = $region96
        $region95: #{tpu_custom_call.1} parent=47 // pred_region
          %2692 = vst.msk [vmem:[%s2668 + $0x8] sm:$0xf] %vm725, 0
          %2693 = vst.msk [vmem:[%s2668 + $0xc] sm:$0xf] %vm725, 0
        $region96: #{tpu_custom_call.1} parent=47 // pred_fallthru
          _
        // Predicated region
        $region97: #{tpu_custom_call.1} parent=47 // pred_check
          %p2694 = pneg %p807
        $region98: #{tpu_custom_call.1} parent=47 // pred_check_branch
          %2696 = sbr.rel (%p2694) target = $region100
        $region99: #{tpu_custom_call.1} parent=47 // pred_region
          %s2697 = scalar_lea.vmem [#allocation3], 200
          %2698 = vst.msk [vmem:[%s2697 + $0x8] sm:$0xf] %vm725, 0
          %2699 = vst.msk [vmem:[%s2697 + $0xc] sm:$0xf] %vm725, 0
        $region100: #{tpu_custom_call.1} parent=47 // pred_fallthru
          _
        %v2700 = vld [vmem:[%s2668 + $0x4] sm:$0x8]
        %v2701 = vld [vmem:[%s2668 + $0x8] sm:$0xf]
        %v2702 = vld [vmem:[%s2668 + $0xc] sm:$0xf]
        %v2703 = vld [vmem:[%s2668 + $0x18] sm:$0x8]
        %v2704 = vld [vmem:[%s2668 + $0x1c] sm:$0xf]
        %v2705 = vld [vmem:[%s2668 + $0x20] sm:$0xf]
        %v2706 = vld [vmem:[%s2668 + $0x2c] sm:$0x8]
        %v2707 = vld [vmem:[%s2668 + $0x30] sm:$0xf]
        %v2708 = vld [vmem:[%s2668 + $0x34] sm:$0xf]
        %v2709 = vld [vmem:[%s2668 + $0x40] sm:$0x8]
        %v2710 = vld [vmem:[%s2668 + $0x44] sm:$0xf]
        %v2711 = vld [vmem:[%s2668 + $0x48] sm:$0xf]
        %v2712 = vld [vmem:[%s2668 + $0x54] sm:$0x8]
        %v2713 = vld [vmem:[%s2668 + $0x58] sm:$0xf]
        %v2714 = vld [vmem:[%s2668 + $0x5c] sm:$0xf]
        %v2715 = vld [vmem:[%s2668 + $0x68] sm:$0x8]
        %v2716 = vld [vmem:[%s2668 + $0x6c] sm:$0xf]
        %v2717 = vld [vmem:[%s2668 + $0x70] sm:$0xf]
        %v2718 = vld [vmem:[%s2668 + $0x7c] sm:$0x8]
        %v2719 = vld [vmem:[%s2668 + $0x80] sm:$0xf]
        %v2720 = vld [vmem:[%s2668 + $0x84] sm:$0xf]
        %v2721 = vld [vmem:[%s2668 + $0x90] sm:$0x8]
        %v2722 = vld [vmem:[%s2668 + $0x94] sm:$0xf]
        %v2723 = vld [vmem:[%s2668 + $0x98] sm:$0xf]
        %v2724 = vld [vmem:[%s2668 + $0x10] sm:$0x1]
        %v2725 = vld [vmem:[%s2668 + $0x24] sm:$0x1]
        %v2726 = vld [vmem:[%s2668 + $0x38] sm:$0x1]
        %v2727 = vld [vmem:[%s2668 + $0x4c] sm:$0x1]
        %v2728 = vld [vmem:[%s2668 + $0x60] sm:$0x1]
        %v2729 = vld [vmem:[%s2668 + $0x74] sm:$0x1]
        %v2730 = vld [vmem:[%s2668 + $0x88] sm:$0x1]
        %v2731 = vld [vmem:[%s2668 + $0x9c] sm:$0x1]
        %s2732 = scalar_lea.vmem [#allocation3], 40
        %v2733 = vld [vmem:[%s2732 + $0x4] sm:$0x8]
        %v2734 = vld [vmem:[%s2732 + $0x8] sm:$0xf]
        %v2735 = vld [vmem:[%s2732 + $0xc] sm:$0xf]
        %v2736 = vld [vmem:[%s2732 + $0x18] sm:$0x8]
        %v2737 = vld [vmem:[%s2732 + $0x1c] sm:$0xf]
        %v2738 = vld [vmem:[%s2732 + $0x20] sm:$0xf]
        %v2739 = vld [vmem:[%s2732 + $0x2c] sm:$0x8]
        %v2740 = vld [vmem:[%s2732 + $0x30] sm:$0xf]
        %v2741 = vld [vmem:[%s2732 + $0x34] sm:$0xf]
        %v2742 = vld [vmem:[%s2732 + $0x40] sm:$0x8]
        %v2743 = vld [vmem:[%s2732 + $0x44] sm:$0xf]
        %v2744 = vld [vmem:[%s2732 + $0x48] sm:$0xf]
        %v2745 = vld [vmem:[%s2732 + $0x54] sm:$0x8]
        %v2746 = vld [vmem:[%s2732 + $0x58] sm:$0xf]
        %v2747 = vld [vmem:[%s2732 + $0x5c] sm:$0xf]
        %v2748 = vld [vmem:[%s2732 + $0x68] sm:$0x8]
        %v2749 = vld [vmem:[%s2732 + $0x6c] sm:$0xf]
        %v2750 = vld [vmem:[%s2732 + $0x70] sm:$0xf]
        %v2751 = vld [vmem:[%s2732 + $0x7c] sm:$0x8]
        %v2752 = vld [vmem:[%s2732 + $0x80] sm:$0xf]
        %v2753 = vld [vmem:[%s2732 + $0x84] sm:$0xf]
        %v2754 = vld [vmem:[%s2732 + $0x90] sm:$0x8]
        %v2755 = vld [vmem:[%s2732 + $0x94] sm:$0xf]
        %v2756 = vld [vmem:[%s2732 + $0x98] sm:$0xf]
        %v2757 = vld [vmem:[%s2732 + $0x10] sm:$0x1]
        %v2758 = vld [vmem:[%s2732 + $0x24] sm:$0x1]
        %v2759 = vld [vmem:[%s2732 + $0x38] sm:$0x1]
        %v2760 = vld [vmem:[%s2732 + $0x4c] sm:$0x1]
        %v2761 = vld [vmem:[%s2732 + $0x60] sm:$0x1]
        %v2762 = vld [vmem:[%s2732 + $0x74] sm:$0x1]
        %v2763 = vld [vmem:[%s2732 + $0x88] sm:$0x1]
        %v2764 = vld [vmem:[%s2732 + $0x9c] sm:$0x1]
        %s2765 = scalar_lea.vmem [#allocation3], 60
        %v2766 = vld [vmem:[%s2765 + $0x4] sm:$0x8]
        %v2767 = vld [vmem:[%s2765 + $0x8] sm:$0xf]
        %v2768 = vld [vmem:[%s2765 + $0xc] sm:$0xf]
        %v2769 = vld [vmem:[%s2765 + $0x18] sm:$0x8]
        %v2770 = vld [vmem:[%s2765 + $0x1c] sm:$0xf]
        %v2771 = vld [vmem:[%s2765 + $0x20] sm:$0xf]
        %v2772 = vld [vmem:[%s2765 + $0x2c] sm:$0x8]
        %v2773 = vld [vmem:[%s2765 + $0x30] sm:$0xf]
        %v2774 = vld [vmem:[%s2765 + $0x34] sm:$0xf]
        %v2775 = vld [vmem:[%s2765 + $0x40] sm:$0x8]
        %v2776 = vld [vmem:[%s2765 + $0x44] sm:$0xf]
        %v2777 = vld [vmem:[%s2765 + $0x48] sm:$0xf]
        %v2778 = vld [vmem:[%s2765 + $0x54] sm:$0x8]
        %v2779 = vld [vmem:[%s2765 + $0x58] sm:$0xf]
        %v2780 = vld [vmem:[%s2765 + $0x5c] sm:$0xf]
        %v2781 = vld [vmem:[%s2765 + $0x68] sm:$0x8]
        %v2782 = vld [vmem:[%s2765 + $0x6c] sm:$0xf]
        %v2783 = vld [vmem:[%s2765 + $0x70] sm:$0xf]
        %v2784 = vld [vmem:[%s2765 + $0x7c] sm:$0x8]
        %v2785 = vld [vmem:[%s2765 + $0x80] sm:$0xf]
        %v2786 = vld [vmem:[%s2765 + $0x84] sm:$0xf]
        %v2787 = vld [vmem:[%s2765 + $0x90] sm:$0x8]
        %v2788 = vld [vmem:[%s2765 + $0x94] sm:$0xf]
        %v2789 = vld [vmem:[%s2765 + $0x98] sm:$0xf]
        %v2790 = vld [vmem:[%s2765 + $0x10] sm:$0x1]
        %v2791 = vld [vmem:[%s2765 + $0x24] sm:$0x1]
        %v2792 = vld [vmem:[%s2765 + $0x38] sm:$0x1]
        %v2793 = vld [vmem:[%s2765 + $0x4c] sm:$0x1]
        %v2794 = vld [vmem:[%s2765 + $0x60] sm:$0x1]
        %v2795 = vld [vmem:[%s2765 + $0x74] sm:$0x1]
        %v2796 = vld [vmem:[%s2765 + $0x88] sm:$0x1]
        %v2797 = vld [vmem:[%s2765 + $0x9c] sm:$0x1]
        %v2822 = vunpack.c.l.b16 %v2700
        %v2823 = vunpack.c.l.b16 %v2701
        %v2824 = vunpack.c.l.b16 %v2702
        %v2825 = vunpack.c.l.b16 %v2703
        %v2826 = vunpack.c.l.b16 %v2704
        %v2827 = vunpack.c.l.b16 %v2705
        %v2828 = vunpack.c.l.b16 %v2706
        %v2829 = vunpack.c.l.b16 %v2707
        %v2830 = vunpack.c.l.b16 %v2708
        %v2831 = vunpack.c.l.b16 %v2709
        %v2832 = vunpack.c.l.b16 %v2710
        %v2833 = vunpack.c.l.b16 %v2711
        %v2834 = vunpack.c.l.b16 %v2712
        %v2835 = vunpack.c.l.b16 %v2713
        %v2836 = vunpack.c.l.b16 %v2714
        %v2837 = vunpack.c.l.b16 %v2715
        %v2838 = vunpack.c.l.b16 %v2716
        %v2839 = vunpack.c.l.b16 %v2717
        %v2840 = vunpack.c.l.b16 %v2718
        %v2841 = vunpack.c.l.b16 %v2719
        %v2842 = vunpack.c.l.b16 %v2720
        %v2843 = vunpack.c.l.b16 %v2721
        %v2844 = vunpack.c.l.b16 %v2722
        %v2845 = vunpack.c.l.b16 %v2723
        %v2846 = vpack.c.b16 %v2823, %v2822
        %v2847 = vpack.c.b16 %v2824, %v2824
        %v2848 = vpack.c.b16 %v2826, %v2825
        %v2849 = vpack.c.b16 %v2827, %v2827
        %v2850 = vpack.c.b16 %v2829, %v2828
        %v2851 = vpack.c.b16 %v2830, %v2830
        %v2852 = vpack.c.b16 %v2832, %v2831
        %v2853 = vpack.c.b16 %v2833, %v2833
        %v2854 = vpack.c.b16 %v2835, %v2834
        %v2855 = vpack.c.b16 %v2836, %v2836
        %v2856 = vpack.c.b16 %v2838, %v2837
        %v2857 = vpack.c.b16 %v2839, %v2839
        %v2858 = vpack.c.b16 %v2841, %v2840
        %v2859 = vpack.c.b16 %v2842, %v2842
        %v2860 = vpack.c.b16 %v2844, %v2843
        %v2861 = vpack.c.b16 %v2845, %v2845
        %v2862 = vpack.c.b16 %v2824, %v2823
        %v2863 = vpack.c.b16 %v2827, %v2826
        %v2864 = vpack.c.b16 %v2830, %v2829
        %v2865 = vpack.c.b16 %v2833, %v2832
        %v2866 = vpack.c.b16 %v2836, %v2835
        %v2867 = vpack.c.b16 %v2839, %v2838
        %v2868 = vpack.c.b16 %v2842, %v2841
        %v2869 = vpack.c.b16 %v2845, %v2844
        %v2871 = vshrl.u32 %v2862, 16
        %v2873 = vrot.slane %v2871, 4
        %v2874 = vshll.u32 %v2862, 16
        %v2876 = vrot.slane %v2874, 5
        %v2877 = vor.u32 %v2873, %v2876
        %v2879 = vshrl.u32 %v2863, 16
        %v2881 = vrot.slane %v2879, 4
        %v2882 = vshll.u32 %v2863, 16
        %v2884 = vrot.slane %v2882, 5
        %v2885 = vor.u32 %v2881, %v2884
        %v2887 = vshrl.u32 %v2864, 16
        %v2889 = vrot.slane %v2887, 4
        %v2890 = vshll.u32 %v2864, 16
        %v2892 = vrot.slane %v2890, 5
        %v2893 = vor.u32 %v2889, %v2892
        %v2895 = vshrl.u32 %v2865, 16
        %v2897 = vrot.slane %v2895, 4
        %v2898 = vshll.u32 %v2865, 16
        %v2900 = vrot.slane %v2898, 5
        %v2901 = vor.u32 %v2897, %v2900
        %v2903 = vshrl.u32 %v2866, 16
        %v2905 = vrot.slane %v2903, 4
        %v2906 = vshll.u32 %v2866, 16
        %v2908 = vrot.slane %v2906, 5
        %v2909 = vor.u32 %v2905, %v2908
        %v2911 = vshrl.u32 %v2867, 16
        %v2913 = vrot.slane %v2911, 4
        %v2914 = vshll.u32 %v2867, 16
        %v2916 = vrot.slane %v2914, 5
        %v2917 = vor.u32 %v2913, %v2916
        %v2919 = vshrl.u32 %v2868, 16
        %v2921 = vrot.slane %v2919, 4
        %v2922 = vshll.u32 %v2868, 16
        %v2924 = vrot.slane %v2922, 5
        %v2925 = vor.u32 %v2921, %v2924
        %v2927 = vshrl.u32 %v2869, 16
        %v2929 = vrot.slane %v2927, 4
        %v2930 = vshll.u32 %v2869, 16
        %v2932 = vrot.slane %v2930, 5
        %v2933 = vor.u32 %v2929, %v2932
        %2934 = vrot.lane.b32.xlu0 %v2877, 8
        %v2935 = vpop.permute.xlu0 %2934
        %2936 = vrot.lane.b32.xlu0 %v2885, 8
        %v2937 = vpop.permute.xlu0 %2936
        %2938 = vrot.lane.b32.xlu0 %v2893, 8
        %v2939 = vpop.permute.xlu0 %2938
        %2940 = vrot.lane.b32.xlu0 %v2901, 8
        %v2941 = vpop.permute.xlu0 %2940
        %2942 = vrot.lane.b32.xlu0 %v2909, 8
        %v2943 = vpop.permute.xlu0 %2942
        %2944 = vrot.lane.b32.xlu0 %v2917, 8
        %v2945 = vpop.permute.xlu0 %2944
        %2946 = vrot.lane.b32.xlu0 %v2925, 8
        %v2947 = vpop.permute.xlu0 %2946
        %2948 = vrot.lane.b32.xlu0 %v2933, 8
        %v2949 = vpop.permute.xlu0 %2948
        %v2958 = vunpack.c.l.b16 %v2724
        %v2959 = vunpack.c.l.b16 %v2725
        %v2960 = vunpack.c.l.b16 %v2726
        %v2961 = vunpack.c.l.b16 %v2727
        %v2962 = vunpack.c.l.b16 %v2728
        %v2963 = vunpack.c.l.b16 %v2729
        %v2964 = vunpack.c.l.b16 %v2730
        %v2965 = vunpack.c.l.b16 %v2731
        %v2966 = vpack.c.b16 %v2958, %v2958
        %v2967 = vpack.c.b16 %v2959, %v2959
        %v2968 = vpack.c.b16 %v2960, %v2960
        %v2969 = vpack.c.b16 %v2961, %v2961
        %v2970 = vpack.c.b16 %v2962, %v2962
        %v2971 = vpack.c.b16 %v2963, %v2963
        %v2972 = vpack.c.b16 %v2964, %v2964
        %v2973 = vpack.c.b16 %v2965, %v2965
        %v2974 = vrot.slane %v2862, 5
        %v2975 = vrot.slane %v2966, 5
        %v2976 = vsel %vm1157, %v2974, %v2975
        %v2977 = vrot.slane %v2863, 5
        %v2978 = vrot.slane %v2967, 5
        %v2979 = vsel %vm1157, %v2977, %v2978
        %v2980 = vrot.slane %v2864, 5
        %v2981 = vrot.slane %v2968, 5
        %v2982 = vsel %vm1157, %v2980, %v2981
        %v2983 = vrot.slane %v2865, 5
        %v2984 = vrot.slane %v2969, 5
        %v2985 = vsel %vm1157, %v2983, %v2984
        %v2986 = vrot.slane %v2866, 5
        %v2987 = vrot.slane %v2970, 5
        %v2988 = vsel %vm1157, %v2986, %v2987
        %v2989 = vrot.slane %v2867, 5
        %v2990 = vrot.slane %v2971, 5
        %v2991 = vsel %vm1157, %v2989, %v2990
        %v2992 = vrot.slane %v2868, 5
        %v2993 = vrot.slane %v2972, 5
        %v2994 = vsel %vm1157, %v2992, %v2993
        %v2995 = vrot.slane %v2869, 5
        %v2996 = vrot.slane %v2973, 5
        %v2997 = vsel %vm1157, %v2995, %v2996
        %2998 = vrot.lane.b32.xlu0 %v2974, 16
        %v2999 = vpop.permute.xlu0 %2998
        %3000 = vrot.lane.b32.xlu0 %v2976, 16
        %v3001 = vpop.permute.xlu0 %3000
        %3002 = vrot.lane.b32.xlu0 %v2977, 16
        %v3003 = vpop.permute.xlu0 %3002
        %3004 = vrot.lane.b32.xlu0 %v2979, 16
        %v3005 = vpop.permute.xlu0 %3004
        %3006 = vrot.lane.b32.xlu0 %v2980, 16
        %v3007 = vpop.permute.xlu0 %3006
        %3008 = vrot.lane.b32.xlu0 %v2982, 16
        %v3009 = vpop.permute.xlu0 %3008
        %3010 = vrot.lane.b32.xlu0 %v2983, 16
        %v3011 = vpop.permute.xlu0 %3010
        %3012 = vrot.lane.b32.xlu0 %v2985, 16
        %v3013 = vpop.permute.xlu0 %3012
        %3014 = vrot.lane.b32.xlu0 %v2986, 16
        %v3015 = vpop.permute.xlu0 %3014
        %3016 = vrot.lane.b32.xlu0 %v2988, 16
        %v3017 = vpop.permute.xlu0 %3016
        %3018 = vrot.lane.b32.xlu0 %v2989, 16
        %v3019 = vpop.permute.xlu0 %3018
        %3020 = vrot.lane.b32.xlu0 %v2991, 16
        %v3021 = vpop.permute.xlu0 %3020
        %3022 = vrot.lane.b32.xlu0 %v2992, 16
        %v3023 = vpop.permute.xlu0 %3022
        %3024 = vrot.lane.b32.xlu0 %v2994, 16
        %v3025 = vpop.permute.xlu0 %3024
        %3026 = vrot.lane.b32.xlu0 %v2995, 16
        %v3027 = vpop.permute.xlu0 %3026
        %3028 = vrot.lane.b32.xlu0 %v2997, 16
        %v3029 = vpop.permute.xlu0 %3028
        %v3054 = vunpack.c.l.b16 %v2733
        %v3055 = vunpack.c.l.b16 %v2734
        %v3056 = vunpack.c.l.b16 %v2735
        %v3057 = vunpack.c.l.b16 %v2736
        %v3058 = vunpack.c.l.b16 %v2737
        %v3059 = vunpack.c.l.b16 %v2738
        %v3060 = vunpack.c.l.b16 %v2739
        %v3061 = vunpack.c.l.b16 %v2740
        %v3062 = vunpack.c.l.b16 %v2741
        %v3063 = vunpack.c.l.b16 %v2742
        %v3064 = vunpack.c.l.b16 %v2743
        %v3065 = vunpack.c.l.b16 %v2744
        %v3066 = vunpack.c.l.b16 %v2745
        %v3067 = vunpack.c.l.b16 %v2746
        %v3068 = vunpack.c.l.b16 %v2747
        %v3069 = vunpack.c.l.b16 %v2748
        %v3070 = vunpack.c.l.b16 %v2749
        %v3071 = vunpack.c.l.b16 %v2750
        %v3072 = vunpack.c.l.b16 %v2751
        %v3073 = vunpack.c.l.b16 %v2752
        %v3074 = vunpack.c.l.b16 %v2753
        %v3075 = vunpack.c.l.b16 %v2754
        %v3076 = vunpack.c.l.b16 %v2755
        %v3077 = vunpack.c.l.b16 %v2756
        %v3078 = vpack.c.b16 %v3055, %v3054
        %v3079 = vpack.c.b16 %v3056, %v3056
        %v3080 = vpack.c.b16 %v3058, %v3057
        %v3081 = vpack.c.b16 %v3059, %v3059
        %v3082 = vpack.c.b16 %v3061, %v3060
        %v3083 = vpack.c.b16 %v3062, %v3062
        %v3084 = vpack.c.b16 %v3064, %v3063
        %v3085 = vpack.c.b16 %v3065, %v3065
        %v3086 = vpack.c.b16 %v3067, %v3066
        %v3087 = vpack.c.b16 %v3068, %v3068
        %v3088 = vpack.c.b16 %v3070, %v3069
        %v3089 = vpack.c.b16 %v3071, %v3071
        %v3090 = vpack.c.b16 %v3073, %v3072
        %v3091 = vpack.c.b16 %v3074, %v3074
        %v3092 = vpack.c.b16 %v3076, %v3075
        %v3093 = vpack.c.b16 %v3077, %v3077
        %3094 = vrot.lane.b32.xlu0 %v3078, 24
        %v3095 = vpop.permute.xlu0 %3094
        %3096 = vrot.lane.b32.xlu0 %v3079, 24
        %v3097 = vpop.permute.xlu0 %3096
        %3098 = vrot.lane.b32.xlu0 %v3080, 24
        %v3099 = vpop.permute.xlu0 %3098
        %3100 = vrot.lane.b32.xlu0 %v3081, 24
        %v3101 = vpop.permute.xlu0 %3100
        %3102 = vrot.lane.b32.xlu0 %v3082, 24
        %v3103 = vpop.permute.xlu0 %3102
        %3104 = vrot.lane.b32.xlu0 %v3083, 24
        %v3105 = vpop.permute.xlu0 %3104
        %3106 = vrot.lane.b32.xlu0 %v3084, 24
        %v3107 = vpop.permute.xlu0 %3106
        %3108 = vrot.lane.b32.xlu0 %v3085, 24
        %v3109 = vpop.permute.xlu0 %3108
        %3110 = vrot.lane.b32.xlu0 %v3086, 24
        %v3111 = vpop.permute.xlu0 %3110
        %3112 = vrot.lane.b32.xlu0 %v3087, 24
        %v3113 = vpop.permute.xlu0 %3112
        %3114 = vrot.lane.b32.xlu0 %v3088, 24
        %v3115 = vpop.permute.xlu0 %3114
        %3116 = vrot.lane.b32.xlu0 %v3089, 24
        %v3117 = vpop.permute.xlu0 %3116
        %3118 = vrot.lane.b32.xlu0 %v3090, 24
        %v3119 = vpop.permute.xlu0 %3118
        %3120 = vrot.lane.b32.xlu0 %v3091, 24
        %v3121 = vpop.permute.xlu0 %3120
        %3122 = vrot.lane.b32.xlu0 %v3092, 24
        %v3123 = vpop.permute.xlu0 %3122
        %3124 = vrot.lane.b32.xlu0 %v3093, 24
        %v3125 = vpop.permute.xlu0 %3124
        %v3126 = vpack.c.b16 %v3056, %v3055
        %v3127 = vpack.c.b16 %v3059, %v3058
        %v3128 = vpack.c.b16 %v3062, %v3061
        %v3129 = vpack.c.b16 %v3065, %v3064
        %v3130 = vpack.c.b16 %v3068, %v3067
        %v3131 = vpack.c.b16 %v3071, %v3070
        %v3132 = vpack.c.b16 %v3074, %v3073
        %v3133 = vpack.c.b16 %v3077, %v3076
        %v3135 = vshrl.u32 %v3126, 16
        %v3137 = vrot.slane %v3135, 4
        %v3138 = vshll.u32 %v3126, 16
        %v3140 = vrot.slane %v3138, 5
        %v3141 = vor.u32 %v3137, %v3140
        %v3143 = vshrl.u32 %v3127, 16
        %v3145 = vrot.slane %v3143, 4
        %v3146 = vshll.u32 %v3127, 16
        %v3148 = vrot.slane %v3146, 5
        %v3149 = vor.u32 %v3145, %v3148
        %v3151 = vshrl.u32 %v3128, 16
        %v3153 = vrot.slane %v3151, 4
        %v3154 = vshll.u32 %v3128, 16
        %v3156 = vrot.slane %v3154, 5
        %v3157 = vor.u32 %v3153, %v3156
        %v3159 = vshrl.u32 %v3129, 16
        %v3161 = vrot.slane %v3159, 4
        %v3162 = vshll.u32 %v3129, 16
        %v3164 = vrot.slane %v3162, 5
        %v3165 = vor.u32 %v3161, %v3164
        %v3167 = vshrl.u32 %v3130, 16
        %v3169 = vrot.slane %v3167, 4
        %v3170 = vshll.u32 %v3130, 16
        %v3172 = vrot.slane %v3170, 5
        %v3173 = vor.u32 %v3169, %v3172
        %v3175 = vshrl.u32 %v3131, 16
        %v3177 = vrot.slane %v3175, 4
        %v3178 = vshll.u32 %v3131, 16
        %v3180 = vrot.slane %v3178, 5
        %v3181 = vor.u32 %v3177, %v3180
        %v3183 = vshrl.u32 %v3132, 16
        %v3185 = vrot.slane %v3183, 4
        %v3186 = vshll.u32 %v3132, 16
        %v3188 = vrot.slane %v3186, 5
        %v3189 = vor.u32 %v3185, %v3188
        %v3191 = vshrl.u32 %v3133, 16
        %v3193 = vrot.slane %v3191, 4
        %v3194 = vshll.u32 %v3133, 16
        %v3196 = vrot.slane %v3194, 5
        %v3197 = vor.u32 %v3193, %v3196
        %3198 = vrot.lane.b32.xlu0 %v3141, 32
        %v3199 = vpop.permute.xlu0 %3198
        %3200 = vrot.lane.b32.xlu0 %v3149, 32
        %v3201 = vpop.permute.xlu0 %3200
        %3202 = vrot.lane.b32.xlu0 %v3157, 32
        %v3203 = vpop.permute.xlu0 %3202
        %3204 = vrot.lane.b32.xlu0 %v3165, 32
        %v3205 = vpop.permute.xlu0 %3204
        %3206 = vrot.lane.b32.xlu0 %v3173, 32
        %v3207 = vpop.permute.xlu0 %3206
        %3208 = vrot.lane.b32.xlu0 %v3181, 32
        %v3209 = vpop.permute.xlu0 %3208
        %3210 = vrot.lane.b32.xlu0 %v3189, 32
        %v3211 = vpop.permute.xlu0 %3210
        %3212 = vrot.lane.b32.xlu0 %v3197, 32
        %v3213 = vpop.permute.xlu0 %3212
        %v3222 = vunpack.c.l.b16 %v2757
        %v3223 = vunpack.c.l.b16 %v2758
        %v3224 = vunpack.c.l.b16 %v2759
        %v3225 = vunpack.c.l.b16 %v2760
        %v3226 = vunpack.c.l.b16 %v2761
        %v3227 = vunpack.c.l.b16 %v2762
        %v3228 = vunpack.c.l.b16 %v2763
        %v3229 = vunpack.c.l.b16 %v2764
        %v3230 = vpack.c.b16 %v3222, %v3222
        %v3231 = vpack.c.b16 %v3223, %v3223
        %v3232 = vpack.c.b16 %v3224, %v3224
        %v3233 = vpack.c.b16 %v3225, %v3225
        %v3234 = vpack.c.b16 %v3226, %v3226
        %v3235 = vpack.c.b16 %v3227, %v3227
        %v3236 = vpack.c.b16 %v3228, %v3228
        %v3237 = vpack.c.b16 %v3229, %v3229
        %v3238 = vrot.slane %v3126, 5
        %v3239 = vrot.slane %v3230, 5
        %v3240 = vsel %vm1157, %v3238, %v3239
        %v3241 = vrot.slane %v3127, 5
        %v3242 = vrot.slane %v3231, 5
        %v3243 = vsel %vm1157, %v3241, %v3242
        %v3244 = vrot.slane %v3128, 5
        %v3245 = vrot.slane %v3232, 5
        %v3246 = vsel %vm1157, %v3244, %v3245
        %v3247 = vrot.slane %v3129, 5
        %v3248 = vrot.slane %v3233, 5
        %v3249 = vsel %vm1157, %v3247, %v3248
        %v3250 = vrot.slane %v3130, 5
        %v3251 = vrot.slane %v3234, 5
        %v3252 = vsel %vm1157, %v3250, %v3251
        %v3253 = vrot.slane %v3131, 5
        %v3254 = vrot.slane %v3235, 5
        %v3255 = vsel %vm1157, %v3253, %v3254
        %v3256 = vrot.slane %v3132, 5
        %v3257 = vrot.slane %v3236, 5
        %v3258 = vsel %vm1157, %v3256, %v3257
        %v3259 = vrot.slane %v3133, 5
        %v3260 = vrot.slane %v3237, 5
        %v3261 = vsel %vm1157, %v3259, %v3260
        %3262 = vrot.lane.b32.xlu0 %v3238, 40
        %v3263 = vpop.permute.xlu0 %3262
        %3264 = vrot.lane.b32.xlu0 %v3240, 40
        %v3265 = vpop.permute.xlu0 %3264
        %3266 = vrot.lane.b32.xlu0 %v3241, 40
        %v3267 = vpop.permute.xlu0 %3266
        %3268 = vrot.lane.b32.xlu0 %v3243, 40
        %v3269 = vpop.permute.xlu0 %3268
        %3270 = vrot.lane.b32.xlu0 %v3244, 40
        %v3271 = vpop.permute.xlu0 %3270
        %3272 = vrot.lane.b32.xlu0 %v3246, 40
        %v3273 = vpop.permute.xlu0 %3272
        %3274 = vrot.lane.b32.xlu0 %v3247, 40
        %v3275 = vpop.permute.xlu0 %3274
        %3276 = vrot.lane.b32.xlu0 %v3249, 40
        %v3277 = vpop.permute.xlu0 %3276
        %3278 = vrot.lane.b32.xlu0 %v3250, 40
        %v3279 = vpop.permute.xlu0 %3278
        %3280 = vrot.lane.b32.xlu0 %v3252, 40
        %v3281 = vpop.permute.xlu0 %3280
        %3282 = vrot.lane.b32.xlu0 %v3253, 40
        %v3283 = vpop.permute.xlu0 %3282
        %3284 = vrot.lane.b32.xlu0 %v3255, 40
        %v3285 = vpop.permute.xlu0 %3284
        %3286 = vrot.lane.b32.xlu0 %v3256, 40
        %v3287 = vpop.permute.xlu0 %3286
        %3288 = vrot.lane.b32.xlu0 %v3258, 40
        %v3289 = vpop.permute.xlu0 %3288
        %3290 = vrot.lane.b32.xlu0 %v3259, 40
        %v3291 = vpop.permute.xlu0 %3290
        %3292 = vrot.lane.b32.xlu0 %v3261, 40
        %v3293 = vpop.permute.xlu0 %3292
        %v3318 = vunpack.c.l.b16 %v2766
        %v3319 = vunpack.c.l.b16 %v2767
        %v3320 = vunpack.c.l.b16 %v2768
        %v3321 = vunpack.c.l.b16 %v2769
        %v3322 = vunpack.c.l.b16 %v2770
        %v3323 = vunpack.c.l.b16 %v2771
        %v3324 = vunpack.c.l.b16 %v2772
        %v3325 = vunpack.c.l.b16 %v2773
        %v3326 = vunpack.c.l.b16 %v2774
        %v3327 = vunpack.c.l.b16 %v2775
        %v3328 = vunpack.c.l.b16 %v2776
        %v3329 = vunpack.c.l.b16 %v2777
        %v3330 = vunpack.c.l.b16 %v2778
        %v3331 = vunpack.c.l.b16 %v2779
        %v3332 = vunpack.c.l.b16 %v2780
        %v3333 = vunpack.c.l.b16 %v2781
        %v3334 = vunpack.c.l.b16 %v2782
        %v3335 = vunpack.c.l.b16 %v2783
        %v3336 = vunpack.c.l.b16 %v2784
        %v3337 = vunpack.c.l.b16 %v2785
        %v3338 = vunpack.c.l.b16 %v2786
        %v3339 = vunpack.c.l.b16 %v2787
        %v3340 = vunpack.c.l.b16 %v2788
        %v3341 = vunpack.c.l.b16 %v2789
        %v3342 = vpack.c.b16 %v3319, %v3318
        %v3343 = vpack.c.b16 %v3320, %v3320
        %v3344 = vpack.c.b16 %v3322, %v3321
        %v3345 = vpack.c.b16 %v3323, %v3323
        %v3346 = vpack.c.b16 %v3325, %v3324
        %v3347 = vpack.c.b16 %v3326, %v3326
        %v3348 = vpack.c.b16 %v3328, %v3327
        %v3349 = vpack.c.b16 %v3329, %v3329
        %v3350 = vpack.c.b16 %v3331, %v3330
        %v3351 = vpack.c.b16 %v3332, %v3332
        %v3352 = vpack.c.b16 %v3334, %v3333
        %v3353 = vpack.c.b16 %v3335, %v3335
        %v3354 = vpack.c.b16 %v3337, %v3336
        %v3355 = vpack.c.b16 %v3338, %v3338
        %v3356 = vpack.c.b16 %v3340, %v3339
        %v3357 = vpack.c.b16 %v3341, %v3341
        %3358 = vrot.lane.b32.xlu0 %v3342, 48
        %v3359 = vpop.permute.xlu0 %3358
        %3360 = vrot.lane.b32.xlu0 %v3343, 48
        %v3361 = vpop.permute.xlu0 %3360
        %3362 = vrot.lane.b32.xlu0 %v3344, 48
        %v3363 = vpop.permute.xlu0 %3362
        %3364 = vrot.lane.b32.xlu0 %v3345, 48
        %v3365 = vpop.permute.xlu0 %3364
        %3366 = vrot.lane.b32.xlu0 %v3346, 48
        %v3367 = vpop.permute.xlu0 %3366
        %3368 = vrot.lane.b32.xlu0 %v3347, 48
        %v3369 = vpop.permute.xlu0 %3368
        %3370 = vrot.lane.b32.xlu0 %v3348, 48
        %v3371 = vpop.permute.xlu0 %3370
        %3372 = vrot.lane.b32.xlu0 %v3349, 48
        %v3373 = vpop.permute.xlu0 %3372
        %3374 = vrot.lane.b32.xlu0 %v3350, 48
        %v3375 = vpop.permute.xlu0 %3374
        %3376 = vrot.lane.b32.xlu0 %v3351, 48
        %v3377 = vpop.permute.xlu0 %3376
        %3378 = vrot.lane.b32.xlu0 %v3352, 48
        %v3379 = vpop.permute.xlu0 %3378
        %3380 = vrot.lane.b32.xlu0 %v3353, 48
        %v3381 = vpop.permute.xlu0 %3380
        %3382 = vrot.lane.b32.xlu0 %v3354, 48
        %v3383 = vpop.permute.xlu0 %3382
        %3384 = vrot.lane.b32.xlu0 %v3355, 48
        %v3385 = vpop.permute.xlu0 %3384
        %3386 = vrot.lane.b32.xlu0 %v3356, 48
        %v3387 = vpop.permute.xlu0 %3386
        %3388 = vrot.lane.b32.xlu0 %v3357, 48
        %v3389 = vpop.permute.xlu0 %3388
        %v3390 = vpack.c.b16 %v3320, %v3319
        %v3391 = vpack.c.b16 %v3323, %v3322
        %v3392 = vpack.c.b16 %v3326, %v3325
        %v3393 = vpack.c.b16 %v3329, %v3328
        %v3394 = vpack.c.b16 %v3332, %v3331
        %v3395 = vpack.c.b16 %v3335, %v3334
        %v3396 = vpack.c.b16 %v3338, %v3337
        %v3397 = vpack.c.b16 %v3341, %v3340
        %v3399 = vshrl.u32 %v3390, 16
        %v3401 = vrot.slane %v3399, 4
        %v3402 = vshll.u32 %v3390, 16
        %v3404 = vrot.slane %v3402, 5
        %v3405 = vor.u32 %v3401, %v3404
        %v3407 = vshrl.u32 %v3391, 16
        %v3409 = vrot.slane %v3407, 4
        %v3410 = vshll.u32 %v3391, 16
        %v3412 = vrot.slane %v3410, 5
        %v3413 = vor.u32 %v3409, %v3412
        %v3415 = vshrl.u32 %v3392, 16
        %v3417 = vrot.slane %v3415, 4
        %v3418 = vshll.u32 %v3392, 16
        %v3420 = vrot.slane %v3418, 5
        %v3421 = vor.u32 %v3417, %v3420
        %v3423 = vshrl.u32 %v3393, 16
        %v3425 = vrot.slane %v3423, 4
        %v3426 = vshll.u32 %v3393, 16
        %v3428 = vrot.slane %v3426, 5
        %v3429 = vor.u32 %v3425, %v3428
        %v3431 = vshrl.u32 %v3394, 16
        %v3433 = vrot.slane %v3431, 4
        %v3434 = vshll.u32 %v3394, 16
        %v3436 = vrot.slane %v3434, 5
        %v3437 = vor.u32 %v3433, %v3436
        %v3439 = vshrl.u32 %v3395, 16
        %v3441 = vrot.slane %v3439, 4
        %v3442 = vshll.u32 %v3395, 16
        %v3444 = vrot.slane %v3442, 5
        %v3445 = vor.u32 %v3441, %v3444
        %v3447 = vshrl.u32 %v3396, 16
        %v3449 = vrot.slane %v3447, 4
        %v3450 = vshll.u32 %v3396, 16
        %v3452 = vrot.slane %v3450, 5
        %v3453 = vor.u32 %v3449, %v3452
        %v3455 = vshrl.u32 %v3397, 16
        %v3457 = vrot.slane %v3455, 4
        %v3458 = vshll.u32 %v3397, 16
        %v3460 = vrot.slane %v3458, 5
        %v3461 = vor.u32 %v3457, %v3460
        %3462 = vrot.lane.b32.xlu0 %v3405, 56
        %v3463 = vpop.permute.xlu0 %3462
        %3464 = vrot.lane.b32.xlu0 %v3413, 56
        %v3465 = vpop.permute.xlu0 %3464
        %3466 = vrot.lane.b32.xlu0 %v3421, 56
        %v3467 = vpop.permute.xlu0 %3466
        %3468 = vrot.lane.b32.xlu0 %v3429, 56
        %v3469 = vpop.permute.xlu0 %3468
        %3470 = vrot.lane.b32.xlu0 %v3437, 56
        %v3471 = vpop.permute.xlu0 %3470
        %3472 = vrot.lane.b32.xlu0 %v3445, 56
        %v3473 = vpop.permute.xlu0 %3472
        %3474 = vrot.lane.b32.xlu0 %v3453, 56
        %v3475 = vpop.permute.xlu0 %3474
        %3476 = vrot.lane.b32.xlu0 %v3461, 56
        %v3477 = vpop.permute.xlu0 %3476
        %v3486 = vunpack.c.l.b16 %v2790
        %v3487 = vunpack.c.l.b16 %v2791
        %v3488 = vunpack.c.l.b16 %v2792
        %v3489 = vunpack.c.l.b16 %v2793
        %v3490 = vunpack.c.l.b16 %v2794
        %v3491 = vunpack.c.l.b16 %v2795
        %v3492 = vunpack.c.l.b16 %v2796
        %v3493 = vunpack.c.l.b16 %v2797
        %v3494 = vpack.c.b16 %v3486, %v3486
        %v3495 = vpack.c.b16 %v3487, %v3487
        %v3496 = vpack.c.b16 %v3488, %v3488
        %v3497 = vpack.c.b16 %v3489, %v3489
        %v3498 = vpack.c.b16 %v3490, %v3490
        %v3499 = vpack.c.b16 %v3491, %v3491
        %v3500 = vpack.c.b16 %v3492, %v3492
        %v3501 = vpack.c.b16 %v3493, %v3493
        %v3502 = vrot.slane %v3390, 5
        %v3503 = vrot.slane %v3494, 5
        %v3504 = vsel %vm1157, %v3502, %v3503
        %v3505 = vrot.slane %v3391, 5
        %v3506 = vrot.slane %v3495, 5
        %v3507 = vsel %vm1157, %v3505, %v3506
        %v3508 = vrot.slane %v3392, 5
        %v3509 = vrot.slane %v3496, 5
        %v3510 = vsel %vm1157, %v3508, %v3509
        %v3511 = vrot.slane %v3393, 5
        %v3512 = vrot.slane %v3497, 5
        %v3513 = vsel %vm1157, %v3511, %v3512
        %v3514 = vrot.slane %v3394, 5
        %v3515 = vrot.slane %v3498, 5
        %v3516 = vsel %vm1157, %v3514, %v3515
        %v3517 = vrot.slane %v3395, 5
        %v3518 = vrot.slane %v3499, 5
        %v3519 = vsel %vm1157, %v3517, %v3518
        %v3520 = vrot.slane %v3396, 5
        %v3521 = vrot.slane %v3500, 5
        %v3522 = vsel %vm1157, %v3520, %v3521
        %v3523 = vrot.slane %v3397, 5
        %v3524 = vrot.slane %v3501, 5
        %v3525 = vsel %vm1157, %v3523, %v3524
        %3526 = vrot.lane.b32.xlu0 %v3502, 64
        %v3527 = vpop.permute.xlu0 %3526
        %3528 = vrot.lane.b32.xlu0 %v3504, 64
        %v3529 = vpop.permute.xlu0 %3528
        %3530 = vrot.lane.b32.xlu0 %v3505, 64
        %v3531 = vpop.permute.xlu0 %3530
        %3532 = vrot.lane.b32.xlu0 %v3507, 64
        %v3533 = vpop.permute.xlu0 %3532
        %3534 = vrot.lane.b32.xlu0 %v3508, 64
        %v3535 = vpop.permute.xlu0 %3534
        %3536 = vrot.lane.b32.xlu0 %v3510, 64
        %v3537 = vpop.permute.xlu0 %3536
        %3538 = vrot.lane.b32.xlu0 %v3511, 64
        %v3539 = vpop.permute.xlu0 %3538
        %3540 = vrot.lane.b32.xlu0 %v3513, 64
        %v3541 = vpop.permute.xlu0 %3540
        %3542 = vrot.lane.b32.xlu0 %v3514, 64
        %v3543 = vpop.permute.xlu0 %3542
        %3544 = vrot.lane.b32.xlu0 %v3516, 64
        %v3545 = vpop.permute.xlu0 %3544
        %3546 = vrot.lane.b32.xlu0 %v3517, 64
        %v3547 = vpop.permute.xlu0 %3546
        %3548 = vrot.lane.b32.xlu0 %v3519, 64
        %v3549 = vpop.permute.xlu0 %3548
        %3550 = vrot.lane.b32.xlu0 %v3520, 64
        %v3551 = vpop.permute.xlu0 %3550
        %3552 = vrot.lane.b32.xlu0 %v3522, 64
        %v3553 = vpop.permute.xlu0 %3552
        %3554 = vrot.lane.b32.xlu0 %v3523, 64
        %v3555 = vpop.permute.xlu0 %3554
        %3556 = vrot.lane.b32.xlu0 %v3525, 64
        %v3557 = vpop.permute.xlu0 %3556
        %v3560 = vsel %vm1888, %v2846, %v2935
        %v3562 = vsel %vm1888, %v2847, %v2935
        %v3565 = vsel %vm1888, %v2848, %v2937
        %v3567 = vsel %vm1888, %v2849, %v2937
        %v3570 = vsel %vm1888, %v2850, %v2939
        %v3572 = vsel %vm1888, %v2851, %v2939
        %v3575 = vsel %vm1888, %v2852, %v2941
        %v3577 = vsel %vm1888, %v2853, %v2941
        %v3580 = vsel %vm1888, %v2854, %v2943
        %v3582 = vsel %vm1888, %v2855, %v2943
        %v3585 = vsel %vm1888, %v2856, %v2945
        %v3587 = vsel %vm1888, %v2857, %v2945
        %v3590 = vsel %vm1888, %v2858, %v2947
        %v3592 = vsel %vm1888, %v2859, %v2947
        %v3595 = vsel %vm1888, %v2860, %v2949
        %v3597 = vsel %vm1888, %v2861, %v2949
        %v3599 = vsel %vm1939, %v3560, %v2999
        %v3601 = vsel %vm1939, %v3562, %v3001
        %v3603 = vsel %vm1939, %v3565, %v3003
        %v3605 = vsel %vm1939, %v3567, %v3005
        %v3607 = vsel %vm1939, %v3570, %v3007
        %v3609 = vsel %vm1939, %v3572, %v3009
        %v3611 = vsel %vm1939, %v3575, %v3011
        %v3613 = vsel %vm1939, %v3577, %v3013
        %v3615 = vsel %vm1939, %v3580, %v3015
        %v3617 = vsel %vm1939, %v3582, %v3017
        %v3619 = vsel %vm1939, %v3585, %v3019
        %v3621 = vsel %vm1939, %v3587, %v3021
        %v3623 = vsel %vm1939, %v3590, %v3023
        %v3625 = vsel %vm1939, %v3592, %v3025
        %v3627 = vsel %vm1939, %v3595, %v3027
        %v3629 = vsel %vm1939, %v3597, %v3029
        %v3631 = vsel %vm1980, %v3599, %v3095
        %v3633 = vsel %vm1980, %v3601, %v3097
        %v3635 = vsel %vm1980, %v3603, %v3099
        %v3637 = vsel %vm1980, %v3605, %v3101
        %v3639 = vsel %vm1980, %v3607, %v3103
        %v3641 = vsel %vm1980, %v3609, %v3105
        %v3643 = vsel %vm1980, %v3611, %v3107
        %v3645 = vsel %vm1980, %v3613, %v3109
        %v3647 = vsel %vm1980, %v3615, %v3111
        %v3649 = vsel %vm1980, %v3617, %v3113
        %v3651 = vsel %vm1980, %v3619, %v3115
        %v3653 = vsel %vm1980, %v3621, %v3117
        %v3655 = vsel %vm1980, %v3623, %v3119
        %v3657 = vsel %vm1980, %v3625, %v3121
        %v3659 = vsel %vm1980, %v3627, %v3123
        %v3661 = vsel %vm1980, %v3629, %v3125
        %v3663 = vsel %vm2021, %v3631, %v3199
        %v3664 = vsel %vm2021, %v3633, %v3199
        %v3666 = vsel %vm2021, %v3635, %v3201
        %v3667 = vsel %vm2021, %v3637, %v3201
        %v3669 = vsel %vm2021, %v3639, %v3203
        %v3670 = vsel %vm2021, %v3641, %v3203
        %v3672 = vsel %vm2021, %v3643, %v3205
        %v3673 = vsel %vm2021, %v3645, %v3205
        %v3675 = vsel %vm2021, %v3647, %v3207
        %v3676 = vsel %vm2021, %v3649, %v3207
        %v3678 = vsel %vm2021, %v3651, %v3209
        %v3679 = vsel %vm2021, %v3653, %v3209
        %v3681 = vsel %vm2021, %v3655, %v3211
        %v3682 = vsel %vm2021, %v3657, %v3211
        %v3684 = vsel %vm2021, %v3659, %v3213
        %v3685 = vsel %vm2021, %v3661, %v3213
        %v3687 = vsel %vm2052, %v3663, %v3263
        %v3689 = vsel %vm2052, %v3664, %v3265
        %v3691 = vsel %vm2052, %v3666, %v3267
        %v3693 = vsel %vm2052, %v3667, %v3269
        %v3695 = vsel %vm2052, %v3669, %v3271
        %v3697 = vsel %vm2052, %v3670, %v3273
        %v3699 = vsel %vm2052, %v3672, %v3275
        %v3701 = vsel %vm2052, %v3673, %v3277
        %v3703 = vsel %vm2052, %v3675, %v3279
        %v3705 = vsel %vm2052, %v3676, %v3281
        %v3707 = vsel %vm2052, %v3678, %v3283
        %v3709 = vsel %vm2052, %v3679, %v3285
        %v3711 = vsel %vm2052, %v3681, %v3287
        %v3713 = vsel %vm2052, %v3682, %v3289
        %v3715 = vsel %vm2052, %v3684, %v3291
        %v3717 = vsel %vm2052, %v3685, %v3293
        %v3719 = vsel %vm2093, %v3687, %v3359
        %v3721 = vsel %vm2093, %v3689, %v3361
        %v3723 = vsel %vm2093, %v3691, %v3363
        %v3725 = vsel %vm2093, %v3693, %v3365
        %v3727 = vsel %vm2093, %v3695, %v3367
        %v3729 = vsel %vm2093, %v3697, %v3369
        %v3731 = vsel %vm2093, %v3699, %v3371
        %v3733 = vsel %vm2093, %v3701, %v3373
        %v3735 = vsel %vm2093, %v3703, %v3375
        %v3737 = vsel %vm2093, %v3705, %v3377
        %v3739 = vsel %vm2093, %v3707, %v3379
        %v3741 = vsel %vm2093, %v3709, %v3381
        %v3743 = vsel %vm2093, %v3711, %v3383
        %v3745 = vsel %vm2093, %v3713, %v3385
        %v3747 = vsel %vm2093, %v3715, %v3387
        %v3749 = vsel %vm2093, %v3717, %v3389
        %v3751 = vsel %vm2134, %v3719, %v3463
        %v3752 = vsel %vm2134, %v3721, %v3463
        %v3754 = vsel %vm2134, %v3723, %v3465
        %v3755 = vsel %vm2134, %v3725, %v3465
        %v3757 = vsel %vm2134, %v3727, %v3467
        %v3758 = vsel %vm2134, %v3729, %v3467
        %v3760 = vsel %vm2134, %v3731, %v3469
        %v3761 = vsel %vm2134, %v3733, %v3469
        %v3763 = vsel %vm2134, %v3735, %v3471
        %v3764 = vsel %vm2134, %v3737, %v3471
        %v3766 = vsel %vm2134, %v3739, %v3473
        %v3767 = vsel %vm2134, %v3741, %v3473
        %v3769 = vsel %vm2134, %v3743, %v3475
        %v3770 = vsel %vm2134, %v3745, %v3475
        %v3772 = vsel %vm2134, %v3747, %v3477
        %v3773 = vsel %vm2134, %v3749, %v3477
        %v3775 = vsel %vm2165, %v3751, %v3527
        %v3777 = vsel %vm2165, %v3752, %v3529
        %v3779 = vsel %vm2165, %v3754, %v3531
        %v3781 = vsel %vm2165, %v3755, %v3533
        %v3783 = vsel %vm2165, %v3757, %v3535
        %v3785 = vsel %vm2165, %v3758, %v3537
        %v3787 = vsel %vm2165, %v3760, %v3539
        %v3789 = vsel %vm2165, %v3761, %v3541
        %v3791 = vsel %vm2165, %v3763, %v3543
        %v3793 = vsel %vm2165, %v3764, %v3545
        %v3795 = vsel %vm2165, %v3766, %v3547
        %v3797 = vsel %vm2165, %v3767, %v3549
        %v3799 = vsel %vm2165, %v3769, %v3551
        %v3801 = vsel %vm2165, %v3770, %v3553
        %v3803 = vsel %vm2165, %v3772, %v3555
        %v3805 = vsel %vm2165, %v3773, %v3557
        %v3806 = vshrl.u32 %v3775, 16
        %v3808 = vrot.slane %v3806, 3
        %v3809 = vshll.u32 %v3775, 16
        %v3811 = vrot.slane %v3809, 4
        %v3812 = vor.u32 %v3808, %v3811
        %v3813 = vshrl.u32 %v3777, 16
        %v3815 = vrot.slane %v3813, 3
        %v3816 = vshll.u32 %v3777, 16
        %v3818 = vrot.slane %v3816, 4
        %v3819 = vor.u32 %v3815, %v3818
        %v3820 = vsel %vm2206, %v3812, %v3819
        %v3821 = vshrl.u32 %v3779, 16
        %v3823 = vrot.slane %v3821, 3
        %v3824 = vshll.u32 %v3779, 16
        %v3826 = vrot.slane %v3824, 4
        %v3827 = vor.u32 %v3823, %v3826
        %v3828 = vshrl.u32 %v3781, 16
        %v3830 = vrot.slane %v3828, 3
        %v3831 = vshll.u32 %v3781, 16
        %v3833 = vrot.slane %v3831, 4
        %v3834 = vor.u32 %v3830, %v3833
        %v3835 = vsel %vm2206, %v3827, %v3834
        %v3836 = vshrl.u32 %v3783, 16
        %v3838 = vrot.slane %v3836, 3
        %v3839 = vshll.u32 %v3783, 16
        %v3841 = vrot.slane %v3839, 4
        %v3842 = vor.u32 %v3838, %v3841
        %v3843 = vshrl.u32 %v3785, 16
        %v3845 = vrot.slane %v3843, 3
        %v3846 = vshll.u32 %v3785, 16
        %v3848 = vrot.slane %v3846, 4
        %v3849 = vor.u32 %v3845, %v3848
        %v3850 = vsel %vm2206, %v3842, %v3849
        %v3851 = vshrl.u32 %v3787, 16
        %v3853 = vrot.slane %v3851, 3
        %v3854 = vshll.u32 %v3787, 16
        %v3856 = vrot.slane %v3854, 4
        %v3857 = vor.u32 %v3853, %v3856
        %v3858 = vshrl.u32 %v3789, 16
        %v3860 = vrot.slane %v3858, 3
        %v3861 = vshll.u32 %v3789, 16
        %v3863 = vrot.slane %v3861, 4
        %v3864 = vor.u32 %v3860, %v3863
        %v3865 = vsel %vm2206, %v3857, %v3864
        %v3866 = vshrl.u32 %v3791, 16
        %v3868 = vrot.slane %v3866, 3
        %v3869 = vshll.u32 %v3791, 16
        %v3871 = vrot.slane %v3869, 4
        %v3872 = vor.u32 %v3868, %v3871
        %v3873 = vshrl.u32 %v3793, 16
        %v3875 = vrot.slane %v3873, 3
        %v3876 = vshll.u32 %v3793, 16
        %v3878 = vrot.slane %v3876, 4
        %v3879 = vor.u32 %v3875, %v3878
        %v3880 = vsel %vm2206, %v3872, %v3879
        %v3881 = vshrl.u32 %v3795, 16
        %v3883 = vrot.slane %v3881, 3
        %v3884 = vshll.u32 %v3795, 16
        %v3886 = vrot.slane %v3884, 4
        %v3887 = vor.u32 %v3883, %v3886
        %v3888 = vshrl.u32 %v3797, 16
        %v3890 = vrot.slane %v3888, 3
        %v3891 = vshll.u32 %v3797, 16
        %v3893 = vrot.slane %v3891, 4
        %v3894 = vor.u32 %v3890, %v3893
        %v3895 = vsel %vm2206, %v3887, %v3894
        %v3896 = vshrl.u32 %v3799, 16
        %v3898 = vrot.slane %v3896, 3
        %v3899 = vshll.u32 %v3799, 16
        %v3901 = vrot.slane %v3899, 4
        %v3902 = vor.u32 %v3898, %v3901
        %v3903 = vshrl.u32 %v3801, 16
        %v3905 = vrot.slane %v3903, 3
        %v3906 = vshll.u32 %v3801, 16
        %v3908 = vrot.slane %v3906, 4
        %v3909 = vor.u32 %v3905, %v3908
        %v3910 = vsel %vm2206, %v3902, %v3909
        %v3911 = vshrl.u32 %v3803, 16
        %v3913 = vrot.slane %v3911, 3
        %v3914 = vshll.u32 %v3803, 16
        %v3916 = vrot.slane %v3914, 4
        %v3917 = vor.u32 %v3913, %v3916
        %v3918 = vshrl.u32 %v3805, 16
        %v3920 = vrot.slane %v3918, 3
        %v3921 = vshll.u32 %v3805, 16
        %v3923 = vrot.slane %v3921, 4
        %v3924 = vor.u32 %v3920, %v3923
        %v3925 = vsel %vm2206, %v3917, %v3924
        %v3926 = vld [vmem:[#allocation13] sm:$0xf]
        %v3927 = vld [vmem:[#allocation13 + $0x4] sm:$0xf]
        %v3928 = vld [vmem:[#allocation13 + $0x8] sm:$0xf]
        %v3929 = vld [vmem:[#allocation13 + $0xc] sm:$0xf]
        %v3930 = vld [vmem:[#allocation13 + $0x10] sm:$0xf]
        %v3931 = vld [vmem:[#allocation13 + $0x14] sm:$0xf]
        %v3932 = vld [vmem:[#allocation13 + $0x18] sm:$0xf]
        %v3933 = vld [vmem:[#allocation13 + $0x1c] sm:$0xf]
        %v3934 = vld [vmem:[#allocation13 + $0x20] sm:$0xf]
        %v3944 = vunpack.c.l.b16 %v3926
        %v3945 = vunpack.c.l.b16 %v3927
        %v3946 = vunpack.c.l.b16 %v3928
        %v3947 = vunpack.c.l.b16 %v3929
        %v3948 = vunpack.c.l.b16 %v3930
        %v3949 = vunpack.c.l.b16 %v3931
        %v3950 = vunpack.c.l.b16 %v3932
        %v3951 = vunpack.c.l.b16 %v3933
        %v3952 = vunpack.c.l.b16 %v3934
        %v3953 = vpack.c.b16 %v3945, %v3944
        %v3954 = vpack.c.b16 %v3947, %v3946
        %v3955 = vpack.c.b16 %v3949, %v3948
        %v3956 = vpack.c.b16 %v3951, %v3950
        %v3957 = vpack.c.b16 %v3952, %v3952
        %v3963 = vsel %vm2393, %v3820, 0
        %v3966 = vsel %vm2393, %v3835, 0
        %v3969 = vsel %vm2393, %v3850, 0
        %v3972 = vsel %vm2393, %v3865, 0
        %v3975 = vsel %vm2393, %v3880, 0
        %v3978 = vsel %vm2393, %v3895, 0
        %v3981 = vsel %vm2393, %v3910, 0
        %v3984 = vsel %vm2393, %v3925, 0
        %v3987 = vsel %vm2424, %v3957, 0
        %3989 = vmatprep.subr.bf16.mxu0 0
        %3990 = vmatpush1.bf16.msra.mxu0 %v3953
        %3991 = vmatprep.subr.bf16.mxu0 0
        %3992 = vmatpush1.bf16.msra.mxu0 %v3954
        %3993 = vmatprep.subr.bf16.mxu0 0
        %3994 = vmatpush1.bf16.msra.mxu0 %v3955
        %3995 = vmatprep.subr.bf16.mxu0 0
        %3996 = vmatpush1.bf16.msra.mxu0 %v3956
        %3997 = vmatprep.subr.bf16.mxu0 0
        %3998 = vmatpush1.bf16.msra.mxu0 %v3987
        %3999 = vmatprep.subr.bf16.mxu0 0
        %4000 = vmatpush1.bf16.msra.mxu0 0
        %4001 = vmatprep.subr.bf16.mxu0 0
        %4002 = vmatpush1.bf16.msra.mxu0 0
        %4003 = vmatprep.subr.bf16.mxu0 0
        %4004 = vmatpush1.bf16.msra.mxu0 0
        %4005 = vmatprep.subr.bf16.mxu0 0
        %4006 = vmatpush1.bf16.msra.mxu0 0
        %4007 = vmatprep.subr.bf16.mxu0 0
        %4008 = vmatpush1.bf16.msra.mxu0 0
        %4009 = vmatprep.subr.bf16.mxu0 0
        %4010 = vmatpush1.bf16.msra.mxu0 0
        %4011 = vmatprep.subr.bf16.mxu0 0
        %4012 = vmatpush1.bf16.msra.mxu0 0
        %4013 = vmatprep.subr.bf16.mxu0 0
        %4014 = vmatpush1.bf16.msra.mxu0 0
        %4015 = vmatprep.subr.bf16.mxu0 0
        %4016 = vmatpush1.bf16.msra.mxu0 0
        %4017 = vmatprep.subr.bf16.mxu0 0
        %4018 = vmatpush1.bf16.msra.mxu0 0
        %4019 = vmatprep.subr.bf16.mxu0 0
        %4020 = vmatpush1.bf16.msra.mxu0 0
        %4021 = vmatprep.mubr.bf16.mxu0 0
        %4022 = vmatmul.mubr.bf16.gmra.mrb[0].mxu0 %v3963
        %v4023 = vpop.f32.mrb[0].mxu0
        %v4024 = vadd.f32 0.0, %v4023
        %v4025 = vpop.f32.mrb[0].mxu0
        %v4026 = vpop.f32.mrb[0].mxu0
        %v4027 = vadd.f32 0.0, %v4026
        %v4028 = vpop.f32.mrb[0].mxu0
        %4029 = vmatprep.mubr.bf16.mxu0 0
        %4030 = vmatmul.mubr.bf16.gmra.mrb[0].mxu0 %v3966
        %v4031 = vpop.f32.mrb[0].mxu0
        %v4032 = vadd.f32 0.0, %v4031
        %v4033 = vpop.f32.mrb[0].mxu0
        %v4034 = vpop.f32.mrb[0].mxu0
        %v4035 = vadd.f32 0.0, %v4034
        %v4036 = vpop.f32.mrb[0].mxu0
        %4037 = vmatprep.mubr.bf16.mxu0 0
        %4038 = vmatmul.mubr.bf16.gmra.mrb[0].mxu0 %v3969
        %v4039 = vpop.f32.mrb[0].mxu0
        %v4040 = vadd.f32 0.0, %v4039
        %v4041 = vpop.f32.mrb[0].mxu0
        %v4042 = vpop.f32.mrb[0].mxu0
        %v4043 = vadd.f32 0.0, %v4042
        %v4044 = vpop.f32.mrb[0].mxu0
        %4045 = vmatprep.mubr.bf16.mxu0 0
        %4046 = vmatmul.mubr.bf16.gmra.mrb[0].mxu0 %v3972
        %v4047 = vpop.f32.mrb[0].mxu0
        %v4048 = vadd.f32 0.0, %v4047
        %v4049 = vpop.f32.mrb[0].mxu0
        %v4050 = vpop.f32.mrb[0].mxu0
        %v4051 = vadd.f32 0.0, %v4050
        %v4052 = vpop.f32.mrb[0].mxu0
        %4053 = vmatprep.mubr.bf16.mxu0 0
        %4054 = vmatmul.mubr.bf16.gmra.mrb[0].mxu0 %v3975
        %v4055 = vpop.f32.mrb[0].mxu0
        %v4056 = vadd.f32 0.0, %v4055
        %v4057 = vpop.f32.mrb[0].mxu0
        %v4058 = vpop.f32.mrb[0].mxu0
        %v4059 = vadd.f32 0.0, %v4058
        %v4060 = vpop.f32.mrb[0].mxu0
        %4061 = vmatprep.mubr.bf16.mxu0 0
        %4062 = vmatmul.mubr.bf16.gmra.mrb[0].mxu0 %v3978
        %v4063 = vpop.f32.mrb[0].mxu0
        %v4064 = vadd.f32 0.0, %v4063
        %v4065 = vpop.f32.mrb[0].mxu0
        %v4066 = vpop.f32.mrb[0].mxu0
        %v4067 = vadd.f32 0.0, %v4066
        %v4068 = vpop.f32.mrb[0].mxu0
        %4069 = vmatprep.mubr.bf16.mxu0 0
        %4070 = vmatmul.mubr.bf16.gmra.mrb[0].mxu0 %v3981
        %v4071 = vpop.f32.mrb[0].mxu0
        %v4072 = vadd.f32 0.0, %v4071
        %v4073 = vpop.f32.mrb[0].mxu0
        %v4074 = vpop.f32.mrb[0].mxu0
        %v4075 = vadd.f32 0.0, %v4074
        %v4076 = vpop.f32.mrb[0].mxu0
        %4077 = vmatprep.mubr.bf16.mxu0 0
        %4078 = vmatmul.mubr.bf16.gmra.mrb[0].mxu0 %v3984
        %v4079 = vpop.f32.mrb[0].mxu0
        %v4080 = vadd.f32 0.0, %v4079
        %v4081 = vpop.f32.mrb[0].mxu0
        %v4082 = vpop.f32.mrb[0].mxu0
        %v4083 = vadd.f32 0.0, %v4082
        %v4084 = vpop.f32.mrb[0].mxu0
        %4085 = vdwg.mxu0
        %v4086 = vld [vmem:[#allocation15] sm:$0x1]
        %v4088 = vlaneseq
        %v4089 = vshrl.u32 %v4088, 7
        %v4090 = vsub.s32 0, %v4089
        %v4091 = vrot.slane %v4086, %v4090
        %v4093 = vadd.f32 %v4024, %v4091
        %v4094 = vadd.f32 %v4027, %v4091
        %v4095 = vadd.f32 %v4032, %v4091
        %v4096 = vadd.f32 %v4035, %v4091
        %v4097 = vadd.f32 %v4040, %v4091
        %v4098 = vadd.f32 %v4043, %v4091
        %v4099 = vadd.f32 %v4048, %v4091
        %v4100 = vadd.f32 %v4051, %v4091
        %v4101 = vadd.f32 %v4056, %v4091
        %v4102 = vadd.f32 %v4059, %v4091
        %v4103 = vadd.f32 %v4064, %v4091
        %v4104 = vadd.f32 %v4067, %v4091
        %v4105 = vadd.f32 %v4072, %v4091
        %v4106 = vadd.f32 %v4075, %v4091
        %v4107 = vadd.f32 %v4080, %v4091
        %v4108 = vadd.f32 %v4083, %v4091
        %v4109 = vmax.f32 %v4093, 0.0
        %v4110 = vmax.f32 %v4094, 0.0
        %v4111 = vmax.f32 %v4095, 0.0
        %v4112 = vmax.f32 %v4096, 0.0
        %v4113 = vmax.f32 %v4097, 0.0
        %v4114 = vmax.f32 %v4098, 0.0
        %v4115 = vmax.f32 %v4099, 0.0
        %v4116 = vmax.f32 %v4100, 0.0
        %v4117 = vmax.f32 %v4101, 0.0
        %v4118 = vmax.f32 %v4102, 0.0
        %v4119 = vmax.f32 %v4103, 0.0
        %v4120 = vmax.f32 %v4104, 0.0
        %v4121 = vmax.f32 %v4105, 0.0
        %v4122 = vmax.f32 %v4106, 0.0
        %v4123 = vmax.f32 %v4107, 0.0
        %v4124 = vmax.f32 %v4108, 0.0
        %v4125 = vmul.f32 %v4109, 0.5
        %v4126 = vmul.f32 %v4110, 0.5
        %v4127 = vmul.f32 %v4111, 0.5
        %v4128 = vmul.f32 %v4112, 0.5
        %v4129 = vmul.f32 %v4113, 0.5
        %v4130 = vmul.f32 %v4114, 0.5
        %v4131 = vmul.f32 %v4115, 0.5
        %v4132 = vmul.f32 %v4116, 0.5
        %v4133 = vmul.f32 %v4117, 0.5
        %v4134 = vmul.f32 %v4118, 0.5
        %v4135 = vmul.f32 %v4119, 0.5
        %v4136 = vmul.f32 %v4120, 0.5
        %v4137 = vmul.f32 %v4121, 0.5
        %v4138 = vmul.f32 %v4122, 0.5
        %v4139 = vmul.f32 %v4123, 0.5
        %v4140 = vmul.f32 %v4124, 0.5
        %v4141 = vld [vmem:[%s406] sm:$0xff]
        %v4142 = vld [vmem:[%s406 + $0x8] sm:$0xff]
        %v4143 = vld [vmem:[%s406 + $0x10] sm:$0xff]
        %v4144 = vld [vmem:[%s406 + $0x18] sm:$0xff]
        %v4145 = vld [vmem:[%s406 + $0x20] sm:$0xff]
        %v4146 = vld [vmem:[%s406 + $0x28] sm:$0xff]
        %v4147 = vld [vmem:[%s406 + $0x30] sm:$0xff]
        %v4148 = vld [vmem:[%s406 + $0x38] sm:$0xff]
        %v4149 = vld [vmem:[%s406 + $0x40] sm:$0xff]
        %v4150 = vld [vmem:[%s406 + $0x48] sm:$0xff]
        %v4151 = vld [vmem:[%s406 + $0x50] sm:$0xff]
        %v4152 = vld [vmem:[%s406 + $0x58] sm:$0xff]
        %v4153 = vld [vmem:[%s406 + $0x60] sm:$0xff]
        %v4154 = vld [vmem:[%s406 + $0x68] sm:$0xff]
        %v4155 = vld [vmem:[%s406 + $0x70] sm:$0xff]
        %v4156 = vld [vmem:[%s406 + $0x78] sm:$0xff]
        %v4157 = vadd.f32 %v4125, %v4141
        %v4158 = vadd.f32 %v4126, %v4142
        %v4159 = vadd.f32 %v4127, %v4143
        %v4160 = vadd.f32 %v4128, %v4144
        %v4161 = vadd.f32 %v4129, %v4145
        %v4162 = vadd.f32 %v4130, %v4146
        %v4163 = vadd.f32 %v4131, %v4147
        %v4164 = vadd.f32 %v4132, %v4148
        %v4165 = vadd.f32 %v4133, %v4149
        %v4166 = vadd.f32 %v4134, %v4150
        %v4167 = vadd.f32 %v4135, %v4151
        %v4168 = vadd.f32 %v4136, %v4152
        %v4169 = vadd.f32 %v4137, %v4153
        %v4170 = vadd.f32 %v4138, %v4154
        %v4171 = vadd.f32 %v4139, %v4155
        %v4172 = vadd.f32 %v4140, %v4156
        %4173 = vst.msk [vmem:[%s480] sm:$0xff] %vm1888, %v4157
        %4174 = vst.msk [vmem:[%s480 + $0x8] sm:$0xff] %vm1888, %v4158
        %4175 = vst.msk [vmem:[%s480 + $0x10] sm:$0xff] %vm1888, %v4159
        %4176 = vst.msk [vmem:[%s480 + $0x18] sm:$0xff] %vm1888, %v4160
        %4177 = vst.msk [vmem:[%s480 + $0x20] sm:$0xff] %vm1888, %v4161
        %4178 = vst.msk [vmem:[%s480 + $0x28] sm:$0xff] %vm1888, %v4162
        %4179 = vst.msk [vmem:[%s480 + $0x30] sm:$0xff] %vm1888, %v4163
        %4180 = vst.msk [vmem:[%s480 + $0x38] sm:$0xff] %vm1888, %v4164
        %4181 = vst.msk [vmem:[%s480 + $0x40] sm:$0xff] %vm1888, %v4165
        %4182 = vst.msk [vmem:[%s480 + $0x48] sm:$0xff] %vm1888, %v4166
        %4183 = vst.msk [vmem:[%s480 + $0x50] sm:$0xff] %vm1888, %v4167
        %4184 = vst.msk [vmem:[%s480 + $0x58] sm:$0xff] %vm1888, %v4168
        %4185 = vst.msk [vmem:[%s480 + $0x60] sm:$0xff] %vm1888, %v4169
        %4186 = vst.msk [vmem:[%s480 + $0x68] sm:$0xff] %vm1888, %v4170
        %4187 = vst.msk [vmem:[%s480 + $0x70] sm:$0xff] %vm1888, %v4171
        %4188 = vst.msk [vmem:[%s480 + $0x78] sm:$0xff] %vm1888, %v4172
        %s4189 = sand.u32 %s235, 1
        %s4190 = scalar_lea.sflag [#allocation6], %s4189
        %s4191 = sand.u32 %s235, 1
        %s4192 = smul.addr %s4191, 128
        %s4193 = scalar_lea.vmem [#allocation16], %s4192
        // Predicated region
        $region101: #{tpu_custom_call.1} parent=47 // pred_check
          %p4194 = pneg %p245
        $region102: #{tpu_custom_call.1} parent=47 // pred_check_branch
          %4196 = sbr.rel (%p4194) target = $region104
        $region103: #{tpu_custom_call.1} parent=47 // pred_region
          %s4197 = smul.u32 8, %s34
          %s4199 = ssub.s32 2048, 2048
          %4200 = vsyncadd %s4190, %s4199
          %s4201 = smul.addr %s4197, 2
          %s4202 = smul.addr %s33, 32
          %s4203 = sadd.s32 %s4201, %s4202
          %s4204 = smul.addr %s4203, 128
          %s4205 = scalar_lea.hbm %s7, %s4204
          %s4206 = sshll.u32 %s4193, 4
          %s4207 = int_to_ptr.vmem [resolvable:$true] %s4206
          %4212 = dma.vmem_to_hbm [thread:$0]  %s4207, 2048, %s4205, %s4190, 128, 128, 8
        $region104: #{tpu_custom_call.1} parent=47 // pred_fallthru
          _
      $region48: #{tpu_custom_call.1} parent=5 // pred_fallthru
        _
      %p4213 = scmp.le.s32.totalorder 2, %s24
      // Predicated region
      $region105: #{tpu_custom_call.1} parent=5 // pred_check
        %p4214 = pneg %p4213
      $region106: #{tpu_custom_call.1} parent=5 // pred_check_branch
        %4216 = sbr.rel (%p4214) target = $region108
      $region107: #{tpu_custom_call.1} parent=5 // pred_region
        %s4217 = ssub.s32 %s24, 2
        // Predicated region
        $region109: #{tpu_custom_call.1} parent=107 // pred_check
          %p4218 = pneg %p251
        $region110: #{tpu_custom_call.1} parent=107 // pred_check_branch
          %4220 = sbr.rel (%p4218) target = $region112
        $region111: #{tpu_custom_call.1} parent=107 // pred_region
          %s4221 = sand.u32 %s236, 1
          %s4222 = scalar_lea.sflag [#allocation6], %s4221
          %s4223 = sand.u32 %s236, 1
          %s4224 = smul.addr %s4223, 128
          %s4225 = scalar_lea.vmem [#allocation16], %s4224
          %4226 = dma.done %s4222, 2048
        $region112: #{tpu_custom_call.1} parent=107 // pred_fallthru
          _
      $region108: #{tpu_custom_call.1} parent=5 // pred_fallthru
        _
    $region6: #{tpu_custom_call.1} parent=1 // loop_footer
      %s28 = sadd.s32 1, %s24
    $region7: #{tpu_custom_call.1} parent=1 // loop_footer_branch
      %23 = sbr.rel target = $region3
    $region8: #{tpu_custom_call.1} parent=1 // loop_exit
      _
    %4227 = vsyncpa [#allocation5], 1
    %s4228 = scalar_lea.sflag [#allocation5], 1
    %4229 = vsyncpa %s4228, 1
    %4230 = vsyncpa [#allocation8], 1
    %s4231 = scalar_lea.sflag [#allocation8], 1
    %4232 = vsyncpa %s4231, 1
    %4233 = vsyncpa [#allocation11], 1
    %4234 = vsyncpa [#allocation14], 1
    %4235 = vsyncpa [#allocation6], 1
    %s4236 = scalar_lea.sflag [#allocation6], 1
    %4237 = vsyncpa %s4236, 1

// kernel: tpu_custom_call.1
$region0: #{tpu_custom_call.1}
  #allocation0 [shape = 'u32[]', space=smem, size = 0x4, offset = 0x4, fixed_abs, tag = 'smem constant byte address 0x4 - core index']
  #allocation1 [shape = 'u32[144,128]{1,0:T(1,128)}', space=vmem, size = 0x12000, scoped, tag = 'internal scratch']
  #allocation2 [shape = 'bf16[12,40,8]{2,1,0:T(8,128)(2,1)}', space=vmem, size = 0x1e000, scoped, tag = 'scratch operand']
  #allocation3 [shape = 'bf16[12,40,8]{2,1,0:T(8,128)(2,1)}', space=vmem, size = 0x1e000, scoped, tag = 'scratch operand']
  %s0 = inlined_call_operand.hbm [shape: f32[2,16,16,8], index: 0, kind: input, shape index: {}]
  %s1 = inlined_call_operand.hbm [shape: f32[2,16,16,8], index: 1, kind: input, shape index: {}]
  %s2 = inlined_call_operand.hbm [shape: f32[2,16,16,8], index: 2, kind: input, shape index: {}]
  %s3 = inlined_call_operand.hbm [shape: bf16[72,8], index: 3, kind: input, shape index: {}]
  %s4 = inlined_call_operand.hbm [shape: f32[1,8], index: 4, kind: input, shape index: {}]
  %s5 = inlined_call_operand.hbm [shape: bf16[72,8], index: 5, kind: input, shape index: {}]
  %s6 = inlined_call_operand.hbm [shape: f32[1,8], index: 6, kind: input, shape index: {}]
  %s7 = inlined_call_operand.hbm [shape: f32[2,16,16,8], index: 7, kind: output, shape index: {}]
  %s8 = sld [smem:[#allocation0]]
  $region113: #{tpu_custom_call.1} parent=0
    _
  %s10 = ssub.s32 1, %s8
  %s11 = scalar_select 0, %s10, %s8
  $region1: #{tpu_custom_call.1} parent=0
    #allocation4 [shape = 'u8[131072]{0}', space=vmem, size = 0x20000, scoped, tag = 'input window, operand 0']
    #allocation5 [shape = 's32[2]{0}', space=sflag, size = 0x8, scoped, tag = 'scoped memory for tpu_custom_call.1']
    #allocation6 [shape = 's32[2]{0}', space=sflag, size = 0x8, scoped, tag = 'scoped memory for tpu_custom_call.1']
    #allocation7 [shape = 'u8[32768]{0}', space=vmem, size = 0x8000, scoped, tag = 'input window, operand 1']
    #allocation8 [shape = 's32[2]{0}', space=sflag, size = 0x8, scoped, tag = 'scoped memory for tpu_custom_call.1']
    #allocation9 [shape = 'u8[32768]{0}', space=vmem, size = 0x8000, scoped, tag = 'input window, operand 2']
    #allocation10 [shape = 'u8[18432]{0}', space=vmem, size = 0x4800, scoped, tag = 'input window, operand 3, single buffered']
    #allocation11 [shape = 's32[1]{0}', space=sflag, size = 0x4, scoped, tag = 'scoped memory for tpu_custom_call.1']
    #allocation12 [shape = 'u8[512]{0}', space=vmem, size = 0x400, scoped, tag = 'input window, operand 4, single buffered']
    #allocation13 [shape = 'u8[18432]{0}', space=vmem, size = 0x4800, scoped, tag = 'input window, operand 5, single buffered']
    #allocation14 [shape = 's32[1]{0}', space=sflag, size = 0x4, scoped, tag = 'scoped memory for tpu_custom_call.1']
    #allocation15 [shape = 'u8[512]{0}', space=vmem, size = 0x400, scoped, tag = 'input window, operand 6, single buffered']
    #allocation16 [shape = 'u8[131072]{0}', space=vmem, size = 0x20000, scoped, tag = 'output window, operand 0']
    %12 = vsyncpa [#allocation5], 0
    %s13 = scalar_lea.sflag [#allocation5], 1
    %14 = vsyncpa %s13, 0
    %15 = vsyncpa [#allocation8], 0
    %s16 = scalar_lea.sflag [#allocation8], 1
    %17 = vsyncpa %s16, 0
    %18 = vsyncpa [#allocation11], 0
    %19 = vsyncpa [#allocation14], 0
    %20 = vsyncpa [#allocation6], 0
    %s21 = scalar_lea.sflag [#allocation6], 1
    %22 = vsyncpa %s21, 0
    loop: start=0, step=1, limit=6
    $region2: #{tpu_custom_call.1} parent=1 // loop_pre_header
      _
    $region3: #{tpu_custom_call.1} parent=1 // loop_header
      %s24 = sphi 0, %s28
      %p25 = scmp.ge.s32.totalorder %s24, 6
      %s31 = sphi 0, %s43
      %s32 = sphi 0, %s39
      %s33 = sphi 0, %s31
      %s34 = sphi 0, %s32
      %s35 = sphi 0, %s33
      %s36 = sphi 0, %s34
      %s48 = sphi 0, %s50
      %s51 = sphi 0, %s48
      %s52 = sphi 0, %s51
      %s68 = sphi 0, %s52
      %s84 = sphi 0, %s86
      %s87 = sphi 0, %s84
      %s88 = sphi 0, %s87
      %s104 = sphi 0, %s88
      %s120 = sphi 0, %s122
      %s123 = sphi 0, %s120
      %s124 = sphi 0, %s123
      %s140 = sphi 0, %s124
      %s144 = sphi 0, %s144
      %s146 = sphi 0, %s144
      %s147 = sphi 0, %s146
      %s161 = sphi 0, %s147
      %s165 = sphi 0, %s165
      %s167 = sphi 0, %s165
      %s168 = sphi 0, %s167
      %s182 = sphi 0, %s168
      %s186 = sphi 0, %s186
      %s188 = sphi 0, %s186
      %s189 = sphi 0, %s188
      %s203 = sphi 0, %s189
      %s207 = sphi 0, %s207
      %s209 = sphi 0, %s207
      %s210 = sphi 0, %s209
      %s224 = sphi 0, %s210
      %s232 = sphi 0, %s234
      %s235 = sphi 0, %s232
      %s236 = sphi 0, %s235
      %s252 = sphi 0, %s236
    $region4: #{tpu_custom_call.1} parent=1 // loop_header_branch
      %27 = sbr.rel (%p25) target = $region8
    $region5: #{tpu_custom_call.1} parent=1 // loop_body
      %s29 = ssub.s32 %s24, 1
      %s30 = ssub.s32 %s24, 2
      %s37 = sadd.s32 1, %s32
      %p38 = scmp.ge.s32.totalorder %s37, 2
      %s39 = scalar_select %p38, 0, %s37
      %s40 = sadd.s32 1, %s31
      %s41 = scalar_select %p38, %s40, %s31
      %p42 = scmp.ge.s32.totalorder %s41, 2
      %s43 = scalar_select %p42, 0, %s41
      %s44 = ssub.s32 %s31, %s43
      %s45 = ssub.s32 %s32, %s39
      %s46 = sor.u32 %s44, %s45
      %p47 = scmp.eq.s32.totalorder %s46, 0
      %s49 = sadd.s32 %s48, 1
      %s50 = scalar_select %p47, %s48, %s49
      %p53 = pneg %p47
      %p54 = scmp.eq.s32.totalorder %s24, 3
      %p55 = por %p53, %p54
      %p56 = scmp.ne.s32.totalorder %s48, %s51
      %p57 = scmp.eq.s32.totalorder %s24, 0
      %p58 = por %p56, %p57
      %p59 = scmp.ne.s32.totalorder %s48, %s51
      %p60 = scmp.eq.s32.totalorder %s29, 3
      %p61 = por %p59, %p60
      %p62 = scmp.ne.s32.totalorder %s51, %s52
      %p63 = scmp.eq.s32.totalorder %s29, 0
      %p64 = por %p62, %p63
      %p65 = scmp.ne.s32.totalorder %s51, %s52
      %p66 = scmp.eq.s32.totalorder %s30, 3
      %p67 = por %p65, %p66
      %p69 = scmp.ne.s32.totalorder %s52, %s68
      %p70 = scmp.eq.s32.totalorder %s30, 0
      %p71 = por %p69, %p70
      %s72 = smul.u32 %s32, 4
      %s73 = ssub.s32 %s72, 1
      %p74 = scmp.gt.s32.totalorder %s73, 0
      %s75 = scalar_select %p74, %s73, 0
      %s76 = smul.u32 %s39, 4
      %s77 = ssub.s32 %s76, 1
      %p78 = scmp.gt.s32.totalorder %s77, 0
      %s79 = scalar_select %p78, %s77, 0
      %s80 = ssub.s32 %s31, %s43
      %s81 = ssub.s32 %s75, %s79
      %s82 = sor.u32 %s80, %s81
      %p83 = scmp.eq.s32.totalorder %s82, 0
      %s85 = sadd.s32 %s84, 1
      %s86 = scalar_select %p83, %s84, %s85
      %p89 = pneg %p83
      %p90 = scmp.eq.s32.totalorder %s24, 3
      %p91 = por %p89, %p90
      %p92 = scmp.ne.s32.totalorder %s84, %s87
      %p93 = scmp.eq.s32.totalorder %s24, 0
      %p94 = por %p92, %p93
      %p95 = scmp.ne.s32.totalorder %s84, %s87
      %p96 = scmp.eq.s32.totalorder %s29, 3
      %p97 = por %p95, %p96
      %p98 = scmp.ne.s32.totalorder %s87, %s88
      %p99 = scmp.eq.s32.totalorder %s29, 0
      %p100 = por %p98, %p99
      %p101 = scmp.ne.s32.totalorder %s87, %s88
      %p102 = scmp.eq.s32.totalorder %s30, 3
      %p103 = por %p101, %p102
      %p105 = scmp.ne.s32.totalorder %s88, %s104
      %p106 = scmp.eq.s32.totalorder %s30, 0
      %p107 = por %p105, %p106
      %s108 = smul.u32 %s32, 4
      %s109 = sadd.s32 %s108, 4
      %p110 = scmp.lt.s32.totalorder %s109, 7
      %s111 = scalar_select %p110, %s109, 7
      %s112 = smul.u32 %s39, 4
      %s113 = sadd.s32 %s112, 4
      %p114 = scmp.lt.s32.totalorder %s113, 7
      %s115 = scalar_select %p114, %s113, 7
      %s116 = ssub.s32 %s31, %s43
      %s117 = ssub.s32 %s111, %s115
      %s118 = sor.u32 %s116, %s117
      %p119 = scmp.eq.s32.totalorder %s118, 0
      %s121 = sadd.s32 %s120, 1
      %s122 = scalar_select %p119, %s120, %s121
      %p125 = pneg %p119
      %p126 = scmp.eq.s32.totalorder %s24, 3
      %p127 = por %p125, %p126
      %p128 = scmp.ne.s32.totalorder %s120, %s123
      %p129 = scmp.eq.s32.totalorder %s24, 0
      %p130 = por %p128, %p129
      %p131 = scmp.ne.s32.totalorder %s120, %s123
      %p132 = scmp.eq.s32.totalorder %s29, 3
      %p133 = por %p131, %p132
      %p134 = scmp.ne.s32.totalorder %s123, %s124
      %p135 = scmp.eq.s32.totalorder %s29, 0
      %p136 = por %p134, %p135
      %p137 = scmp.ne.s32.totalorder %s123, %s124
      %p138 = scmp.eq.s32.totalorder %s30, 3
      %p139 = por %p137, %p138
      %p141 = scmp.ne.s32.totalorder %s124, %s140
      %p142 = scmp.eq.s32.totalorder %s30, 0
      %p143 = por %p141, %p142
      %s145 = sadd.s32 %s144, 1
      %p148 = scmp.eq.s32.totalorder %s24, 3
      %p149 = scmp.ne.s32.totalorder %s144, %s146
      %p150 = scmp.eq.s32.totalorder %s24, 0
      %p151 = por %p149, %p150
      %p152 = scmp.ne.s32.totalorder %s144, %s146
      %p153 = scmp.eq.s32.totalorder %s29, 3
      %p154 = por %p152, %p153
      %p155 = scmp.ne.s32.totalorder %s146, %s147
      %p156 = scmp.eq.s32.totalorder %s29, 0
      %p157 = por %p155, %p156
      %p158 = scmp.ne.s32.totalorder %s146, %s147
      %p159 = scmp.eq.s32.totalorder %s30, 3
      %p160 = por %p158, %p159
      %p162 = scmp.ne.s32.totalorder %s147, %s161
      %p163 = scmp.eq.s32.totalorder %s30, 0
      %p164 = por %p162, %p163
      %s166 = sadd.s32 %s165, 1
      %p169 = scmp.eq.s32.totalorder %s24, 3
      %p170 = scmp.ne.s32.totalorder %s165, %s167
      %p171 = scmp.eq.s32.totalorder %s24, 0
      %p172 = por %p170, %p171
      %p173 = scmp.ne.s32.totalorder %s165, %s167
      %p174 = scmp.eq.s32.totalorder %s29, 3
      %p175 = por %p173, %p174
      %p176 = scmp.ne.s32.totalorder %s167, %s168
      %p177 = scmp.eq.s32.totalorder %s29, 0
      %p178 = por %p176, %p177
      %p179 = scmp.ne.s32.totalorder %s167, %s168
      %p180 = scmp.eq.s32.totalorder %s30, 3
      %p181 = por %p179, %p180
      %p183 = scmp.ne.s32.totalorder %s168, %s182
      %p184 = scmp.eq.s32.totalorder %s30, 0
      %p185 = por %p183, %p184
      %s187 = sadd.s32 %s186, 1
      %p190 = scmp.eq.s32.totalorder %s24, 3
      %p191 = scmp.ne.s32.totalorder %s186, %s188
      %p192 = scmp.eq.s32.totalorder %s24, 0
      %p193 = por %p191, %p192
      %p194 = scmp.ne.s32.totalorder %s186, %s188
      %p195 = scmp.eq.s32.totalorder %s29, 3
      %p196 = por %p194, %p195
      %p197 = scmp.ne.s32.totalorder %s188, %s189
      %p198 = scmp.eq.s32.totalorder %s29, 0
      %p199 = por %p197, %p198
      %p200 = scmp.ne.s32.totalorder %s188, %s189
      %p201 = scmp.eq.s32.totalorder %s30, 3
      %p202 = por %p200, %p201
      %p204 = scmp.ne.s32.totalorder %s189, %s203
      %p205 = scmp.eq.s32.totalorder %s30, 0
      %p206 = por %p204, %p205
      %s208 = sadd.s32 %s207, 1
      %p211 = scmp.eq.s32.totalorder %s24, 3
      %p212 = scmp.ne.s32.totalorder %s207, %s209
      %p213 = scmp.eq.s32.totalorder %s24, 0
      %p214 = por %p212, %p213
      %p215 = scmp.ne.s32.totalorder %s207, %s209
      %p216 = scmp.eq.s32.totalorder %s29, 3
      %p217 = por %p215, %p216
      %p218 = scmp.ne.s32.totalorder %s209, %s210
      %p219 = scmp.eq.s32.totalorder %s29, 0
      %p220 = por %p218, %p219
      %p221 = scmp.ne.s32.totalorder %s209, %s210
      %p222 = scmp.eq.s32.totalorder %s30, 3
      %p223 = por %p221, %p222
      %p225 = scmp.ne.s32.totalorder %s210, %s224
      %p226 = scmp.eq.s32.totalorder %s30, 0
      %p227 = por %p225, %p226
      %s228 = ssub.s32 %s31, %s43
      %s229 = ssub.s32 %s32, %s39
      %s230 = sor.u32 %s228, %s229
      %p231 = scmp.eq.s32.totalorder %s230, 0
      %s233 = sadd.s32 %s232, 1
      %s234 = scalar_select %p231, %s232, %s233
      %p237 = pneg %p231
      %p238 = scmp.eq.s32.totalorder %s24, 3
      %p239 = por %p237, %p238
      %p240 = scmp.ne.s32.totalorder %s232, %s235
      %p241 = scmp.eq.s32.totalorder %s24, 0
      %p242 = por %p240, %p241
      %p243 = scmp.ne.s32.totalorder %s232, %s235
      %p244 = scmp.eq.s32.totalorder %s29, 3
      %p245 = por %p243, %p244
      %p246 = scmp.ne.s32.totalorder %s235, %s236
      %p247 = scmp.eq.s32.totalorder %s29, 0
      %p248 = por %p246, %p247
      %p249 = scmp.ne.s32.totalorder %s235, %s236
      %p250 = scmp.eq.s32.totalorder %s30, 3
      %p251 = por %p249, %p250
      %p253 = scmp.ne.s32.totalorder %s236, %s252
      %p254 = scmp.eq.s32.totalorder %s30, 0
      %p255 = por %p253, %p254
      %p256 = scmp.le.s32.totalorder 1, %s24
      %p257 = scmp.lt.s32.totalorder %s24, 5
      %p258 = pnand %p256, %p257
      %p259 = pneg %p258
      // Predicated region
      $region9: #{tpu_custom_call.1} parent=5 // pred_check
        _
      $region10: #{tpu_custom_call.1} parent=5 // pred_check_branch
        %261 = sbr.rel (%p258) target = $region12
      $region11: #{tpu_custom_call.1} parent=5 // pred_region
        %s262 = ssub.s32 %s24, 1
        // Predicated region
        $region13: #{tpu_custom_call.1} parent=11 // pred_check
          %p263 = pneg %p157
        $region14: #{tpu_custom_call.1} parent=11 // pred_check_branch
          %265 = sbr.rel (%p263) target = $region16
        $region15: #{tpu_custom_call.1} parent=11 // pred_region
          %s267 = ssub.s32 576, 576
          %268 = vsyncadd [#allocation11], %s267
          %s269 = sshll.u32 [#allocation10], 4
          %s270 = int_to_ptr.vmem [resolvable:$true] %s269
          %275 = dma.hbm_to_vmem [thread:$0]  %s3, 576, %s270, [#allocation11], 64, 64, 4
        $region16: #{tpu_custom_call.1} parent=11 // pred_fallthru
          _
        // Predicated region
        $region17: #{tpu_custom_call.1} parent=11 // pred_check
          %p276 = pneg %p178
        $region18: #{tpu_custom_call.1} parent=11 // pred_check_branch
          %278 = sbr.rel (%p276) target = $region20
        $region19: #{tpu_custom_call.1} parent=11 // pred_region
          %s280 = ssub.s32 16, 16
          %281 = vsyncadd [#allocation11], %s280
          %s283 = sshll.u32 [#allocation12], 4
          %s284 = int_to_ptr.vmem [resolvable:$true] %s283
          %286 = dma.hbm_to_vmem [thread:$0]  %s4, 16, %s284, [#allocation11]
        $region20: #{tpu_custom_call.1} parent=11 // pred_fallthru
          _
        // Predicated region
        $region21: #{tpu_custom_call.1} parent=11 // pred_check
          %p287 = pneg %p199
        $region22: #{tpu_custom_call.1} parent=11 // pred_check_branch
          %289 = sbr.rel (%p287) target = $region24
        $region23: #{tpu_custom_call.1} parent=11 // pred_region
          %s291 = ssub.s32 576, 576
          %292 = vsyncadd [#allocation14], %s291
          %s293 = sshll.u32 [#allocation13], 4
          %s294 = int_to_ptr.vmem [resolvable:$true] %s293
          %299 = dma.hbm_to_vmem [thread:$0]  %s5, 576, %s294, [#allocation14], 64, 64, 4
        $region24: #{tpu_custom_call.1} parent=11 // pred_fallthru
          _
        // Predicated region
        $region25: #{tpu_custom_call.1} parent=11 // pred_check
          %p300 = pneg %p220
        $region26: #{tpu_custom_call.1} parent=11 // pred_check_branch
          %302 = sbr.rel (%p300) target = $region28
        $region27: #{tpu_custom_call.1} parent=11 // pred_region
          %s304 = ssub.s32 16, 16
          %305 = vsyncadd [#allocation14], %s304
          %s307 = sshll.u32 [#allocation15], 4
          %s308 = int_to_ptr.vmem [resolvable:$true] %s307
          %310 = dma.hbm_to_vmem [thread:$0]  %s6, 16, %s308, [#allocation14]
        $region28: #{tpu_custom_call.1} parent=11 // pred_fallthru
          _
      $region12: #{tpu_custom_call.1} parent=5 // pred_fallthru
        _
      %p311 = scmp.lt.s32.totalorder %s24, 4
      // Predicated region
      $region29: #{tpu_custom_call.1} parent=5 // pred_check
        %p312 = pneg %p311
      $region30: #{tpu_custom_call.1} parent=5 // pred_check_branch
        %314 = sbr.rel (%p312) target = $region32
      $region31: #{tpu_custom_call.1} parent=5 // pred_region
        // Predicated region
        $region33: #{tpu_custom_call.1} parent=31 // pred_check
          %p315 = pneg %p58
        $region34: #{tpu_custom_call.1} parent=31 // pred_check_branch
          %317 = sbr.rel (%p315) target = $region36
        $region35: #{tpu_custom_call.1} parent=31 // pred_region
          %s318 = sand.u32 %s48, 1
          %s319 = scalar_lea.sflag [#allocation5], %s318
          %s320 = sand.u32 %s48, 1
          %s321 = smul.addr %s320, 128
          %s322 = scalar_lea.vmem [#allocation4], %s321
          %s323 = smul.u32 8, %s32
          %s325 = ssub.s32 2048, 2048
          %326 = vsyncadd %s319, %s325
          %s327 = smul.addr %s323, 2
          %s328 = smul.addr %s31, 32
          %s329 = sadd.s32 %s327, %s328
          %s330 = smul.addr %s329, 128
          %s331 = scalar_lea.hbm %s0, %s330
          %s332 = sshll.u32 %s322, 4
          %s333 = int_to_ptr.vmem [resolvable:$true] %s332
          %338 = dma.hbm_to_vmem [thread:$0]  %s331, 2048, %s333, %s319, 128, 128, 8
        $region36: #{tpu_custom_call.1} parent=31 // pred_fallthru
          _
        // Predicated region
        $region37: #{tpu_custom_call.1} parent=31 // pred_check
          %p339 = pneg %p94
        $region38: #{tpu_custom_call.1} parent=31 // pred_check_branch
          %341 = sbr.rel (%p339) target = $region40
        $region39: #{tpu_custom_call.1} parent=31 // pred_region
          %s342 = sand.u32 %s24, 1
          %s343 = scalar_lea.sflag [#allocation8], %s342
          %s344 = sand.u32 %s84, 1
          %s345 = smul.addr %s344, 32
          %s346 = scalar_lea.vmem [#allocation7], %s345
          %s347 = smul.u32 %s32, 4
          %s348 = ssub.s32 %s347, 1
          %p349 = scmp.gt.s32.totalorder %s348, 0
          %s350 = scalar_select %p349, %s348, 0
          %s351 = smul.u32 2, %s350
          %s353 = ssub.s32 512, 512
          %354 = vsyncadd %s343, %s353
          %s355 = smul.addr %s351, 2
          %s356 = smul.addr %s31, 32
          %s357 = sadd.s32 %s355, %s356
          %s358 = smul.addr %s357, 128
          %s359 = scalar_lea.hbm %s1, %s358
          %s360 = sshll.u32 %s346, 4
          %s361 = int_to_ptr.vmem [resolvable:$true] %s360
          %366 = dma.hbm_to_vmem [thread:$0]  %s359, 512, %s361, %s343, 128, 128, 8
        $region40: #{tpu_custom_call.1} parent=31 // pred_fallthru
          _
        // Predicated region
        $region41: #{tpu_custom_call.1} parent=31 // pred_check
          %p367 = pneg %p130
        $region42: #{tpu_custom_call.1} parent=31 // pred_check_branch
          %369 = sbr.rel (%p367) target = $region44
        $region43: #{tpu_custom_call.1} parent=31 // pred_region
          %s370 = sand.u32 %s24, 1
          %s371 = scalar_lea.sflag [#allocation8], %s370
          %s372 = sand.u32 %s120, 1
          %s373 = smul.addr %s372, 32
          %s374 = scalar_lea.vmem [#allocation9], %s373
          %s375 = smul.u32 %s32, 4
          %s376 = sadd.s32 %s375, 4
          %p377 = scmp.lt.s32.totalorder %s376, 7
          %s378 = scalar_select %p377, %s376, 7
          %s379 = smul.u32 2, %s378
          %s381 = ssub.s32 512, 512
          %382 = vsyncadd %s371, %s381
          %s383 = smul.addr %s379, 2
          %s384 = smul.addr %s31, 32
          %s385 = sadd.s32 %s383, %s384
          %s386 = smul.addr %s385, 128
          %s387 = scalar_lea.hbm %s2, %s386
          %s388 = sshll.u32 %s374, 4
          %s389 = int_to_ptr.vmem [resolvable:$true] %s388
          %394 = dma.hbm_to_vmem [thread:$0]  %s387, 512, %s389, %s371, 128, 128, 8
        $region44: #{tpu_custom_call.1} parent=31 // pred_fallthru
          _
      $region32: #{tpu_custom_call.1} parent=5 // pred_fallthru
        _
      %p395 = scmp.le.s32.totalorder 1, %s24
      %p396 = scmp.lt.s32.totalorder %s24, 5
      %p397 = pnand %p395, %p396
      %p398 = pneg %p397
      // Predicated region
      $region45: #{tpu_custom_call.1} parent=5 // pred_check
        _
      $region46: #{tpu_custom_call.1} parent=5 // pred_check_branch
        %400 = sbr.rel (%p397) target = $region48
      $region47: #{tpu_custom_call.1} parent=5 // pred_region
        %s401 = ssub.s32 %s24, 1
        %s402 = sand.u32 %s51, 1
        %s403 = scalar_lea.sflag [#allocation5], %s402
        %s404 = sand.u32 %s51, 1
        %s405 = smul.addr %s404, 128
        %s406 = scalar_lea.vmem [#allocation4], %s405
        // Predicated region
        $region49: #{tpu_custom_call.1} parent=47 // pred_check
          %p407 = pneg %p64
        $region50: #{tpu_custom_call.1} parent=47 // pred_check_branch
          %409 = sbr.rel (%p407) target = $region52
        $region51: #{tpu_custom_call.1} parent=47 // pred_region
          %410 = dma.done %s403, 2048
        $region52: #{tpu_custom_call.1} parent=47 // pred_fallthru
          _
        %s411 = sand.u32 %s29, 1
        %s412 = scalar_lea.sflag [#allocation8], %s411
        %s413 = sand.u32 %s87, 1
        %s414 = smul.addr %s413, 32
        %s415 = scalar_lea.vmem [#allocation7], %s414
        // Predicated region
        $region53: #{tpu_custom_call.1} parent=47 // pred_check
          %p416 = pneg %p100
        $region54: #{tpu_custom_call.1} parent=47 // pred_check_branch
          %418 = sbr.rel (%p416) target = $region56
        $region55: #{tpu_custom_call.1} parent=47 // pred_region
          %419 = dma.done %s412, 512
        $region56: #{tpu_custom_call.1} parent=47 // pred_fallthru
          _
        %s420 = sand.u32 %s29, 1
        %s421 = scalar_lea.sflag [#allocation8], %s420
        %s422 = sand.u32 %s123, 1
        %s423 = smul.addr %s422, 32
        %s424 = scalar_lea.vmem [#allocation9], %s423
        // Predicated region
        $region57: #{tpu_custom_call.1} parent=47 // pred_check
          %p425 = pneg %p136
        $region58: #{tpu_custom_call.1} parent=47 // pred_check_branch
          %427 = sbr.rel (%p425) target = $region60
        $region59: #{tpu_custom_call.1} parent=47 // pred_region
          %428 = dma.done %s421, 512
        $region60: #{tpu_custom_call.1} parent=47 // pred_fallthru
          _
        // Predicated region
        $region61: #{tpu_custom_call.1} parent=47 // pred_check
          %p429 = pneg %p157
        $region62: #{tpu_custom_call.1} parent=47 // pred_check_branch
          %431 = sbr.rel (%p429) target = $region64
        $region63: #{tpu_custom_call.1} parent=47 // pred_region
          %432 = dma.done [#allocation11], 576
        $region64: #{tpu_custom_call.1} parent=47 // pred_fallthru
          _
        // Predicated region
        $region65: #{tpu_custom_call.1} parent=47 // pred_check
          %p433 = pneg %p178
        $region66: #{tpu_custom_call.1} parent=47 // pred_check_branch
          %435 = sbr.rel (%p433) target = $region68
        $region67: #{tpu_custom_call.1} parent=47 // pred_region
          %436 = dma.done [#allocation11], 16
        $region68: #{tpu_custom_call.1} parent=47 // pred_fallthru
          _
        // Predicated region
        $region69: #{tpu_custom_call.1} parent=47 // pred_check
          %p437 = pneg %p199
        $region70: #{tpu_custom_call.1} parent=47 // pred_check_branch
          %439 = sbr.rel (%p437) target = $region72
        $region71: #{tpu_custom_call.1} parent=47 // pred_region
          %440 = dma.done [#allocation14], 576
        $region72: #{tpu_custom_call.1} parent=47 // pred_fallthru
          _
        // Predicated region
        $region73: #{tpu_custom_call.1} parent=47 // pred_check
          %p441 = pneg %p220
        $region74: #{tpu_custom_call.1} parent=47 // pred_check_branch
          %443 = sbr.rel (%p441) target = $region76
        $region75: #{tpu_custom_call.1} parent=47 // pred_region
          %444 = dma.done [#allocation14], 16
        $region76: #{tpu_custom_call.1} parent=47 // pred_fallthru
          _
        %s445 = sand.u32 %s51, 1
        %s446 = scalar_lea.sflag [#allocation5], %s445
        %s447 = sand.u32 %s51, 1
        %s448 = smul.addr %s447, 128
        %s449 = scalar_lea.vmem [#allocation4], %s448
        %p450 = pneg %p64
        %p451 = pneg %p61
        %s452 = sand.u32 %s29, 1
        %s453 = scalar_lea.sflag [#allocation8], %s452
        %s454 = sand.u32 %s87, 1
        %s455 = smul.addr %s454, 32
        %s456 = scalar_lea.vmem [#allocation7], %s455
        %p457 = pneg %p100
        %p458 = pneg %p97
        %s459 = sand.u32 %s29, 1
        %s460 = scalar_lea.sflag [#allocation8], %s459
        %s461 = sand.u32 %s123, 1
        %s462 = smul.addr %s461, 32
        %s463 = scalar_lea.vmem [#allocation9], %s462
        %p464 = pneg %p136
        %p465 = pneg %p133
        %p466 = pneg %p157
        %p467 = pneg %p154
        %p468 = pneg %p178
        %p469 = pneg %p175
        %p470 = pneg %p199
        %p471 = pneg %p196
        %p472 = pneg %p220
        %p473 = pneg %p217
        %p474 = pneg %p248
        %p475 = pneg %p245
        %s476 = sand.u32 %s235, 1
        %s477 = scalar_lea.sflag [#allocation6], %s476
        %s478 = sand.u32 %s235, 1
        %s479 = smul.addr %s478, 128
        %s480 = scalar_lea.vmem [#allocation16], %s479
        %s481 = smul.u32 8, %s34
        %s482 = smul.u32 %s34, 4
        %s483 = ssub.s32 %s482, 1
        %p484 = scmp.gt.s32.totalorder %s483, 0
        %s485 = scalar_select %p484, %s483, 0
        %s486 = smul.u32 2, %s485
        %s487 = smul.u32 %s34, 4
        %s488 = sadd.s32 %s487, 4
        %p489 = scmp.lt.s32.totalorder %s488, 7
        %s490 = scalar_select %p489, %s488, 7
        %s491 = smul.u32 2, %s490
        %s492 = smul.u32 8, %s34
        %vm494 = vcmask 60419
        %vm495 = vsmask.f32 7950
        %vm496 = vmand %vm494, %vm495
        %v497 = vld [vmem:[#allocation2 + $0x4] sm:$0x8]
        %v498 = vsel %vm496, 0, %v497
        %499 = vst [vmem:[#allocation2 + $0x4] sm:$0x8] %v498
        %v500 = vld [vmem:[#allocation2 + $0x18] sm:$0x8]
        %v501 = vsel %vm496, 0, %v500
        %502 = vst [vmem:[#allocation2 + $0x18] sm:$0x8] %v501
        %v503 = vld [vmem:[#allocation2 + $0x2c] sm:$0x8]
        %v504 = vsel %vm496, 0, %v503
        %505 = vst [vmem:[#allocation2 + $0x2c] sm:$0x8] %v504
        %v506 = vld [vmem:[#allocation2 + $0x40] sm:$0x8]
        %v507 = vsel %vm496, 0, %v506
        %508 = vst [vmem:[#allocation2 + $0x40] sm:$0x8] %v507
        %v509 = vld [vmem:[#allocation2 + $0x54] sm:$0x8]
        %v510 = vsel %vm496, 0, %v509
        %511 = vst [vmem:[#allocation2 + $0x54] sm:$0x8] %v510
        %v512 = vld [vmem:[#allocation2 + $0x68] sm:$0x8]
        %v513 = vsel %vm496, 0, %v512
        %514 = vst [vmem:[#allocation2 + $0x68] sm:$0x8] %v513
        %v515 = vld [vmem:[#allocation2 + $0x7c] sm:$0x8]
        %v516 = vsel %vm496, 0, %v515
        %517 = vst [vmem:[#allocation2 + $0x7c] sm:$0x8] %v516
        %v518 = vld [vmem:[#allocation2 + $0x90] sm:$0x8]
        %v519 = vsel %vm496, 0, %v518
        %520 = vst [vmem:[#allocation2 + $0x90] sm:$0x8] %v519
        %v521 = vld [vmem:[#allocation2 + $0xa4] sm:$0x8]
        %v522 = vsel %vm496, 0, %v521
        %523 = vst [vmem:[#allocation2 + $0xa4] sm:$0x8] %v522
        %v524 = vld [vmem:[#allocation2 + $0xb8] sm:$0x8]
        %v525 = vsel %vm496, 0, %v524
        %526 = vst [vmem:[#allocation2 + $0xb8] sm:$0x8] %v525
        %v527 = vld [vmem:[#allocation2 + $0xcc] sm:$0x8]
        %v528 = vsel %vm496, 0, %v527
        %529 = vst [vmem:[#allocation2 + $0xcc] sm:$0x8] %v528
        %v530 = vld [vmem:[#allocation2 + $0xe0] sm:$0x8]
        %v531 = vsel %vm496, 0, %v530
        %532 = vst [vmem:[#allocation2 + $0xe0] sm:$0x8] %v531
        %vm533 = vcmask 57344
        %vm534 = vsmask.f32 256
        %vm535 = vmand %vm533, %vm534
        %v536 = vld [vmem:[#allocation2 + $0x10] sm:$0x1]
        %v537 = vsel %vm535, 0, %v536
        %538 = vst [vmem:[#allocation2 + $0x10] sm:$0x1] %v537
        %v539 = vld [vmem:[#allocation2 + $0x24] sm:$0x1]
        %v540 = vsel %vm535, 0, %v539
        %541 = vst [vmem:[#allocation2 + $0x24] sm:$0x1] %v540
        %v542 = vld [vmem:[#allocation2 + $0x38] sm:$0x1]
        %v543 = vsel %vm535, 0, %v542
        %544 = vst [vmem:[#allocation2 + $0x38] sm:$0x1] %v543
        %v545 = vld [vmem:[#allocation2 + $0x4c] sm:$0x1]
        %v546 = vsel %vm535, 0, %v545
        %547 = vst [vmem:[#allocation2 + $0x4c] sm:$0x1] %v546
        %v548 = vld [vmem:[#allocation2 + $0x60] sm:$0x1]
        %v549 = vsel %vm535, 0, %v548
        %550 = vst [vmem:[#allocation2 + $0x60] sm:$0x1] %v549
        %v551 = vld [vmem:[#allocation2 + $0x74] sm:$0x1]
        %v552 = vsel %vm535, 0, %v551
        %553 = vst [vmem:[#allocation2 + $0x74] sm:$0x1] %v552
        %v554 = vld [vmem:[#allocation2 + $0x88] sm:$0x1]
        %v555 = vsel %vm535, 0, %v554
        %556 = vst [vmem:[#allocation2 + $0x88] sm:$0x1] %v555
        %v557 = vld [vmem:[#allocation2 + $0x9c] sm:$0x1]
        %v558 = vsel %vm535, 0, %v557
        %559 = vst [vmem:[#allocation2 + $0x9c] sm:$0x1] %v558
        %v560 = vld [vmem:[#allocation2 + $0xb0] sm:$0x1]
        %v561 = vsel %vm535, 0, %v560
        %562 = vst [vmem:[#allocation2 + $0xb0] sm:$0x1] %v561
        %v563 = vld [vmem:[#allocation2 + $0xc4] sm:$0x1]
        %v564 = vsel %vm535, 0, %v563
        %565 = vst [vmem:[#allocation2 + $0xc4] sm:$0x1] %v564
        %v566 = vld [vmem:[#allocation2 + $0xd8] sm:$0x1]
        %v567 = vsel %vm535, 0, %v566
        %568 = vst [vmem:[#allocation2 + $0xd8] sm:$0x1] %v567
        %v569 = vld [vmem:[#allocation2 + $0xec] sm:$0x1]
        %v570 = vsel %vm535, 0, %v569
        %571 = vst [vmem:[#allocation2 + $0xec] sm:$0x1] %v570
        %v572 = vld [vmem:[#allocation3 + $0x4] sm:$0x8]
        %v573 = vsel %vm496, 0, %v572
        %574 = vst [vmem:[#allocation3 + $0x4] sm:$0x8] %v573
        %v575 = vld [vmem:[#allocation3 + $0x18] sm:$0x8]
        %v576 = vsel %vm496, 0, %v575
        %577 = vst [vmem:[#allocation3 + $0x18] sm:$0x8] %v576
        %v578 = vld [vmem:[#allocation3 + $0x2c] sm:$0x8]
        %v579 = vsel %vm496, 0, %v578
        %580 = vst [vmem:[#allocation3 + $0x2c] sm:$0x8] %v579
        %v581 = vld [vmem:[#allocation3 + $0x40] sm:$0x8]
        %v582 = vsel %vm496, 0, %v581
        %583 = vst [vmem:[#allocation3 + $0x40] sm:$0x8] %v582
        %v584 = vld [vmem:[#allocation3 + $0x54] sm:$0x8]
        %v585 = vsel %vm496, 0, %v584
        %586 = vst [vmem:[#allocation3 + $0x54] sm:$0x8] %v585
        %v587 = vld [vmem:[#allocation3 + $0x68] sm:$0x8]
        %v588 = vsel %vm496, 0, %v587
        %589 = vst [vmem:[#allocation3 + $0x68] sm:$0x8] %v588
        %v590 = vld [vmem:[#allocation3 + $0x7c] sm:$0x8]
        %v591 = vsel %vm496, 0, %v590
        %592 = vst [vmem:[#allocation3 + $0x7c] sm:$0x8] %v591
        %v593 = vld [vmem:[#allocation3 + $0x90] sm:$0x8]
        %v594 = vsel %vm496, 0, %v593
        %595 = vst [vmem:[#allocation3 + $0x90] sm:$0x8] %v594
        %v596 = vld [vmem:[#allocation3 + $0xa4] sm:$0x8]
        %v597 = vsel %vm496, 0, %v596
        %598 = vst [vmem:[#allocation3 + $0xa4] sm:$0x8] %v597
        %v599 = vld [vmem:[#allocation3 + $0xb8] sm:$0x8]
        %v600 = vsel %vm496, 0, %v599
        %601 = vst [vmem:[#allocation3 + $0xb8] sm:$0x8] %v600
        %v602 = vld [vmem:[#allocation3 + $0xcc] sm:$0x8]
        %v603 = vsel %vm496, 0, %v602
        %604 = vst [vmem:[#allocation3 + $0xcc] sm:$0x8] %v603
        %v605 = vld [vmem:[#allocation3 + $0xe0] sm:$0x8]
        %v606 = vsel %vm496, 0, %v605
        %607 = vst [vmem:[#allocation3 + $0xe0] sm:$0x8] %v606
        %v608 = vld [vmem:[#allocation3 + $0x10] sm:$0x1]
        %v609 = vsel %vm535, 0, %v608
        %610 = vst [vmem:[#allocation3 + $0x10] sm:$0x1] %v609
        %v611 = vld [vmem:[#allocation3 + $0x24] sm:$0x1]
        %v612 = vsel %vm535, 0, %v611
        %613 = vst [vmem:[#allocation3 + $0x24] sm:$0x1] %v612
        %v614 = vld [vmem:[#allocation3 + $0x38] sm:$0x1]
        %v615 = vsel %vm535, 0, %v614
        %616 = vst [vmem:[#allocation3 + $0x38] sm:$0x1] %v615
        %v617 = vld [vmem:[#allocation3 + $0x4c] sm:$0x1]
        %v618 = vsel %vm535, 0, %v617
        %619 = vst [vmem:[#allocation3 + $0x4c] sm:$0x1] %v618
        %v620 = vld [vmem:[#allocation3 + $0x60] sm:$0x1]
        %v621 = vsel %vm535, 0, %v620
        %622 = vst [vmem:[#allocation3 + $0x60] sm:$0x1] %v621
        %v623 = vld [vmem:[#allocation3 + $0x74] sm:$0x1]
        %v624 = vsel %vm535, 0, %v623
        %625 = vst [vmem:[#allocation3 + $0x74] sm:$0x1] %v624
        %v626 = vld [vmem:[#allocation3 + $0x88] sm:$0x1]
        %v627 = vsel %vm535, 0, %v626
        %628 = vst [vmem:[#allocation3 + $0x88] sm:$0x1] %v627
        %v629 = vld [vmem:[#allocation3 + $0x9c] sm:$0x1]
        %v630 = vsel %vm535, 0, %v629
        %631 = vst [vmem:[#allocation3 + $0x9c] sm:$0x1] %v630
        %v632 = vld [vmem:[#allocation3 + $0xb0] sm:$0x1]
        %v633 = vsel %vm535, 0, %v632
        %634 = vst [vmem:[#allocation3 + $0xb0] sm:$0x1] %v633
        %v635 = vld [vmem:[#allocation3 + $0xc4] sm:$0x1]
        %v636 = vsel %vm535, 0, %v635
        %637 = vst [vmem:[#allocation3 + $0xc4] sm:$0x1] %v636
        %v638 = vld [vmem:[#allocation3 + $0xd8] sm:$0x1]
        %v639 = vsel %vm535, 0, %v638
        %640 = vst [vmem:[#allocation3 + $0xd8] sm:$0x1] %v639
        %v641 = vld [vmem:[#allocation3 + $0xec] sm:$0x1]
        %v642 = vsel %vm535, 0, %v641
        %643 = vst [vmem:[#allocation3 + $0xec] sm:$0x1] %v642
        %v644 = vld [vmem:[%s406] sm:$0xff]
        %v645 = vld [vmem:[%s406 + $0x8] sm:$0xff]
        %v646 = vld [vmem:[%s406 + $0x10] sm:$0xff]
        %v647 = vld [vmem:[%s406 + $0x18] sm:$0xff]
        %v648 = vld [vmem:[%s406 + $0x20] sm:$0xff]
        %v649 = vld [vmem:[%s406 + $0x28] sm:$0xff]
        %v650 = vld [vmem:[%s406 + $0x30] sm:$0xff]
        %v651 = vld [vmem:[%s406 + $0x38] sm:$0xff]
        %v652 = vld [vmem:[%s406 + $0x40] sm:$0xff]
        %v653 = vld [vmem:[%s406 + $0x48] sm:$0xff]
        %v654 = vld [vmem:[%s406 + $0x50] sm:$0xff]
        %v655 = vld [vmem:[%s406 + $0x58] sm:$0xff]
        %v656 = vld [vmem:[%s406 + $0x60] sm:$0xff]
        %v657 = vld [vmem:[%s406 + $0x68] sm:$0xff]
        %v658 = vld [vmem:[%s406 + $0x70] sm:$0xff]
        %v659 = vld [vmem:[%s406 + $0x78] sm:$0xff]
        %v660 = vpack.c.bf16 %v645, %v644
        %v661 = vpack.c.bf16 %v647, %v646
        %v662 = vpack.c.bf16 %v649, %v648
        %v663 = vpack.c.bf16 %v651, %v650
        %v664 = vpack.c.bf16 %v653, %v652
        %v665 = vpack.c.bf16 %v655, %v654
        %v666 = vpack.c.bf16 %v657, %v656
        %v667 = vpack.c.bf16 %v659, %v658
        %v676 = vunpack.c.l.b16 %v660
        %v677 = vunpack.c.h.b16 %v660
        %v678 = vunpack.c.l.b16 %v661
        %v679 = vunpack.c.h.b16 %v661
        %v680 = vunpack.c.l.b16 %v662
        %v681 = vunpack.c.h.b16 %v662
        %v682 = vunpack.c.l.b16 %v663
        %v683 = vunpack.c.h.b16 %v663
        %v684 = vunpack.c.l.b16 %v664
        %v685 = vunpack.c.h.b16 %v664
        %v686 = vunpack.c.l.b16 %v665
        %v687 = vunpack.c.h.b16 %v665
        %v688 = vunpack.c.l.b16 %v666
        %v689 = vunpack.c.h.b16 %v666
        %v690 = vunpack.c.l.b16 %v667
        %v691 = vunpack.c.h.b16 %v667
        %v692 = vpack.c.b16 %v676, %v676
        %v693 = vpack.c.b16 %v677, %v677
        %v694 = vpack.c.b16 %v678, %v678
        %v695 = vpack.c.b16 %v679, %v679
        %v696 = vpack.c.b16 %v680, %v680
        %v697 = vpack.c.b16 %v681, %v681
        %v698 = vpack.c.b16 %v682, %v682
        %v699 = vpack.c.b16 %v683, %v683
        %v700 = vpack.c.b16 %v684, %v684
        %v701 = vpack.c.b16 %v685, %v685
        %v702 = vpack.c.b16 %v686, %v686
        %v703 = vpack.c.b16 %v687, %v687
        %v704 = vpack.c.b16 %v688, %v688
        %v705 = vpack.c.b16 %v689, %v689
        %v706 = vpack.c.b16 %v690, %v690
        %v707 = vpack.c.b16 %v691, %v691
        %s724 = scalar_lea.vmem [#allocation2], 40
        %vm725 = vcmask 60416
        %726 = vst.msk [vmem:[%s724 + $0x8] sm:$0xf] %vm725, %v692
        %727 = vst.msk [vmem:[%s724 + $0xc] sm:$0xf] %vm725, %v693
        %728 = vst.msk [vmem:[%s724 + $0x1c] sm:$0xf] %vm725, %v694
        %729 = vst.msk [vmem:[%s724 + $0x20] sm:$0xf] %vm725, %v695
        %730 = vst.msk [vmem:[%s724 + $0x30] sm:$0xf] %vm725, %v696
        %731 = vst.msk [vmem:[%s724 + $0x34] sm:$0xf] %vm725, %v697
        %732 = vst.msk [vmem:[%s724 + $0x44] sm:$0xf] %vm725, %v698
        %733 = vst.msk [vmem:[%s724 + $0x48] sm:$0xf] %vm725, %v699
        %734 = vst.msk [vmem:[%s724 + $0x58] sm:$0xf] %vm725, %v700
        %735 = vst.msk [vmem:[%s724 + $0x5c] sm:$0xf] %vm725, %v701
        %736 = vst.msk [vmem:[%s724 + $0x6c] sm:$0xf] %vm725, %v702
        %737 = vst.msk [vmem:[%s724 + $0x70] sm:$0xf] %vm725, %v703
        %738 = vst.msk [vmem:[%s724 + $0x80] sm:$0xf] %vm725, %v704
        %739 = vst.msk [vmem:[%s724 + $0x84] sm:$0xf] %vm725, %v705
        %740 = vst.msk [vmem:[%s724 + $0x94] sm:$0xf] %vm725, %v706
        %741 = vst.msk [vmem:[%s724 + $0x98] sm:$0xf] %vm725, %v707
        %p742 = scmp.gt.s32.totalorder %s34, 0
        // Predicated region
        $region77: #{tpu_custom_call.1} parent=47 // pred_check
          %p743 = pneg %p742
        $region78: #{tpu_custom_call.1} parent=47 // pred_check_branch
          %745 = sbr.rel (%p743) target = $region80
        $region79: #{tpu_custom_call.1} parent=47 // pred_region
          %v746 = vld [vmem:[%s415] sm:$0xff]
          %v747 = vld [vmem:[%s415 + $0x8] sm:$0xff]
          %v748 = vld [vmem:[%s415 + $0x10] sm:$0xff]
          %v749 = vld [vmem:[%s415 + $0x18] sm:$0xff]
          %v750 = vpack.c.bf16 %v747, %v746
          %v751 = vpack.c.bf16 %v749, %v748
          %v754 = vunpack.c.l.b16 %v750
          %v755 = vunpack.c.h.b16 %v750
          %v756 = vunpack.c.l.b16 %v751
          %v757 = vunpack.c.h.b16 %v751
          %v758 = vpack.c.b16 %v754, %v754
          %v759 = vpack.c.b16 %v755, %v755
          %v760 = vpack.c.b16 %v756, %v756
          %v761 = vpack.c.b16 %v757, %v757
          %766 = vst.msk [vmem:[#allocation2 + $0x8] sm:$0xf] %vm725, %v758
          %767 = vst.msk [vmem:[#allocation2 + $0xc] sm:$0xf] %vm725, %v759
          %768 = vst.msk [vmem:[#allocation2 + $0x1c] sm:$0xf] %vm725, %v760
          %769 = vst.msk [vmem:[#allocation2 + $0x20] sm:$0xf] %vm725, %v761
        $region80: #{tpu_custom_call.1} parent=47 // pred_fallthru
          _
        %p770 = scmp.eq.s32.totalorder %s34, 0
        // Predicated region
        $region81: #{tpu_custom_call.1} parent=47 // pred_check
          %p771 = pneg %p770
        $region82: #{tpu_custom_call.1} parent=47 // pred_check_branch
          %773 = sbr.rel (%p771) target = $region84
        $region83: #{tpu_custom_call.1} parent=47 // pred_region
          %774 = vst.msk [vmem:[#allocation2 + $0x8] sm:$0xf] %vm725, 0
          %775 = vst.msk [vmem:[#allocation2 + $0xc] sm:$0xf] %vm725, 0
          %776 = vst.msk [vmem:[#allocation2 + $0x1c] sm:$0xf] %vm725, 0
          %777 = vst.msk [vmem:[#allocation2 + $0x20] sm:$0xf] %vm725, 0
        $region84: #{tpu_custom_call.1} parent=47 // pred_fallthru
          _
        %p778 = scmp.lt.s32.totalorder %s34, 1
        // Predicated region
        $region85: #{tpu_custom_call.1} parent=47 // pred_check
          %p779 = pneg %p778
        $region86: #{tpu_custom_call.1} parent=47 // pred_check_branch
          %781 = sbr.rel (%p779) target = $region88
        $region87: #{tpu_custom_call.1} parent=47 // pred_region
          %v782 = vld [vmem:[%s424] sm:$0xff]
          %v783 = vld [vmem:[%s424 + $0x8] sm:$0xff]
          %v784 = vld [vmem:[%s424 + $0x10] sm:$0xff]
          %v785 = vld [vmem:[%s424 + $0x18] sm:$0xff]
          %v786 = vpack.c.bf16 %v783, %v782
          %v787 = vpack.c.bf16 %v785, %v784
          %v790 = vunpack.c.l.b16 %v786
          %v791 = vunpack.c.h.b16 %v786
          %v792 = vunpack.c.l.b16 %v787
          %v793 = vunpack.c.h.b16 %v787
          %v794 = vpack.c.b16 %v790, %v790
          %v795 = vpack.c.b16 %v791, %v791
          %v796 = vpack.c.b16 %v792, %v792
          %v797 = vpack.c.b16 %v793, %v793
          %s802 = scalar_lea.vmem [#allocation2], 200
          %803 = vst.msk [vmem:[%s802 + $0x8] sm:$0xf] %vm725, %v794
          %804 = vst.msk [vmem:[%s802 + $0xc] sm:$0xf] %vm725, %v795
          %805 = vst.msk [vmem:[%s802 + $0x1c] sm:$0xf] %vm725, %v796
          %806 = vst.msk [vmem:[%s802 + $0x20] sm:$0xf] %vm725, %v797
        $region88: #{tpu_custom_call.1} parent=47 // pred_fallthru
          _
        %p807 = scmp.eq.s32.totalorder %s34, 1
        // Predicated region
        $region89: #{tpu_custom_call.1} parent=47 // pred_check
          %p808 = pneg %p807
        $region90: #{tpu_custom_call.1} parent=47 // pred_check_branch
          %810 = sbr.rel (%p808) target = $region92
        $region91: #{tpu_custom_call.1} parent=47 // pred_region
          %s811 = scalar_lea.vmem [#allocation2], 200
          %812 = vst.msk [vmem:[%s811 + $0x8] sm:$0xf] %vm725, 0
          %813 = vst.msk [vmem:[%s811 + $0xc] sm:$0xf] %vm725, 0
          %814 = vst.msk [vmem:[%s811 + $0x1c] sm:$0xf] %vm725, 0
          %815 = vst.msk [vmem:[%s811 + $0x20] sm:$0xf] %vm725, 0
        $region92: #{tpu_custom_call.1} parent=47 // pred_fallthru
          _
        %v816 = vld [vmem:[#allocation2 + $0x4] sm:$0x8]
        %v817 = vld [vmem:[#allocation2 + $0x8] sm:$0xf]
        %v818 = vld [vmem:[#allocation2 + $0xc] sm:$0xf]
        %v819 = vld [vmem:[#allocation2 + $0x18] sm:$0x8]
        %v820 = vld [vmem:[#allocation2 + $0x1c] sm:$0xf]
        %v821 = vld [vmem:[#allocation2 + $0x20] sm:$0xf]
        %v822 = vld [vmem:[#allocation2 + $0x2c] sm:$0x8]
        %v823 = vld [vmem:[#allocation2 + $0x30] sm:$0xf]
        %v824 = vld [vmem:[#allocation2 + $0x34] sm:$0xf]
        %v825 = vld [vmem:[#allocation2 + $0x40] sm:$0x8]
        %v826 = vld [vmem:[#allocation2 + $0x44] sm:$0xf]
        %v827 = vld [vmem:[#allocation2 + $0x48] sm:$0xf]
        %v828 = vld [vmem:[#allocation2 + $0x54] sm:$0x8]
        %v829 = vld [vmem:[#allocation2 + $0x58] sm:$0xf]
        %v830 = vld [vmem:[#allocation2 + $0x5c] sm:$0xf]
        %v831 = vld [vmem:[#allocation2 + $0x68] sm:$0x8]
        %v832 = vld [vmem:[#allocation2 + $0x6c] sm:$0xf]
        %v833 = vld [vmem:[#allocation2 + $0x70] sm:$0xf]
        %v834 = vld [vmem:[#allocation2 + $0x7c] sm:$0x8]
        %v835 = vld [vmem:[#allocation2 + $0x80] sm:$0xf]
        %v836 = vld [vmem:[#allocation2 + $0x84] sm:$0xf]
        %v837 = vld [vmem:[#allocation2 + $0x90] sm:$0x8]
        %v838 = vld [vmem:[#allocation2 + $0x94] sm:$0xf]
        %v839 = vld [vmem:[#allocation2 + $0x98] sm:$0xf]
        %v840 = vld [vmem:[#allocation2 + $0xa4] sm:$0x8]
        %v841 = vld [vmem:[#allocation2 + $0xa8] sm:$0xf]
        %v842 = vld [vmem:[#allocation2 + $0xac] sm:$0xf]
        %v843 = vld [vmem:[#allocation2 + $0xb8] sm:$0x8]
        %v844 = vld [vmem:[#allocation2 + $0xbc] sm:$0xf]
        %v845 = vld [vmem:[#allocation2 + $0xc0] sm:$0xf]
        %v846 = vld [vmem:[#allocation2 + $0x10] sm:$0x1]
        %v847 = vld [vmem:[#allocation2 + $0x24] sm:$0x1]
        %v848 = vld [vmem:[#allocation2 + $0x38] sm:$0x1]
        %v849 = vld [vmem:[#allocation2 + $0x4c] sm:$0x1]
        %v850 = vld [vmem:[#allocation2 + $0x60] sm:$0x1]
        %v851 = vld [vmem:[#allocation2 + $0x74] sm:$0x1]
        %v852 = vld [vmem:[#allocation2 + $0x88] sm:$0x1]
        %v853 = vld [vmem:[#allocation2 + $0x9c] sm:$0x1]
        %v854 = vld [vmem:[#allocation2 + $0xb0] sm:$0x1]
        %v855 = vld [vmem:[#allocation2 + $0xc4] sm:$0x1]
        %s856 = scalar_lea.vmem [#allocation2], 20
        %v857 = vld [vmem:[%s856 + $0x4] sm:$0x8]
        %v858 = vld [vmem:[%s856 + $0x8] sm:$0xf]
        %v859 = vld [vmem:[%s856 + $0xc] sm:$0xf]
        %v860 = vld [vmem:[%s856 + $0x18] sm:$0x8]
        %v861 = vld [vmem:[%s856 + $0x1c] sm:$0xf]
        %v862 = vld [vmem:[%s856 + $0x20] sm:$0xf]
        %v863 = vld [vmem:[%s856 + $0x2c] sm:$0x8]
        %v864 = vld [vmem:[%s856 + $0x30] sm:$0xf]
        %v865 = vld [vmem:[%s856 + $0x34] sm:$0xf]
        %v866 = vld [vmem:[%s856 + $0x40] sm:$0x8]
        %v867 = vld [vmem:[%s856 + $0x44] sm:$0xf]
        %v868 = vld [vmem:[%s856 + $0x48] sm:$0xf]
        %v869 = vld [vmem:[%s856 + $0x54] sm:$0x8]
        %v870 = vld [vmem:[%s856 + $0x58] sm:$0xf]
        %v871 = vld [vmem:[%s856 + $0x5c] sm:$0xf]
        %v872 = vld [vmem:[%s856 + $0x68] sm:$0x8]
        %v873 = vld [vmem:[%s856 + $0x6c] sm:$0xf]
        %v874 = vld [vmem:[%s856 + $0x70] sm:$0xf]
        %v875 = vld [vmem:[%s856 + $0x7c] sm:$0x8]
        %v876 = vld [vmem:[%s856 + $0x80] sm:$0xf]
        %v877 = vld [vmem:[%s856 + $0x84] sm:$0xf]
        %v878 = vld [vmem:[%s856 + $0x90] sm:$0x8]
        %v879 = vld [vmem:[%s856 + $0x94] sm:$0xf]
        %v880 = vld [vmem:[%s856 + $0x98] sm:$0xf]
        %v881 = vld [vmem:[%s856 + $0xa4] sm:$0x8]
        %v882 = vld [vmem:[%s856 + $0xa8] sm:$0xf]
        %v883 = vld [vmem:[%s856 + $0xac] sm:$0xf]
        %v884 = vld [vmem:[%s856 + $0xb8] sm:$0x8]
        %v885 = vld [vmem:[%s856 + $0xbc] sm:$0xf]
        %v886 = vld [vmem:[%s856 + $0xc0] sm:$0xf]
        %v887 = vld [vmem:[%s856 + $0x10] sm:$0x1]
        %v888 = vld [vmem:[%s856 + $0x24] sm:$0x1]
        %v889 = vld [vmem:[%s856 + $0x38] sm:$0x1]
        %v890 = vld [vmem:[%s856 + $0x4c] sm:$0x1]
        %v891 = vld [vmem:[%s856 + $0x60] sm:$0x1]
        %v892 = vld [vmem:[%s856 + $0x74] sm:$0x1]
        %v893 = vld [vmem:[%s856 + $0x88] sm:$0x1]
        %v894 = vld [vmem:[%s856 + $0x9c] sm:$0x1]
        %v895 = vld [vmem:[%s856 + $0xb0] sm:$0x1]
        %v896 = vld [vmem:[%s856 + $0xc4] sm:$0x1]
        %v897 = vld [vmem:[%s724 + $0x4] sm:$0x8]
        %v898 = vld [vmem:[%s724 + $0x8] sm:$0xf]
        %v899 = vld [vmem:[%s724 + $0xc] sm:$0xf]
        %v900 = vld [vmem:[%s724 + $0x18] sm:$0x8]
        %v901 = vld [vmem:[%s724 + $0x1c] sm:$0xf]
        %v902 = vld [vmem:[%s724 + $0x20] sm:$0xf]
        %v903 = vld [vmem:[%s724 + $0x2c] sm:$0x8]
        %v904 = vld [vmem:[%s724 + $0x30] sm:$0xf]
        %v905 = vld [vmem:[%s724 + $0x34] sm:$0xf]
        %v906 = vld [vmem:[%s724 + $0x40] sm:$0x8]
        %v907 = vld [vmem:[%s724 + $0x44] sm:$0xf]
        %v908 = vld [vmem:[%s724 + $0x48] sm:$0xf]
        %v909 = vld [vmem:[%s724 + $0x54] sm:$0x8]
        %v910 = vld [vmem:[%s724 + $0x58] sm:$0xf]
        %v911 = vld [vmem:[%s724 + $0x5c] sm:$0xf]
        %v912 = vld [vmem:[%s724 + $0x68] sm:$0x8]
        %v913 = vld [vmem:[%s724 + $0x6c] sm:$0xf]
        %v914 = vld [vmem:[%s724 + $0x70] sm:$0xf]
        %v915 = vld [vmem:[%s724 + $0x7c] sm:$0x8]
        %v916 = vld [vmem:[%s724 + $0x80] sm:$0xf]
        %v917 = vld [vmem:[%s724 + $0x84] sm:$0xf]
        %v918 = vld [vmem:[%s724 + $0x90] sm:$0x8]
        %v919 = vld [vmem:[%s724 + $0x94] sm:$0xf]
        %v920 = vld [vmem:[%s724 + $0x98] sm:$0xf]
        %v921 = vld [vmem:[%s724 + $0xa4] sm:$0x8]
        %v922 = vld [vmem:[%s724 + $0xa8] sm:$0xf]
        %v923 = vld [vmem:[%s724 + $0xac] sm:$0xf]
        %v924 = vld [vmem:[%s724 + $0xb8] sm:$0x8]
        %v925 = vld [vmem:[%s724 + $0xbc] sm:$0xf]
        %v926 = vld [vmem:[%s724 + $0xc0] sm:$0xf]
        %v927 = vld [vmem:[%s724 + $0x10] sm:$0x1]
        %v928 = vld [vmem:[%s724 + $0x24] sm:$0x1]
        %v929 = vld [vmem:[%s724 + $0x38] sm:$0x1]
        %v930 = vld [vmem:[%s724 + $0x4c] sm:$0x1]
        %v931 = vld [vmem:[%s724 + $0x60] sm:$0x1]
        %v932 = vld [vmem:[%s724 + $0x74] sm:$0x1]
        %v933 = vld [vmem:[%s724 + $0x88] sm:$0x1]
        %v934 = vld [vmem:[%s724 + $0x9c] sm:$0x1]
        %v935 = vld [vmem:[%s724 + $0xb0] sm:$0x1]
        %v936 = vld [vmem:[%s724 + $0xc4] sm:$0x1]
        %v967 = vunpack.c.l.b16 %v816
        %v968 = vunpack.c.l.b16 %v817
        %v969 = vunpack.c.l.b16 %v818
        %v970 = vunpack.c.l.b16 %v819
        %v971 = vunpack.c.l.b16 %v820
        %v972 = vunpack.c.l.b16 %v821
        %v973 = vunpack.c.l.b16 %v822
        %v974 = vunpack.c.l.b16 %v823
        %v975 = vunpack.c.l.b16 %v824
        %v976 = vunpack.c.l.b16 %v825
        %v977 = vunpack.c.l.b16 %v826
        %v978 = vunpack.c.l.b16 %v827
        %v979 = vunpack.c.l.b16 %v828
        %v980 = vunpack.c.l.b16 %v829
        %v981 = vunpack.c.l.b16 %v830
        %v982 = vunpack.c.l.b16 %v831
        %v983 = vunpack.c.l.b16 %v832
        %v984 = vunpack.c.l.b16 %v833
        %v985 = vunpack.c.l.b16 %v834
        %v986 = vunpack.c.l.b16 %v835
        %v987 = vunpack.c.l.b16 %v836
        %v988 = vunpack.c.l.b16 %v837
        %v989 = vunpack.c.l.b16 %v838
        %v990 = vunpack.c.l.b16 %v839
        %v991 = vunpack.c.l.b16 %v840
        %v992 = vunpack.c.l.b16 %v841
        %v993 = vunpack.c.l.b16 %v842
        %v994 = vunpack.c.l.b16 %v843
        %v995 = vunpack.c.l.b16 %v844
        %v996 = vunpack.c.l.b16 %v845
        %v997 = vpack.c.b16 %v968, %v967
        %v998 = vpack.c.b16 %v969, %v969
        %v999 = vpack.c.b16 %v971, %v970
        %v1000 = vpack.c.b16 %v972, %v972
        %v1001 = vpack.c.b16 %v974, %v973
        %v1002 = vpack.c.b16 %v975, %v975
        %v1003 = vpack.c.b16 %v977, %v976
        %v1004 = vpack.c.b16 %v978, %v978
        %v1005 = vpack.c.b16 %v980, %v979
        %v1006 = vpack.c.b16 %v981, %v981
        %v1007 = vpack.c.b16 %v983, %v982
        %v1008 = vpack.c.b16 %v984, %v984
        %v1009 = vpack.c.b16 %v986, %v985
        %v1010 = vpack.c.b16 %v987, %v987
        %v1011 = vpack.c.b16 %v989, %v988
        %v1012 = vpack.c.b16 %v990, %v990
        %v1013 = vpack.c.b16 %v992, %v991
        %v1014 = vpack.c.b16 %v993, %v993
        %v1015 = vpack.c.b16 %v995, %v994
        %v1016 = vpack.c.b16 %v996, %v996
        %v1017 = vpack.c.b16 %v969, %v968
        %v1018 = vpack.c.b16 %v972, %v971
        %v1019 = vpack.c.b16 %v975, %v974
        %v1020 = vpack.c.b16 %v978, %v977
        %v1021 = vpack.c.b16 %v981, %v980
        %v1022 = vpack.c.b16 %v984, %v983
        %v1023 = vpack.c.b16 %v987, %v986
        %v1024 = vpack.c.b16 %v990, %v989
        %v1025 = vpack.c.b16 %v993, %v992
        %v1026 = vpack.c.b16 %v996, %v995
        %v1028 = vshrl.u32 %v1017, 16
        %v1030 = vrot.slane %v1028, 4
        %v1031 = vshll.u32 %v1017, 16
        %v1033 = vrot.slane %v1031, 5
        %v1034 = vor.u32 %v1030, %v1033
        %v1036 = vshrl.u32 %v1018, 16
        %v1038 = vrot.slane %v1036, 4
        %v1039 = vshll.u32 %v1018, 16
        %v1041 = vrot.slane %v1039, 5
        %v1042 = vor.u32 %v1038, %v1041
        %v1044 = vshrl.u32 %v1019, 16
        %v1046 = vrot.slane %v1044, 4
        %v1047 = vshll.u32 %v1019, 16
        %v1049 = vrot.slane %v1047, 5
        %v1050 = vor.u32 %v1046, %v1049
        %v1052 = vshrl.u32 %v1020, 16
        %v1054 = vrot.slane %v1052, 4
        %v1055 = vshll.u32 %v1020, 16
        %v1057 = vrot.slane %v1055, 5
        %v1058 = vor.u32 %v1054, %v1057
        %v1060 = vshrl.u32 %v1021, 16
        %v1062 = vrot.slane %v1060, 4
        %v1063 = vshll.u32 %v1021, 16
        %v1065 = vrot.slane %v1063, 5
        %v1066 = vor.u32 %v1062, %v1065
        %v1068 = vshrl.u32 %v1022, 16
        %v1070 = vrot.slane %v1068, 4
        %v1071 = vshll.u32 %v1022, 16
        %v1073 = vrot.slane %v1071, 5
        %v1074 = vor.u32 %v1070, %v1073
        %v1076 = vshrl.u32 %v1023, 16
        %v1078 = vrot.slane %v1076, 4
        %v1079 = vshll.u32 %v1023, 16
        %v1081 = vrot.slane %v1079, 5
        %v1082 = vor.u32 %v1078, %v1081
        %v1084 = vshrl.u32 %v1024, 16
        %v1086 = vrot.slane %v1084, 4
        %v1087 = vshll.u32 %v1024, 16
        %v1089 = vrot.slane %v1087, 5
        %v1090 = vor.u32 %v1086, %v1089
        %v1092 = vshrl.u32 %v1025, 16
        %v1094 = vrot.slane %v1092, 4
        %v1095 = vshll.u32 %v1025, 16
        %v1097 = vrot.slane %v1095, 5
        %v1098 = vor.u32 %v1094, %v1097
        %v1100 = vshrl.u32 %v1026, 16
        %v1102 = vrot.slane %v1100, 4
        %v1103 = vshll.u32 %v1026, 16
        %v1105 = vrot.slane %v1103, 5
        %v1106 = vor.u32 %v1102, %v1105
        %1107 = vrot.lane.b32.xlu0 %v1034, 8
        %v1108 = vpop.permute.xlu0 %1107
        %1109 = vrot.lane.b32.xlu0 %v1042, 8
        %v1110 = vpop.permute.xlu0 %1109
        %1111 = vrot.lane.b32.xlu0 %v1050, 8
        %v1112 = vpop.permute.xlu0 %1111
        %1113 = vrot.lane.b32.xlu0 %v1058, 8
        %v1114 = vpop.permute.xlu0 %1113
        %1115 = vrot.lane.b32.xlu0 %v1066, 8
        %v1116 = vpop.permute.xlu0 %1115
        %1117 = vrot.lane.b32.xlu0 %v1074, 8
        %v1118 = vpop.permute.xlu0 %1117
        %1119 = vrot.lane.b32.xlu0 %v1082, 8
        %v1120 = vpop.permute.xlu0 %1119
        %1121 = vrot.lane.b32.xlu0 %v1090, 8
        %v1122 = vpop.permute.xlu0 %1121
        %1123 = vrot.lane.b32.xlu0 %v1098, 8
        %v1124 = vpop.permute.xlu0 %1123
        %1125 = vrot.lane.b32.xlu0 %v1106, 8
        %v1126 = vpop.permute.xlu0 %1125
        %v1137 = vunpack.c.l.b16 %v846
        %v1138 = vunpack.c.l.b16 %v847
        %v1139 = vunpack.c.l.b16 %v848
        %v1140 = vunpack.c.l.b16 %v849
        %v1141 = vunpack.c.l.b16 %v850
        %v1142 = vunpack.c.l.b16 %v851
        %v1143 = vunpack.c.l.b16 %v852
        %v1144 = vunpack.c.l.b16 %v853
        %v1145 = vunpack.c.l.b16 %v854
        %v1146 = vunpack.c.l.b16 %v855
        %v1147 = vpack.c.b16 %v1137, %v1137
        %v1148 = vpack.c.b16 %v1138, %v1138
        %v1149 = vpack.c.b16 %v1139, %v1139
        %v1150 = vpack.c.b16 %v1140, %v1140
        %v1151 = vpack.c.b16 %v1141, %v1141
        %v1152 = vpack.c.b16 %v1142, %v1142
        %v1153 = vpack.c.b16 %v1143, %v1143
        %v1154 = vpack.c.b16 %v1144, %v1144
        %v1155 = vpack.c.b16 %v1145, %v1145
        %v1156 = vpack.c.b16 %v1146, %v1146
        %vm1157 = vcmask 1042432
        %v1158 = vrot.slane %v1017, 5
        %v1159 = vrot.slane %v1147, 5
        %v1160 = vsel %vm1157, %v1158, %v1159
        %v1161 = vrot.slane %v1018, 5
        %v1162 = vrot.slane %v1148, 5
        %v1163 = vsel %vm1157, %v1161, %v1162
        %v1164 = vrot.slane %v1019, 5
        %v1165 = vrot.slane %v1149, 5
        %v1166 = vsel %vm1157, %v1164, %v1165
        %v1167 = vrot.slane %v1020, 5
        %v1168 = vrot.slane %v1150, 5
        %v1169 = vsel %vm1157, %v1167, %v1168
        %v1170 = vrot.slane %v1021, 5
        %v1171 = vrot.slane %v1151, 5
        %v1172 = vsel %vm1157, %v1170, %v1171
        %v1173 = vrot.slane %v1022, 5
        %v1174 = vrot.slane %v1152, 5
        %v1175 = vsel %vm1157, %v1173, %v1174
        %v1176 = vrot.slane %v1023, 5
        %v1177 = vrot.slane %v1153, 5
        %v1178 = vsel %vm1157, %v1176, %v1177
        %v1179 = vrot.slane %v1024, 5
        %v1180 = vrot.slane %v1154, 5
        %v1181 = vsel %vm1157, %v1179, %v1180
        %v1182 = vrot.slane %v1025, 5
        %v1183 = vrot.slane %v1155, 5
        %v1184 = vsel %vm1157, %v1182, %v1183
        %v1185 = vrot.slane %v1026, 5
        %v1186 = vrot.slane %v1156, 5
        %v1187 = vsel %vm1157, %v1185, %v1186
        %1188 = vrot.lane.b32.xlu0 %v1158, 16
        %v1189 = vpop.permute.xlu0 %1188
        %1190 = vrot.lane.b32.xlu0 %v1160, 16
        %v1191 = vpop.permute.xlu0 %1190
        %1192 = vrot.lane.b32.xlu0 %v1161, 16
        %v1193 = vpop.permute.xlu0 %1192
        %1194 = vrot.lane.b32.xlu0 %v1163, 16
        %v1195 = vpop.permute.xlu0 %1194
        %1196 = vrot.lane.b32.xlu0 %v1164, 16
        %v1197 = vpop.permute.xlu0 %1196
        %1198 = vrot.lane.b32.xlu0 %v1166, 16
        %v1199 = vpop.permute.xlu0 %1198
        %1200 = vrot.lane.b32.xlu0 %v1167, 16
        %v1201 = vpop.permute.xlu0 %1200
        %1202 = vrot.lane.b32.xlu0 %v1169, 16
        %v1203 = vpop.permute.xlu0 %1202
        %1204 = vrot.lane.b32.xlu0 %v1170, 16
        %v1205 = vpop.permute.xlu0 %1204
        %1206 = vrot.lane.b32.xlu0 %v1172, 16
        %v1207 = vpop.permute.xlu0 %1206
        %1208 = vrot.lane.b32.xlu0 %v1173, 16
        %v1209 = vpop.permute.xlu0 %1208
        %1210 = vrot.lane.b32.xlu0 %v1175, 16
        %v1211 = vpop.permute.xlu0 %1210
        %1212 = vrot.lane.b32.xlu0 %v1176, 16
        %v1213 = vpop.permute.xlu0 %1212
        %1214 = vrot.lane.b32.xlu0 %v1178, 16
        %v1215 = vpop.permute.xlu0 %1214
        %1216 = vrot.lane.b32.xlu0 %v1179, 16
        %v1217 = vpop.permute.xlu0 %1216
        %1218 = vrot.lane.b32.xlu0 %v1181, 16
        %v1219 = vpop.permute.xlu0 %1218
        %1220 = vrot.lane.b32.xlu0 %v1182, 16
        %v1221 = vpop.permute.xlu0 %1220
        %1222 = vrot.lane.b32.xlu0 %v1184, 16
        %v1223 = vpop.permute.xlu0 %1222
        %1224 = vrot.lane.b32.xlu0 %v1185, 16
        %v1225 = vpop.permute.xlu0 %1224
        %1226 = vrot.lane.b32.xlu0 %v1187, 16
        %v1227 = vpop.permute.xlu0 %1226
        %v1258 = vunpack.c.l.b16 %v857
        %v1259 = vunpack.c.l.b16 %v858
        %v1260 = vunpack.c.l.b16 %v859
        %v1261 = vunpack.c.l.b16 %v860
        %v1262 = vunpack.c.l.b16 %v861
        %v1263 = vunpack.c.l.b16 %v862
        %v1264 = vunpack.c.l.b16 %v863
        %v1265 = vunpack.c.l.b16 %v864
        %v1266 = vunpack.c.l.b16 %v865
        %v1267 = vunpack.c.l.b16 %v866
        %v1268 = vunpack.c.l.b16 %v867
        %v1269 = vunpack.c.l.b16 %v868
        %v1270 = vunpack.c.l.b16 %v869
        %v1271 = vunpack.c.l.b16 %v870
        %v1272 = vunpack.c.l.b16 %v871
        %v1273 = vunpack.c.l.b16 %v872
        %v1274 = vunpack.c.l.b16 %v873
        %v1275 = vunpack.c.l.b16 %v874
        %v1276 = vunpack.c.l.b16 %v875
        %v1277 = vunpack.c.l.b16 %v876
        %v1278 = vunpack.c.l.b16 %v877
        %v1279 = vunpack.c.l.b16 %v878
        %v1280 = vunpack.c.l.b16 %v879
        %v1281 = vunpack.c.l.b16 %v880
        %v1282 = vunpack.c.l.b16 %v881
        %v1283 = vunpack.c.l.b16 %v882
        %v1284 = vunpack.c.l.b16 %v883
        %v1285 = vunpack.c.l.b16 %v884
        %v1286 = vunpack.c.l.b16 %v885
        %v1287 = vunpack.c.l.b16 %v886
        %v1288 = vpack.c.b16 %v1259, %v1258
        %v1289 = vpack.c.b16 %v1260, %v1260
        %v1290 = vpack.c.b16 %v1262, %v1261
        %v1291 = vpack.c.b16 %v1263, %v1263
        %v1292 = vpack.c.b16 %v1265, %v1264
        %v1293 = vpack.c.b16 %v1266, %v1266
        %v1294 = vpack.c.b16 %v1268, %v1267
        %v1295 = vpack.c.b16 %v1269, %v1269
        %v1296 = vpack.c.b16 %v1271, %v1270
        %v1297 = vpack.c.b16 %v1272, %v1272
        %v1298 = vpack.c.b16 %v1274, %v1273
        %v1299 = vpack.c.b16 %v1275, %v1275
        %v1300 = vpack.c.b16 %v1277, %v1276
        %v1301 = vpack.c.b16 %v1278, %v1278
        %v1302 = vpack.c.b16 %v1280, %v1279
        %v1303 = vpack.c.b16 %v1281, %v1281
        %v1304 = vpack.c.b16 %v1283, %v1282
        %v1305 = vpack.c.b16 %v1284, %v1284
        %v1306 = vpack.c.b16 %v1286, %v1285
        %v1307 = vpack.c.b16 %v1287, %v1287
        %1308 = vrot.lane.b32.xlu0 %v1288, 24
        %v1309 = vpop.permute.xlu0 %1308
        %1310 = vrot.lane.b32.xlu0 %v1289, 24
        %v1311 = vpop.permute.xlu0 %1310
        %1312 = vrot.lane.b32.xlu0 %v1290, 24
        %v1313 = vpop.permute.xlu0 %1312
        %1314 = vrot.lane.b32.xlu0 %v1291, 24
        %v1315 = vpop.permute.xlu0 %1314
        %1316 = vrot.lane.b32.xlu0 %v1292, 24
        %v1317 = vpop.permute.xlu0 %1316
        %1318 = vrot.lane.b32.xlu0 %v1293, 24
        %v1319 = vpop.permute.xlu0 %1318
        %1320 = vrot.lane.b32.xlu0 %v1294, 24
        %v1321 = vpop.permute.xlu0 %1320
        %1322 = vrot.lane.b32.xlu0 %v1295, 24
        %v1323 = vpop.permute.xlu0 %1322
        %1324 = vrot.lane.b32.xlu0 %v1296, 24
        %v1325 = vpop.permute.xlu0 %1324
        %1326 = vrot.lane.b32.xlu0 %v1297, 24
        %v1327 = vpop.permute.xlu0 %1326
        %1328 = vrot.lane.b32.xlu0 %v1298, 24
        %v1329 = vpop.permute.xlu0 %1328
        %1330 = vrot.lane.b32.xlu0 %v1299, 24
        %v1331 = vpop.permute.xlu0 %1330
        %1332 = vrot.lane.b32.xlu0 %v1300, 24
        %v1333 = vpop.permute.xlu0 %1332
        %1334 = vrot.lane.b32.xlu0 %v1301, 24
        %v1335 = vpop.permute.xlu0 %1334
        %1336 = vrot.lane.b32.xlu0 %v1302, 24
        %v1337 = vpop.permute.xlu0 %1336
        %1338 = vrot.lane.b32.xlu0 %v1303, 24
        %v1339 = vpop.permute.xlu0 %1338
        %1340 = vrot.lane.b32.xlu0 %v1304, 24
        %v1341 = vpop.permute.xlu0 %1340
        %1342 = vrot.lane.b32.xlu0 %v1305, 24
        %v1343 = vpop.permute.xlu0 %1342
        %1344 = vrot.lane.b32.xlu0 %v1306, 24
        %v1345 = vpop.permute.xlu0 %1344
        %1346 = vrot.lane.b32.xlu0 %v1307, 24
        %v1347 = vpop.permute.xlu0 %1346
        %v1348 = vpack.c.b16 %v1260, %v1259
        %v1349 = vpack.c.b16 %v1263, %v1262
        %v1350 = vpack.c.b16 %v1266, %v1265
        %v1351 = vpack.c.b16 %v1269, %v1268
        %v1352 = vpack.c.b16 %v1272, %v1271
        %v1353 = vpack.c.b16 %v1275, %v1274
        %v1354 = vpack.c.b16 %v1278, %v1277
        %v1355 = vpack.c.b16 %v1281, %v1280
        %v1356 = vpack.c.b16 %v1284, %v1283
        %v1357 = vpack.c.b16 %v1287, %v1286
        %v1359 = vshrl.u32 %v1348, 16
        %v1361 = vrot.slane %v1359, 4
        %v1362 = vshll.u32 %v1348, 16
        %v1364 = vrot.slane %v1362, 5
        %v1365 = vor.u32 %v1361, %v1364
        %v1367 = vshrl.u32 %v1349, 16
        %v1369 = vrot.slane %v1367, 4
        %v1370 = vshll.u32 %v1349, 16
        %v1372 = vrot.slane %v1370, 5
        %v1373 = vor.u32 %v1369, %v1372
        %v1375 = vshrl.u32 %v1350, 16
        %v1377 = vrot.slane %v1375, 4
        %v1378 = vshll.u32 %v1350, 16
        %v1380 = vrot.slane %v1378, 5
        %v1381 = vor.u32 %v1377, %v1380
        %v1383 = vshrl.u32 %v1351, 16
        %v1385 = vrot.slane %v1383, 4
        %v1386 = vshll.u32 %v1351, 16
        %v1388 = vrot.slane %v1386, 5
        %v1389 = vor.u32 %v1385, %v1388
        %v1391 = vshrl.u32 %v1352, 16
        %v1393 = vrot.slane %v1391, 4
        %v1394 = vshll.u32 %v1352, 16
        %v1396 = vrot.slane %v1394, 5
        %v1397 = vor.u32 %v1393, %v1396
        %v1399 = vshrl.u32 %v1353, 16
        %v1401 = vrot.slane %v1399, 4
        %v1402 = vshll.u32 %v1353, 16
        %v1404 = vrot.slane %v1402, 5
        %v1405 = vor.u32 %v1401, %v1404
        %v1407 = vshrl.u32 %v1354, 16
        %v1409 = vrot.slane %v1407, 4
        %v1410 = vshll.u32 %v1354, 16
        %v1412 = vrot.slane %v1410, 5
        %v1413 = vor.u32 %v1409, %v1412
        %v1415 = vshrl.u32 %v1355, 16
        %v1417 = vrot.slane %v1415, 4
        %v1418 = vshll.u32 %v1355, 16
        %v1420 = vrot.slane %v1418, 5
        %v1421 = vor.u32 %v1417, %v1420
        %v1423 = vshrl.u32 %v1356, 16
        %v1425 = vrot.slane %v1423, 4
        %v1426 = vshll.u32 %v1356, 16
        %v1428 = vrot.slane %v1426, 5
        %v1429 = vor.u32 %v1425, %v1428
        %v1431 = vshrl.u32 %v1357, 16
        %v1433 = vrot.slane %v1431, 4
        %v1434 = vshll.u32 %v1357, 16
        %v1436 = vrot.slane %v1434, 5
        %v1437 = vor.u32 %v1433, %v1436
        %1438 = vrot.lane.b32.xlu0 %v1365, 32
        %v1439 = vpop.permute.xlu0 %1438
        %1440 = vrot.lane.b32.xlu0 %v1373, 32
        %v1441 = vpop.permute.xlu0 %1440
        %1442 = vrot.lane.b32.xlu0 %v1381, 32
        %v1443 = vpop.permute.xlu0 %1442
        %1444 = vrot.lane.b32.xlu0 %v1389, 32
        %v1445 = vpop.permute.xlu0 %1444
        %1446 = vrot.lane.b32.xlu0 %v1397, 32
        %v1447 = vpop.permute.xlu0 %1446
        %1448 = vrot.lane.b32.xlu0 %v1405, 32
        %v1449 = vpop.permute.xlu0 %1448
        %1450 = vrot.lane.b32.xlu0 %v1413, 32
        %v1451 = vpop.permute.xlu0 %1450
        %1452 = vrot.lane.b32.xlu0 %v1421, 32
        %v1453 = vpop.permute.xlu0 %1452
        %1454 = vrot.lane.b32.xlu0 %v1429, 32
        %v1455 = vpop.permute.xlu0 %1454
        %1456 = vrot.lane.b32.xlu0 %v1437, 32
        %v1457 = vpop.permute.xlu0 %1456
        %v1468 = vunpack.c.l.b16 %v887
        %v1469 = vunpack.c.l.b16 %v888
        %v1470 = vunpack.c.l.b16 %v889
        %v1471 = vunpack.c.l.b16 %v890
        %v1472 = vunpack.c.l.b16 %v891
        %v1473 = vunpack.c.l.b16 %v892
        %v1474 = vunpack.c.l.b16 %v893
        %v1475 = vunpack.c.l.b16 %v894
        %v1476 = vunpack.c.l.b16 %v895
        %v1477 = vunpack.c.l.b16 %v896
        %v1478 = vpack.c.b16 %v1468, %v1468
        %v1479 = vpack.c.b16 %v1469, %v1469
        %v1480 = vpack.c.b16 %v1470, %v1470
        %v1481 = vpack.c.b16 %v1471, %v1471
        %v1482 = vpack.c.b16 %v1472, %v1472
        %v1483 = vpack.c.b16 %v1473, %v1473
        %v1484 = vpack.c.b16 %v1474, %v1474
        %v1485 = vpack.c.b16 %v1475, %v1475
        %v1486 = vpack.c.b16 %v1476, %v1476
        %v1487 = vpack.c.b16 %v1477, %v1477
        %v1488 = vrot.slane %v1348, 5
        %v1489 = vrot.slane %v1478, 5
        %v1490 = vsel %vm1157, %v1488, %v1489
        %v1491 = vrot.slane %v1349, 5
        %v1492 = vrot.slane %v1479, 5
        %v1493 = vsel %vm1157, %v1491, %v1492
        %v1494 = vrot.slane %v1350, 5
        %v1495 = vrot.slane %v1480, 5
        %v1496 = vsel %vm1157, %v1494, %v1495
        %v1497 = vrot.slane %v1351, 5
        %v1498 = vrot.slane %v1481, 5
        %v1499 = vsel %vm1157, %v1497, %v1498
        %v1500 = vrot.slane %v1352, 5
        %v1501 = vrot.slane %v1482, 5
        %v1502 = vsel %vm1157, %v1500, %v1501
        %v1503 = vrot.slane %v1353, 5
        %v1504 = vrot.slane %v1483, 5
        %v1505 = vsel %vm1157, %v1503, %v1504
        %v1506 = vrot.slane %v1354, 5
        %v1507 = vrot.slane %v1484, 5
        %v1508 = vsel %vm1157, %v1506, %v1507
        %v1509 = vrot.slane %v1355, 5
        %v1510 = vrot.slane %v1485, 5
        %v1511 = vsel %vm1157, %v1509, %v1510
        %v1512 = vrot.slane %v1356, 5
        %v1513 = vrot.slane %v1486, 5
        %v1514 = vsel %vm1157, %v1512, %v1513
        %v1515 = vrot.slane %v1357, 5
        %v1516 = vrot.slane %v1487, 5
        %v1517 = vsel %vm1157, %v1515, %v1516
        %1518 = vrot.lane.b32.xlu0 %v1488, 40
        %v1519 = vpop.permute.xlu0 %1518
        %1520 = vrot.lane.b32.xlu0 %v1490, 40
        %v1521 = vpop.permute.xlu0 %1520
        %1522 = vrot.lane.b32.xlu0 %v1491, 40
        %v1523 = vpop.permute.xlu0 %1522
        %1524 = vrot.lane.b32.xlu0 %v1493, 40
        %v1525 = vpop.permute.xlu0 %1524
        %1526 = vrot.lane.b32.xlu0 %v1494, 40
        %v1527 = vpop.permute.xlu0 %1526
        %1528 = vrot.lane.b32.xlu0 %v1496, 40
        %v1529 = vpop.permute.xlu0 %1528
        %1530 = vrot.lane.b32.xlu0 %v1497, 40
        %v1531 = vpop.permute.xlu0 %1530
        %1532 = vrot.lane.b32.xlu0 %v1499, 40
        %v1533 = vpop.permute.xlu0 %1532
        %1534 = vrot.lane.b32.xlu0 %v1500, 40
        %v1535 = vpop.permute.xlu0 %1534
        %1536 = vrot.lane.b32.xlu0 %v1502, 40
        %v1537 = vpop.permute.xlu0 %1536
        %1538 = vrot.lane.b32.xlu0 %v1503, 40
        %v1539 = vpop.permute.xlu0 %1538
        %1540 = vrot.lane.b32.xlu0 %v1505, 40
        %v1541 = vpop.permute.xlu0 %1540
        %1542 = vrot.lane.b32.xlu0 %v1506, 40
        %v1543 = vpop.permute.xlu0 %1542
        %1544 = vrot.lane.b32.xlu0 %v1508, 40
        %v1545 = vpop.permute.xlu0 %1544
        %1546 = vrot.lane.b32.xlu0 %v1509, 40
        %v1547 = vpop.permute.xlu0 %1546
        %1548 = vrot.lane.b32.xlu0 %v1511, 40
        %v1549 = vpop.permute.xlu0 %1548
        %1550 = vrot.lane.b32.xlu0 %v1512, 40
        %v1551 = vpop.permute.xlu0 %1550
        %1552 = vrot.lane.b32.xlu0 %v1514, 40
        %v1553 = vpop.permute.xlu0 %1552
        %1554 = vrot.lane.b32.xlu0 %v1515, 40
        %v1555 = vpop.permute.xlu0 %1554
        %1556 = vrot.lane.b32.xlu0 %v1517, 40
        %v1557 = vpop.permute.xlu0 %1556
        %v1588 = vunpack.c.l.b16 %v897
        %v1589 = vunpack.c.l.b16 %v898
        %v1590 = vunpack.c.l.b16 %v899
        %v1591 = vunpack.c.l.b16 %v900
        %v1592 = vunpack.c.l.b16 %v901
        %v1593 = vunpack.c.l.b16 %v902
        %v1594 = vunpack.c.l.b16 %v903
        %v1595 = vunpack.c.l.b16 %v904
        %v1596 = vunpack.c.l.b16 %v905
        %v1597 = vunpack.c.l.b16 %v906
        %v1598 = vunpack.c.l.b16 %v907
        %v1599 = vunpack.c.l.b16 %v908
        %v1600 = vunpack.c.l.b16 %v909
        %v1601 = vunpack.c.l.b16 %v910
        %v1602 = vunpack.c.l.b16 %v911
        %v1603 = vunpack.c.l.b16 %v912
        %v1604 = vunpack.c.l.b16 %v913
        %v1605 = vunpack.c.l.b16 %v914
        %v1606 = vunpack.c.l.b16 %v915
        %v1607 = vunpack.c.l.b16 %v916
        %v1608 = vunpack.c.l.b16 %v917
        %v1609 = vunpack.c.l.b16 %v918
        %v1610 = vunpack.c.l.b16 %v919
        %v1611 = vunpack.c.l.b16 %v920
        %v1612 = vunpack.c.l.b16 %v921
        %v1613 = vunpack.c.l.b16 %v922
        %v1614 = vunpack.c.l.b16 %v923
        %v1615 = vunpack.c.l.b16 %v924
        %v1616 = vunpack.c.l.b16 %v925
        %v1617 = vunpack.c.l.b16 %v926
        %v1618 = vpack.c.b16 %v1589, %v1588
        %v1619 = vpack.c.b16 %v1590, %v1590
        %v1620 = vpack.c.b16 %v1592, %v1591
        %v1621 = vpack.c.b16 %v1593, %v1593
        %v1622 = vpack.c.b16 %v1595, %v1594
        %v1623 = vpack.c.b16 %v1596, %v1596
        %v1624 = vpack.c.b16 %v1598, %v1597
        %v1625 = vpack.c.b16 %v1599, %v1599
        %v1626 = vpack.c.b16 %v1601, %v1600
        %v1627 = vpack.c.b16 %v1602, %v1602
        %v1628 = vpack.c.b16 %v1604, %v1603
        %v1629 = vpack.c.b16 %v1605, %v1605
        %v1630 = vpack.c.b16 %v1607, %v1606
        %v1631 = vpack.c.b16 %v1608, %v1608
        %v1632 = vpack.c.b16 %v1610, %v1609
        %v1633 = vpack.c.b16 %v1611, %v1611
        %v1634 = vpack.c.b16 %v1613, %v1612
        %v1635 = vpack.c.b16 %v1614, %v1614
        %v1636 = vpack.c.b16 %v1616, %v1615
        %v1637 = vpack.c.b16 %v1617, %v1617
        %1638 = vrot.lane.b32.xlu0 %v1618, 48
        %v1639 = vpop.permute.xlu0 %1638
        %1640 = vrot.lane.b32.xlu0 %v1619, 48
        %v1641 = vpop.permute.xlu0 %1640
        %1642 = vrot.lane.b32.xlu0 %v1620, 48
        %v1643 = vpop.permute.xlu0 %1642
        %1644 = vrot.lane.b32.xlu0 %v1621, 48
        %v1645 = vpop.permute.xlu0 %1644
        %1646 = vrot.lane.b32.xlu0 %v1622, 48
        %v1647 = vpop.permute.xlu0 %1646
        %1648 = vrot.lane.b32.xlu0 %v1623, 48
        %v1649 = vpop.permute.xlu0 %1648
        %1650 = vrot.lane.b32.xlu0 %v1624, 48
        %v1651 = vpop.permute.xlu0 %1650
        %1652 = vrot.lane.b32.xlu0 %v1625, 48
        %v1653 = vpop.permute.xlu0 %1652
        %1654 = vrot.lane.b32.xlu0 %v1626, 48
        %v1655 = vpop.permute.xlu0 %1654
        %1656 = vrot.lane.b32.xlu0 %v1627, 48
        %v1657 = vpop.permute.xlu0 %1656
        %1658 = vrot.lane.b32.xlu0 %v1628, 48
        %v1659 = vpop.permute.xlu0 %1658
        %1660 = vrot.lane.b32.xlu0 %v1629, 48
        %v1661 = vpop.permute.xlu0 %1660
        %1662 = vrot.lane.b32.xlu0 %v1630, 48
        %v1663 = vpop.permute.xlu0 %1662
        %1664 = vrot.lane.b32.xlu0 %v1631, 48
        %v1665 = vpop.permute.xlu0 %1664
        %1666 = vrot.lane.b32.xlu0 %v1632, 48
        %v1667 = vpop.permute.xlu0 %1666
        %1668 = vrot.lane.b32.xlu0 %v1633, 48
        %v1669 = vpop.permute.xlu0 %1668
        %1670 = vrot.lane.b32.xlu0 %v1634, 48
        %v1671 = vpop.permute.xlu0 %1670
        %1672 = vrot.lane.b32.xlu0 %v1635, 48
        %v1673 = vpop.permute.xlu0 %1672
        %1674 = vrot.lane.b32.xlu0 %v1636, 48
        %v1675 = vpop.permute.xlu0 %1674
        %1676 = vrot.lane.b32.xlu0 %v1637, 48
        %v1677 = vpop.permute.xlu0 %1676
        %v1678 = vpack.c.b16 %v1590, %v1589
        %v1679 = vpack.c.b16 %v1593, %v1592
        %v1680 = vpack.c.b16 %v1596, %v1595
        %v1681 = vpack.c.b16 %v1599, %v1598
        %v1682 = vpack.c.b16 %v1602, %v1601
        %v1683 = vpack.c.b16 %v1605, %v1604
        %v1684 = vpack.c.b16 %v1608, %v1607
        %v1685 = vpack.c.b16 %v1611, %v1610
        %v1686 = vpack.c.b16 %v1614, %v1613
        %v1687 = vpack.c.b16 %v1617, %v1616
        %v1689 = vshrl.u32 %v1678, 16
        %v1691 = vrot.slane %v1689, 4
        %v1692 = vshll.u32 %v1678, 16
        %v1694 = vrot.slane %v1692, 5
        %v1695 = vor.u32 %v1691, %v1694
        %v1697 = vshrl.u32 %v1679, 16
        %v1699 = vrot.slane %v1697, 4
        %v1700 = vshll.u32 %v1679, 16
        %v1702 = vrot.slane %v1700, 5
        %v1703 = vor.u32 %v1699, %v1702
        %v1705 = vshrl.u32 %v1680, 16
        %v1707 = vrot.slane %v1705, 4
        %v1708 = vshll.u32 %v1680, 16
        %v1710 = vrot.slane %v1708, 5
        %v1711 = vor.u32 %v1707, %v1710
        %v1713 = vshrl.u32 %v1681, 16
        %v1715 = vrot.slane %v1713, 4
        %v1716 = vshll.u32 %v1681, 16
        %v1718 = vrot.slane %v1716, 5
        %v1719 = vor.u32 %v1715, %v1718
        %v1721 = vshrl.u32 %v1682, 16
        %v1723 = vrot.slane %v1721, 4
        %v1724 = vshll.u32 %v1682, 16
        %v1726 = vrot.slane %v1724, 5
        %v1727 = vor.u32 %v1723, %v1726
        %v1729 = vshrl.u32 %v1683, 16
        %v1731 = vrot.slane %v1729, 4
        %v1732 = vshll.u32 %v1683, 16
        %v1734 = vrot.slane %v1732, 5
        %v1735 = vor.u32 %v1731, %v1734
        %v1737 = vshrl.u32 %v1684, 16
        %v1739 = vrot.slane %v1737, 4
        %v1740 = vshll.u32 %v1684, 16
        %v1742 = vrot.slane %v1740, 5
        %v1743 = vor.u32 %v1739, %v1742
        %v1745 = vshrl.u32 %v1685, 16
        %v1747 = vrot.slane %v1745, 4
        %v1748 = vshll.u32 %v1685, 16
        %v1750 = vrot.slane %v1748, 5
        %v1751 = vor.u32 %v1747, %v1750
        %v1753 = vshrl.u32 %v1686, 16
        %v1755 = vrot.slane %v1753, 4
        %v1756 = vshll.u32 %v1686, 16
        %v1758 = vrot.slane %v1756, 5
        %v1759 = vor.u32 %v1755, %v1758
        %v1761 = vshrl.u32 %v1687, 16
        %v1763 = vrot.slane %v1761, 4
        %v1764 = vshll.u32 %v1687, 16
        %v1766 = vrot.slane %v1764, 5
        %v1767 = vor.u32 %v1763, %v1766
        %1768 = vrot.lane.b32.xlu0 %v1695, 56
        %v1769 = vpop.permute.xlu0 %1768
        %1770 = vrot.lane.b32.xlu0 %v1703, 56
        %v1771 = vpop.permute.xlu0 %1770
        %1772 = vrot.lane.b32.xlu0 %v1711, 56
        %v1773 = vpop.permute.xlu0 %1772
        %1774 = vrot.lane.b32.xlu0 %v1719, 56
        %v1775 = vpop.permute.xlu0 %1774
        %1776 = vrot.lane.b32.xlu0 %v1727, 56
        %v1777 = vpop.permute.xlu0 %1776
        %1778 = vrot.lane.b32.xlu0 %v1735, 56
        %v1779 = vpop.permute.xlu0 %1778
        %1780 = vrot.lane.b32.xlu0 %v1743, 56
        %v1781 = vpop.permute.xlu0 %1780
        %1782 = vrot.lane.b32.xlu0 %v1751, 56
        %v1783 = vpop.permute.xlu0 %1782
        %1784 = vrot.lane.b32.xlu0 %v1759, 56
        %v1785 = vpop.permute.xlu0 %1784
        %1786 = vrot.lane.b32.xlu0 %v1767, 56
        %v1787 = vpop.permute.xlu0 %1786
        %v1798 = vunpack.c.l.b16 %v927
        %v1799 = vunpack.c.l.b16 %v928
        %v1800 = vunpack.c.l.b16 %v929
        %v1801 = vunpack.c.l.b16 %v930
        %v1802 = vunpack.c.l.b16 %v931
        %v1803 = vunpack.c.l.b16 %v932
        %v1804 = vunpack.c.l.b16 %v933
        %v1805 = vunpack.c.l.b16 %v934
        %v1806 = vunpack.c.l.b16 %v935
        %v1807 = vunpack.c.l.b16 %v936
        %v1808 = vpack.c.b16 %v1798, %v1798
        %v1809 = vpack.c.b16 %v1799, %v1799
        %v1810 = vpack.c.b16 %v1800, %v1800
        %v1811 = vpack.c.b16 %v1801, %v1801
        %v1812 = vpack.c.b16 %v1802, %v1802
        %v1813 = vpack.c.b16 %v1803, %v1803
        %v1814 = vpack.c.b16 %v1804, %v1804
        %v1815 = vpack.c.b16 %v1805, %v1805
        %v1816 = vpack.c.b16 %v1806, %v1806
        %v1817 = vpack.c.b16 %v1807, %v1807
        %v1818 = vrot.slane %v1678, 5
        %v1819 = vrot.slane %v1808, 5
        %v1820 = vsel %vm1157, %v1818, %v1819
        %v1821 = vrot.slane %v1679, 5
        %v1822 = vrot.slane %v1809, 5
        %v1823 = vsel %vm1157, %v1821, %v1822
        %v1824 = vrot.slane %v1680, 5
        %v1825 = vrot.slane %v1810, 5
        %v1826 = vsel %vm1157, %v1824, %v1825
        %v1827 = vrot.slane %v1681, 5
        %v1828 = vrot.slane %v1811, 5
        %v1829 = vsel %vm1157, %v1827, %v1828
        %v1830 = vrot.slane %v1682, 5
        %v1831 = vrot.slane %v1812, 5
        %v1832 = vsel %vm1157, %v1830, %v1831
        %v1833 = vrot.slane %v1683, 5
        %v1834 = vrot.slane %v1813, 5
        %v1835 = vsel %vm1157, %v1833, %v1834
        %v1836 = vrot.slane %v1684, 5
        %v1837 = vrot.slane %v1814, 5
        %v1838 = vsel %vm1157, %v1836, %v1837
        %v1839 = vrot.slane %v1685, 5
        %v1840 = vrot.slane %v1815, 5
        %v1841 = vsel %vm1157, %v1839, %v1840
        %v1842 = vrot.slane %v1686, 5
        %v1843 = vrot.slane %v1816, 5
        %v1844 = vsel %vm1157, %v1842, %v1843
        %v1845 = vrot.slane %v1687, 5
        %v1846 = vrot.slane %v1817, 5
        %v1847 = vsel %vm1157, %v1845, %v1846
        %1848 = vrot.lane.b32.xlu0 %v1818, 64
        %v1849 = vpop.permute.xlu0 %1848
        %1850 = vrot.lane.b32.xlu0 %v1820, 64
        %v1851 = vpop.permute.xlu0 %1850
        %1852 = vrot.lane.b32.xlu0 %v1821, 64
        %v1853 = vpop.permute.xlu0 %1852
        %1854 = vrot.lane.b32.xlu0 %v1823, 64
        %v1855 = vpop.permute.xlu0 %1854
        %1856 = vrot.lane.b32.xlu0 %v1824, 64
        %v1857 = vpop.permute.xlu0 %1856
        %1858 = vrot.lane.b32.xlu0 %v1826, 64
        %v1859 = vpop.permute.xlu0 %1858
        %1860 = vrot.lane.b32.xlu0 %v1827, 64
        %v1861 = vpop.permute.xlu0 %1860
        %1862 = vrot.lane.b32.xlu0 %v1829, 64
        %v1863 = vpop.permute.xlu0 %1862
        %1864 = vrot.lane.b32.xlu0 %v1830, 64
        %v1865 = vpop.permute.xlu0 %1864
        %1866 = vrot.lane.b32.xlu0 %v1832, 64
        %v1867 = vpop.permute.xlu0 %1866
        %1868 = vrot.lane.b32.xlu0 %v1833, 64
        %v1869 = vpop.permute.xlu0 %1868
        %1870 = vrot.lane.b32.xlu0 %v1835, 64
        %v1871 = vpop.permute.xlu0 %1870
        %1872 = vrot.lane.b32.xlu0 %v1836, 64
        %v1873 = vpop.permute.xlu0 %1872
        %1874 = vrot.lane.b32.xlu0 %v1838, 64
        %v1875 = vpop.permute.xlu0 %1874
        %1876 = vrot.lane.b32.xlu0 %v1839, 64
        %v1877 = vpop.permute.xlu0 %1876
        %1878 = vrot.lane.b32.xlu0 %v1841, 64
        %v1879 = vpop.permute.xlu0 %1878
        %1880 = vrot.lane.b32.xlu0 %v1842, 64
        %v1881 = vpop.permute.xlu0 %1880
        %1882 = vrot.lane.b32.xlu0 %v1844, 64
        %v1883 = vpop.permute.xlu0 %1882
        %1884 = vrot.lane.b32.xlu0 %v1845, 64
        %v1885 = vpop.permute.xlu0 %1884
        %1886 = vrot.lane.b32.xlu0 %v1847, 64
        %v1887 = vpop.permute.xlu0 %1886
        %vm1888 = vcmask 64512
        %v1891 = vsel %vm1888, %v997, %v1108
        %v1893 = vsel %vm1888, %v998, %v1108
        %v1896 = vsel %vm1888, %v999, %v1110
        %v1898 = vsel %vm1888, %v1000, %v1110
        %v1901 = vsel %vm1888, %v1001, %v1112
        %v1903 = vsel %vm1888, %v1002, %v1112
        %v1906 = vsel %vm1888, %v1003, %v1114
        %v1908 = vsel %vm1888, %v1004, %v1114
        %v1911 = vsel %vm1888, %v1005, %v1116
        %v1913 = vsel %vm1888, %v1006, %v1116
        %v1916 = vsel %vm1888, %v1007, %v1118
        %v1918 = vsel %vm1888, %v1008, %v1118
        %v1921 = vsel %vm1888, %v1009, %v1120
        %v1923 = vsel %vm1888, %v1010, %v1120
        %v1926 = vsel %vm1888, %v1011, %v1122
        %v1928 = vsel %vm1888, %v1012, %v1122
        %v1931 = vsel %vm1888, %v1013, %v1124
        %v1933 = vsel %vm1888, %v1014, %v1124
        %v1936 = vsel %vm1888, %v1015, %v1126
        %v1938 = vsel %vm1888, %v1016, %v1126
        %vm1939 = vcmask 130048
        %v1941 = vsel %vm1939, %v1891, %v1189
        %v1943 = vsel %vm1939, %v1893, %v1191
        %v1945 = vsel %vm1939, %v1896, %v1193
        %v1947 = vsel %vm1939, %v1898, %v1195
        %v1949 = vsel %vm1939, %v1901, %v1197
        %v1951 = vsel %vm1939, %v1903, %v1199
        %v1953 = vsel %vm1939, %v1906, %v1201
        %v1955 = vsel %vm1939, %v1908, %v1203
        %v1957 = vsel %vm1939, %v1911, %v1205
        %v1959 = vsel %vm1939, %v1913, %v1207
        %v1961 = vsel %vm1939, %v1916, %v1209
        %v1963 = vsel %vm1939, %v1918, %v1211
        %v1965 = vsel %vm1939, %v1921, %v1213
        %v1967 = vsel %vm1939, %v1923, %v1215
        %v1969 = vsel %vm1939, %v1926, %v1217
        %v1971 = vsel %vm1939, %v1928, %v1219
        %v1973 = vsel %vm1939, %v1931, %v1221
        %v1975 = vsel %vm1939, %v1933, %v1223
        %v1977 = vsel %vm1939, %v1936, %v1225
        %v1979 = vsel %vm1939, %v1938, %v1227
        %vm1980 = vcmask 195584
        %v1982 = vsel %vm1980, %v1941, %v1309
        %v1984 = vsel %vm1980, %v1943, %v1311
        %v1986 = vsel %vm1980, %v1945, %v1313
        %v1988 = vsel %vm1980, %v1947, %v1315
        %v1990 = vsel %vm1980, %v1949, %v1317
        %v1992 = vsel %vm1980, %v1951, %v1319
        %v1994 = vsel %vm1980, %v1953, %v1321
        %v1996 = vsel %vm1980, %v1955, %v1323
        %v1998 = vsel %vm1980, %v1957, %v1325
        %v2000 = vsel %vm1980, %v1959, %v1327
        %v2002 = vsel %vm1980, %v1961, %v1329
        %v2004 = vsel %vm1980, %v1963, %v1331
        %v2006 = vsel %vm1980, %v1965, %v1333
        %v2008 = vsel %vm1980, %v1967, %v1335
        %v2010 = vsel %vm1980, %v1969, %v1337
        %v2012 = vsel %vm1980, %v1971, %v1339
        %v2014 = vsel %vm1980, %v1973, %v1341
        %v2016 = vsel %vm1980, %v1975, %v1343
        %v2018 = vsel %vm1980, %v1977, %v1345
        %v2020 = vsel %vm1980, %v1979, %v1347
        %vm2021 = vcmask 261120
        %v2023 = vsel %vm2021, %v1982, %v1439
        %v2024 = vsel %vm2021, %v1984, %v1439
        %v2026 = vsel %vm2021, %v1986, %v1441
        %v2027 = vsel %vm2021, %v1988, %v1441
        %v2029 = vsel %vm2021, %v1990, %v1443
        %v2030 = vsel %vm2021, %v1992, %v1443
        %v2032 = vsel %vm2021, %v1994, %v1445
        %v2033 = vsel %vm2021, %v1996, %v1445
        %v2035 = vsel %vm2021, %v1998, %v1447
        %v2036 = vsel %vm2021, %v2000, %v1447
        %v2038 = vsel %vm2021, %v2002, %v1449
        %v2039 = vsel %vm2021, %v2004, %v1449
        %v2041 = vsel %vm2021, %v2006, %v1451
        %v2042 = vsel %vm2021, %v2008, %v1451
        %v2044 = vsel %vm2021, %v2010, %v1453
        %v2045 = vsel %vm2021, %v2012, %v1453
        %v2047 = vsel %vm2021, %v2014, %v1455
        %v2048 = vsel %vm2021, %v2016, %v1455
        %v2050 = vsel %vm2021, %v2018, %v1457
        %v2051 = vsel %vm2021, %v2020, %v1457
        %vm2052 = vcmask 326656
        %v2054 = vsel %vm2052, %v2023, %v1519
        %v2056 = vsel %vm2052, %v2024, %v1521
        %v2058 = vsel %vm2052, %v2026, %v1523
        %v2060 = vsel %vm2052, %v2027, %v1525
        %v2062 = vsel %vm2052, %v2029, %v1527
        %v2064 = vsel %vm2052, %v2030, %v1529
        %v2066 = vsel %vm2052, %v2032, %v1531
        %v2068 = vsel %vm2052, %v2033, %v1533
        %v2070 = vsel %vm2052, %v2035, %v1535
        %v2072 = vsel %vm2052, %v2036, %v1537
        %v2074 = vsel %vm2052, %v2038, %v1539
        %v2076 = vsel %vm2052, %v2039, %v1541
        %v2078 = vsel %vm2052, %v2041, %v1543
        %v2080 = vsel %vm2052, %v2042, %v1545
        %v2082 = vsel %vm2052, %v2044, %v1547
        %v2084 = vsel %vm2052, %v2045, %v1549
        %v2086 = vsel %vm2052, %v2047, %v1551
        %v2088 = vsel %vm2052, %v2048, %v1553
        %v2090 = vsel %vm2052, %v2050, %v1555
        %v2092 = vsel %vm2052, %v2051, %v1557
        %vm2093 = vcmask 392192
        %v2095 = vsel %vm2093, %v2054, %v1639
        %v2097 = vsel %vm2093, %v2056, %v1641
        %v2099 = vsel %vm2093, %v2058, %v1643
        %v2101 = vsel %vm2093, %v2060, %v1645
        %v2103 = vsel %vm2093, %v2062, %v1647
        %v2105 = vsel %vm2093, %v2064, %v1649
        %v2107 = vsel %vm2093, %v2066, %v1651
        %v2109 = vsel %vm2093, %v2068, %v1653
        %v2111 = vsel %vm2093, %v2070, %v1655
        %v2113 = vsel %vm2093, %v2072, %v1657
        %v2115 = vsel %vm2093, %v2074, %v1659
        %v2117 = vsel %vm2093, %v2076, %v1661
        %v2119 = vsel %vm2093, %v2078, %v1663
        %v2121 = vsel %vm2093, %v2080, %v1665
        %v2123 = vsel %vm2093, %v2082, %v1667
        %v2125 = vsel %vm2093, %v2084, %v1669
        %v2127 = vsel %vm2093, %v2086, %v1671
        %v2129 = vsel %vm2093, %v2088, %v1673
        %v2131 = vsel %vm2093, %v2090, %v1675
        %v2133 = vsel %vm2093, %v2092, %v1677
        %vm2134 = vcmask 457728
        %v2136 = vsel %vm2134, %v2095, %v1769
        %v2137 = vsel %vm2134, %v2097, %v1769
        %v2139 = vsel %vm2134, %v2099, %v1771
        %v2140 = vsel %vm2134, %v2101, %v1771
        %v2142 = vsel %vm2134, %v2103, %v1773
        %v2143 = vsel %vm2134, %v2105, %v1773
        %v2145 = vsel %vm2134, %v2107, %v1775
        %v2146 = vsel %vm2134, %v2109, %v1775
        %v2148 = vsel %vm2134, %v2111, %v1777
        %v2149 = vsel %vm2134, %v2113, %v1777
        %v2151 = vsel %vm2134, %v2115, %v1779
        %v2152 = vsel %vm2134, %v2117, %v1779
        %v2154 = vsel %vm2134, %v2119, %v1781
        %v2155 = vsel %vm2134, %v2121, %v1781
        %v2157 = vsel %vm2134, %v2123, %v1783
        %v2158 = vsel %vm2134, %v2125, %v1783
        %v2160 = vsel %vm2134, %v2127, %v1785
        %v2161 = vsel %vm2134, %v2129, %v1785
        %v2163 = vsel %vm2134, %v2131, %v1787
        %v2164 = vsel %vm2134, %v2133, %v1787
        %vm2165 = vcmask 523264
        %v2167 = vsel %vm2165, %v2136, %v1849
        %v2169 = vsel %vm2165, %v2137, %v1851
        %v2171 = vsel %vm2165, %v2139, %v1853
        %v2173 = vsel %vm2165, %v2140, %v1855
        %v2175 = vsel %vm2165, %v2142, %v1857
        %v2177 = vsel %vm2165, %v2143, %v1859
        %v2179 = vsel %vm2165, %v2145, %v1861
        %v2181 = vsel %vm2165, %v2146, %v1863
        %v2183 = vsel %vm2165, %v2148, %v1865
        %v2185 = vsel %vm2165, %v2149, %v1867
        %v2187 = vsel %vm2165, %v2151, %v1869
        %v2189 = vsel %vm2165, %v2152, %v1871
        %v2191 = vsel %vm2165, %v2154, %v1873
        %v2193 = vsel %vm2165, %v2155, %v1875
        %v2195 = vsel %vm2165, %v2157, %v1877
        %v2197 = vsel %vm2165, %v2158, %v1879
        %v2199 = vsel %vm2165, %v2160, %v1881
        %v2201 = vsel %vm2165, %v2161, %v1883
        %v2203 = vsel %vm2165, %v2163, %v1885
        %v2205 = vsel %vm2165, %v2164, %v1887
        %vm2206 = vsmask.f32 4352
        %v2207 = vshrl.u32 %v2167, 16
        %v2209 = vrot.slane %v2207, 3
        %v2210 = vshll.u32 %v2167, 16
        %v2212 = vrot.slane %v2210, 4
        %v2213 = vor.u32 %v2209, %v2212
        %v2214 = vshrl.u32 %v2169, 16
        %v2216 = vrot.slane %v2214, 3
        %v2217 = vshll.u32 %v2169, 16
        %v2219 = vrot.slane %v2217, 4
        %v2220 = vor.u32 %v2216, %v2219
        %v2221 = vsel %vm2206, %v2213, %v2220
        %v2222 = vshrl.u32 %v2171, 16
        %v2224 = vrot.slane %v2222, 3
        %v2225 = vshll.u32 %v2171, 16
        %v2227 = vrot.slane %v2225, 4
        %v2228 = vor.u32 %v2224, %v2227
        %v2229 = vshrl.u32 %v2173, 16
        %v2231 = vrot.slane %v2229, 3
        %v2232 = vshll.u32 %v2173, 16
        %v2234 = vrot.slane %v2232, 4
        %v2235 = vor.u32 %v2231, %v2234
        %v2236 = vsel %vm2206, %v2228, %v2235
        %v2237 = vshrl.u32 %v2175, 16
        %v2239 = vrot.slane %v2237, 3
        %v2240 = vshll.u32 %v2175, 16
        %v2242 = vrot.slane %v2240, 4
        %v2243 = vor.u32 %v2239, %v2242
        %v2244 = vshrl.u32 %v2177, 16
        %v2246 = vrot.slane %v2244, 3
        %v2247 = vshll.u32 %v2177, 16
        %v2249 = vrot.slane %v2247, 4
        %v2250 = vor.u32 %v2246, %v2249
        %v2251 = vsel %vm2206, %v2243, %v2250
        %v2252 = vshrl.u32 %v2179, 16
        %v2254 = vrot.slane %v2252, 3
        %v2255 = vshll.u32 %v2179, 16
        %v2257 = vrot.slane %v2255, 4
        %v2258 = vor.u32 %v2254, %v2257
        %v2259 = vshrl.u32 %v2181, 16
        %v2261 = vrot.slane %v2259, 3
        %v2262 = vshll.u32 %v2181, 16
        %v2264 = vrot.slane %v2262, 4
        %v2265 = vor.u32 %v2261, %v2264
        %v2266 = vsel %vm2206, %v2258, %v2265
        %v2267 = vshrl.u32 %v2183, 16
        %v2269 = vrot.slane %v2267, 3
        %v2270 = vshll.u32 %v2183, 16
        %v2272 = vrot.slane %v2270, 4
        %v2273 = vor.u32 %v2269, %v2272
        %v2274 = vshrl.u32 %v2185, 16
        %v2276 = vrot.slane %v2274, 3
        %v2277 = vshll.u32 %v2185, 16
        %v2279 = vrot.slane %v2277, 4
        %v2280 = vor.u32 %v2276, %v2279
        %v2281 = vsel %vm2206, %v2273, %v2280
        %v2282 = vshrl.u32 %v2187, 16
        %v2284 = vrot.slane %v2282, 3
        %v2285 = vshll.u32 %v2187, 16
        %v2287 = vrot.slane %v2285, 4
        %v2288 = vor.u32 %v2284, %v2287
        %v2289 = vshrl.u32 %v2189, 16
        %v2291 = vrot.slane %v2289, 3
        %v2292 = vshll.u32 %v2189, 16
        %v2294 = vrot.slane %v2292, 4
        %v2295 = vor.u32 %v2291, %v2294
        %v2296 = vsel %vm2206, %v2288, %v2295
        %v2297 = vshrl.u32 %v2191, 16
        %v2299 = vrot.slane %v2297, 3
        %v2300 = vshll.u32 %v2191, 16
        %v2302 = vrot.slane %v2300, 4
        %v2303 = vor.u32 %v2299, %v2302
        %v2304 = vshrl.u32 %v2193, 16
        %v2306 = vrot.slane %v2304, 3
        %v2307 = vshll.u32 %v2193, 16
        %v2309 = vrot.slane %v2307, 4
        %v2310 = vor.u32 %v2306, %v2309
        %v2311 = vsel %vm2206, %v2303, %v2310
        %v2312 = vshrl.u32 %v2195, 16
        %v2314 = vrot.slane %v2312, 3
        %v2315 = vshll.u32 %v2195, 16
        %v2317 = vrot.slane %v2315, 4
        %v2318 = vor.u32 %v2314, %v2317
        %v2319 = vshrl.u32 %v2197, 16
        %v2321 = vrot.slane %v2319, 3
        %v2322 = vshll.u32 %v2197, 16
        %v2324 = vrot.slane %v2322, 4
        %v2325 = vor.u32 %v2321, %v2324
        %v2326 = vsel %vm2206, %v2318, %v2325
        %v2327 = vshrl.u32 %v2199, 16
        %v2329 = vrot.slane %v2327, 3
        %v2330 = vshll.u32 %v2199, 16
        %v2332 = vrot.slane %v2330, 4
        %v2333 = vor.u32 %v2329, %v2332
        %v2334 = vshrl.u32 %v2201, 16
        %v2336 = vrot.slane %v2334, 3
        %v2337 = vshll.u32 %v2201, 16
        %v2339 = vrot.slane %v2337, 4
        %v2340 = vor.u32 %v2336, %v2339
        %v2341 = vsel %vm2206, %v2333, %v2340
        %v2342 = vshrl.u32 %v2203, 16
        %v2344 = vrot.slane %v2342, 3
        %v2345 = vshll.u32 %v2203, 16
        %v2347 = vrot.slane %v2345, 4
        %v2348 = vor.u32 %v2344, %v2347
        %v2349 = vshrl.u32 %v2205, 16
        %v2351 = vrot.slane %v2349, 3
        %v2352 = vshll.u32 %v2205, 16
        %v2354 = vrot.slane %v2352, 4
        %v2355 = vor.u32 %v2351, %v2354
        %v2356 = vsel %vm2206, %v2348, %v2355
        %v2357 = vld [vmem:[#allocation10] sm:$0xf]
        %v2358 = vld [vmem:[#allocation10 + $0x4] sm:$0xf]
        %v2359 = vld [vmem:[#allocation10 + $0x8] sm:$0xf]
        %v2360 = vld [vmem:[#allocation10 + $0xc] sm:$0xf]
        %v2361 = vld [vmem:[#allocation10 + $0x10] sm:$0xf]
        %v2362 = vld [vmem:[#allocation10 + $0x14] sm:$0xf]
        %v2363 = vld [vmem:[#allocation10 + $0x18] sm:$0xf]
        %v2364 = vld [vmem:[#allocation10 + $0x1c] sm:$0xf]
        %v2365 = vld [vmem:[#allocation10 + $0x20] sm:$0xf]
        %v2375 = vunpack.c.l.b16 %v2357
        %v2376 = vunpack.c.l.b16 %v2358
        %v2377 = vunpack.c.l.b16 %v2359
        %v2378 = vunpack.c.l.b16 %v2360
        %v2379 = vunpack.c.l.b16 %v2361
        %v2380 = vunpack.c.l.b16 %v2362
        %v2381 = vunpack.c.l.b16 %v2363
        %v2382 = vunpack.c.l.b16 %v2364
        %v2383 = vunpack.c.l.b16 %v2365
        %v2384 = vpack.c.b16 %v2376, %v2375
        %v2385 = vpack.c.b16 %v2378, %v2377
        %v2386 = vpack.c.b16 %v2380, %v2379
        %v2387 = vpack.c.b16 %v2382, %v2381
        %v2388 = vpack.c.b16 %v2383, %v2383
        %vm2393 = vcmask 588800
        %v2395 = vsel %vm2393, %v2221, 0
        %v2398 = vsel %vm2393, %v2236, 0
        %v2401 = vsel %vm2393, %v2251, 0
        %v2404 = vsel %vm2393, %v2266, 0
        %v2407 = vsel %vm2393, %v2281, 0
        %v2410 = vsel %vm2393, %v2296, 0
        %v2413 = vsel %vm2393, %v2311, 0
        %v2416 = vsel %vm2393, %v2326, 0
        %v2419 = vsel %vm2393, %v2341, 0
        %v2422 = vsel %vm2393, %v2356, 0
        %vm2424 = vcmask 1043456
        %v2426 = vsel %vm2424, %v2388, 0
        %2428 = vmatprep.subr.bf16.mxu0 0
        %2429 = vmatpush1.bf16.msra.mxu0 %v2384
        %2430 = vmatprep.subr.bf16.mxu0 0
        %2431 = vmatpush1.bf16.msra.mxu0 %v2385
        %2432 = vmatprep.subr.bf16.mxu0 0
        %2433 = vmatpush1.bf16.msra.mxu0 %v2386
        %2434 = vmatprep.subr.bf16.mxu0 0
        %2435 = vmatpush1.bf16.msra.mxu0 %v2387
        %2436 = vmatprep.subr.bf16.mxu0 0
        %2437 = vmatpush1.bf16.msra.mxu0 %v2426
        %2438 = vmatprep.subr.bf16.mxu0 0
        %2439 = vmatpush1.bf16.msra.mxu0 0
        %2440 = vmatprep.subr.bf16.mxu0 0
        %2441 = vmatpush1.bf16.msra.mxu0 0
        %2442 = vmatprep.subr.bf16.mxu0 0
        %2443 = vmatpush1.bf16.msra.mxu0 0
        %2444 = vmatprep.subr.bf16.mxu0 0
        %2445 = vmatpush1.bf16.msra.mxu0 0
        %2446 = vmatprep.subr.bf16.mxu0 0
        %2447 = vmatpush1.bf16.msra.mxu0 0
        %2448 = vmatprep.subr.bf16.mxu0 0
        %2449 = vmatpush1.bf16.msra.mxu0 0
        %2450 = vmatprep.subr.bf16.mxu0 0
        %2451 = vmatpush1.bf16.msra.mxu0 0
        %2452 = vmatprep.subr.bf16.mxu0 0
        %2453 = vmatpush1.bf16.msra.mxu0 0
        %2454 = vmatprep.subr.bf16.mxu0 0
        %2455 = vmatpush1.bf16.msra.mxu0 0
        %2456 = vmatprep.subr.bf16.mxu0 0
        %2457 = vmatpush1.bf16.msra.mxu0 0
        %2458 = vmatprep.subr.bf16.mxu0 0
        %2459 = vmatpush1.bf16.msra.mxu0 0
        %2460 = vmatprep.mubr.bf16.mxu0 0
        %2461 = vmatmul.mubr.bf16.gmra.mrb[0].mxu0 %v2395
        %v2462 = vpop.f32.mrb[0].mxu0
        %v2463 = vadd.f32 0.0, %v2462
        %v2464 = vpop.f32.mrb[0].mxu0
        %v2465 = vpop.f32.mrb[0].mxu0
        %v2466 = vadd.f32 0.0, %v2465
        %v2467 = vpop.f32.mrb[0].mxu0
        %2468 = vmatprep.mubr.bf16.mxu0 0
        %2469 = vmatmul.mubr.bf16.gmra.mrb[0].mxu0 %v2398
        %v2470 = vpop.f32.mrb[0].mxu0
        %v2471 = vadd.f32 0.0, %v2470
        %v2472 = vpop.f32.mrb[0].mxu0
        %v2473 = vpop.f32.mrb[0].mxu0
        %v2474 = vadd.f32 0.0, %v2473
        %v2475 = vpop.f32.mrb[0].mxu0
        %2476 = vmatprep.mubr.bf16.mxu0 0
        %2477 = vmatmul.mubr.bf16.gmra.mrb[0].mxu0 %v2401
        %v2478 = vpop.f32.mrb[0].mxu0
        %v2479 = vadd.f32 0.0, %v2478
        %v2480 = vpop.f32.mrb[0].mxu0
        %v2481 = vpop.f32.mrb[0].mxu0
        %v2482 = vadd.f32 0.0, %v2481
        %v2483 = vpop.f32.mrb[0].mxu0
        %2484 = vmatprep.mubr.bf16.mxu0 0
        %2485 = vmatmul.mubr.bf16.gmra.mrb[0].mxu0 %v2404
        %v2486 = vpop.f32.mrb[0].mxu0
        %v2487 = vadd.f32 0.0, %v2486
        %v2488 = vpop.f32.mrb[0].mxu0
        %v2489 = vpop.f32.mrb[0].mxu0
        %v2490 = vadd.f32 0.0, %v2489
        %v2491 = vpop.f32.mrb[0].mxu0
        %2492 = vmatprep.mubr.bf16.mxu0 0
        %2493 = vmatmul.mubr.bf16.gmra.mrb[0].mxu0 %v2407
        %v2494 = vpop.f32.mrb[0].mxu0
        %v2495 = vadd.f32 0.0, %v2494
        %v2496 = vpop.f32.mrb[0].mxu0
        %v2497 = vpop.f32.mrb[0].mxu0
        %v2498 = vadd.f32 0.0, %v2497
        %v2499 = vpop.f32.mrb[0].mxu0
        %2500 = vmatprep.mubr.bf16.mxu0 0
        %2501 = vmatmul.mubr.bf16.gmra.mrb[0].mxu0 %v2410
        %v2502 = vpop.f32.mrb[0].mxu0
        %v2503 = vadd.f32 0.0, %v2502
        %v2504 = vpop.f32.mrb[0].mxu0
        %v2505 = vpop.f32.mrb[0].mxu0
        %v2506 = vadd.f32 0.0, %v2505
        %v2507 = vpop.f32.mrb[0].mxu0
        %2508 = vmatprep.mubr.bf16.mxu0 0
        %2509 = vmatmul.mubr.bf16.gmra.mrb[0].mxu0 %v2413
        %v2510 = vpop.f32.mrb[0].mxu0
        %v2511 = vadd.f32 0.0, %v2510
        %v2512 = vpop.f32.mrb[0].mxu0
        %v2513 = vpop.f32.mrb[0].mxu0
        %v2514 = vadd.f32 0.0, %v2513
        %v2515 = vpop.f32.mrb[0].mxu0
        %2516 = vmatprep.mubr.bf16.mxu0 0
        %2517 = vmatmul.mubr.bf16.gmra.mrb[0].mxu0 %v2416
        %v2518 = vpop.f32.mrb[0].mxu0
        %v2519 = vadd.f32 0.0, %v2518
        %v2520 = vpop.f32.mrb[0].mxu0
        %v2521 = vpop.f32.mrb[0].mxu0
        %v2522 = vadd.f32 0.0, %v2521
        %v2523 = vpop.f32.mrb[0].mxu0
        %2524 = vmatprep.mubr.bf16.mxu0 0
        %2525 = vmatmul.mubr.bf16.gmra.mrb[0].mxu0 %v2419
        %v2526 = vpop.f32.mrb[0].mxu0
        %v2527 = vadd.f32 0.0, %v2526
        %v2528 = vpop.f32.mrb[0].mxu0
        %v2529 = vpop.f32.mrb[0].mxu0
        %v2530 = vadd.f32 0.0, %v2529
        %v2531 = vpop.f32.mrb[0].mxu0
        %2532 = vmatprep.mubr.bf16.mxu0 0
        %2533 = vmatmul.mubr.bf16.gmra.mrb[0].mxu0 %v2422
        %v2534 = vpop.f32.mrb[0].mxu0
        %v2535 = vadd.f32 0.0, %v2534
        %v2536 = vpop.f32.mrb[0].mxu0
        %v2537 = vpop.f32.mrb[0].mxu0
        %v2538 = vadd.f32 0.0, %v2537
        %v2539 = vpop.f32.mrb[0].mxu0
        %2540 = vdwg.mxu0
        %v2541 = vld [vmem:[#allocation12] sm:$0x1]
        %v2543 = vlaneseq
        %v2544 = vshrl.u32 %v2543, 7
        %v2545 = vsub.s32 0, %v2544
        %v2546 = vrot.slane %v2541, %v2545
        %v2548 = vadd.f32 %v2463, %v2546
        %v2549 = vadd.f32 %v2466, %v2546
        %v2550 = vadd.f32 %v2471, %v2546
        %v2551 = vadd.f32 %v2474, %v2546
        %v2552 = vadd.f32 %v2479, %v2546
        %v2553 = vadd.f32 %v2482, %v2546
        %v2554 = vadd.f32 %v2487, %v2546
        %v2555 = vadd.f32 %v2490, %v2546
        %v2556 = vadd.f32 %v2495, %v2546
        %v2557 = vadd.f32 %v2498, %v2546
        %v2558 = vadd.f32 %v2503, %v2546
        %v2559 = vadd.f32 %v2506, %v2546
        %v2560 = vadd.f32 %v2511, %v2546
        %v2561 = vadd.f32 %v2514, %v2546
        %v2562 = vadd.f32 %v2519, %v2546
        %v2563 = vadd.f32 %v2522, %v2546
        %v2564 = vadd.f32 %v2527, %v2546
        %v2565 = vadd.f32 %v2530, %v2546
        %v2566 = vadd.f32 %v2535, %v2546
        %v2567 = vadd.f32 %v2538, %v2546
        %v2568 = vmax.f32 %v2548, 0.0
        %v2569 = vmax.f32 %v2549, 0.0
        %v2570 = vmax.f32 %v2550, 0.0
        %v2571 = vmax.f32 %v2551, 0.0
        %v2572 = vmax.f32 %v2552, 0.0
        %v2573 = vmax.f32 %v2553, 0.0
        %v2574 = vmax.f32 %v2554, 0.0
        %v2575 = vmax.f32 %v2555, 0.0
        %v2576 = vmax.f32 %v2556, 0.0
        %v2577 = vmax.f32 %v2557, 0.0
        %v2578 = vmax.f32 %v2558, 0.0
        %v2579 = vmax.f32 %v2559, 0.0
        %v2580 = vmax.f32 %v2560, 0.0
        %v2581 = vmax.f32 %v2561, 0.0
        %v2582 = vmax.f32 %v2562, 0.0
        %v2583 = vmax.f32 %v2563, 0.0
        %v2584 = vmax.f32 %v2564, 0.0
        %v2585 = vmax.f32 %v2565, 0.0
        %v2586 = vmax.f32 %v2566, 0.0
        %v2587 = vmax.f32 %v2567, 0.0
        %v2588 = vpack.c.bf16 %v2569, %v2568
        %v2589 = vpack.c.bf16 %v2571, %v2570
        %v2590 = vpack.c.bf16 %v2573, %v2572
        %v2591 = vpack.c.bf16 %v2575, %v2574
        %v2592 = vpack.c.bf16 %v2577, %v2576
        %v2593 = vpack.c.bf16 %v2579, %v2578
        %v2594 = vpack.c.bf16 %v2581, %v2580
        %v2595 = vpack.c.bf16 %v2583, %v2582
        %v2596 = vpack.c.bf16 %v2585, %v2584
        %v2597 = vpack.c.bf16 %v2587, %v2586
        %v2608 = vunpack.c.l.b16 %v2588
        %v2609 = vunpack.c.h.b16 %v2588
        %v2610 = vunpack.c.l.b16 %v2589
        %v2611 = vunpack.c.h.b16 %v2589
        %v2612 = vunpack.c.l.b16 %v2590
        %v2613 = vunpack.c.h.b16 %v2590
        %v2614 = vunpack.c.l.b16 %v2591
        %v2615 = vunpack.c.h.b16 %v2591
        %v2616 = vunpack.c.l.b16 %v2592
        %v2617 = vunpack.c.h.b16 %v2592
        %v2618 = vunpack.c.l.b16 %v2593
        %v2619 = vunpack.c.h.b16 %v2593
        %v2620 = vunpack.c.l.b16 %v2594
        %v2621 = vunpack.c.h.b16 %v2594
        %v2622 = vunpack.c.l.b16 %v2595
        %v2623 = vunpack.c.h.b16 %v2595
        %v2624 = vunpack.c.l.b16 %v2596
        %v2625 = vunpack.c.h.b16 %v2596
        %v2626 = vunpack.c.l.b16 %v2597
        %v2627 = vunpack.c.h.b16 %v2597
        %v2628 = vpack.c.b16 %v2608, %v2608
        %v2629 = vpack.c.b16 %v2609, %v2609
        %v2630 = vpack.c.b16 %v2610, %v2610
        %v2631 = vpack.c.b16 %v2611, %v2611
        %v2632 = vpack.c.b16 %v2612, %v2612
        %v2633 = vpack.c.b16 %v2613, %v2613
        %v2634 = vpack.c.b16 %v2614, %v2614
        %v2635 = vpack.c.b16 %v2615, %v2615
        %v2636 = vpack.c.b16 %v2616, %v2616
        %v2637 = vpack.c.b16 %v2617, %v2617
        %v2638 = vpack.c.b16 %v2618, %v2618
        %v2639 = vpack.c.b16 %v2619, %v2619
        %v2640 = vpack.c.b16 %v2620, %v2620
        %v2641 = vpack.c.b16 %v2621, %v2621
        %v2642 = vpack.c.b16 %v2622, %v2622
        %v2643 = vpack.c.b16 %v2623, %v2623
        %v2644 = vpack.c.b16 %v2624, %v2624
        %v2645 = vpack.c.b16 %v2625, %v2625
        %v2646 = vpack.c.b16 %v2626, %v2626
        %v2647 = vpack.c.b16 %v2627, %v2627
        %s2668 = scalar_lea.vmem [#allocation3], 20
        %2669 = vst.msk [vmem:[%s2668 + $0x8] sm:$0xf] %vm725, %v2628
        %2670 = vst.msk [vmem:[%s2668 + $0xc] sm:$0xf] %vm725, %v2629
        %2671 = vst.msk [vmem:[%s2668 + $0x1c] sm:$0xf] %vm725, %v2630
        %2672 = vst.msk [vmem:[%s2668 + $0x20] sm:$0xf] %vm725, %v2631
        %2673 = vst.msk [vmem:[%s2668 + $0x30] sm:$0xf] %vm725, %v2632
        %2674 = vst.msk [vmem:[%s2668 + $0x34] sm:$0xf] %vm725, %v2633
        %2675 = vst.msk [vmem:[%s2668 + $0x44] sm:$0xf] %vm725, %v2634
        %2676 = vst.msk [vmem:[%s2668 + $0x48] sm:$0xf] %vm725, %v2635
        %2677 = vst.msk [vmem:[%s2668 + $0x58] sm:$0xf] %vm725, %v2636
        %2678 = vst.msk [vmem:[%s2668 + $0x5c] sm:$0xf] %vm725, %v2637
        %2679 = vst.msk [vmem:[%s2668 + $0x6c] sm:$0xf] %vm725, %v2638
        %2680 = vst.msk [vmem:[%s2668 + $0x70] sm:$0xf] %vm725, %v2639
        %2681 = vst.msk [vmem:[%s2668 + $0x80] sm:$0xf] %vm725, %v2640
        %2682 = vst.msk [vmem:[%s2668 + $0x84] sm:$0xf] %vm725, %v2641
        %2683 = vst.msk [vmem:[%s2668 + $0x94] sm:$0xf] %vm725, %v2642
        %2684 = vst.msk [vmem:[%s2668 + $0x98] sm:$0xf] %vm725, %v2643
        %2685 = vst.msk [vmem:[%s2668 + $0xa8] sm:$0xf] %vm725, %v2644
        %2686 = vst.msk [vmem:[%s2668 + $0xac] sm:$0xf] %vm725, %v2645
        %2687 = vst.msk [vmem:[%s2668 + $0xbc] sm:$0xf] %vm725, %v2646
        %2688 = vst.msk [vmem:[%s2668 + $0xc0] sm:$0xf] %vm725, %v2647
        // Predicated region
        $region93: #{tpu_custom_call.1} parent=47 // pred_check
          %p2689 = pneg %p770
        $region94: #{tpu_custom_call.1} parent=47 // pred_check_branch
          %2691 = sbr.rel (%p2689) target = $region96
        $region95: #{tpu_custom_call.1} parent=47 // pred_region
          %2692 = vst.msk [vmem:[%s2668 + $0x8] sm:$0xf] %vm725, 0
          %2693 = vst.msk [vmem:[%s2668 + $0xc] sm:$0xf] %vm725, 0
        $region96: #{tpu_custom_call.1} parent=47 // pred_fallthru
          _
        // Predicated region
        $region97: #{tpu_custom_call.1} parent=47 // pred_check
          %p2694 = pneg %p807
        $region98: #{tpu_custom_call.1} parent=47 // pred_check_branch
          %2696 = sbr.rel (%p2694) target = $region100
        $region99: #{tpu_custom_call.1} parent=47 // pred_region
          %s2697 = scalar_lea.vmem [#allocation3], 200
          %2698 = vst.msk [vmem:[%s2697 + $0x8] sm:$0xf] %vm725, 0
          %2699 = vst.msk [vmem:[%s2697 + $0xc] sm:$0xf] %vm725, 0
        $region100: #{tpu_custom_call.1} parent=47 // pred_fallthru
          _
        %v2700 = vld [vmem:[%s2668 + $0x4] sm:$0x8]
        %v2701 = vld [vmem:[%s2668 + $0x8] sm:$0xf]
        %v2702 = vld [vmem:[%s2668 + $0xc] sm:$0xf]
        %v2703 = vld [vmem:[%s2668 + $0x18] sm:$0x8]
        %v2704 = vld [vmem:[%s2668 + $0x1c] sm:$0xf]
        %v2705 = vld [vmem:[%s2668 + $0x20] sm:$0xf]
        %v2706 = vld [vmem:[%s2668 + $0x2c] sm:$0x8]
        %v2707 = vld [vmem:[%s2668 + $0x30] sm:$0xf]
        %v2708 = vld [vmem:[%s2668 + $0x34] sm:$0xf]
        %v2709 = vld [vmem:[%s2668 + $0x40] sm:$0x8]
        %v2710 = vld [vmem:[%s2668 + $0x44] sm:$0xf]
        %v2711 = vld [vmem:[%s2668 + $0x48] sm:$0xf]
        %v2712 = vld [vmem:[%s2668 + $0x54] sm:$0x8]
        %v2713 = vld [vmem:[%s2668 + $0x58] sm:$0xf]
        %v2714 = vld [vmem:[%s2668 + $0x5c] sm:$0xf]
        %v2715 = vld [vmem:[%s2668 + $0x68] sm:$0x8]
        %v2716 = vld [vmem:[%s2668 + $0x6c] sm:$0xf]
        %v2717 = vld [vmem:[%s2668 + $0x70] sm:$0xf]
        %v2718 = vld [vmem:[%s2668 + $0x7c] sm:$0x8]
        %v2719 = vld [vmem:[%s2668 + $0x80] sm:$0xf]
        %v2720 = vld [vmem:[%s2668 + $0x84] sm:$0xf]
        %v2721 = vld [vmem:[%s2668 + $0x90] sm:$0x8]
        %v2722 = vld [vmem:[%s2668 + $0x94] sm:$0xf]
        %v2723 = vld [vmem:[%s2668 + $0x98] sm:$0xf]
        %v2724 = vld [vmem:[%s2668 + $0x10] sm:$0x1]
        %v2725 = vld [vmem:[%s2668 + $0x24] sm:$0x1]
        %v2726 = vld [vmem:[%s2668 + $0x38] sm:$0x1]
        %v2727 = vld [vmem:[%s2668 + $0x4c] sm:$0x1]
        %v2728 = vld [vmem:[%s2668 + $0x60] sm:$0x1]
        %v2729 = vld [vmem:[%s2668 + $0x74] sm:$0x1]
        %v2730 = vld [vmem:[%s2668 + $0x88] sm:$0x1]
        %v2731 = vld [vmem:[%s2668 + $0x9c] sm:$0x1]
        %s2732 = scalar_lea.vmem [#allocation3], 40
        %v2733 = vld [vmem:[%s2732 + $0x4] sm:$0x8]
        %v2734 = vld [vmem:[%s2732 + $0x8] sm:$0xf]
        %v2735 = vld [vmem:[%s2732 + $0xc] sm:$0xf]
        %v2736 = vld [vmem:[%s2732 + $0x18] sm:$0x8]
        %v2737 = vld [vmem:[%s2732 + $0x1c] sm:$0xf]
        %v2738 = vld [vmem:[%s2732 + $0x20] sm:$0xf]
        %v2739 = vld [vmem:[%s2732 + $0x2c] sm:$0x8]
        %v2740 = vld [vmem:[%s2732 + $0x30] sm:$0xf]
        %v2741 = vld [vmem:[%s2732 + $0x34] sm:$0xf]
        %v2742 = vld [vmem:[%s2732 + $0x40] sm:$0x8]
        %v2743 = vld [vmem:[%s2732 + $0x44] sm:$0xf]
        %v2744 = vld [vmem:[%s2732 + $0x48] sm:$0xf]
        %v2745 = vld [vmem:[%s2732 + $0x54] sm:$0x8]
        %v2746 = vld [vmem:[%s2732 + $0x58] sm:$0xf]
        %v2747 = vld [vmem:[%s2732 + $0x5c] sm:$0xf]
        %v2748 = vld [vmem:[%s2732 + $0x68] sm:$0x8]
        %v2749 = vld [vmem:[%s2732 + $0x6c] sm:$0xf]
        %v2750 = vld [vmem:[%s2732 + $0x70] sm:$0xf]
        %v2751 = vld [vmem:[%s2732 + $0x7c] sm:$0x8]
        %v2752 = vld [vmem:[%s2732 + $0x80] sm:$0xf]
        %v2753 = vld [vmem:[%s2732 + $0x84] sm:$0xf]
        %v2754 = vld [vmem:[%s2732 + $0x90] sm:$0x8]
        %v2755 = vld [vmem:[%s2732 + $0x94] sm:$0xf]
        %v2756 = vld [vmem:[%s2732 + $0x98] sm:$0xf]
        %v2757 = vld [vmem:[%s2732 + $0x10] sm:$0x1]
        %v2758 = vld [vmem:[%s2732 + $0x24] sm:$0x1]
        %v2759 = vld [vmem:[%s2732 + $0x38] sm:$0x1]
        %v2760 = vld [vmem:[%s2732 + $0x4c] sm:$0x1]
        %v2761 = vld [vmem:[%s2732 + $0x60] sm:$0x1]
        %v2762 = vld [vmem:[%s2732 + $0x74] sm:$0x1]
        %v2763 = vld [vmem:[%s2732 + $0x88] sm:$0x1]
        %v2764 = vld [vmem:[%s2732 + $0x9c] sm:$0x1]
        %s2765 = scalar_lea.vmem [#allocation3], 60
        %v2766 = vld [vmem:[%s2765 + $0x4] sm:$0x8]
        %v2767 = vld [vmem:[%s2765 + $0x8] sm:$0xf]
        %v2768 = vld [vmem:[%s2765 + $0xc] sm:$0xf]
        %v2769 = vld [vmem:[%s2765 + $0x18] sm:$0x8]
        %v2770 = vld [vmem:[%s2765 + $0x1c] sm:$0xf]
        %v2771 = vld [vmem:[%s2765 + $0x20] sm:$0xf]
        %v2772 = vld [vmem:[%s2765 + $0x2c] sm:$0x8]
        %v2773 = vld [vmem:[%s2765 + $0x30] sm:$0xf]
        %v2774 = vld [vmem:[%s2765 + $0x34] sm:$0xf]
        %v2775 = vld [vmem:[%s2765 + $0x40] sm:$0x8]
        %v2776 = vld [vmem:[%s2765 + $0x44] sm:$0xf]
        %v2777 = vld [vmem:[%s2765 + $0x48] sm:$0xf]
        %v2778 = vld [vmem:[%s2765 + $0x54] sm:$0x8]
        %v2779 = vld [vmem:[%s2765 + $0x58] sm:$0xf]
        %v2780 = vld [vmem:[%s2765 + $0x5c] sm:$0xf]
        %v2781 = vld [vmem:[%s2765 + $0x68] sm:$0x8]
        %v2782 = vld [vmem:[%s2765 + $0x6c] sm:$0xf]
        %v2783 = vld [vmem:[%s2765 + $0x70] sm:$0xf]
        %v2784 = vld [vmem:[%s2765 + $0x7c] sm:$0x8]
        %v2785 = vld [vmem:[%s2765 + $0x80] sm:$0xf]
        %v2786 = vld [vmem:[%s2765 + $0x84] sm:$0xf]
        %v2787 = vld [vmem:[%s2765 + $0x90] sm:$0x8]
        %v2788 = vld [vmem:[%s2765 + $0x94] sm:$0xf]
        %v2789 = vld [vmem:[%s2765 + $0x98] sm:$0xf]
        %v2790 = vld [vmem:[%s2765 + $0x10] sm:$0x1]
        %v2791 = vld [vmem:[%s2765 + $0x24] sm:$0x1]
        %v2792 = vld [vmem:[%s2765 + $0x38] sm:$0x1]
        %v2793 = vld [vmem:[%s2765 + $0x4c] sm:$0x1]
        %v2794 = vld [vmem:[%s2765 + $0x60] sm:$0x1]
        %v2795 = vld [vmem:[%s2765 + $0x74] sm:$0x1]
        %v2796 = vld [vmem:[%s2765 + $0x88] sm:$0x1]
        %v2797 = vld [vmem:[%s2765 + $0x9c] sm:$0x1]
        %v2822 = vunpack.c.l.b16 %v2700
        %v2823 = vunpack.c.l.b16 %v2701
        %v2824 = vunpack.c.l.b16 %v2702
        %v2825 = vunpack.c.l.b16 %v2703
        %v2826 = vunpack.c.l.b16 %v2704
        %v2827 = vunpack.c.l.b16 %v2705
        %v2828 = vunpack.c.l.b16 %v2706
        %v2829 = vunpack.c.l.b16 %v2707
        %v2830 = vunpack.c.l.b16 %v2708
        %v2831 = vunpack.c.l.b16 %v2709
        %v2832 = vunpack.c.l.b16 %v2710
        %v2833 = vunpack.c.l.b16 %v2711
        %v2834 = vunpack.c.l.b16 %v2712
        %v2835 = vunpack.c.l.b16 %v2713
        %v2836 = vunpack.c.l.b16 %v2714
        %v2837 = vunpack.c.l.b16 %v2715
        %v2838 = vunpack.c.l.b16 %v2716
        %v2839 = vunpack.c.l.b16 %v2717
        %v2840 = vunpack.c.l.b16 %v2718
        %v2841 = vunpack.c.l.b16 %v2719
        %v2842 = vunpack.c.l.b16 %v2720
        %v2843 = vunpack.c.l.b16 %v2721
        %v2844 = vunpack.c.l.b16 %v2722
        %v2845 = vunpack.c.l.b16 %v2723
        %v2846 = vpack.c.b16 %v2823, %v2822
        %v2847 = vpack.c.b16 %v2824, %v2824
        %v2848 = vpack.c.b16 %v2826, %v2825
        %v2849 = vpack.c.b16 %v2827, %v2827
        %v2850 = vpack.c.b16 %v2829, %v2828
        %v2851 = vpack.c.b16 %v2830, %v2830
        %v2852 = vpack.c.b16 %v2832, %v2831
        %v2853 = vpack.c.b16 %v2833, %v2833
        %v2854 = vpack.c.b16 %v2835, %v2834
        %v2855 = vpack.c.b16 %v2836, %v2836
        %v2856 = vpack.c.b16 %v2838, %v2837
        %v2857 = vpack.c.b16 %v2839, %v2839
        %v2858 = vpack.c.b16 %v2841, %v2840
        %v2859 = vpack.c.b16 %v2842, %v2842
        %v2860 = vpack.c.b16 %v2844, %v2843
        %v2861 = vpack.c.b16 %v2845, %v2845
        %v2862 = vpack.c.b16 %v2824, %v2823
        %v2863 = vpack.c.b16 %v2827, %v2826
        %v2864 = vpack.c.b16 %v2830, %v2829
        %v2865 = vpack.c.b16 %v2833, %v2832
        %v2866 = vpack.c.b16 %v2836, %v2835
        %v2867 = vpack.c.b16 %v2839, %v2838
        %v2868 = vpack.c.b16 %v2842, %v2841
        %v2869 = vpack.c.b16 %v2845, %v2844
        %v2871 = vshrl.u32 %v2862, 16
        %v2873 = vrot.slane %v2871, 4
        %v2874 = vshll.u32 %v2862, 16
        %v2876 = vrot.slane %v2874, 5
        %v2877 = vor.u32 %v2873, %v2876
        %v2879 = vshrl.u32 %v2863, 16
        %v2881 = vrot.slane %v2879, 4
        %v2882 = vshll.u32 %v2863, 16
        %v2884 = vrot.slane %v2882, 5
        %v2885 = vor.u32 %v2881, %v2884
        %v2887 = vshrl.u32 %v2864, 16
        %v2889 = vrot.slane %v2887, 4
        %v2890 = vshll.u32 %v2864, 16
        %v2892 = vrot.slane %v2890, 5
        %v2893 = vor.u32 %v2889, %v2892
        %v2895 = vshrl.u32 %v2865, 16
        %v2897 = vrot.slane %v2895, 4
        %v2898 = vshll.u32 %v2865, 16
        %v2900 = vrot.slane %v2898, 5
        %v2901 = vor.u32 %v2897, %v2900
        %v2903 = vshrl.u32 %v2866, 16
        %v2905 = vrot.slane %v2903, 4
        %v2906 = vshll.u32 %v2866, 16
        %v2908 = vrot.slane %v2906, 5
        %v2909 = vor.u32 %v2905, %v2908
        %v2911 = vshrl.u32 %v2867, 16
        %v2913 = vrot.slane %v2911, 4
        %v2914 = vshll.u32 %v2867, 16
        %v2916 = vrot.slane %v2914, 5
        %v2917 = vor.u32 %v2913, %v2916
        %v2919 = vshrl.u32 %v2868, 16
        %v2921 = vrot.slane %v2919, 4
        %v2922 = vshll.u32 %v2868, 16
        %v2924 = vrot.slane %v2922, 5
        %v2925 = vor.u32 %v2921, %v2924
        %v2927 = vshrl.u32 %v2869, 16
        %v2929 = vrot.slane %v2927, 4
        %v2930 = vshll.u32 %v2869, 16
        %v2932 = vrot.slane %v2930, 5
        %v2933 = vor.u32 %v2929, %v2932
        %2934 = vrot.lane.b32.xlu0 %v2877, 8
        %v2935 = vpop.permute.xlu0 %2934
        %2936 = vrot.lane.b32.xlu0 %v2885, 8
        %v2937 = vpop.permute.xlu0 %2936
        %2938 = vrot.lane.b32.xlu0 %v2893, 8
        %v2939 = vpop.permute.xlu0 %2938
        %2940 = vrot.lane.b32.xlu0 %v2901, 8
        %v2941 = vpop.permute.xlu0 %2940
        %2942 = vrot.lane.b32.xlu0 %v2909, 8
        %v2943 = vpop.permute.xlu0 %2942
        %2944 = vrot.lane.b32.xlu0 %v2917, 8
        %v2945 = vpop.permute.xlu0 %2944
        %2946 = vrot.lane.b32.xlu0 %v2925, 8
        %v2947 = vpop.permute.xlu0 %2946
        %2948 = vrot.lane.b32.xlu0 %v2933, 8
        %v2949 = vpop.permute.xlu0 %2948
        %v2958 = vunpack.c.l.b16 %v2724
        %v2959 = vunpack.c.l.b16 %v2725
        %v2960 = vunpack.c.l.b16 %v2726
        %v2961 = vunpack.c.l.b16 %v2727
        %v2962 = vunpack.c.l.b16 %v2728
        %v2963 = vunpack.c.l.b16 %v2729
        %v2964 = vunpack.c.l.b16 %v2730
        %v2965 = vunpack.c.l.b16 %v2731
        %v2966 = vpack.c.b16 %v2958, %v2958
        %v2967 = vpack.c.b16 %v2959, %v2959
        %v2968 = vpack.c.b16 %v2960, %v2960
        %v2969 = vpack.c.b16 %v2961, %v2961
        %v2970 = vpack.c.b16 %v2962, %v2962
        %v2971 = vpack.c.b16 %v2963, %v2963
        %v2972 = vpack.c.b16 %v2964, %v2964
        %v2973 = vpack.c.b16 %v2965, %v2965
        %v2974 = vrot.slane %v2862, 5
        %v2975 = vrot.slane %v2966, 5
        %v2976 = vsel %vm1157, %v2974, %v2975
        %v2977 = vrot.slane %v2863, 5
        %v2978 = vrot.slane %v2967, 5
        %v2979 = vsel %vm1157, %v2977, %v2978
        %v2980 = vrot.slane %v2864, 5
        %v2981 = vrot.slane %v2968, 5
        %v2982 = vsel %vm1157, %v2980, %v2981
        %v2983 = vrot.slane %v2865, 5
        %v2984 = vrot.slane %v2969, 5
        %v2985 = vsel %vm1157, %v2983, %v2984
        %v2986 = vrot.slane %v2866, 5
        %v2987 = vrot.slane %v2970, 5
        %v2988 = vsel %vm1157, %v2986, %v2987
        %v2989 = vrot.slane %v2867, 5
        %v2990 = vrot.slane %v2971, 5
        %v2991 = vsel %vm1157, %v2989, %v2990
        %v2992 = vrot.slane %v2868, 5
        %v2993 = vrot.slane %v2972, 5
        %v2994 = vsel %vm1157, %v2992, %v2993
        %v2995 = vrot.slane %v2869, 5
        %v2996 = vrot.slane %v2973, 5
        %v2997 = vsel %vm1157, %v2995, %v2996
        %2998 = vrot.lane.b32.xlu0 %v2974, 16
        %v2999 = vpop.permute.xlu0 %2998
        %3000 = vrot.lane.b32.xlu0 %v2976, 16
        %v3001 = vpop.permute.xlu0 %3000
        %3002 = vrot.lane.b32.xlu0 %v2977, 16
        %v3003 = vpop.permute.xlu0 %3002
        %3004 = vrot.lane.b32.xlu0 %v2979, 16
        %v3005 = vpop.permute.xlu0 %3004
        %3006 = vrot.lane.b32.xlu0 %v2980, 16
        %v3007 = vpop.permute.xlu0 %3006
        %3008 = vrot.lane.b32.xlu0 %v2982, 16
        %v3009 = vpop.permute.xlu0 %3008
        %3010 = vrot.lane.b32.xlu0 %v2983, 16
        %v3011 = vpop.permute.xlu0 %3010
        %3012 = vrot.lane.b32.xlu0 %v2985, 16
        %v3013 = vpop.permute.xlu0 %3012
        %3014 = vrot.lane.b32.xlu0 %v2986, 16
        %v3015 = vpop.permute.xlu0 %3014
        %3016 = vrot.lane.b32.xlu0 %v2988, 16
        %v3017 = vpop.permute.xlu0 %3016
        %3018 = vrot.lane.b32.xlu0 %v2989, 16
        %v3019 = vpop.permute.xlu0 %3018
        %3020 = vrot.lane.b32.xlu0 %v2991, 16
        %v3021 = vpop.permute.xlu0 %3020
        %3022 = vrot.lane.b32.xlu0 %v2992, 16
        %v3023 = vpop.permute.xlu0 %3022
        %3024 = vrot.lane.b32.xlu0 %v2994, 16
        %v3025 = vpop.permute.xlu0 %3024
        %3026 = vrot.lane.b32.xlu0 %v2995, 16
        %v3027 = vpop.permute.xlu0 %3026
        %3028 = vrot.lane.b32.xlu0 %v2997, 16
        %v3029 = vpop.permute.xlu0 %3028
        %v3054 = vunpack.c.l.b16 %v2733
        %v3055 = vunpack.c.l.b16 %v2734
        %v3056 = vunpack.c.l.b16 %v2735
        %v3057 = vunpack.c.l.b16 %v2736
        %v3058 = vunpack.c.l.b16 %v2737
        %v3059 = vunpack.c.l.b16 %v2738
        %v3060 = vunpack.c.l.b16 %v2739
        %v3061 = vunpack.c.l.b16 %v2740
        %v3062 = vunpack.c.l.b16 %v2741
        %v3063 = vunpack.c.l.b16 %v2742
        %v3064 = vunpack.c.l.b16 %v2743
        %v3065 = vunpack.c.l.b16 %v2744
        %v3066 = vunpack.c.l.b16 %v2745
        %v3067 = vunpack.c.l.b16 %v2746
        %v3068 = vunpack.c.l.b16 %v2747
        %v3069 = vunpack.c.l.b16 %v2748
        %v3070 = vunpack.c.l.b16 %v2749
        %v3071 = vunpack.c.l.b16 %v2750
        %v3072 = vunpack.c.l.b16 %v2751
        %v3073 = vunpack.c.l.b16 %v2752
        %v3074 = vunpack.c.l.b16 %v2753
        %v3075 = vunpack.c.l.b16 %v2754
        %v3076 = vunpack.c.l.b16 %v2755
        %v3077 = vunpack.c.l.b16 %v2756
        %v3078 = vpack.c.b16 %v3055, %v3054
        %v3079 = vpack.c.b16 %v3056, %v3056
        %v3080 = vpack.c.b16 %v3058, %v3057
        %v3081 = vpack.c.b16 %v3059, %v3059
        %v3082 = vpack.c.b16 %v3061, %v3060
        %v3083 = vpack.c.b16 %v3062, %v3062
        %v3084 = vpack.c.b16 %v3064, %v3063
        %v3085 = vpack.c.b16 %v3065, %v3065
        %v3086 = vpack.c.b16 %v3067, %v3066
        %v3087 = vpack.c.b16 %v3068, %v3068
        %v3088 = vpack.c.b16 %v3070, %v3069
        %v3089 = vpack.c.b16 %v3071, %v3071
        %v3090 = vpack.c.b16 %v3073, %v3072
        %v3091 = vpack.c.b16 %v3074, %v3074
        %v3092 = vpack.c.b16 %v3076, %v3075
        %v3093 = vpack.c.b16 %v3077, %v3077
        %3094 = vrot.lane.b32.xlu0 %v3078, 24
        %v3095 = vpop.permute.xlu0 %3094
        %3096 = vrot.lane.b32.xlu0 %v3079, 24
        %v3097 = vpop.permute.xlu0 %3096
        %3098 = vrot.lane.b32.xlu0 %v3080, 24
        %v3099 = vpop.permute.xlu0 %3098
        %3100 = vrot.lane.b32.xlu0 %v3081, 24
        %v3101 = vpop.permute.xlu0 %3100
        %3102 = vrot.lane.b32.xlu0 %v3082, 24
        %v3103 = vpop.permute.xlu0 %3102
        %3104 = vrot.lane.b32.xlu0 %v3083, 24
        %v3105 = vpop.permute.xlu0 %3104
        %3106 = vrot.lane.b32.xlu0 %v3084, 24
        %v3107 = vpop.permute.xlu0 %3106
        %3108 = vrot.lane.b32.xlu0 %v3085, 24
        %v3109 = vpop.permute.xlu0 %3108
        %3110 = vrot.lane.b32.xlu0 %v3086, 24
        %v3111 = vpop.permute.xlu0 %3110
        %3112 = vrot.lane.b32.xlu0 %v3087, 24
        %v3113 = vpop.permute.xlu0 %3112
        %3114 = vrot.lane.b32.xlu0 %v3088, 24
        %v3115 = vpop.permute.xlu0 %3114
        %3116 = vrot.lane.b32.xlu0 %v3089, 24
        %v3117 = vpop.permute.xlu0 %3116
        %3118 = vrot.lane.b32.xlu0 %v3090, 24
        %v3119 = vpop.permute.xlu0 %3118
        %3120 = vrot.lane.b32.xlu0 %v3091, 24
        %v3121 = vpop.permute.xlu0 %3120
        %3122 = vrot.lane.b32.xlu0 %v3092, 24
        %v3123 = vpop.permute.xlu0 %3122
        %3124 = vrot.lane.b32.xlu0 %v3093, 24
        %v3125 = vpop.permute.xlu0 %3124
        %v3126 = vpack.c.b16 %v3056, %v3055
        %v3127 = vpack.c.b16 %v3059, %v3058
        %v3128 = vpack.c.b16 %v3062, %v3061
        %v3129 = vpack.c.b16 %v3065, %v3064
        %v3130 = vpack.c.b16 %v3068, %v3067
        %v3131 = vpack.c.b16 %v3071, %v3070
        %v3132 = vpack.c.b16 %v3074, %v3073
        %v3133 = vpack.c.b16 %v3077, %v3076
        %v3135 = vshrl.u32 %v3126, 16
        %v3137 = vrot.slane %v3135, 4
        %v3138 = vshll.u32 %v3126, 16
        %v3140 = vrot.slane %v3138, 5
        %v3141 = vor.u32 %v3137, %v3140
        %v3143 = vshrl.u32 %v3127, 16
        %v3145 = vrot.slane %v3143, 4
        %v3146 = vshll.u32 %v3127, 16
        %v3148 = vrot.slane %v3146, 5
        %v3149 = vor.u32 %v3145, %v3148
        %v3151 = vshrl.u32 %v3128, 16
        %v3153 = vrot.slane %v3151, 4
        %v3154 = vshll.u32 %v3128, 16
        %v3156 = vrot.slane %v3154, 5
        %v3157 = vor.u32 %v3153, %v3156
        %v3159 = vshrl.u32 %v3129, 16
        %v3161 = vrot.slane %v3159, 4
        %v3162 = vshll.u32 %v3129, 16
        %v3164 = vrot.slane %v3162, 5
        %v3165 = vor.u32 %v3161, %v3164
        %v3167 = vshrl.u32 %v3130, 16
        %v3169 = vrot.slane %v3167, 4
        %v3170 = vshll.u32 %v3130, 16
        %v3172 = vrot.slane %v3170, 5
        %v3173 = vor.u32 %v3169, %v3172
        %v3175 = vshrl.u32 %v3131, 16
        %v3177 = vrot.slane %v3175, 4
        %v3178 = vshll.u32 %v3131, 16
        %v3180 = vrot.slane %v3178, 5
        %v3181 = vor.u32 %v3177, %v3180
        %v3183 = vshrl.u32 %v3132, 16
        %v3185 = vrot.slane %v3183, 4
        %v3186 = vshll.u32 %v3132, 16
        %v3188 = vrot.slane %v3186, 5
        %v3189 = vor.u32 %v3185, %v3188
        %v3191 = vshrl.u32 %v3133, 16
        %v3193 = vrot.slane %v3191, 4
        %v3194 = vshll.u32 %v3133, 16
        %v3196 = vrot.slane %v3194, 5
        %v3197 = vor.u32 %v3193, %v3196
        %3198 = vrot.lane.b32.xlu0 %v3141, 32
        %v3199 = vpop.permute.xlu0 %3198
        %3200 = vrot.lane.b32.xlu0 %v3149, 32
        %v3201 = vpop.permute.xlu0 %3200
        %3202 = vrot.lane.b32.xlu0 %v3157, 32
        %v3203 = vpop.permute.xlu0 %3202
        %3204 = vrot.lane.b32.xlu0 %v3165, 32
        %v3205 = vpop.permute.xlu0 %3204
        %3206 = vrot.lane.b32.xlu0 %v3173, 32
        %v3207 = vpop.permute.xlu0 %3206
        %3208 = vrot.lane.b32.xlu0 %v3181, 32
        %v3209 = vpop.permute.xlu0 %3208
        %3210 = vrot.lane.b32.xlu0 %v3189, 32
        %v3211 = vpop.permute.xlu0 %3210
        %3212 = vrot.lane.b32.xlu0 %v3197, 32
        %v3213 = vpop.permute.xlu0 %3212
        %v3222 = vunpack.c.l.b16 %v2757
        %v3223 = vunpack.c.l.b16 %v2758
        %v3224 = vunpack.c.l.b16 %v2759
        %v3225 = vunpack.c.l.b16 %v2760
        %v3226 = vunpack.c.l.b16 %v2761
        %v3227 = vunpack.c.l.b16 %v2762
        %v3228 = vunpack.c.l.b16 %v2763
        %v3229 = vunpack.c.l.b16 %v2764
        %v3230 = vpack.c.b16 %v3222, %v3222
        %v3231 = vpack.c.b16 %v3223, %v3223
        %v3232 = vpack.c.b16 %v3224, %v3224
        %v3233 = vpack.c.b16 %v3225, %v3225
        %v3234 = vpack.c.b16 %v3226, %v3226
        %v3235 = vpack.c.b16 %v3227, %v3227
        %v3236 = vpack.c.b16 %v3228, %v3228
        %v3237 = vpack.c.b16 %v3229, %v3229
        %v3238 = vrot.slane %v3126, 5
        %v3239 = vrot.slane %v3230, 5
        %v3240 = vsel %vm1157, %v3238, %v3239
        %v3241 = vrot.slane %v3127, 5
        %v3242 = vrot.slane %v3231, 5
        %v3243 = vsel %vm1157, %v3241, %v3242
        %v3244 = vrot.slane %v3128, 5
        %v3245 = vrot.slane %v3232, 5
        %v3246 = vsel %vm1157, %v3244, %v3245
        %v3247 = vrot.slane %v3129, 5
        %v3248 = vrot.slane %v3233, 5
        %v3249 = vsel %vm1157, %v3247, %v3248
        %v3250 = vrot.slane %v3130, 5
        %v3251 = vrot.slane %v3234, 5
        %v3252 = vsel %vm1157, %v3250, %v3251
        %v3253 = vrot.slane %v3131, 5
        %v3254 = vrot.slane %v3235, 5
        %v3255 = vsel %vm1157, %v3253, %v3254
        %v3256 = vrot.slane %v3132, 5
        %v3257 = vrot.slane %v3236, 5
        %v3258 = vsel %vm1157, %v3256, %v3257
        %v3259 = vrot.slane %v3133, 5
        %v3260 = vrot.slane %v3237, 5
        %v3261 = vsel %vm1157, %v3259, %v3260
        %3262 = vrot.lane.b32.xlu0 %v3238, 40
        %v3263 = vpop.permute.xlu0 %3262
        %3264 = vrot.lane.b32.xlu0 %v3240, 40
        %v3265 = vpop.permute.xlu0 %3264
        %3266 = vrot.lane.b32.xlu0 %v3241, 40
        %v3267 = vpop.permute.xlu0 %3266
        %3268 = vrot.lane.b32.xlu0 %v3243, 40
        %v3269 = vpop.permute.xlu0 %3268
        %3270 = vrot.lane.b32.xlu0 %v3244, 40
        %v3271 = vpop.permute.xlu0 %3270
        %3272 = vrot.lane.b32.xlu0 %v3246, 40
        %v3273 = vpop.permute.xlu0 %3272
        %3274 = vrot.lane.b32.xlu0 %v3247, 40
        %v3275 = vpop.permute.xlu0 %3274
        %3276 = vrot.lane.b32.xlu0 %v3249, 40
        %v3277 = vpop.permute.xlu0 %3276
        %3278 = vrot.lane.b32.xlu0 %v3250, 40
        %v3279 = vpop.permute.xlu0 %3278
        %3280 = vrot.lane.b32.xlu0 %v3252, 40
        %v3281 = vpop.permute.xlu0 %3280
        %3282 = vrot.lane.b32.xlu0 %v3253, 40
        %v3283 = vpop.permute.xlu0 %3282
        %3284 = vrot.lane.b32.xlu0 %v3255, 40
        %v3285 = vpop.permute.xlu0 %3284
        %3286 = vrot.lane.b32.xlu0 %v3256, 40
        %v3287 = vpop.permute.xlu0 %3286
        %3288 = vrot.lane.b32.xlu0 %v3258, 40
        %v3289 = vpop.permute.xlu0 %3288
        %3290 = vrot.lane.b32.xlu0 %v3259, 40
        %v3291 = vpop.permute.xlu0 %3290
        %3292 = vrot.lane.b32.xlu0 %v3261, 40
        %v3293 = vpop.permute.xlu0 %3292
        %v3318 = vunpack.c.l.b16 %v2766
        %v3319 = vunpack.c.l.b16 %v2767
        %v3320 = vunpack.c.l.b16 %v2768
        %v3321 = vunpack.c.l.b16 %v2769
        %v3322 = vunpack.c.l.b16 %v2770
        %v3323 = vunpack.c.l.b16 %v2771
        %v3324 = vunpack.c.l.b16 %v2772
        %v3325 = vunpack.c.l.b16 %v2773
        %v3326 = vunpack.c.l.b16 %v2774
        %v3327 = vunpack.c.l.b16 %v2775
        %v3328 = vunpack.c.l.b16 %v2776
        %v3329 = vunpack.c.l.b16 %v2777
        %v3330 = vunpack.c.l.b16 %v2778
        %v3331 = vunpack.c.l.b16 %v2779
        %v3332 = vunpack.c.l.b16 %v2780
        %v3333 = vunpack.c.l.b16 %v2781
        %v3334 = vunpack.c.l.b16 %v2782
        %v3335 = vunpack.c.l.b16 %v2783
        %v3336 = vunpack.c.l.b16 %v2784
        %v3337 = vunpack.c.l.b16 %v2785
        %v3338 = vunpack.c.l.b16 %v2786
        %v3339 = vunpack.c.l.b16 %v2787
        %v3340 = vunpack.c.l.b16 %v2788
        %v3341 = vunpack.c.l.b16 %v2789
        %v3342 = vpack.c.b16 %v3319, %v3318
        %v3343 = vpack.c.b16 %v3320, %v3320
        %v3344 = vpack.c.b16 %v3322, %v3321
        %v3345 = vpack.c.b16 %v3323, %v3323
        %v3346 = vpack.c.b16 %v3325, %v3324
        %v3347 = vpack.c.b16 %v3326, %v3326
        %v3348 = vpack.c.b16 %v3328, %v3327
        %v3349 = vpack.c.b16 %v3329, %v3329
        %v3350 = vpack.c.b16 %v3331, %v3330
        %v3351 = vpack.c.b16 %v3332, %v3332
        %v3352 = vpack.c.b16 %v3334, %v3333
        %v3353 = vpack.c.b16 %v3335, %v3335
        %v3354 = vpack.c.b16 %v3337, %v3336
        %v3355 = vpack.c.b16 %v3338, %v3338
        %v3356 = vpack.c.b16 %v3340, %v3339
        %v3357 = vpack.c.b16 %v3341, %v3341
        %3358 = vrot.lane.b32.xlu0 %v3342, 48
        %v3359 = vpop.permute.xlu0 %3358
        %3360 = vrot.lane.b32.xlu0 %v3343, 48
        %v3361 = vpop.permute.xlu0 %3360
        %3362 = vrot.lane.b32.xlu0 %v3344, 48
        %v3363 = vpop.permute.xlu0 %3362
        %3364 = vrot.lane.b32.xlu0 %v3345, 48
        %v3365 = vpop.permute.xlu0 %3364
        %3366 = vrot.lane.b32.xlu0 %v3346, 48
        %v3367 = vpop.permute.xlu0 %3366
        %3368 = vrot.lane.b32.xlu0 %v3347, 48
        %v3369 = vpop.permute.xlu0 %3368
        %3370 = vrot.lane.b32.xlu0 %v3348, 48
        %v3371 = vpop.permute.xlu0 %3370
        %3372 = vrot.lane.b32.xlu0 %v3349, 48
        %v3373 = vpop.permute.xlu0 %3372
        %3374 = vrot.lane.b32.xlu0 %v3350, 48
        %v3375 = vpop.permute.xlu0 %3374
        %3376 = vrot.lane.b32.xlu0 %v3351, 48
        %v3377 = vpop.permute.xlu0 %3376
        %3378 = vrot.lane.b32.xlu0 %v3352, 48
        %v3379 = vpop.permute.xlu0 %3378
        %3380 = vrot.lane.b32.xlu0 %v3353, 48
        %v3381 = vpop.permute.xlu0 %3380
        %3382 = vrot.lane.b32.xlu0 %v3354, 48
        %v3383 = vpop.permute.xlu0 %3382
        %3384 = vrot.lane.b32.xlu0 %v3355, 48
        %v3385 = vpop.permute.xlu0 %3384
        %3386 = vrot.lane.b32.xlu0 %v3356, 48
        %v3387 = vpop.permute.xlu0 %3386
        %3388 = vrot.lane.b32.xlu0 %v3357, 48
        %v3389 = vpop.permute.xlu0 %3388
        %v3390 = vpack.c.b16 %v3320, %v3319
        %v3391 = vpack.c.b16 %v3323, %v3322
        %v3392 = vpack.c.b16 %v3326, %v3325
        %v3393 = vpack.c.b16 %v3329, %v3328
        %v3394 = vpack.c.b16 %v3332, %v3331
        %v3395 = vpack.c.b16 %v3335, %v3334
        %v3396 = vpack.c.b16 %v3338, %v3337
        %v3397 = vpack.c.b16 %v3341, %v3340
        %v3399 = vshrl.u32 %v3390, 16
        %v3401 = vrot.slane %v3399, 4
        %v3402 = vshll.u32 %v3390, 16
        %v3404 = vrot.slane %v3402, 5
        %v3405 = vor.u32 %v3401, %v3404
        %v3407 = vshrl.u32 %v3391, 16
        %v3409 = vrot.slane %v3407, 4
        %v3410 = vshll.u32 %v3391, 16
        %v3412 = vrot.slane %v3410, 5
        %v3413 = vor.u32 %v3409, %v3412
        %v3415 = vshrl.u32 %v3392, 16
        %v3417 = vrot.slane %v3415, 4
        %v3418 = vshll.u32 %v3392, 16
        %v3420 = vrot.slane %v3418, 5
        %v3421 = vor.u32 %v3417, %v3420
        %v3423 = vshrl.u32 %v3393, 16
        %v3425 = vrot.slane %v3423, 4
        %v3426 = vshll.u32 %v3393, 16
        %v3428 = vrot.slane %v3426, 5
        %v3429 = vor.u32 %v3425, %v3428
        %v3431 = vshrl.u32 %v3394, 16
        %v3433 = vrot.slane %v3431, 4
        %v3434 = vshll.u32 %v3394, 16
        %v3436 = vrot.slane %v3434, 5
        %v3437 = vor.u32 %v3433, %v3436
        %v3439 = vshrl.u32 %v3395, 16
        %v3441 = vrot.slane %v3439, 4
        %v3442 = vshll.u32 %v3395, 16
        %v3444 = vrot.slane %v3442, 5
        %v3445 = vor.u32 %v3441, %v3444
        %v3447 = vshrl.u32 %v3396, 16
        %v3449 = vrot.slane %v3447, 4
        %v3450 = vshll.u32 %v3396, 16
        %v3452 = vrot.slane %v3450, 5
        %v3453 = vor.u32 %v3449, %v3452
        %v3455 = vshrl.u32 %v3397, 16
        %v3457 = vrot.slane %v3455, 4
        %v3458 = vshll.u32 %v3397, 16
        %v3460 = vrot.slane %v3458, 5
        %v3461 = vor.u32 %v3457, %v3460
        %3462 = vrot.lane.b32.xlu0 %v3405, 56
        %v3463 = vpop.permute.xlu0 %3462
        %3464 = vrot.lane.b32.xlu0 %v3413, 56
        %v3465 = vpop.permute.xlu0 %3464
        %3466 = vrot.lane.b32.xlu0 %v3421, 56
        %v3467 = vpop.permute.xlu0 %3466
        %3468 = vrot.lane.b32.xlu0 %v3429, 56
        %v3469 = vpop.permute.xlu0 %3468
        %3470 = vrot.lane.b32.xlu0 %v3437, 56
        %v3471 = vpop.permute.xlu0 %3470
        %3472 = vrot.lane.b32.xlu0 %v3445, 56
        %v3473 = vpop.permute.xlu0 %3472
        %3474 = vrot.lane.b32.xlu0 %v3453, 56
        %v3475 = vpop.permute.xlu0 %3474
        %3476 = vrot.lane.b32.xlu0 %v3461, 56
        %v3477 = vpop.permute.xlu0 %3476
        %v3486 = vunpack.c.l.b16 %v2790
        %v3487 = vunpack.c.l.b16 %v2791
        %v3488 = vunpack.c.l.b16 %v2792
        %v3489 = vunpack.c.l.b16 %v2793
        %v3490 = vunpack.c.l.b16 %v2794
        %v3491 = vunpack.c.l.b16 %v2795
        %v3492 = vunpack.c.l.b16 %v2796
        %v3493 = vunpack.c.l.b16 %v2797
        %v3494 = vpack.c.b16 %v3486, %v3486
        %v3495 = vpack.c.b16 %v3487, %v3487
        %v3496 = vpack.c.b16 %v3488, %v3488
        %v3497 = vpack.c.b16 %v3489, %v3489
        %v3498 = vpack.c.b16 %v3490, %v3490
        %v3499 = vpack.c.b16 %v3491, %v3491
        %v3500 = vpack.c.b16 %v3492, %v3492
        %v3501 = vpack.c.b16 %v3493, %v3493
        %v3502 = vrot.slane %v3390, 5
        %v3503 = vrot.slane %v3494, 5
        %v3504 = vsel %vm1157, %v3502, %v3503
        %v3505 = vrot.slane %v3391, 5
        %v3506 = vrot.slane %v3495, 5
        %v3507 = vsel %vm1157, %v3505, %v3506
        %v3508 = vrot.slane %v3392, 5
        %v3509 = vrot.slane %v3496, 5
        %v3510 = vsel %vm1157, %v3508, %v3509
        %v3511 = vrot.slane %v3393, 5
        %v3512 = vrot.slane %v3497, 5
        %v3513 = vsel %vm1157, %v3511, %v3512
        %v3514 = vrot.slane %v3394, 5
        %v3515 = vrot.slane %v3498, 5
        %v3516 = vsel %vm1157, %v3514, %v3515
        %v3517 = vrot.slane %v3395, 5
        %v3518 = vrot.slane %v3499, 5
        %v3519 = vsel %vm1157, %v3517, %v3518
        %v3520 = vrot.slane %v3396, 5
        %v3521 = vrot.slane %v3500, 5
        %v3522 = vsel %vm1157, %v3520, %v3521
        %v3523 = vrot.slane %v3397, 5
        %v3524 = vrot.slane %v3501, 5
        %v3525 = vsel %vm1157, %v3523, %v3524
        %3526 = vrot.lane.b32.xlu0 %v3502, 64
        %v3527 = vpop.permute.xlu0 %3526
        %3528 = vrot.lane.b32.xlu0 %v3504, 64
        %v3529 = vpop.permute.xlu0 %3528
        %3530 = vrot.lane.b32.xlu0 %v3505, 64
        %v3531 = vpop.permute.xlu0 %3530
        %3532 = vrot.lane.b32.xlu0 %v3507, 64
        %v3533 = vpop.permute.xlu0 %3532
        %3534 = vrot.lane.b32.xlu0 %v3508, 64
        %v3535 = vpop.permute.xlu0 %3534
        %3536 = vrot.lane.b32.xlu0 %v3510, 64
        %v3537 = vpop.permute.xlu0 %3536
        %3538 = vrot.lane.b32.xlu0 %v3511, 64
        %v3539 = vpop.permute.xlu0 %3538
        %3540 = vrot.lane.b32.xlu0 %v3513, 64
        %v3541 = vpop.permute.xlu0 %3540
        %3542 = vrot.lane.b32.xlu0 %v3514, 64
        %v3543 = vpop.permute.xlu0 %3542
        %3544 = vrot.lane.b32.xlu0 %v3516, 64
        %v3545 = vpop.permute.xlu0 %3544
        %3546 = vrot.lane.b32.xlu0 %v3517, 64
        %v3547 = vpop.permute.xlu0 %3546
        %3548 = vrot.lane.b32.xlu0 %v3519, 64
        %v3549 = vpop.permute.xlu0 %3548
        %3550 = vrot.lane.b32.xlu0 %v3520, 64
        %v3551 = vpop.permute.xlu0 %3550
        %3552 = vrot.lane.b32.xlu0 %v3522, 64
        %v3553 = vpop.permute.xlu0 %3552
        %3554 = vrot.lane.b32.xlu0 %v3523, 64
        %v3555 = vpop.permute.xlu0 %3554
        %3556 = vrot.lane.b32.xlu0 %v3525, 64
        %v3557 = vpop.permute.xlu0 %3556
        %v3560 = vsel %vm1888, %v2846, %v2935
        %v3562 = vsel %vm1888, %v2847, %v2935
        %v3565 = vsel %vm1888, %v2848, %v2937
        %v3567 = vsel %vm1888, %v2849, %v2937
        %v3570 = vsel %vm1888, %v2850, %v2939
        %v3572 = vsel %vm1888, %v2851, %v2939
        %v3575 = vsel %vm1888, %v2852, %v2941
        %v3577 = vsel %vm1888, %v2853, %v2941
        %v3580 = vsel %vm1888, %v2854, %v2943
        %v3582 = vsel %vm1888, %v2855, %v2943
        %v3585 = vsel %vm1888, %v2856, %v2945
        %v3587 = vsel %vm1888, %v2857, %v2945
        %v3590 = vsel %vm1888, %v2858, %v2947
        %v3592 = vsel %vm1888, %v2859, %v2947
        %v3595 = vsel %vm1888, %v2860, %v2949
        %v3597 = vsel %vm1888, %v2861, %v2949
        %v3599 = vsel %vm1939, %v3560, %v2999
        %v3601 = vsel %vm1939, %v3562, %v3001
        %v3603 = vsel %vm1939, %v3565, %v3003
        %v3605 = vsel %vm1939, %v3567, %v3005
        %v3607 = vsel %vm1939, %v3570, %v3007
        %v3609 = vsel %vm1939, %v3572, %v3009
        %v3611 = vsel %vm1939, %v3575, %v3011
        %v3613 = vsel %vm1939, %v3577, %v3013
        %v3615 = vsel %vm1939, %v3580, %v3015
        %v3617 = vsel %vm1939, %v3582, %v3017
        %v3619 = vsel %vm1939, %v3585, %v3019
        %v3621 = vsel %vm1939, %v3587, %v3021
        %v3623 = vsel %vm1939, %v3590, %v3023
        %v3625 = vsel %vm1939, %v3592, %v3025
        %v3627 = vsel %vm1939, %v3595, %v3027
        %v3629 = vsel %vm1939, %v3597, %v3029
        %v3631 = vsel %vm1980, %v3599, %v3095
        %v3633 = vsel %vm1980, %v3601, %v3097
        %v3635 = vsel %vm1980, %v3603, %v3099
        %v3637 = vsel %vm1980, %v3605, %v3101
        %v3639 = vsel %vm1980, %v3607, %v3103
        %v3641 = vsel %vm1980, %v3609, %v3105
        %v3643 = vsel %vm1980, %v3611, %v3107
        %v3645 = vsel %vm1980, %v3613, %v3109
        %v3647 = vsel %vm1980, %v3615, %v3111
        %v3649 = vsel %vm1980, %v3617, %v3113
        %v3651 = vsel %vm1980, %v3619, %v3115
        %v3653 = vsel %vm1980, %v3621, %v3117
        %v3655 = vsel %vm1980, %v3623, %v3119
        %v3657 = vsel %vm1980, %v3625, %v3121
        %v3659 = vsel %vm1980, %v3627, %v3123
        %v3661 = vsel %vm1980, %v3629, %v3125
        %v3663 = vsel %vm2021, %v3631, %v3199
        %v3664 = vsel %vm2021, %v3633, %v3199
        %v3666 = vsel %vm2021, %v3635, %v3201
        %v3667 = vsel %vm2021, %v3637, %v3201
        %v3669 = vsel %vm2021, %v3639, %v3203
        %v3670 = vsel %vm2021, %v3641, %v3203
        %v3672 = vsel %vm2021, %v3643, %v3205
        %v3673 = vsel %vm2021, %v3645, %v3205
        %v3675 = vsel %vm2021, %v3647, %v3207
        %v3676 = vsel %vm2021, %v3649, %v3207
        %v3678 = vsel %vm2021, %v3651, %v3209
        %v3679 = vsel %vm2021, %v3653, %v3209
        %v3681 = vsel %vm2021, %v3655, %v3211
        %v3682 = vsel %vm2021, %v3657, %v3211
        %v3684 = vsel %vm2021, %v3659, %v3213
        %v3685 = vsel %vm2021, %v3661, %v3213
        %v3687 = vsel %vm2052, %v3663, %v3263
        %v3689 = vsel %vm2052, %v3664, %v3265
        %v3691 = vsel %vm2052, %v3666, %v3267
        %v3693 = vsel %vm2052, %v3667, %v3269
        %v3695 = vsel %vm2052, %v3669, %v3271
        %v3697 = vsel %vm2052, %v3670, %v3273
        %v3699 = vsel %vm2052, %v3672, %v3275
        %v3701 = vsel %vm2052, %v3673, %v3277
        %v3703 = vsel %vm2052, %v3675, %v3279
        %v3705 = vsel %vm2052, %v3676, %v3281
        %v3707 = vsel %vm2052, %v3678, %v3283
        %v3709 = vsel %vm2052, %v3679, %v3285
        %v3711 = vsel %vm2052, %v3681, %v3287
        %v3713 = vsel %vm2052, %v3682, %v3289
        %v3715 = vsel %vm2052, %v3684, %v3291
        %v3717 = vsel %vm2052, %v3685, %v3293
        %v3719 = vsel %vm2093, %v3687, %v3359
        %v3721 = vsel %vm2093, %v3689, %v3361
        %v3723 = vsel %vm2093, %v3691, %v3363
        %v3725 = vsel %vm2093, %v3693, %v3365
        %v3727 = vsel %vm2093, %v3695, %v3367
        %v3729 = vsel %vm2093, %v3697, %v3369
        %v3731 = vsel %vm2093, %v3699, %v3371
        %v3733 = vsel %vm2093, %v3701, %v3373
        %v3735 = vsel %vm2093, %v3703, %v3375
        %v3737 = vsel %vm2093, %v3705, %v3377
        %v3739 = vsel %vm2093, %v3707, %v3379
        %v3741 = vsel %vm2093, %v3709, %v3381
        %v3743 = vsel %vm2093, %v3711, %v3383
        %v3745 = vsel %vm2093, %v3713, %v3385
        %v3747 = vsel %vm2093, %v3715, %v3387
        %v3749 = vsel %vm2093, %v3717, %v3389
        %v3751 = vsel %vm2134, %v3719, %v3463
        %v3752 = vsel %vm2134, %v3721, %v3463
        %v3754 = vsel %vm2134, %v3723, %v3465
        %v3755 = vsel %vm2134, %v3725, %v3465
        %v3757 = vsel %vm2134, %v3727, %v3467
        %v3758 = vsel %vm2134, %v3729, %v3467
        %v3760 = vsel %vm2134, %v3731, %v3469
        %v3761 = vsel %vm2134, %v3733, %v3469
        %v3763 = vsel %vm2134, %v3735, %v3471
        %v3764 = vsel %vm2134, %v3737, %v3471
        %v3766 = vsel %vm2134, %v3739, %v3473
        %v3767 = vsel %vm2134, %v3741, %v3473
        %v3769 = vsel %vm2134, %v3743, %v3475
        %v3770 = vsel %vm2134, %v3745, %v3475
        %v3772 = vsel %vm2134, %v3747, %v3477
        %v3773 = vsel %vm2134, %v3749, %v3477
        %v3775 = vsel %vm2165, %v3751, %v3527
        %v3777 = vsel %vm2165, %v3752, %v3529
        %v3779 = vsel %vm2165, %v3754, %v3531
        %v3781 = vsel %vm2165, %v3755, %v3533
        %v3783 = vsel %vm2165, %v3757, %v3535
        %v3785 = vsel %vm2165, %v3758, %v3537
        %v3787 = vsel %vm2165, %v3760, %v3539
        %v3789 = vsel %vm2165, %v3761, %v3541
        %v3791 = vsel %vm2165, %v3763, %v3543
        %v3793 = vsel %vm2165, %v3764, %v3545
        %v3795 = vsel %vm2165, %v3766, %v3547
        %v3797 = vsel %vm2165, %v3767, %v3549
        %v3799 = vsel %vm2165, %v3769, %v3551
        %v3801 = vsel %vm2165, %v3770, %v3553
        %v3803 = vsel %vm2165, %v3772, %v3555
        %v3805 = vsel %vm2165, %v3773, %v3557
        %v3806 = vshrl.u32 %v3775, 16
        %v3808 = vrot.slane %v3806, 3
        %v3809 = vshll.u32 %v3775, 16
        %v3811 = vrot.slane %v3809, 4
        %v3812 = vor.u32 %v3808, %v3811
        %v3813 = vshrl.u32 %v3777, 16
        %v3815 = vrot.slane %v3813, 3
        %v3816 = vshll.u32 %v3777, 16
        %v3818 = vrot.slane %v3816, 4
        %v3819 = vor.u32 %v3815, %v3818
        %v3820 = vsel %vm2206, %v3812, %v3819
        %v3821 = vshrl.u32 %v3779, 16
        %v3823 = vrot.slane %v3821, 3
        %v3824 = vshll.u32 %v3779, 16
        %v3826 = vrot.slane %v3824, 4
        %v3827 = vor.u32 %v3823, %v3826
        %v3828 = vshrl.u32 %v3781, 16
        %v3830 = vrot.slane %v3828, 3
        %v3831 = vshll.u32 %v3781, 16
        %v3833 = vrot.slane %v3831, 4
        %v3834 = vor.u32 %v3830, %v3833
        %v3835 = vsel %vm2206, %v3827, %v3834
        %v3836 = vshrl.u32 %v3783, 16
        %v3838 = vrot.slane %v3836, 3
        %v3839 = vshll.u32 %v3783, 16
        %v3841 = vrot.slane %v3839, 4
        %v3842 = vor.u32 %v3838, %v3841
        %v3843 = vshrl.u32 %v3785, 16
        %v3845 = vrot.slane %v3843, 3
        %v3846 = vshll.u32 %v3785, 16
        %v3848 = vrot.slane %v3846, 4
        %v3849 = vor.u32 %v3845, %v3848
        %v3850 = vsel %vm2206, %v3842, %v3849
        %v3851 = vshrl.u32 %v3787, 16
        %v3853 = vrot.slane %v3851, 3
        %v3854 = vshll.u32 %v3787, 16
        %v3856 = vrot.slane %v3854, 4
        %v3857 = vor.u32 %v3853, %v3856
        %v3858 = vshrl.u32 %v3789, 16
        %v3860 = vrot.slane %v3858, 3
        %v3861 = vshll.u32 %v3789, 16
        %v3863 = vrot.slane %v3861, 4
        %v3864 = vor.u32 %v3860, %v3863
        %v3865 = vsel %vm2206, %v3857, %v3864
        %v3866 = vshrl.u32 %v3791, 16
        %v3868 = vrot.slane %v3866, 3
        %v3869 = vshll.u32 %v3791, 16
        %v3871 = vrot.slane %v3869, 4
        %v3872 = vor.u32 %v3868, %v3871
        %v3873 = vshrl.u32 %v3793, 16
        %v3875 = vrot.slane %v3873, 3
        %v3876 = vshll.u32 %v3793, 16
        %v3878 = vrot.slane %v3876, 4
        %v3879 = vor.u32 %v3875, %v3878
        %v3880 = vsel %vm2206, %v3872, %v3879
        %v3881 = vshrl.u32 %v3795, 16
        %v3883 = vrot.slane %v3881, 3
        %v3884 = vshll.u32 %v3795, 16
        %v3886 = vrot.slane %v3884, 4
        %v3887 = vor.u32 %v3883, %v3886
        %v3888 = vshrl.u32 %v3797, 16
        %v3890 = vrot.slane %v3888, 3
        %v3891 = vshll.u32 %v3797, 16
        %v3893 = vrot.slane %v3891, 4
        %v3894 = vor.u32 %v3890, %v3893
        %v3895 = vsel %vm2206, %v3887, %v3894
        %v3896 = vshrl.u32 %v3799, 16
        %v3898 = vrot.slane %v3896, 3
        %v3899 = vshll.u32 %v3799, 16
        %v3901 = vrot.slane %v3899, 4
        %v3902 = vor.u32 %v3898, %v3901
        %v3903 = vshrl.u32 %v3801, 16
        %v3905 = vrot.slane %v3903, 3
        %v3906 = vshll.u32 %v3801, 16
        %v3908 = vrot.slane %v3906, 4
        %v3909 = vor.u32 %v3905, %v3908
        %v3910 = vsel %vm2206, %v3902, %v3909
        %v3911 = vshrl.u32 %v3803, 16
        %v3913 = vrot.slane %v3911, 3
        %v3914 = vshll.u32 %v3803, 16
        %v3916 = vrot.slane %v3914, 4
        %v3917 = vor.u32 %v3913, %v3916
        %v3918 = vshrl.u32 %v3805, 16
        %v3920 = vrot.slane %v3918, 3
        %v3921 = vshll.u32 %v3805, 16
        %v3923 = vrot.slane %v3921, 4
        %v3924 = vor.u32 %v3920, %v3923
        %v3925 = vsel %vm2206, %v3917, %v3924
        %v3926 = vld [vmem:[#allocation13] sm:$0xf]
        %v3927 = vld [vmem:[#allocation13 + $0x4] sm:$0xf]
        %v3928 = vld [vmem:[#allocation13 + $0x8] sm:$0xf]
        %v3929 = vld [vmem:[#allocation13 + $0xc] sm:$0xf]
        %v3930 = vld [vmem:[#allocation13 + $0x10] sm:$0xf]
        %v3931 = vld [vmem:[#allocation13 + $0x14] sm:$0xf]
        %v3932 = vld [vmem:[#allocation13 + $0x18] sm:$0xf]
        %v3933 = vld [vmem:[#allocation13 + $0x1c] sm:$0xf]
        %v3934 = vld [vmem:[#allocation13 + $0x20] sm:$0xf]
        %v3944 = vunpack.c.l.b16 %v3926
        %v3945 = vunpack.c.l.b16 %v3927
        %v3946 = vunpack.c.l.b16 %v3928
        %v3947 = vunpack.c.l.b16 %v3929
        %v3948 = vunpack.c.l.b16 %v3930
        %v3949 = vunpack.c.l.b16 %v3931
        %v3950 = vunpack.c.l.b16 %v3932
        %v3951 = vunpack.c.l.b16 %v3933
        %v3952 = vunpack.c.l.b16 %v3934
        %v3953 = vpack.c.b16 %v3945, %v3944
        %v3954 = vpack.c.b16 %v3947, %v3946
        %v3955 = vpack.c.b16 %v3949, %v3948
        %v3956 = vpack.c.b16 %v3951, %v3950
        %v3957 = vpack.c.b16 %v3952, %v3952
        %v3963 = vsel %vm2393, %v3820, 0
        %v3966 = vsel %vm2393, %v3835, 0
        %v3969 = vsel %vm2393, %v3850, 0
        %v3972 = vsel %vm2393, %v3865, 0
        %v3975 = vsel %vm2393, %v3880, 0
        %v3978 = vsel %vm2393, %v3895, 0
        %v3981 = vsel %vm2393, %v3910, 0
        %v3984 = vsel %vm2393, %v3925, 0
        %v3987 = vsel %vm2424, %v3957, 0
        %3989 = vmatprep.subr.bf16.mxu0 0
        %3990 = vmatpush1.bf16.msra.mxu0 %v3953
        %3991 = vmatprep.subr.bf16.mxu0 0
        %3992 = vmatpush1.bf16.msra.mxu0 %v3954
        %3993 = vmatprep.subr.bf16.mxu0 0
        %3994 = vmatpush1.bf16.msra.mxu0 %v3955
        %3995 = vmatprep.subr.bf16.mxu0 0
        %3996 = vmatpush1.bf16.msra.mxu0 %v3956
        %3997 = vmatprep.subr.bf16.mxu0 0
        %3998 = vmatpush1.bf16.msra.mxu0 %v3987
        %3999 = vmatprep.subr.bf16.mxu0 0
        %4000 = vmatpush1.bf16.msra.mxu0 0
        %4001 = vmatprep.subr.bf16.mxu0 0
        %4002 = vmatpush1.bf16.msra.mxu0 0
        %4003 = vmatprep.subr.bf16.mxu0 0
        %4004 = vmatpush1.bf16.msra.mxu0 0
        %4005 = vmatprep.subr.bf16.mxu0 0
        %4006 = vmatpush1.bf16.msra.mxu0 0
        %4007 = vmatprep.subr.bf16.mxu0 0
        %4008 = vmatpush1.bf16.msra.mxu0 0
        %4009 = vmatprep.subr.bf16.mxu0 0
        %4010 = vmatpush1.bf16.msra.mxu0 0
        %4011 = vmatprep.subr.bf16.mxu0 0
        %4012 = vmatpush1.bf16.msra.mxu0 0
        %4013 = vmatprep.subr.bf16.mxu0 0
        %4014 = vmatpush1.bf16.msra.mxu0 0
        %4015 = vmatprep.subr.bf16.mxu0 0
        %4016 = vmatpush1.bf16.msra.mxu0 0
        %4017 = vmatprep.subr.bf16.mxu0 0
        %4018 = vmatpush1.bf16.msra.mxu0 0
        %4019 = vmatprep.subr.bf16.mxu0 0
        %4020 = vmatpush1.bf16.msra.mxu0 0
        %4021 = vmatprep.mubr.bf16.mxu0 0
        %4022 = vmatmul.mubr.bf16.gmra.mrb[0].mxu0 %v3963
        %v4023 = vpop.f32.mrb[0].mxu0
        %v4024 = vadd.f32 0.0, %v4023
        %v4025 = vpop.f32.mrb[0].mxu0
        %v4026 = vpop.f32.mrb[0].mxu0
        %v4027 = vadd.f32 0.0, %v4026
        %v4028 = vpop.f32.mrb[0].mxu0
        %4029 = vmatprep.mubr.bf16.mxu0 0
        %4030 = vmatmul.mubr.bf16.gmra.mrb[0].mxu0 %v3966
        %v4031 = vpop.f32.mrb[0].mxu0
        %v4032 = vadd.f32 0.0, %v4031
        %v4033 = vpop.f32.mrb[0].mxu0
        %v4034 = vpop.f32.mrb[0].mxu0
        %v4035 = vadd.f32 0.0, %v4034
        %v4036 = vpop.f32.mrb[0].mxu0
        %4037 = vmatprep.mubr.bf16.mxu0 0
        %4038 = vmatmul.mubr.bf16.gmra.mrb[0].mxu0 %v3969
        %v4039 = vpop.f32.mrb[0].mxu0
        %v4040 = vadd.f32 0.0, %v4039
        %v4041 = vpop.f32.mrb[0].mxu0
        %v4042 = vpop.f32.mrb[0].mxu0
        %v4043 = vadd.f32 0.0, %v4042
        %v4044 = vpop.f32.mrb[0].mxu0
        %4045 = vmatprep.mubr.bf16.mxu0 0
        %4046 = vmatmul.mubr.bf16.gmra.mrb[0].mxu0 %v3972
        %v4047 = vpop.f32.mrb[0].mxu0
        %v4048 = vadd.f32 0.0, %v4047
        %v4049 = vpop.f32.mrb[0].mxu0
        %v4050 = vpop.f32.mrb[0].mxu0
        %v4051 = vadd.f32 0.0, %v4050
        %v4052 = vpop.f32.mrb[0].mxu0
        %4053 = vmatprep.mubr.bf16.mxu0 0
        %4054 = vmatmul.mubr.bf16.gmra.mrb[0].mxu0 %v3975
        %v4055 = vpop.f32.mrb[0].mxu0
        %v4056 = vadd.f32 0.0, %v4055
        %v4057 = vpop.f32.mrb[0].mxu0
        %v4058 = vpop.f32.mrb[0].mxu0
        %v4059 = vadd.f32 0.0, %v4058
        %v4060 = vpop.f32.mrb[0].mxu0
        %4061 = vmatprep.mubr.bf16.mxu0 0
        %4062 = vmatmul.mubr.bf16.gmra.mrb[0].mxu0 %v3978
        %v4063 = vpop.f32.mrb[0].mxu0
        %v4064 = vadd.f32 0.0, %v4063
        %v4065 = vpop.f32.mrb[0].mxu0
        %v4066 = vpop.f32.mrb[0].mxu0
        %v4067 = vadd.f32 0.0, %v4066
        %v4068 = vpop.f32.mrb[0].mxu0
        %4069 = vmatprep.mubr.bf16.mxu0 0
        %4070 = vmatmul.mubr.bf16.gmra.mrb[0].mxu0 %v3981
        %v4071 = vpop.f32.mrb[0].mxu0
        %v4072 = vadd.f32 0.0, %v4071
        %v4073 = vpop.f32.mrb[0].mxu0
        %v4074 = vpop.f32.mrb[0].mxu0
        %v4075 = vadd.f32 0.0, %v4074
        %v4076 = vpop.f32.mrb[0].mxu0
        %4077 = vmatprep.mubr.bf16.mxu0 0
        %4078 = vmatmul.mubr.bf16.gmra.mrb[0].mxu0 %v3984
        %v4079 = vpop.f32.mrb[0].mxu0
        %v4080 = vadd.f32 0.0, %v4079
        %v4081 = vpop.f32.mrb[0].mxu0
        %v4082 = vpop.f32.mrb[0].mxu0
        %v4083 = vadd.f32 0.0, %v4082
        %v4084 = vpop.f32.mrb[0].mxu0
        %4085 = vdwg.mxu0
        %v4086 = vld [vmem:[#allocation15] sm:$0x1]
        %v4088 = vlaneseq
        %v4089 = vshrl.u32 %v4088, 7
        %v4090 = vsub.s32 0, %v4089
        %v4091 = vrot.slane %v4086, %v4090
        %v4093 = vadd.f32 %v4024, %v4091
        %v4094 = vadd.f32 %v4027, %v4091
        %v4095 = vadd.f32 %v4032, %v4091
        %v4096 = vadd.f32 %v4035, %v4091
        %v4097 = vadd.f32 %v4040, %v4091
        %v4098 = vadd.f32 %v4043, %v4091
        %v4099 = vadd.f32 %v4048, %v4091
        %v4100 = vadd.f32 %v4051, %v4091
        %v4101 = vadd.f32 %v4056, %v4091
        %v4102 = vadd.f32 %v4059, %v4091
        %v4103 = vadd.f32 %v4064, %v4091
        %v4104 = vadd.f32 %v4067, %v4091
        %v4105 = vadd.f32 %v4072, %v4091
        %v4106 = vadd.f32 %v4075, %v4091
        %v4107 = vadd.f32 %v4080, %v4091
        %v4108 = vadd.f32 %v4083, %v4091
        %v4109 = vmax.f32 %v4093, 0.0
        %v4110 = vmax.f32 %v4094, 0.0
        %v4111 = vmax.f32 %v4095, 0.0
        %v4112 = vmax.f32 %v4096, 0.0
        %v4113 = vmax.f32 %v4097, 0.0
        %v4114 = vmax.f32 %v4098, 0.0
        %v4115 = vmax.f32 %v4099, 0.0
        %v4116 = vmax.f32 %v4100, 0.0
        %v4117 = vmax.f32 %v4101, 0.0
        %v4118 = vmax.f32 %v4102, 0.0
        %v4119 = vmax.f32 %v4103, 0.0
        %v4120 = vmax.f32 %v4104, 0.0
        %v4121 = vmax.f32 %v4105, 0.0
        %v4122 = vmax.f32 %v4106, 0.0
        %v4123 = vmax.f32 %v4107, 0.0
        %v4124 = vmax.f32 %v4108, 0.0
        %v4125 = vmul.f32 %v4109, 0.5
        %v4126 = vmul.f32 %v4110, 0.5
        %v4127 = vmul.f32 %v4111, 0.5
        %v4128 = vmul.f32 %v4112, 0.5
        %v4129 = vmul.f32 %v4113, 0.5
        %v4130 = vmul.f32 %v4114, 0.5
        %v4131 = vmul.f32 %v4115, 0.5
        %v4132 = vmul.f32 %v4116, 0.5
        %v4133 = vmul.f32 %v4117, 0.5
        %v4134 = vmul.f32 %v4118, 0.5
        %v4135 = vmul.f32 %v4119, 0.5
        %v4136 = vmul.f32 %v4120, 0.5
        %v4137 = vmul.f32 %v4121, 0.5
        %v4138 = vmul.f32 %v4122, 0.5
        %v4139 = vmul.f32 %v4123, 0.5
        %v4140 = vmul.f32 %v4124, 0.5
        %v4141 = vld [vmem:[%s406] sm:$0xff]
        %v4142 = vld [vmem:[%s406 + $0x8] sm:$0xff]
        %v4143 = vld [vmem:[%s406 + $0x10] sm:$0xff]
        %v4144 = vld [vmem:[%s406 + $0x18] sm:$0xff]
        %v4145 = vld [vmem:[%s406 + $0x20] sm:$0xff]
        %v4146 = vld [vmem:[%s406 + $0x28] sm:$0xff]
        %v4147 = vld [vmem:[%s406 + $0x30] sm:$0xff]
        %v4148 = vld [vmem:[%s406 + $0x38] sm:$0xff]
        %v4149 = vld [vmem:[%s406 + $0x40] sm:$0xff]
        %v4150 = vld [vmem:[%s406 + $0x48] sm:$0xff]
        %v4151 = vld [vmem:[%s406 + $0x50] sm:$0xff]
        %v4152 = vld [vmem:[%s406 + $0x58] sm:$0xff]
        %v4153 = vld [vmem:[%s406 + $0x60] sm:$0xff]
        %v4154 = vld [vmem:[%s406 + $0x68] sm:$0xff]
        %v4155 = vld [vmem:[%s406 + $0x70] sm:$0xff]
        %v4156 = vld [vmem:[%s406 + $0x78] sm:$0xff]
        %v4157 = vadd.f32 %v4125, %v4141
        %v4158 = vadd.f32 %v4126, %v4142
        %v4159 = vadd.f32 %v4127, %v4143
        %v4160 = vadd.f32 %v4128, %v4144
        %v4161 = vadd.f32 %v4129, %v4145
        %v4162 = vadd.f32 %v4130, %v4146
        %v4163 = vadd.f32 %v4131, %v4147
        %v4164 = vadd.f32 %v4132, %v4148
        %v4165 = vadd.f32 %v4133, %v4149
        %v4166 = vadd.f32 %v4134, %v4150
        %v4167 = vadd.f32 %v4135, %v4151
        %v4168 = vadd.f32 %v4136, %v4152
        %v4169 = vadd.f32 %v4137, %v4153
        %v4170 = vadd.f32 %v4138, %v4154
        %v4171 = vadd.f32 %v4139, %v4155
        %v4172 = vadd.f32 %v4140, %v4156
        %4173 = vst.msk [vmem:[%s480] sm:$0xff] %vm1888, %v4157
        %4174 = vst.msk [vmem:[%s480 + $0x8] sm:$0xff] %vm1888, %v4158
        %4175 = vst.msk [vmem:[%s480 + $0x10] sm:$0xff] %vm1888, %v4159
        %4176 = vst.msk [vmem:[%s480 + $0x18] sm:$0xff] %vm1888, %v4160
        %4177 = vst.msk [vmem:[%s480 + $0x20] sm:$0xff] %vm1888, %v4161
        %4178 = vst.msk [vmem:[%s480 + $0x28] sm:$0xff] %vm1888, %v4162
        %4179 = vst.msk [vmem:[%s480 + $0x30] sm:$0xff] %vm1888, %v4163
        %4180 = vst.msk [vmem:[%s480 + $0x38] sm:$0xff] %vm1888, %v4164
        %4181 = vst.msk [vmem:[%s480 + $0x40] sm:$0xff] %vm1888, %v4165
        %4182 = vst.msk [vmem:[%s480 + $0x48] sm:$0xff] %vm1888, %v4166
        %4183 = vst.msk [vmem:[%s480 + $0x50] sm:$0xff] %vm1888, %v4167
        %4184 = vst.msk [vmem:[%s480 + $0x58] sm:$0xff] %vm1888, %v4168
        %4185 = vst.msk [vmem:[%s480 + $0x60] sm:$0xff] %vm1888, %v4169
        %4186 = vst.msk [vmem:[%s480 + $0x68] sm:$0xff] %vm1888, %v4170
        %4187 = vst.msk [vmem:[%s480 + $0x70] sm:$0xff] %vm1888, %v4171
        %4188 = vst.msk [vmem:[%s480 + $0x78] sm:$0xff] %vm1888, %v4172
        %s4189 = sand.u32 %s235, 1
        %s4190 = scalar_lea.sflag [#allocation6], %s4189
        %s4191 = sand.u32 %s235, 1
        %s4192 = smul.addr %s4191, 128
        %s4193 = scalar_lea.vmem [#allocation16], %s4192
        // Predicated region
        $region101: #{tpu_custom_call.1} parent=47 // pred_check
          %p4194 = pneg %p245
        $region102: #{tpu_custom_call.1} parent=47 // pred_check_branch
          %4196 = sbr.rel (%p4194) target = $region104
        $region103: #{tpu_custom_call.1} parent=47 // pred_region
          %s4197 = smul.u32 8, %s34
          %s4199 = ssub.s32 2048, 2048
          %4200 = vsyncadd %s4190, %s4199
          %s4201 = smul.addr %s4197, 2
          %s4202 = smul.addr %s33, 32
          %s4203 = sadd.s32 %s4201, %s4202
          %s4204 = smul.addr %s4203, 128
          %s4205 = scalar_lea.hbm %s7, %s4204
          %s4206 = sshll.u32 %s4193, 4
          %s4207 = int_to_ptr.vmem [resolvable:$true] %s4206
          %4212 = dma.vmem_to_hbm [thread:$0]  %s4207, 2048, %s4205, %s4190, 128, 128, 8
        $region104: #{tpu_custom_call.1} parent=47 // pred_fallthru
          _
      $region48: #{tpu_custom_call.1} parent=5 // pred_fallthru
        _
      %p4213 = scmp.le.s32.totalorder 2, %s24
      // Predicated region
      $region105: #{tpu_custom_call.1} parent=5 // pred_check
        %p4214 = pneg %p4213
      $region106: #{tpu_custom_call.1} parent=5 // pred_check_branch
        %4216 = sbr.rel (%p4214) target = $region108
      $region107: #{tpu_custom_call.1} parent=5 // pred_region
        %s4217 = ssub.s32 %s24, 2
        // Predicated region
        $region109: #{tpu_custom_call.1} parent=107 // pred_check
          %p4218 = pneg %p251
        $region110: #{tpu_custom_call.1} parent=107 // pred_check_branch
          %4220 = sbr.rel (%p4218) target = $region112
        $region111: #{tpu_custom_call.1} parent=107 // pred_region
          %s4221 = sand.u32 %s236, 1
          %s4222 = scalar_lea.sflag [#allocation6], %s4221
          %s4223 = sand.u32 %s236, 1
          %s4224 = smul.addr %s4223, 128
          %s4225 = scalar_lea.vmem [#allocation16], %s4224
          %4226 = dma.done %s4222, 2048
        $region112: #{tpu_custom_call.1} parent=107 // pred_fallthru
          _
      $region108: #{tpu_custom_call.1} parent=5 // pred_fallthru
        _
    $region6: #{tpu_custom_call.1} parent=1 // loop_footer
      %s28 = sadd.s32 1, %s24
    $region7: #{tpu_custom_call.1} parent=1 // loop_footer_branch
      %23 = sbr.rel target = $region3
    $region8: #{tpu_custom_call.1} parent=1 // loop_exit
      _
    %4227 = vsyncpa [#allocation5], 1
    %s4228 = scalar_lea.sflag [#allocation5], 1
    %4229 = vsyncpa %s4228, 1
    %4230 = vsyncpa [#allocation8], 1
    %s4231 = scalar_lea.sflag [#allocation8], 1
    %4232 = vsyncpa %s4231, 1
    %4233 = vsyncpa [#allocation11], 1
    %4234 = vsyncpa [#allocation14], 1
    %4235 = vsyncpa [#allocation6], 1
    %s4236 = scalar_lea.sflag [#allocation6], 1
    %4237 = vsyncpa %s4236, 1

</llo_original>
